<compile_context>
chip_gen: v7x
topology: tpu7x:2x2x1
jax: 0.10.0
libtpu: 0.0.40
codegen_flags: <defaults>
</compile_context>

<pallas_src>
import math

import jax
import jax.numpy as jnp
import numpy as np
from jax.experimental import pallas as pl
from jax.experimental.pallas import tpu as pltpu

# --- module hyper-parameters (GroupBlock(dim=32, num_heads=4, ws=8)) ---------
DIM = 32
NUM_HEADS = 4
HEAD_DIM = DIM // NUM_HEADS
WS = 8                       # window size (ws x ws tokens per group)
S = WS * WS                  # tokens per window
MLP_HIDDEN = int(DIM * 4.0)  # mlp_ratio = 4.0
EPS = 1e-5                   # torch nn.LayerNorm default
SCALE = HEAD_DIM ** (-0.5)   # qk_scale=None -> head_dim ** -0.5


def _layernorm(x, gamma, beta):
    mean = jnp.mean(x, axis=-1, keepdims=True)
    var = jnp.mean((x - mean) ** 2, axis=-1, keepdims=True)
    return (x - mean) * jax.lax.rsqrt(var + EPS) * gamma + beta


def _gelu_exact(x):
    # nn.GELU() default is the exact erf-based GELU.
    return 0.5 * x * (1.0 + jax.lax.erf(x * (1.0 / math.sqrt(2.0))))


# ----------------- fused kernel: x + Attn(LN1(x)), then x + MLP(LN2(x)) ------
# grid axis 0 = one block of SGB image-row strips (each strip = WS rows = a
# contiguous chunk of WS*W tokens).  Window extraction / merge happens in
# VMEM; LayerNorm / qkv / proj / MLP are per-token; attention is per-window
# per-head, batched as a single (H*GB, S, D) einsum.
def fused_block_kernel(x_ref, g1_ref, b1_ref, wqkv_t_ref, wproj_t_ref,
                       bproj_ref, g2_ref, b2_ref, w1_t_ref, bb1_ref,
                       w2_t_ref, bb2_ref, o_ref):
    SGB, SW, C = x_ref.shape            # strips per block, WS*W tokens, C
    W_img = SW // WS                    # image width
    WG = W_img // WS                    # windows per strip
    GB = SGB * WG                       # windows in this block

    # rows = (strip, row-in-strip), cols = image column
    xs = x_ref[...].reshape(SGB * WS, W_img, C)

    # ---- window partition: (GB, S, C) with GB index = w*SGB + strip --------
    xw = jnp.concatenate(
        [xs[:, w * WS:(w + 1) * WS, :].reshape(SGB, S, C) for w in range(WG)],
        axis=0)
    xt = xw.reshape(GB * S, DIM)        # token matrix (GB*S, C)

    # ---------------- attention branch: x + proj(attn(LN1(x))) --------------
    xn = _layernorm(xt, g1_ref[...], b1_ref[...])
    # qkv Linear (no bias), weight pre-transposed -> (GB*S, 3C).
    # Column layout of 3C is [q | k | v], each split into num_heads chunks of
    # head_dim (matches torch reshape(..., 3, num_heads, head_dim)).
    qkv = jnp.dot(xn, wqkv_t_ref[...], preferred_element_type=jnp.float32)

    def gather_heads(base):
        # -> (H*GB, S, D): batch dim = (head major, window minor)
        return jnp.concatenate(
            [qkv[:, base + h * HEAD_DIM: base + (h + 1) * HEAD_DIM]
                 .reshape(GB, S, HEAD_DIM)
             for h in range(NUM_HEADS)], axis=0)

    q = gather_heads(0)
    k = gather_heads(DIM)
    v = gather_heads(2 * DIM)

    s = jnp.einsum('bqd,bkd->bqk', q, k,
                   preferred_element_type=jnp.float32) * SCALE   # (H*GB, S, S)
    s = s - jnp.max(s, axis=-1, keepdims=True)
    p = jnp.exp(s)
    p = p * pl.reciprocal(jnp.sum(p, axis=-1, keepdims=True), approx=True)
    o = jnp.einsum('bqk,bkd->bqd', p, v,
                   preferred_element_type=jnp.float32)           # (H*GB, S, D)

    # back to (GB*S, C) with heads concatenated along channels
    attn_out = jnp.concatenate(
        [o[h * GB:(h + 1) * GB].reshape(GB * S, HEAD_DIM)
         for h in range(NUM_HEADS)], axis=-1)

    y = jnp.dot(attn_out, wproj_t_ref[...],
                preferred_element_type=jnp.float32) + bproj_ref[...]
    x1 = xt + y                         # residual (drop_path = Identity)

    # ---------------- MLP branch: x1 + fc2(gelu(fc1(LN2(x1)))) --------------
    xn2 = _layernorm(x1, g2_ref[...], b2_ref[...])
    h = jnp.dot(xn2, w1_t_ref[...], preferred_element_type=jnp.float32) + bb1_ref[...]
    h = _gelu_exact(h)
    y2 = jnp.dot(h, w2_t_ref[...], preferred_element_type=jnp.float32) + bb2_ref[...]
    res = (x1 + y2).reshape(GB, S, DIM)

    # ---- un-window back to strip layout and store ---------------------------
    strips = jnp.concatenate(
        [res[w * SGB:(w + 1) * SGB].reshape(SGB * WS, WS, DIM)
         for w in range(WG)], axis=1)                  # (SGB*WS, W_img, C)
    o_ref[...] = strips.reshape(SGB, SW, DIM).astype(o_ref.dtype)


# ---------------------------------- wrapper ----------------------------------
def group_block(x, H, W, p):
    B, N, C = x.shape
    assert N == H * W and C == DIM
    assert H % WS == 0 and W % WS == 0
    hg = H // WS
    n_strips = B * hg
    SW = WS * W                           # tokens per strip (contiguous in N)

    # free (contiguous) reshape: one strip = WS consecutive image rows
    xs = x.reshape(n_strips, SW, C)

    # strips per grid step: keep >= 2 grid steps (both v7x TCs fed) and cap
    # the block at ~2048 tokens so tiles stay comfortably inside VMEM.
    sgb = n_strips if n_strips < 2 else max(1, n_strips // 2)
    sgb = min(sgb, max(1, 2048 // SW))
    while n_strips % sgb:
        sgb -= 1
    grid = (n_strips // sgb,)

    # pre-transpose weights once on the host: no .T (XLU transpose) in-kernel
    wqkv_t = p["wqkv"].T        # (C, 3C)
    wproj_t = p["wproj"].T      # (C, C)
    w1_t = p["w1"].T            # (C, HID)
    w2_t = p["w2"].T            # (HID, C)

    def fullspec(shape):
        return pl.BlockSpec(shape, lambda i, n=len(shape): (0,) * n)

    out = pl.pallas_call(
        fused_block_kernel,
        out_shape=jax.ShapeDtypeStruct((n_strips, SW, C), x.dtype),
        grid=grid,
        in_specs=[
            pl.BlockSpec((sgb, SW, C), lambda i: (i, 0, 0)),
            fullspec((1, C)), fullspec((1, C)),                   # norm1 gamma/beta
            fullspec((C, 3 * C)),                                 # qkv weight (pre-T)
            fullspec((C, C)), fullspec((1, C)),                   # proj weight (pre-T)/bias
            fullspec((1, C)), fullspec((1, C)),                   # norm2 gamma/beta
            fullspec((C, MLP_HIDDEN)), fullspec((1, MLP_HIDDEN)), # fc1 (pre-T)/bias
            fullspec((MLP_HIDDEN, C)), fullspec((1, C)),          # fc2 (pre-T)/bias
        ],
        out_specs=pl.BlockSpec((sgb, SW, C), lambda i: (i, 0, 0)),
        compiler_params=pltpu.CompilerParams(dimension_semantics=("parallel",)),
    )(xs, p["g1"], p["b1"], wqkv_t, wproj_t, p["bproj"],
      p["g2"], p["b2"], w1_t, p["bb1"], w2_t, p["bb2"])

    # free (contiguous) reshape back to (B, N, C)
    return out.reshape(B, N, C)


# --------------------------- pure-JAX reference ------------------------------
def group_block_ref(x, H, W, p):
    B, N, C = x.shape
    hg, wg = H // WS, W // WS

    def ln(v, g, b):
        m = v.mean(-1, keepdims=True)
        var = ((v - m) ** 2).mean(-1, keepdims=True)
        return (v - m) / jnp.sqrt(var + EPS) * g + b

    xn = ln(x, p["g1"], p["b1"])
    xw = (xn.reshape(B, hg, WS, wg, WS, C)
            .transpose(0, 1, 3, 2, 4, 5)
            .reshape(B, hg * wg, WS * WS, C))
    qkv = (xw @ p["wqkv"].T).reshape(B, hg * wg, WS * WS, 3, NUM_HEADS, HEAD_DIM)
    qkv = qkv.transpose(3, 0, 1, 4, 2, 5)
    q, k, v = qkv[0], qkv[1], qkv[2]
    attn = jnp.einsum('bghqd,bghkd->bghqk', q, k) * SCALE
    attn = jax.nn.softmax(attn, axis=-1)
    o = jnp.einsum('bghqk,bghkd->bghqd', attn, v)
    o = o.transpose(0, 1, 3, 2, 4).reshape(B, hg, wg, WS, WS, C)
    o = o.transpose(0, 1, 3, 2, 4, 5).reshape(B, N, C)
    o = o @ p["wproj"].T + p["bproj"]
    x = x + o
    xn2 = ln(x, p["g2"], p["b2"])
    h = xn2 @ p["w1"].T + p["bb1"]
    h = 0.5 * h * (1.0 + jax.lax.erf(h / math.sqrt(2.0)))
    y = h @ p["w2"].T + p["bb2"]
    return x + y


if __name__ == "__main__":
    key = jax.random.PRNGKey(0)
    ks = jax.random.split(key, 10)

    B, H, W = 2, 16, 16
    N = H * W

    # deterministic synthetic parameters (shapes from GroupBlock.__init__)
    params = {
        "g1":    1.0 + 0.1 * jax.random.normal(ks[0], (1, DIM), jnp.float32),
        "b1":    0.1 * jax.random.normal(ks[1], (1, DIM), jnp.float32),
        "wqkv":  0.08 * jax.random.normal(ks[2], (3 * DIM, DIM), jnp.float32),
        "wproj": 0.08 * jax.random.normal(ks[3], (DIM, DIM), jnp.float32),
        "bproj": 0.02 * jax.random.normal(ks[4], (1, DIM), jnp.float32),
        "g2":    1.0 + 0.1 * jax.random.normal(ks[5], (1, DIM), jnp.float32),
        "b2":    0.1 * jax.random.normal(ks[6], (1, DIM), jnp.float32),
        "w1":    0.08 * jax.random.normal(ks[7], (MLP_HIDDEN, DIM), jnp.float32),
        "bb1":   jnp.zeros((1, MLP_HIDDEN), jnp.float32),
        "w2":    0.08 * jax.random.normal(ks[8], (DIM, MLP_HIDDEN), jnp.float32),
        "bb2":   jnp.zeros((1, DIM), jnp.float32),
    }

    # NOTE: dropout / attn_drop / drop_path are all p=0.0 (Identity) in the
    # reference module, so they are no-ops here.
    x = jax.random.normal(ks[9], (B, N, DIM), jnp.float32)

    out = jax.block_until_ready(group_block(x, H, W, params))
    ref = jax.block_until_ready(group_block_ref(x, H, W, params))

    assert out.shape == (B, N, DIM)
    assert np.allclose(np.asarray(out), np.asarray(ref), rtol=1e-2, atol=1e-2), (
        "mismatch: max abs err = %g"
        % float(np.max(np.abs(np.asarray(out) - np.asarray(ref)))))
    print("KERNEL_OK")
</pallas_src>

<mosaic_0001>
module attributes {stable_mosaic.version = 11 : i64} {
  func.func @fused_block_kernel(%arg0: i32, %arg1: memref<2x128x32xf32, #tpu.memory_space<vmem>>, %arg2: memref<1x32xf32, #tpu.memory_space<vmem>>, %arg3: memref<1x32xf32, #tpu.memory_space<vmem>>, %arg4: memref<32x96xf32, #tpu.memory_space<vmem>>, %arg5: memref<32x32xf32, #tpu.memory_space<vmem>>, %arg6: memref<1x32xf32, #tpu.memory_space<vmem>>, %arg7: memref<1x32xf32, #tpu.memory_space<vmem>>, %arg8: memref<1x32xf32, #tpu.memory_space<vmem>>, %arg9: memref<32x128xf32, #tpu.memory_space<vmem>>, %arg10: memref<1x128xf32, #tpu.memory_space<vmem>>, %arg11: memref<128x32xf32, #tpu.memory_space<vmem>>, %arg12: memref<1x32xf32, #tpu.memory_space<vmem>>, %arg13: memref<2x128x32xf32, #tpu.memory_space<vmem>>) attributes {dimension_semantics = [#tpu.dimension_semantics<parallel>], iteration_bounds = array<i64: 2>, scalar_prefetch = 0 : i64, scratch_operands = 0 : i64, tpu.core_type = #tpu.core_type<tc>, window_params = [{transform_indices = @transform_0, window_bounds = array<i64: 2, 128, 32>}, {pipeline_mode = #tpu.pipeline_mode<synchronous>, transform_indices = @transform_1, window_bounds = array<i64: 1, 32>}, {pipeline_mode = #tpu.pipeline_mode<synchronous>, transform_indices = @transform_2, window_bounds = array<i64: 1, 32>}, {pipeline_mode = #tpu.pipeline_mode<synchronous>, transform_indices = @transform_3, window_bounds = array<i64: 32, 96>}, {pipeline_mode = #tpu.pipeline_mode<synchronous>, transform_indices = @transform_4, window_bounds = array<i64: 32, 32>}, {pipeline_mode = #tpu.pipeline_mode<synchronous>, transform_indices = @transform_5, window_bounds = array<i64: 1, 32>}, {pipeline_mode = #tpu.pipeline_mode<synchronous>, transform_indices = @transform_6, window_bounds = array<i64: 1, 32>}, {pipeline_mode = #tpu.pipeline_mode<synchronous>, transform_indices = @transform_7, window_bounds = array<i64: 1, 32>}, {pipeline_mode = #tpu.pipeline_mode<synchronous>, transform_indices = @transform_8, window_bounds = array<i64: 32, 128>}, {pipeline_mode = #tpu.pipeline_mode<synchronous>, transform_indices = @transform_9, window_bounds = array<i64: 1, 128>}, {pipeline_mode = #tpu.pipeline_mode<synchronous>, transform_indices = @transform_10, window_bounds = array<i64: 128, 32>}, {pipeline_mode = #tpu.pipeline_mode<synchronous>, transform_indices = @transform_11, window_bounds = array<i64: 1, 32>}, {transform_indices = @transform_12, window_bounds = array<i64: 2, 128, 32>}]} {
    %c0 = arith.constant 0 : index
    %c0_0 = arith.constant 0 : index
    %c0_1 = arith.constant 0 : index
    %0 = vector.load %arg1[%c0, %c0_0, %c0_1] : memref<2x128x32xf32, #tpu.memory_space<vmem>>, vector<2x128x32xf32>
    %1 = vector.shape_cast %0 : vector<2x128x32xf32> to vector<16x16x32xf32>
    %2 = vector.extract_strided_slice %1 {offsets = [0, 0, 0], sizes = [16, 8, 32], strides = [1, 1, 1]} : vector<16x16x32xf32> to vector<16x8x32xf32>
    %3 = vector.shape_cast %2 : vector<16x8x32xf32> to vector<2x64x32xf32>
    %4 = vector.extract_strided_slice %1 {offsets = [0, 8, 0], sizes = [16, 8, 32], strides = [1, 1, 1]} : vector<16x16x32xf32> to vector<16x8x32xf32>
    %5 = vector.shape_cast %4 : vector<16x8x32xf32> to vector<2x64x32xf32>
    %6 = tpu.concatenate %3, %5 in 0 : vector<2x64x32xf32>, vector<2x64x32xf32> -> vector<4x64x32xf32>
    %7 = vector.shape_cast %6 : vector<4x64x32xf32> to vector<256x32xf32>
    %c0_2 = arith.constant 0 : index
    %c0_3 = arith.constant 0 : index
    %8 = vector.load %arg2[%c0_2, %c0_3] : memref<1x32xf32, #tpu.memory_space<vmem>>, vector<1x32xf32>
    %c0_4 = arith.constant 0 : index
    %c0_5 = arith.constant 0 : index
    %9 = vector.load %arg3[%c0_4, %c0_5] : memref<1x32xf32, #tpu.memory_space<vmem>>, vector<1x32xf32>
    %cst = arith.constant dense<0.000000e+00> : vector<256xf32>
    %10 = vector.multi_reduction <add>, %7, %cst [1] : vector<256x32xf32> to vector<256xf32>
    %11 = vector.shape_cast %10 : vector<256xf32> to vector<256x1xf32>
    %cst_6 = arith.constant 3.200000e+01 : f32
    %12 = vector.broadcast %cst_6 : f32 to vector<256x1xf32>
    %13 = arith.divf %11, %12 : vector<256x1xf32>
    %14 = vector.broadcast %13 : vector<256x1xf32> to vector<256x32xf32>
    %15 = arith.subf %7, %14 : vector<256x32xf32>
    %16 = arith.mulf %15, %15 : vector<256x32xf32>
    %cst_7 = arith.constant dense<0.000000e+00> : vector<256xf32>
    %17 = vector.multi_reduction <add>, %16, %cst_7 [1] : vector<256x32xf32> to vector<256xf32>
    %18 = vector.shape_cast %17 : vector<256xf32> to vector<256x1xf32>
    %cst_8 = arith.constant 3.200000e+01 : f32
    %19 = vector.broadcast %cst_8 : f32 to vector<256x1xf32>
    %20 = arith.divf %18, %19 : vector<256x1xf32>
    %21 = vector.broadcast %13 : vector<256x1xf32> to vector<256x32xf32>
    %22 = arith.subf %7, %21 : vector<256x32xf32>
    %cst_9 = arith.constant 9.99999974E-6 : f32
    %23 = vector.broadcast %cst_9 : f32 to vector<256x1xf32>
    %24 = arith.addf %20, %23 : vector<256x1xf32>
    %25 = math.rsqrt %24 : vector<256x1xf32>
    %26 = vector.broadcast %25 : vector<256x1xf32> to vector<256x32xf32>
    %27 = arith.mulf %22, %26 : vector<256x32xf32>
    %28 = vector.broadcast %8 : vector<1x32xf32> to vector<256x32xf32>
    %29 = arith.mulf %27, %28 : vector<256x32xf32>
    %30 = vector.broadcast %9 : vector<1x32xf32> to vector<256x32xf32>
    %31 = arith.addf %29, %30 : vector<256x32xf32>
    %c0_10 = arith.constant 0 : index
    %c0_11 = arith.constant 0 : index
    %32 = vector.load %arg4[%c0_10, %c0_11] : memref<32x96xf32, #tpu.memory_space<vmem>>, vector<32x96xf32>
    %cst_12 = arith.constant dense<0.000000e+00> : vector<256x96xf32>
    %33 = tpu.matmul %31, %32, %cst_12 {dimension_numbers = #tpu.dot_dimension_numbers<[1], [0], [0], [1], [0, 0, 1, 1], [], []>} : vector<256x32xf32>, vector<32x96xf32>, vector<256x96xf32> -> vector<256x96xf32>
    %34 = vector.extract_strided_slice %33 {offsets = [0, 0], sizes = [256, 8], strides = [1, 1]} : vector<256x96xf32> to vector<256x8xf32>
    %35 = vector.shape_cast %34 : vector<256x8xf32> to vector<4x64x8xf32>
    %36 = vector.extract_strided_slice %33 {offsets = [0, 8], sizes = [256, 8], strides = [1, 1]} : vector<256x96xf32> to vector<256x8xf32>
    %37 = vector.shape_cast %36 : vector<256x8xf32> to vector<4x64x8xf32>
    %38 = vector.extract_strided_slice %33 {offsets = [0, 16], sizes = [256, 8], strides = [1, 1]} : vector<256x96xf32> to vector<256x8xf32>
    %39 = vector.shape_cast %38 : vector<256x8xf32> to vector<4x64x8xf32>
    %40 = vector.extract_strided_slice %33 {offsets = [0, 24], sizes = [256, 8], strides = [1, 1]} : vector<256x96xf32> to vector<256x8xf32>
    %41 = vector.shape_cast %40 : vector<256x8xf32> to vector<4x64x8xf32>
    %42 = tpu.concatenate %35, %37, %39, %41 in 0 : vector<4x64x8xf32>, vector<4x64x8xf32>, vector<4x64x8xf32>, vector<4x64x8xf32> -> vector<16x64x8xf32>
    %43 = vector.extract_strided_slice %33 {offsets = [0, 32], sizes = [256, 8], strides = [1, 1]} : vector<256x96xf32> to vector<256x8xf32>
    %44 = vector.shape_cast %43 : vector<256x8xf32> to vector<4x64x8xf32>
    %45 = vector.extract_strided_slice %33 {offsets = [0, 40], sizes = [256, 8], strides = [1, 1]} : vector<256x96xf32> to vector<256x8xf32>
    %46 = vector.shape_cast %45 : vector<256x8xf32> to vector<4x64x8xf32>
    %47 = vector.extract_strided_slice %33 {offsets = [0, 48], sizes = [256, 8], strides = [1, 1]} : vector<256x96xf32> to vector<256x8xf32>
    %48 = vector.shape_cast %47 : vector<256x8xf32> to vector<4x64x8xf32>
    %49 = vector.extract_strided_slice %33 {offsets = [0, 56], sizes = [256, 8], strides = [1, 1]} : vector<256x96xf32> to vector<256x8xf32>
    %50 = vector.shape_cast %49 : vector<256x8xf32> to vector<4x64x8xf32>
    %51 = tpu.concatenate %44, %46, %48, %50 in 0 : vector<4x64x8xf32>, vector<4x64x8xf32>, vector<4x64x8xf32>, vector<4x64x8xf32> -> vector<16x64x8xf32>
    %52 = vector.extract_strided_slice %33 {offsets = [0, 64], sizes = [256, 8], strides = [1, 1]} : vector<256x96xf32> to vector<256x8xf32>
    %53 = vector.shape_cast %52 : vector<256x8xf32> to vector<4x64x8xf32>
    %54 = vector.extract_strided_slice %33 {offsets = [0, 72], sizes = [256, 8], strides = [1, 1]} : vector<256x96xf32> to vector<256x8xf32>
    %55 = vector.shape_cast %54 : vector<256x8xf32> to vector<4x64x8xf32>
    %56 = vector.extract_strided_slice %33 {offsets = [0, 80], sizes = [256, 8], strides = [1, 1]} : vector<256x96xf32> to vector<256x8xf32>
    %57 = vector.shape_cast %56 : vector<256x8xf32> to vector<4x64x8xf32>
    %58 = vector.extract_strided_slice %33 {offsets = [0, 88], sizes = [256, 8], strides = [1, 1]} : vector<256x96xf32> to vector<256x8xf32>
    %59 = vector.shape_cast %58 : vector<256x8xf32> to vector<4x64x8xf32>
    %60 = tpu.concatenate %53, %55, %57, %59 in 0 : vector<4x64x8xf32>, vector<4x64x8xf32>, vector<4x64x8xf32>, vector<4x64x8xf32> -> vector<16x64x8xf32>
    "tpu.trace_start"() <{level = 10 : i32, message = "bqd,bkd->bqk"}> : () -> ()
    %cst_13 = arith.constant dense<0.000000e+00> : vector<16x64x64xf32>
    %61 = tpu.matmul %42, %51, %cst_13 {dimension_numbers = #tpu.dot_dimension_numbers<[2], [2], [1], [1], [0, 0, 0, 1, 1, 1], [0], [0]>} : vector<16x64x8xf32>, vector<16x64x8xf32>, vector<16x64x64xf32> -> vector<16x64x64xf32>
    "tpu.trace_stop"() : () -> ()
    %cst_14 = arith.constant 0.353553385 : f32
    %62 = vector.broadcast %cst_14 : f32 to vector<16x64x64xf32>
    %63 = arith.mulf %61, %62 : vector<16x64x64xf32>
    %cst_15 = arith.constant dense<0xFF800000> : vector<16x64xf32>
    %64 = vector.multi_reduction <maximumf>, %63, %cst_15 [2] : vector<16x64x64xf32> to vector<16x64xf32>
    %65 = vector.shape_cast %64 : vector<16x64xf32> to vector<16x64x1xf32>
    %66 = vector.broadcast %65 : vector<16x64x1xf32> to vector<16x64x64xf32>
    %67 = arith.subf %63, %66 : vector<16x64x64xf32>
    %68 = math.exp %67 : vector<16x64x64xf32>
    %cst_16 = arith.constant dense<0.000000e+00> : vector<16x64xf32>
    %69 = vector.multi_reduction <add>, %68, %cst_16 [2] : vector<16x64x64xf32> to vector<16x64xf32>
    %70 = vector.shape_cast %69 : vector<16x64xf32> to vector<16x64x1xf32>
    %71 = tpu.reciprocal %70 {approx = true} : vector<16x64x1xf32> -> vector<16x64x1xf32>
    %72 = vector.broadcast %71 : vector<16x64x1xf32> to vector<16x64x64xf32>
    %73 = arith.mulf %68, %72 : vector<16x64x64xf32>
    "tpu.trace_start"() <{level = 10 : i32, message = "bqk,bkd->bqd"}> : () -> ()
    %cst_17 = arith.constant dense<0.000000e+00> : vector<16x64x8xf32>
    %74 = tpu.matmul %73, %60, %cst_17 {dimension_numbers = #tpu.dot_dimension_numbers<[2], [1], [1], [2], [0, 0, 0, 1, 1, 2], [0], [0]>} : vector<16x64x64xf32>, vector<16x64x8xf32>, vector<16x64x8xf32> -> vector<16x64x8xf32>
    "tpu.trace_stop"() : () -> ()
    %75 = vector.extract_strided_slice %74 {offsets = [0, 0, 0], sizes = [4, 64, 8], strides = [1, 1, 1]} : vector<16x64x8xf32> to vector<4x64x8xf32>
    %76 = vector.shape_cast %75 : vector<4x64x8xf32> to vector<256x8xf32>
    %77 = vector.extract_strided_slice %74 {offsets = [4, 0, 0], sizes = [4, 64, 8], strides = [1, 1, 1]} : vector<16x64x8xf32> to vector<4x64x8xf32>
    %78 = vector.shape_cast %77 : vector<4x64x8xf32> to vector<256x8xf32>
    %79 = vector.extract_strided_slice %74 {offsets = [8, 0, 0], sizes = [4, 64, 8], strides = [1, 1, 1]} : vector<16x64x8xf32> to vector<4x64x8xf32>
    %80 = vector.shape_cast %79 : vector<4x64x8xf32> to vector<256x8xf32>
    %81 = vector.extract_strided_slice %74 {offsets = [12, 0, 0], sizes = [4, 64, 8], strides = [1, 1, 1]} : vector<16x64x8xf32> to vector<4x64x8xf32>
    %82 = vector.shape_cast %81 : vector<4x64x8xf32> to vector<256x8xf32>
    %83 = tpu.concatenate %76, %78, %80, %82 in 1 : vector<256x8xf32>, vector<256x8xf32>, vector<256x8xf32>, vector<256x8xf32> -> vector<256x32xf32>
    %c0_18 = arith.constant 0 : index
    %c0_19 = arith.constant 0 : index
    %84 = vector.load %arg5[%c0_18, %c0_19] : memref<32x32xf32, #tpu.memory_space<vmem>>, vector<32x32xf32>
    %cst_20 = arith.constant dense<0.000000e+00> : vector<256x32xf32>
    %85 = tpu.matmul %83, %84, %cst_20 {dimension_numbers = #tpu.dot_dimension_numbers<[1], [0], [0], [1], [0, 0, 1, 1], [], []>} : vector<256x32xf32>, vector<32x32xf32>, vector<256x32xf32> -> vector<256x32xf32>
    %c0_21 = arith.constant 0 : index
    %c0_22 = arith.constant 0 : index
    %86 = vector.load %arg6[%c0_21, %c0_22] : memref<1x32xf32, #tpu.memory_space<vmem>>, vector<1x32xf32>
    %87 = vector.broadcast %86 : vector<1x32xf32> to vector<256x32xf32>
    %88 = arith.addf %85, %87 : vector<256x32xf32>
    %89 = arith.addf %7, %88 : vector<256x32xf32>
    %c0_23 = arith.constant 0 : index
    %c0_24 = arith.constant 0 : index
    %90 = vector.load %arg7[%c0_23, %c0_24] : memref<1x32xf32, #tpu.memory_space<vmem>>, vector<1x32xf32>
    %c0_25 = arith.constant 0 : index
    %c0_26 = arith.constant 0 : index
    %91 = vector.load %arg8[%c0_25, %c0_26] : memref<1x32xf32, #tpu.memory_space<vmem>>, vector<1x32xf32>
    %cst_27 = arith.constant dense<0.000000e+00> : vector<256xf32>
    %92 = vector.multi_reduction <add>, %89, %cst_27 [1] : vector<256x32xf32> to vector<256xf32>
    %93 = vector.shape_cast %92 : vector<256xf32> to vector<256x1xf32>
    %cst_28 = arith.constant 3.200000e+01 : f32
    %94 = vector.broadcast %cst_28 : f32 to vector<256x1xf32>
    %95 = arith.divf %93, %94 : vector<256x1xf32>
    %96 = vector.broadcast %95 : vector<256x1xf32> to vector<256x32xf32>
    %97 = arith.subf %89, %96 : vector<256x32xf32>
    %98 = arith.mulf %97, %97 : vector<256x32xf32>
    %cst_29 = arith.constant dense<0.000000e+00> : vector<256xf32>
    %99 = vector.multi_reduction <add>, %98, %cst_29 [1] : vector<256x32xf32> to vector<256xf32>
    %100 = vector.shape_cast %99 : vector<256xf32> to vector<256x1xf32>
    %cst_30 = arith.constant 3.200000e+01 : f32
    %101 = vector.broadcast %cst_30 : f32 to vector<256x1xf32>
    %102 = arith.divf %100, %101 : vector<256x1xf32>
    %103 = vector.broadcast %95 : vector<256x1xf32> to vector<256x32xf32>
    %104 = arith.subf %89, %103 : vector<256x32xf32>
    %cst_31 = arith.constant 9.99999974E-6 : f32
    %105 = vector.broadcast %cst_31 : f32 to vector<256x1xf32>
    %106 = arith.addf %102, %105 : vector<256x1xf32>
    %107 = math.rsqrt %106 : vector<256x1xf32>
    %108 = vector.broadcast %107 : vector<256x1xf32> to vector<256x32xf32>
    %109 = arith.mulf %104, %108 : vector<256x32xf32>
    %110 = vector.broadcast %90 : vector<1x32xf32> to vector<256x32xf32>
    %111 = arith.mulf %109, %110 : vector<256x32xf32>
    %112 = vector.broadcast %91 : vector<1x32xf32> to vector<256x32xf32>
    %113 = arith.addf %111, %112 : vector<256x32xf32>
    %c0_32 = arith.constant 0 : index
    %c0_33 = arith.constant 0 : index
    %114 = vector.load %arg9[%c0_32, %c0_33] : memref<32x128xf32, #tpu.memory_space<vmem>>, vector<32x128xf32>
    %cst_34 = arith.constant dense<0.000000e+00> : vector<256x128xf32>
    %115 = tpu.matmul %113, %114, %cst_34 {dimension_numbers = #tpu.dot_dimension_numbers<[1], [0], [0], [1], [0, 0, 1, 1], [], []>} : vector<256x32xf32>, vector<32x128xf32>, vector<256x128xf32> -> vector<256x128xf32>
    %c0_35 = arith.constant 0 : index
    %c0_36 = arith.constant 0 : index
    %116 = vector.load %arg10[%c0_35, %c0_36] : memref<1x128xf32, #tpu.memory_space<vmem>>, vector<1x128xf32>
    %117 = vector.broadcast %116 : vector<1x128xf32> to vector<256x128xf32>
    %118 = arith.addf %115, %117 : vector<256x128xf32>
    %cst_37 = arith.constant 5.000000e-01 : f32
    %119 = vector.broadcast %cst_37 : f32 to vector<256x128xf32>
    %120 = arith.mulf %119, %118 : vector<256x128xf32>
    %cst_38 = arith.constant 0.707106769 : f32
    %121 = vector.broadcast %cst_38 : f32 to vector<256x128xf32>
    %122 = arith.mulf %118, %121 : vector<256x128xf32>
    %123 = math.erf %122 : vector<256x128xf32>
    %cst_39 = arith.constant 1.000000e+00 : f32
    %124 = vector.broadcast %cst_39 : f32 to vector<256x128xf32>
    %125 = arith.addf %124, %123 : vector<256x128xf32>
    %126 = arith.mulf %120, %125 : vector<256x128xf32>
    %c0_40 = arith.constant 0 : index
    %c0_41 = arith.constant 0 : index
    %127 = vector.load %arg11[%c0_40, %c0_41] : memref<128x32xf32, #tpu.memory_space<vmem>>, vector<128x32xf32>
    %cst_42 = arith.constant dense<0.000000e+00> : vector<256x32xf32>
    %128 = tpu.matmul %126, %127, %cst_42 {dimension_numbers = #tpu.dot_dimension_numbers<[1], [0], [0], [1], [0, 0, 1, 1], [], []>} : vector<256x128xf32>, vector<128x32xf32>, vector<256x32xf32> -> vector<256x32xf32>
    %c0_43 = arith.constant 0 : index
    %c0_44 = arith.constant 0 : index
    %129 = vector.load %arg12[%c0_43, %c0_44] : memref<1x32xf32, #tpu.memory_space<vmem>>, vector<1x32xf32>
    %130 = vector.broadcast %129 : vector<1x32xf32> to vector<256x32xf32>
    %131 = arith.addf %128, %130 : vector<256x32xf32>
    %132 = arith.addf %89, %131 : vector<256x32xf32>
    %133 = vector.shape_cast %132 : vector<256x32xf32> to vector<4x64x32xf32>
    %134 = vector.extract_strided_slice %133 {offsets = [0, 0, 0], sizes = [2, 64, 32], strides = [1, 1, 1]} : vector<4x64x32xf32> to vector<2x64x32xf32>
    %135 = vector.shape_cast %134 : vector<2x64x32xf32> to vector<16x8x32xf32>
    %136 = vector.extract_strided_slice %133 {offsets = [2, 0, 0], sizes = [2, 64, 32], strides = [1, 1, 1]} : vector<4x64x32xf32> to vector<2x64x32xf32>
    %137 = vector.shape_cast %136 : vector<2x64x32xf32> to vector<16x8x32xf32>
    %138 = tpu.concatenate %135, %137 in 1 : vector<16x8x32xf32>, vector<16x8x32xf32> -> vector<16x16x32xf32>
    %139 = vector.shape_cast %138 : vector<16x16x32xf32> to vector<2x128x32xf32>
    %c0_45 = arith.constant 0 : index
    %c0_46 = arith.constant 0 : index
    %c0_47 = arith.constant 0 : index
    %140 = vector.load %arg13[%c0_45, %c0_46, %c0_47] : memref<2x128x32xf32, #tpu.memory_space<vmem>>, vector<2x128x32xf32>
    tpu.vector_store %arg13[%c0_45, %c0_46, %c0_47], %139 {strides = array<i32>} : memref<2x128x32xf32, #tpu.memory_space<vmem>>, vector<2x128x32xf32>,
    return
  }
  func.func @transform_0(%arg0: i32) -> (i32, i32, i32) {
    %c0_i32 = arith.constant 0 : i32
    %c0_i32_0 = arith.constant 0 : i32
    %c0_i32_1 = arith.constant 0 : i32
    return %arg0, %c0_i32, %c0_i32_0 : i32, i32, i32
  }
  func.func @transform_1(%arg0: i32) -> (i32, i32) {
    %c0_i32 = arith.constant 0 : i32
    %c0_i32_0 = arith.constant 0 : i32
    %c0_i32_1 = arith.constant 0 : i32
    return %c0_i32, %c0_i32_0 : i32, i32
  }
  func.func @transform_2(%arg0: i32) -> (i32, i32) {
    %c0_i32 = arith.constant 0 : i32
    %c0_i32_0 = arith.constant 0 : i32
    %c0_i32_1 = arith.constant 0 : i32
    return %c0_i32, %c0_i32_0 : i32, i32
  }
  func.func @transform_3(%arg0: i32) -> (i32, i32) {
    %c0_i32 = arith.constant 0 : i32
    %c0_i32_0 = arith.constant 0 : i32
    %c0_i32_1 = arith.constant 0 : i32
    return %c0_i32, %c0_i32_0 : i32, i32
  }
  func.func @transform_4(%arg0: i32) -> (i32, i32) {
    %c0_i32 = arith.constant 0 : i32
    %c0_i32_0 = arith.constant 0 : i32
    %c0_i32_1 = arith.constant 0 : i32
    return %c0_i32, %c0_i32_0 : i32, i32
  }
  func.func @transform_5(%arg0: i32) -> (i32, i32) {
    %c0_i32 = arith.constant 0 : i32
    %c0_i32_0 = arith.constant 0 : i32
    %c0_i32_1 = arith.constant 0 : i32
    return %c0_i32, %c0_i32_0 : i32, i32
  }
  func.func @transform_6(%arg0: i32) -> (i32, i32) {
    %c0_i32 = arith.constant 0 : i32
    %c0_i32_0 = arith.constant 0 : i32
    %c0_i32_1 = arith.constant 0 : i32
    return %c0_i32, %c0_i32_0 : i32, i32
  }
  func.func @transform_7(%arg0: i32) -> (i32, i32) {
    %c0_i32 = arith.constant 0 : i32
    %c0_i32_0 = arith.constant 0 : i32
    %c0_i32_1 = arith.constant 0 : i32
    return %c0_i32, %c0_i32_0 : i32, i32
  }
  func.func @transform_8(%arg0: i32) -> (i32, i32) {
    %c0_i32 = arith.constant 0 : i32
    %c0_i32_0 = arith.constant 0 : i32
    %c0_i32_1 = arith.constant 0 : i32
    return %c0_i32, %c0_i32_0 : i32, i32
  }
  func.func @transform_9(%arg0: i32) -> (i32, i32) {
    %c0_i32 = arith.constant 0 : i32
    %c0_i32_0 = arith.constant 0 : i32
    %c0_i32_1 = arith.constant 0 : i32
    return %c0_i32, %c0_i32_0 : i32, i32
  }
  func.func @transform_10(%arg0: i32) -> (i32, i32) {
    %c0_i32 = arith.constant 0 : i32
    %c0_i32_0 = arith.constant 0 : i32
    %c0_i32_1 = arith.constant 0 : i32
    return %c0_i32, %c0_i32_0 : i32, i32
  }
  func.func @transform_11(%arg0: i32) -> (i32, i32) {
    %c0_i32 = arith.constant 0 : i32
    %c0_i32_0 = arith.constant 0 : i32
    %c0_i32_1 = arith.constant 0 : i32
    return %c0_i32, %c0_i32_0 : i32, i32
  }
  func.func @transform_12(%arg0: i32) -> (i32, i32, i32) {
    %c0_i32 = arith.constant 0 : i32
    %c0_i32_0 = arith.constant 0 : i32
    %c0_i32_1 = arith.constant 0 : i32
    return %arg0, %c0_i32, %c0_i32_0 : i32, i32, i32
  }
}

</mosaic_0001>

<llo_original>
// kernel: tpu_custom_call.1
$region0: #{tpu_custom_call.1}
  #allocation0 [shape = 'u32[]', space=smem, size = 0x4, offset = 0x4, fixed_abs, tag = 'smem constant byte address 0x4 - core index']
  #allocation1 [shape = 'u32[144,128]{1,0:T(1,128)}', space=vmem, size = 0x12000, scoped, tag = 'internal scratch']
  %s0 = inlined_call_operand.vmem [shape: f32[4,128,32], index: 0, kind: input, shape index: {}]
  %s1 = inlined_call_operand.vmem [shape: f32[1,32], index: 1, kind: input, shape index: {}]
  %s2 = inlined_call_operand.vmem [shape: f32[1,32], index: 2, kind: input, shape index: {}]
  %s3 = inlined_call_operand.vmem [shape: f32[32,96], index: 3, kind: input, shape index: {}]
  %s4 = inlined_call_operand.vmem [shape: f32[32,32], index: 4, kind: input, shape index: {}]
  %s5 = inlined_call_operand.vmem [shape: f32[1,32], index: 5, kind: input, shape index: {}]
  %s6 = inlined_call_operand.vmem [shape: f32[1,32], index: 6, kind: input, shape index: {}]
  %s7 = inlined_call_operand.vmem [shape: f32[1,32], index: 7, kind: input, shape index: {}]
  %s8 = inlined_call_operand.vmem [shape: f32[32,128], index: 8, kind: input, shape index: {}]
  %s9 = inlined_call_operand.vmem [shape: f32[1,128], index: 9, kind: input, shape index: {}]
  %s10 = inlined_call_operand.vmem [shape: f32[128,32], index: 10, kind: input, shape index: {}]
  %s11 = inlined_call_operand.vmem [shape: f32[1,32], index: 11, kind: input, shape index: {}]
  %s12 = inlined_call_operand.vmem [shape: f32[4,128,32], index: 12, kind: output, shape index: {}]
  %s13 = sld [smem:[#allocation0]]
  $region81: #{tpu_custom_call.1} parent=0
    _
  %s15 = ssub.s32 1, %s13
  %s16 = scalar_select 0, %s15, %s13
  loop: start=0, step=1, limit=4
  $region2: #{tpu_custom_call.1} parent=0 // loop_pre_header
    _
  $region3: #{tpu_custom_call.1} parent=0 // loop_header
    %s18 = sphi 0, %s22
    %p19 = scmp.ge.s32.totalorder %s18, 4
    %s28 = sphi 0, %s30
    %s31 = sphi 0, %s28
    %s32 = sphi 0, %s31
    %s48 = sphi 0, %s32
    %s52 = sphi 0, %s52
    %s54 = sphi 0, %s52
    %s55 = sphi 0, %s54
    %s69 = sphi 0, %s55
    %s73 = sphi 0, %s73
    %s75 = sphi 0, %s73
    %s76 = sphi 0, %s75
    %s90 = sphi 0, %s76
    %s94 = sphi 0, %s94
    %s96 = sphi 0, %s94
    %s97 = sphi 0, %s96
    %s111 = sphi 0, %s97
    %s115 = sphi 0, %s115
    %s117 = sphi 0, %s115
    %s118 = sphi 0, %s117
    %s132 = sphi 0, %s118
    %s136 = sphi 0, %s136
    %s138 = sphi 0, %s136
    %s139 = sphi 0, %s138
    %s153 = sphi 0, %s139
    %s157 = sphi 0, %s157
    %s159 = sphi 0, %s157
    %s160 = sphi 0, %s159
    %s174 = sphi 0, %s160
    %s178 = sphi 0, %s178
    %s180 = sphi 0, %s178
    %s181 = sphi 0, %s180
    %s195 = sphi 0, %s181
    %s199 = sphi 0, %s199
    %s201 = sphi 0, %s199
    %s202 = sphi 0, %s201
    %s216 = sphi 0, %s202
    %s220 = sphi 0, %s220
    %s222 = sphi 0, %s220
    %s223 = sphi 0, %s222
    %s237 = sphi 0, %s223
    %s241 = sphi 0, %s241
    %s243 = sphi 0, %s241
    %s244 = sphi 0, %s243
    %s258 = sphi 0, %s244
    %s262 = sphi 0, %s262
    %s264 = sphi 0, %s262
    %s265 = sphi 0, %s264
    %s279 = sphi 0, %s265
    %s285 = sphi 0, %s287
    %s288 = sphi 0, %s285
    %s289 = sphi 0, %s288
    %s305 = sphi 0, %s289
  $region4: #{tpu_custom_call.1} parent=0 // loop_header_branch
    %21 = sbr.rel (%p19) target = $region8
  $region5: #{tpu_custom_call.1} parent=0 // loop_body
    %s23 = ssub.s32 %s18, 1
    %s24 = ssub.s32 %s18, 2
    %s25 = sadd.s32 %s18, 1
    %s26 = ssub.s32 %s18, %s25
    %p27 = scmp.eq.s32.totalorder %s26, 0
    %s29 = sadd.s32 %s28, 1
    %s30 = scalar_select %p27, %s28, %s29
    %p33 = pneg %p27
    %p34 = scmp.eq.s32.totalorder %s18, 1
    %p35 = por %p33, %p34
    %p36 = scmp.ne.s32.totalorder %s28, %s31
    %p37 = scmp.eq.s32.totalorder %s18, 0
    %p38 = por %p36, %p37
    %p39 = scmp.ne.s32.totalorder %s28, %s31
    %p40 = scmp.eq.s32.totalorder %s23, 1
    %p41 = por %p39, %p40
    %p42 = scmp.ne.s32.totalorder %s31, %s32
    %p43 = scmp.eq.s32.totalorder %s23, 0
    %p44 = por %p42, %p43
    %p45 = scmp.ne.s32.totalorder %s31, %s32
    %p46 = scmp.eq.s32.totalorder %s24, 1
    %p47 = por %p45, %p46
    %p49 = scmp.ne.s32.totalorder %s32, %s48
    %p50 = scmp.eq.s32.totalorder %s24, 0
    %p51 = por %p49, %p50
    %s53 = sadd.s32 %s52, 1
    %p56 = scmp.eq.s32.totalorder %s18, 1
    %p57 = scmp.ne.s32.totalorder %s52, %s54
    %p58 = scmp.eq.s32.totalorder %s18, 0
    %p59 = por %p57, %p58
    %p60 = scmp.ne.s32.totalorder %s52, %s54
    %p61 = scmp.eq.s32.totalorder %s23, 1
    %p62 = por %p60, %p61
    %p63 = scmp.ne.s32.totalorder %s54, %s55
    %p64 = scmp.eq.s32.totalorder %s23, 0
    %p65 = por %p63, %p64
    %p66 = scmp.ne.s32.totalorder %s54, %s55
    %p67 = scmp.eq.s32.totalorder %s24, 1
    %p68 = por %p66, %p67
    %p70 = scmp.ne.s32.totalorder %s55, %s69
    %p71 = scmp.eq.s32.totalorder %s24, 0
    %p72 = por %p70, %p71
    %s74 = sadd.s32 %s73, 1
    %p77 = scmp.eq.s32.totalorder %s18, 1
    %p78 = scmp.ne.s32.totalorder %s73, %s75
    %p79 = scmp.eq.s32.totalorder %s18, 0
    %p80 = por %p78, %p79
    %p81 = scmp.ne.s32.totalorder %s73, %s75
    %p82 = scmp.eq.s32.totalorder %s23, 1
    %p83 = por %p81, %p82
    %p84 = scmp.ne.s32.totalorder %s75, %s76
    %p85 = scmp.eq.s32.totalorder %s23, 0
    %p86 = por %p84, %p85
    %p87 = scmp.ne.s32.totalorder %s75, %s76
    %p88 = scmp.eq.s32.totalorder %s24, 1
    %p89 = por %p87, %p88
    %p91 = scmp.ne.s32.totalorder %s76, %s90
    %p92 = scmp.eq.s32.totalorder %s24, 0
    %p93 = por %p91, %p92
    %s95 = sadd.s32 %s94, 1
    %p98 = scmp.eq.s32.totalorder %s18, 1
    %p99 = scmp.ne.s32.totalorder %s94, %s96
    %p100 = scmp.eq.s32.totalorder %s18, 0
    %p101 = por %p99, %p100
    %p102 = scmp.ne.s32.totalorder %s94, %s96
    %p103 = scmp.eq.s32.totalorder %s23, 1
    %p104 = por %p102, %p103
    %p105 = scmp.ne.s32.totalorder %s96, %s97
    %p106 = scmp.eq.s32.totalorder %s23, 0
    %p107 = por %p105, %p106
    %p108 = scmp.ne.s32.totalorder %s96, %s97
    %p109 = scmp.eq.s32.totalorder %s24, 1
    %p110 = por %p108, %p109
    %p112 = scmp.ne.s32.totalorder %s97, %s111
    %p113 = scmp.eq.s32.totalorder %s24, 0
    %p114 = por %p112, %p113
    %s116 = sadd.s32 %s115, 1
    %p119 = scmp.eq.s32.totalorder %s18, 1
    %p120 = scmp.ne.s32.totalorder %s115, %s117
    %p121 = scmp.eq.s32.totalorder %s18, 0
    %p122 = por %p120, %p121
    %p123 = scmp.ne.s32.totalorder %s115, %s117
    %p124 = scmp.eq.s32.totalorder %s23, 1
    %p125 = por %p123, %p124
    %p126 = scmp.ne.s32.totalorder %s117, %s118
    %p127 = scmp.eq.s32.totalorder %s23, 0
    %p128 = por %p126, %p127
    %p129 = scmp.ne.s32.totalorder %s117, %s118
    %p130 = scmp.eq.s32.totalorder %s24, 1
    %p131 = por %p129, %p130
    %p133 = scmp.ne.s32.totalorder %s118, %s132
    %p134 = scmp.eq.s32.totalorder %s24, 0
    %p135 = por %p133, %p134
    %s137 = sadd.s32 %s136, 1
    %p140 = scmp.eq.s32.totalorder %s18, 1
    %p141 = scmp.ne.s32.totalorder %s136, %s138
    %p142 = scmp.eq.s32.totalorder %s18, 0
    %p143 = por %p141, %p142
    %p144 = scmp.ne.s32.totalorder %s136, %s138
    %p145 = scmp.eq.s32.totalorder %s23, 1
    %p146 = por %p144, %p145
    %p147 = scmp.ne.s32.totalorder %s138, %s139
    %p148 = scmp.eq.s32.totalorder %s23, 0
    %p149 = por %p147, %p148
    %p150 = scmp.ne.s32.totalorder %s138, %s139
    %p151 = scmp.eq.s32.totalorder %s24, 1
    %p152 = por %p150, %p151
    %p154 = scmp.ne.s32.totalorder %s139, %s153
    %p155 = scmp.eq.s32.totalorder %s24, 0
    %p156 = por %p154, %p155
    %s158 = sadd.s32 %s157, 1
    %p161 = scmp.eq.s32.totalorder %s18, 1
    %p162 = scmp.ne.s32.totalorder %s157, %s159
    %p163 = scmp.eq.s32.totalorder %s18, 0
    %p164 = por %p162, %p163
    %p165 = scmp.ne.s32.totalorder %s157, %s159
    %p166 = scmp.eq.s32.totalorder %s23, 1
    %p167 = por %p165, %p166
    %p168 = scmp.ne.s32.totalorder %s159, %s160
    %p169 = scmp.eq.s32.totalorder %s23, 0
    %p170 = por %p168, %p169
    %p171 = scmp.ne.s32.totalorder %s159, %s160
    %p172 = scmp.eq.s32.totalorder %s24, 1
    %p173 = por %p171, %p172
    %p175 = scmp.ne.s32.totalorder %s160, %s174
    %p176 = scmp.eq.s32.totalorder %s24, 0
    %p177 = por %p175, %p176
    %s179 = sadd.s32 %s178, 1
    %p182 = scmp.eq.s32.totalorder %s18, 1
    %p183 = scmp.ne.s32.totalorder %s178, %s180
    %p184 = scmp.eq.s32.totalorder %s18, 0
    %p185 = por %p183, %p184
    %p186 = scmp.ne.s32.totalorder %s178, %s180
    %p187 = scmp.eq.s32.totalorder %s23, 1
    %p188 = por %p186, %p187
    %p189 = scmp.ne.s32.totalorder %s180, %s181
    %p190 = scmp.eq.s32.totalorder %s23, 0
    %p191 = por %p189, %p190
    %p192 = scmp.ne.s32.totalorder %s180, %s181
    %p193 = scmp.eq.s32.totalorder %s24, 1
    %p194 = por %p192, %p193
    %p196 = scmp.ne.s32.totalorder %s181, %s195
    %p197 = scmp.eq.s32.totalorder %s24, 0
    %p198 = por %p196, %p197
    %s200 = sadd.s32 %s199, 1
    %p203 = scmp.eq.s32.totalorder %s18, 1
    %p204 = scmp.ne.s32.totalorder %s199, %s201
    %p205 = scmp.eq.s32.totalorder %s18, 0
    %p206 = por %p204, %p205
    %p207 = scmp.ne.s32.totalorder %s199, %s201
    %p208 = scmp.eq.s32.totalorder %s23, 1
    %p209 = por %p207, %p208
    %p210 = scmp.ne.s32.totalorder %s201, %s202
    %p211 = scmp.eq.s32.totalorder %s23, 0
    %p212 = por %p210, %p211
    %p213 = scmp.ne.s32.totalorder %s201, %s202
    %p214 = scmp.eq.s32.totalorder %s24, 1
    %p215 = por %p213, %p214
    %p217 = scmp.ne.s32.totalorder %s202, %s216
    %p218 = scmp.eq.s32.totalorder %s24, 0
    %p219 = por %p217, %p218
    %s221 = sadd.s32 %s220, 1
    %p224 = scmp.eq.s32.totalorder %s18, 1
    %p225 = scmp.ne.s32.totalorder %s220, %s222
    %p226 = scmp.eq.s32.totalorder %s18, 0
    %p227 = por %p225, %p226
    %p228 = scmp.ne.s32.totalorder %s220, %s222
    %p229 = scmp.eq.s32.totalorder %s23, 1
    %p230 = por %p228, %p229
    %p231 = scmp.ne.s32.totalorder %s222, %s223
    %p232 = scmp.eq.s32.totalorder %s23, 0
    %p233 = por %p231, %p232
    %p234 = scmp.ne.s32.totalorder %s222, %s223
    %p235 = scmp.eq.s32.totalorder %s24, 1
    %p236 = por %p234, %p235
    %p238 = scmp.ne.s32.totalorder %s223, %s237
    %p239 = scmp.eq.s32.totalorder %s24, 0
    %p240 = por %p238, %p239
    %s242 = sadd.s32 %s241, 1
    %p245 = scmp.eq.s32.totalorder %s18, 1
    %p246 = scmp.ne.s32.totalorder %s241, %s243
    %p247 = scmp.eq.s32.totalorder %s18, 0
    %p248 = por %p246, %p247
    %p249 = scmp.ne.s32.totalorder %s241, %s243
    %p250 = scmp.eq.s32.totalorder %s23, 1
    %p251 = por %p249, %p250
    %p252 = scmp.ne.s32.totalorder %s243, %s244
    %p253 = scmp.eq.s32.totalorder %s23, 0
    %p254 = por %p252, %p253
    %p255 = scmp.ne.s32.totalorder %s243, %s244
    %p256 = scmp.eq.s32.totalorder %s24, 1
    %p257 = por %p255, %p256
    %p259 = scmp.ne.s32.totalorder %s244, %s258
    %p260 = scmp.eq.s32.totalorder %s24, 0
    %p261 = por %p259, %p260
    %s263 = sadd.s32 %s262, 1
    %p266 = scmp.eq.s32.totalorder %s18, 1
    %p267 = scmp.ne.s32.totalorder %s262, %s264
    %p268 = scmp.eq.s32.totalorder %s18, 0
    %p269 = por %p267, %p268
    %p270 = scmp.ne.s32.totalorder %s262, %s264
    %p271 = scmp.eq.s32.totalorder %s23, 1
    %p272 = por %p270, %p271
    %p273 = scmp.ne.s32.totalorder %s264, %s265
    %p274 = scmp.eq.s32.totalorder %s23, 0
    %p275 = por %p273, %p274
    %p276 = scmp.ne.s32.totalorder %s264, %s265
    %p277 = scmp.eq.s32.totalorder %s24, 1
    %p278 = por %p276, %p277
    %p280 = scmp.ne.s32.totalorder %s265, %s279
    %p281 = scmp.eq.s32.totalorder %s24, 0
    %p282 = por %p280, %p281
    %s283 = ssub.s32 %s18, %s25
    %p284 = scmp.eq.s32.totalorder %s283, 0
    %s286 = sadd.s32 %s285, 1
    %s287 = scalar_select %p284, %s285, %s286
    %p290 = pneg %p284
    %p291 = scmp.eq.s32.totalorder %s18, 1
    %p292 = por %p290, %p291
    %p293 = scmp.ne.s32.totalorder %s285, %s288
    %p294 = scmp.eq.s32.totalorder %s18, 0
    %p295 = por %p293, %p294
    %p296 = scmp.ne.s32.totalorder %s285, %s288
    %p297 = scmp.eq.s32.totalorder %s23, 1
    %p298 = por %p296, %p297
    %p299 = scmp.ne.s32.totalorder %s288, %s289
    %p300 = scmp.eq.s32.totalorder %s23, 0
    %p301 = por %p299, %p300
    %p302 = scmp.ne.s32.totalorder %s288, %s289
    %p303 = scmp.eq.s32.totalorder %s24, 1
    %p304 = por %p302, %p303
    %p306 = scmp.ne.s32.totalorder %s289, %s305
    %p307 = scmp.eq.s32.totalorder %s24, 0
    %p308 = por %p306, %p307
    %p309 = scmp.le.s32.totalorder 1, %s18
    %p310 = scmp.lt.s32.totalorder %s18, 3
    %p311 = pnand %p309, %p310
    %p312 = pneg %p311
    // Predicated region
    $region9: #{tpu_custom_call.1} parent=5 // pred_check
      _
    $region10: #{tpu_custom_call.1} parent=5 // pred_check_branch
      %314 = sbr.rel (%p311) target = $region12
    $region11: #{tpu_custom_call.1} parent=5 // pred_region
      %s315 = ssub.s32 %s18, 1
      // Predicated region
      $region13: #{tpu_custom_call.1} parent=11 // pred_check
        %p316 = pneg %p65
      $region14: #{tpu_custom_call.1} parent=11 // pred_check_branch
        %318 = sbr.rel (%p316) target = $region16
      $region15: #{tpu_custom_call.1} parent=11 // pred_region
        _
      $region16: #{tpu_custom_call.1} parent=11 // pred_fallthru
        _
      // Predicated region
      $region17: #{tpu_custom_call.1} parent=11 // pred_check
        %p319 = pneg %p86
      $region18: #{tpu_custom_call.1} parent=11 // pred_check_branch
        %321 = sbr.rel (%p319) target = $region20
      $region19: #{tpu_custom_call.1} parent=11 // pred_region
        _
      $region20: #{tpu_custom_call.1} parent=11 // pred_fallthru
        _
      // Predicated region
      $region21: #{tpu_custom_call.1} parent=11 // pred_check
        %p322 = pneg %p107
      $region22: #{tpu_custom_call.1} parent=11 // pred_check_branch
        %324 = sbr.rel (%p322) target = $region24
      $region23: #{tpu_custom_call.1} parent=11 // pred_region
        _
      $region24: #{tpu_custom_call.1} parent=11 // pred_fallthru
        _
      // Predicated region
      $region25: #{tpu_custom_call.1} parent=11 // pred_check
        %p325 = pneg %p128
      $region26: #{tpu_custom_call.1} parent=11 // pred_check_branch
        %327 = sbr.rel (%p325) target = $region28
      $region27: #{tpu_custom_call.1} parent=11 // pred_region
        _
      $region28: #{tpu_custom_call.1} parent=11 // pred_fallthru
        _
      // Predicated region
      $region29: #{tpu_custom_call.1} parent=11 // pred_check
        %p328 = pneg %p149
      $region30: #{tpu_custom_call.1} parent=11 // pred_check_branch
        %330 = sbr.rel (%p328) target = $region32
      $region31: #{tpu_custom_call.1} parent=11 // pred_region
        _
      $region32: #{tpu_custom_call.1} parent=11 // pred_fallthru
        _
      // Predicated region
      $region33: #{tpu_custom_call.1} parent=11 // pred_check
        %p331 = pneg %p170
      $region34: #{tpu_custom_call.1} parent=11 // pred_check_branch
        %333 = sbr.rel (%p331) target = $region36
      $region35: #{tpu_custom_call.1} parent=11 // pred_region
        _
      $region36: #{tpu_custom_call.1} parent=11 // pred_fallthru
        _
      // Predicated region
      $region37: #{tpu_custom_call.1} parent=11 // pred_check
        %p334 = pneg %p191
      $region38: #{tpu_custom_call.1} parent=11 // pred_check_branch
        %336 = sbr.rel (%p334) target = $region40
      $region39: #{tpu_custom_call.1} parent=11 // pred_region
        _
      $region40: #{tpu_custom_call.1} parent=11 // pred_fallthru
        _
      // Predicated region
      $region41: #{tpu_custom_call.1} parent=11 // pred_check
        %p337 = pneg %p212
      $region42: #{tpu_custom_call.1} parent=11 // pred_check_branch
        %339 = sbr.rel (%p337) target = $region44
      $region43: #{tpu_custom_call.1} parent=11 // pred_region
        _
      $region44: #{tpu_custom_call.1} parent=11 // pred_fallthru
        _
      // Predicated region
      $region45: #{tpu_custom_call.1} parent=11 // pred_check
        %p340 = pneg %p233
      $region46: #{tpu_custom_call.1} parent=11 // pred_check_branch
        %342 = sbr.rel (%p340) target = $region48
      $region47: #{tpu_custom_call.1} parent=11 // pred_region
        _
      $region48: #{tpu_custom_call.1} parent=11 // pred_fallthru
        _
      // Predicated region
      $region49: #{tpu_custom_call.1} parent=11 // pred_check
        %p343 = pneg %p254
      $region50: #{tpu_custom_call.1} parent=11 // pred_check_branch
        %345 = sbr.rel (%p343) target = $region52
      $region51: #{tpu_custom_call.1} parent=11 // pred_region
        _
      $region52: #{tpu_custom_call.1} parent=11 // pred_fallthru
        _
      // Predicated region
      $region53: #{tpu_custom_call.1} parent=11 // pred_check
        %p346 = pneg %p275
      $region54: #{tpu_custom_call.1} parent=11 // pred_check_branch
        %348 = sbr.rel (%p346) target = $region56
      $region55: #{tpu_custom_call.1} parent=11 // pred_region
        _
      $region56: #{tpu_custom_call.1} parent=11 // pred_fallthru
        _
    $region12: #{tpu_custom_call.1} parent=5 // pred_fallthru
      _
    %p349 = scmp.lt.s32.totalorder %s18, 2
    // Predicated region
    $region57: #{tpu_custom_call.1} parent=5 // pred_check
      %p350 = pneg %p349
    $region58: #{tpu_custom_call.1} parent=5 // pred_check_branch
      %352 = sbr.rel (%p350) target = $region60
    $region59: #{tpu_custom_call.1} parent=5 // pred_region
      // Predicated region
      $region61: #{tpu_custom_call.1} parent=59 // pred_check
        %p353 = pneg %p38
      $region62: #{tpu_custom_call.1} parent=59 // pred_check_branch
        %355 = sbr.rel (%p353) target = $region64
      $region63: #{tpu_custom_call.1} parent=59 // pred_region
        %s356 = smul.u32 2, %s18
        %p357 = scmp.lt.s32.totalorder %s356, 3
        %s358 = scalar_select %p357, %s356, 3
        %s359 = smul.addr %s358, 16
        %s360 = smul.addr %s359, 8
        %s361 = scalar_lea.vmem %s0, %s360
        %s362 = smul.u32 2, %s18
      $region64: #{tpu_custom_call.1} parent=59 // pred_fallthru
        _
    $region60: #{tpu_custom_call.1} parent=5 // pred_fallthru
      _
    %p363 = scmp.le.s32.totalorder 1, %s18
    %p364 = scmp.lt.s32.totalorder %s18, 3
    %p365 = pnand %p363, %p364
    %p366 = pneg %p365
    // Predicated region
    $region65: #{tpu_custom_call.1} parent=5 // pred_check
      _
    $region66: #{tpu_custom_call.1} parent=5 // pred_check_branch
      %368 = sbr.rel (%p365) target = $region68
    $region67: #{tpu_custom_call.1} parent=5 // pred_region
      %s369 = ssub.s32 %s18, 1
      %s370 = smul.u32 2, %s23
      %p371 = scmp.lt.s32.totalorder %s370, 3
      %s372 = scalar_select %p371, %s370, 3
      %s373 = smul.addr %s372, 16
      %s374 = smul.addr %s373, 8
      %s375 = scalar_lea.vmem %s0, %s374
      %p376 = pneg %p44
      %p377 = pneg %p41
      %p378 = pneg %p65
      %p379 = pneg %p62
      %p380 = pneg %p86
      %p381 = pneg %p83
      %p382 = pneg %p107
      %p383 = pneg %p104
      %p384 = pneg %p128
      %p385 = pneg %p125
      %p386 = pneg %p149
      %p387 = pneg %p146
      %p388 = pneg %p170
      %p389 = pneg %p167
      %p390 = pneg %p191
      %p391 = pneg %p188
      %p392 = pneg %p212
      %p393 = pneg %p209
      %p394 = pneg %p233
      %p395 = pneg %p230
      %p396 = pneg %p254
      %p397 = pneg %p251
      %p398 = pneg %p275
      %p399 = pneg %p272
      %p400 = pneg %p301
      %p401 = pneg %p298
      %s402 = smul.u32 2, %s23
      %p403 = scmp.lt.s32.totalorder %s402, 3
      %s404 = scalar_select %p403, %s402, 3
      %s405 = smul.addr %s404, 16
      %s406 = smul.addr %s405, 8
      %s407 = scalar_lea.vmem %s12, %s406
      %s408 = smul.u32 2, %s23
      %p409 = scmp.lt.s32.totalorder %s408, 3
      %s410 = scalar_select %p409, %s408, 3
      %s411 = smul.addr %s410, 16
      %s412 = smul.addr %s411, 8
      %s413 = scalar_lea.vmem %s0, %s412
      %s414 = smul.u32 2, %s23
      %s415 = smul.u32 2, %s23
      %p416 = scmp.lt.s32.totalorder %s415, 3
      %s417 = scalar_select %p416, %s415, 3
      %s418 = smul.addr %s417, 16
      %s419 = smul.addr %s418, 8
      %s420 = scalar_lea.vmem %s12, %s419
      %s421 = smul.u32 2, %s23
      %v422 = vld [vmem:[%s413] sm:$0xff]
      %v423 = vld [vmem:[%s413 + $0x8] sm:$0xff]
      %v424 = vld [vmem:[%s413 + $0x10] sm:$0xff]
      %v425 = vld [vmem:[%s413 + $0x18] sm:$0xff]
      %v426 = vld [vmem:[%s413 + $0x20] sm:$0xff]
      %v427 = vld [vmem:[%s413 + $0x28] sm:$0xff]
      %v428 = vld [vmem:[%s413 + $0x30] sm:$0xff]
      %v429 = vld [vmem:[%s413 + $0x38] sm:$0xff]
      %v430 = vld [vmem:[%s413 + $0x40] sm:$0xff]
      %v431 = vld [vmem:[%s413 + $0x48] sm:$0xff]
      %v432 = vld [vmem:[%s413 + $0x50] sm:$0xff]
      %v433 = vld [vmem:[%s413 + $0x58] sm:$0xff]
      %v434 = vld [vmem:[%s413 + $0x60] sm:$0xff]
      %v435 = vld [vmem:[%s413 + $0x68] sm:$0xff]
      %v436 = vld [vmem:[%s413 + $0x70] sm:$0xff]
      %v437 = vld [vmem:[%s413 + $0x78] sm:$0xff]
      %v438 = vld [vmem:[%s413 + $0x80] sm:$0xff]
      %v439 = vld [vmem:[%s413 + $0x88] sm:$0xff]
      %v440 = vld [vmem:[%s413 + $0x90] sm:$0xff]
      %v441 = vld [vmem:[%s413 + $0x98] sm:$0xff]
      %v442 = vld [vmem:[%s413 + $0xa0] sm:$0xff]
      %v443 = vld [vmem:[%s413 + $0xa8] sm:$0xff]
      %v444 = vld [vmem:[%s413 + $0xb0] sm:$0xff]
      %v445 = vld [vmem:[%s413 + $0xb8] sm:$0xff]
      %v446 = vld [vmem:[%s413 + $0xc0] sm:$0xff]
      %v447 = vld [vmem:[%s413 + $0xc8] sm:$0xff]
      %v448 = vld [vmem:[%s413 + $0xd0] sm:$0xff]
      %v449 = vld [vmem:[%s413 + $0xd8] sm:$0xff]
      %v450 = vld [vmem:[%s413 + $0xe0] sm:$0xff]
      %v451 = vld [vmem:[%s413 + $0xe8] sm:$0xff]
      %v452 = vld [vmem:[%s413 + $0xf0] sm:$0xff]
      %v453 = vld [vmem:[%s413 + $0xf8] sm:$0xff]
      %v454 = vld [vmem:[%s1] sm:$0x1]
      %v455 = vld [vmem:[%s2] sm:$0x1]
      %vm456 = vcmask 261120
      %v457 = vsel %vm456, %v422, 0.0
      %458 = vadd.xlane.f32.xlu0 %v457
      %v459 = vpop.xlane.xlu0 %458
      %v460 = vsel %vm456, %v424, 0.0
      %461 = vadd.xlane.f32.xlu0 %v460
      %v462 = vpop.xlane.xlu0 %461
      %v463 = vsel %vm456, %v426, 0.0
      %464 = vadd.xlane.f32.xlu0 %v463
      %v465 = vpop.xlane.xlu0 %464
      %v466 = vsel %vm456, %v428, 0.0
      %467 = vadd.xlane.f32.xlu0 %v466
      %v468 = vpop.xlane.xlu0 %467
      %v469 = vsel %vm456, %v430, 0.0
      %470 = vadd.xlane.f32.xlu0 %v469
      %v471 = vpop.xlane.xlu0 %470
      %v472 = vsel %vm456, %v432, 0.0
      %473 = vadd.xlane.f32.xlu0 %v472
      %v474 = vpop.xlane.xlu0 %473
      %v475 = vsel %vm456, %v434, 0.0
      %476 = vadd.xlane.f32.xlu0 %v475
      %v477 = vpop.xlane.xlu0 %476
      %v478 = vsel %vm456, %v436, 0.0
      %479 = vadd.xlane.f32.xlu0 %v478
      %v480 = vpop.xlane.xlu0 %479
      %v481 = vsel %vm456, %v438, 0.0
      %482 = vadd.xlane.f32.xlu0 %v481
      %v483 = vpop.xlane.xlu0 %482
      %v484 = vsel %vm456, %v440, 0.0
      %485 = vadd.xlane.f32.xlu0 %v484
      %v486 = vpop.xlane.xlu0 %485
      %v487 = vsel %vm456, %v442, 0.0
      %488 = vadd.xlane.f32.xlu0 %v487
      %v489 = vpop.xlane.xlu0 %488
      %v490 = vsel %vm456, %v444, 0.0
      %491 = vadd.xlane.f32.xlu0 %v490
      %v492 = vpop.xlane.xlu0 %491
      %v493 = vsel %vm456, %v446, 0.0
      %494 = vadd.xlane.f32.xlu0 %v493
      %v495 = vpop.xlane.xlu0 %494
      %v496 = vsel %vm456, %v448, 0.0
      %497 = vadd.xlane.f32.xlu0 %v496
      %v498 = vpop.xlane.xlu0 %497
      %v499 = vsel %vm456, %v450, 0.0
      %500 = vadd.xlane.f32.xlu0 %v499
      %v501 = vpop.xlane.xlu0 %500
      %v502 = vsel %vm456, %v452, 0.0
      %503 = vadd.xlane.f32.xlu0 %v502
      %v504 = vpop.xlane.xlu0 %503
      %v505 = vsel %vm456, %v423, 0.0
      %506 = vadd.xlane.f32.xlu0 %v505
      %v507 = vpop.xlane.xlu0 %506
      %v508 = vsel %vm456, %v425, 0.0
      %509 = vadd.xlane.f32.xlu0 %v508
      %v510 = vpop.xlane.xlu0 %509
      %v511 = vsel %vm456, %v427, 0.0
      %512 = vadd.xlane.f32.xlu0 %v511
      %v513 = vpop.xlane.xlu0 %512
      %v514 = vsel %vm456, %v429, 0.0
      %515 = vadd.xlane.f32.xlu0 %v514
      %v516 = vpop.xlane.xlu0 %515
      %v517 = vsel %vm456, %v431, 0.0
      %518 = vadd.xlane.f32.xlu0 %v517
      %v519 = vpop.xlane.xlu0 %518
      %v520 = vsel %vm456, %v433, 0.0
      %521 = vadd.xlane.f32.xlu0 %v520
      %v522 = vpop.xlane.xlu0 %521
      %v523 = vsel %vm456, %v435, 0.0
      %524 = vadd.xlane.f32.xlu0 %v523
      %v525 = vpop.xlane.xlu0 %524
      %v526 = vsel %vm456, %v437, 0.0
      %527 = vadd.xlane.f32.xlu0 %v526
      %v528 = vpop.xlane.xlu0 %527
      %v529 = vsel %vm456, %v439, 0.0
      %530 = vadd.xlane.f32.xlu0 %v529
      %v531 = vpop.xlane.xlu0 %530
      %v532 = vsel %vm456, %v441, 0.0
      %533 = vadd.xlane.f32.xlu0 %v532
      %v534 = vpop.xlane.xlu0 %533
      %v535 = vsel %vm456, %v443, 0.0
      %536 = vadd.xlane.f32.xlu0 %v535
      %v537 = vpop.xlane.xlu0 %536
      %v538 = vsel %vm456, %v445, 0.0
      %539 = vadd.xlane.f32.xlu0 %v538
      %v540 = vpop.xlane.xlu0 %539
      %v541 = vsel %vm456, %v447, 0.0
      %542 = vadd.xlane.f32.xlu0 %v541
      %v543 = vpop.xlane.xlu0 %542
      %v544 = vsel %vm456, %v449, 0.0
      %545 = vadd.xlane.f32.xlu0 %v544
      %v546 = vpop.xlane.xlu0 %545
      %v547 = vsel %vm456, %v451, 0.0
      %548 = vadd.xlane.f32.xlu0 %v547
      %v549 = vpop.xlane.xlu0 %548
      %v550 = vsel %vm456, %v453, 0.0
      %551 = vadd.xlane.f32.xlu0 %v550
      %v552 = vpop.xlane.xlu0 %551
      %v553 = vrcp.pop 32.0
      %v554 = vmul.f32 %v459, %v553
      %v555 = vmul.f32 %v462, %v553
      %v556 = vmul.f32 %v465, %v553
      %v557 = vmul.f32 %v468, %v553
      %v558 = vmul.f32 %v471, %v553
      %v559 = vmul.f32 %v474, %v553
      %v560 = vmul.f32 %v477, %v553
      %v561 = vmul.f32 %v480, %v553
      %v562 = vmul.f32 %v483, %v553
      %v563 = vmul.f32 %v486, %v553
      %v564 = vmul.f32 %v489, %v553
      %v565 = vmul.f32 %v492, %v553
      %v566 = vmul.f32 %v495, %v553
      %v567 = vmul.f32 %v498, %v553
      %v568 = vmul.f32 %v501, %v553
      %v569 = vmul.f32 %v504, %v553
      %v570 = vmul.f32 %v507, %v553
      %v571 = vmul.f32 %v510, %v553
      %v572 = vmul.f32 %v513, %v553
      %v573 = vmul.f32 %v516, %v553
      %v574 = vmul.f32 %v519, %v553
      %v575 = vmul.f32 %v522, %v553
      %v576 = vmul.f32 %v525, %v553
      %v577 = vmul.f32 %v528, %v553
      %v578 = vmul.f32 %v531, %v553
      %v579 = vmul.f32 %v534, %v553
      %v580 = vmul.f32 %v537, %v553
      %v581 = vmul.f32 %v540, %v553
      %v582 = vmul.f32 %v543, %v553
      %v583 = vmul.f32 %v546, %v553
      %v584 = vmul.f32 %v549, %v553
      %v585 = vmul.f32 %v552, %v553
      %v586 = vsub.f32 %v422, %v554
      %v587 = vsub.f32 %v424, %v555
      %v588 = vsub.f32 %v426, %v556
      %v589 = vsub.f32 %v428, %v557
      %v590 = vsub.f32 %v430, %v558
      %v591 = vsub.f32 %v432, %v559
      %v592 = vsub.f32 %v434, %v560
      %v593 = vsub.f32 %v436, %v561
      %v594 = vsub.f32 %v438, %v562
      %v595 = vsub.f32 %v440, %v563
      %v596 = vsub.f32 %v442, %v564
      %v597 = vsub.f32 %v444, %v565
      %v598 = vsub.f32 %v446, %v566
      %v599 = vsub.f32 %v448, %v567
      %v600 = vsub.f32 %v450, %v568
      %v601 = vsub.f32 %v452, %v569
      %v602 = vsub.f32 %v423, %v570
      %v603 = vsub.f32 %v425, %v571
      %v604 = vsub.f32 %v427, %v572
      %v605 = vsub.f32 %v429, %v573
      %v606 = vsub.f32 %v431, %v574
      %v607 = vsub.f32 %v433, %v575
      %v608 = vsub.f32 %v435, %v576
      %v609 = vsub.f32 %v437, %v577
      %v610 = vsub.f32 %v439, %v578
      %v611 = vsub.f32 %v441, %v579
      %v612 = vsub.f32 %v443, %v580
      %v613 = vsub.f32 %v445, %v581
      %v614 = vsub.f32 %v447, %v582
      %v615 = vsub.f32 %v449, %v583
      %v616 = vsub.f32 %v451, %v584
      %v617 = vsub.f32 %v453, %v585
      %v618 = vmul.f32 %v586, %v586
      %v619 = vmul.f32 %v587, %v587
      %v620 = vmul.f32 %v588, %v588
      %v621 = vmul.f32 %v589, %v589
      %v622 = vmul.f32 %v590, %v590
      %v623 = vmul.f32 %v591, %v591
      %v624 = vmul.f32 %v592, %v592
      %v625 = vmul.f32 %v593, %v593
      %v626 = vmul.f32 %v594, %v594
      %v627 = vmul.f32 %v595, %v595
      %v628 = vmul.f32 %v596, %v596
      %v629 = vmul.f32 %v597, %v597
      %v630 = vmul.f32 %v598, %v598
      %v631 = vmul.f32 %v599, %v599
      %v632 = vmul.f32 %v600, %v600
      %v633 = vmul.f32 %v601, %v601
      %v634 = vmul.f32 %v602, %v602
      %v635 = vmul.f32 %v603, %v603
      %v636 = vmul.f32 %v604, %v604
      %v637 = vmul.f32 %v605, %v605
      %v638 = vmul.f32 %v606, %v606
      %v639 = vmul.f32 %v607, %v607
      %v640 = vmul.f32 %v608, %v608
      %v641 = vmul.f32 %v609, %v609
      %v642 = vmul.f32 %v610, %v610
      %v643 = vmul.f32 %v611, %v611
      %v644 = vmul.f32 %v612, %v612
      %v645 = vmul.f32 %v613, %v613
      %v646 = vmul.f32 %v614, %v614
      %v647 = vmul.f32 %v615, %v615
      %v648 = vmul.f32 %v616, %v616
      %v649 = vmul.f32 %v617, %v617
      %v650 = vsel %vm456, %v618, 0.0
      %651 = vadd.xlane.f32.xlu0 %v650
      %v652 = vpop.xlane.xlu0 %651
      %v653 = vsel %vm456, %v619, 0.0
      %654 = vadd.xlane.f32.xlu0 %v653
      %v655 = vpop.xlane.xlu0 %654
      %v656 = vsel %vm456, %v620, 0.0
      %657 = vadd.xlane.f32.xlu0 %v656
      %v658 = vpop.xlane.xlu0 %657
      %v659 = vsel %vm456, %v621, 0.0
      %660 = vadd.xlane.f32.xlu0 %v659
      %v661 = vpop.xlane.xlu0 %660
      %v662 = vsel %vm456, %v622, 0.0
      %663 = vadd.xlane.f32.xlu0 %v662
      %v664 = vpop.xlane.xlu0 %663
      %v665 = vsel %vm456, %v623, 0.0
      %666 = vadd.xlane.f32.xlu0 %v665
      %v667 = vpop.xlane.xlu0 %666
      %v668 = vsel %vm456, %v624, 0.0
      %669 = vadd.xlane.f32.xlu0 %v668
      %v670 = vpop.xlane.xlu0 %669
      %v671 = vsel %vm456, %v625, 0.0
      %672 = vadd.xlane.f32.xlu0 %v671
      %v673 = vpop.xlane.xlu0 %672
      %v674 = vsel %vm456, %v626, 0.0
      %675 = vadd.xlane.f32.xlu0 %v674
      %v676 = vpop.xlane.xlu0 %675
      %v677 = vsel %vm456, %v627, 0.0
      %678 = vadd.xlane.f32.xlu0 %v677
      %v679 = vpop.xlane.xlu0 %678
      %v680 = vsel %vm456, %v628, 0.0
      %681 = vadd.xlane.f32.xlu0 %v680
      %v682 = vpop.xlane.xlu0 %681
      %v683 = vsel %vm456, %v629, 0.0
      %684 = vadd.xlane.f32.xlu0 %v683
      %v685 = vpop.xlane.xlu0 %684
      %v686 = vsel %vm456, %v630, 0.0
      %687 = vadd.xlane.f32.xlu0 %v686
      %v688 = vpop.xlane.xlu0 %687
      %v689 = vsel %vm456, %v631, 0.0
      %690 = vadd.xlane.f32.xlu0 %v689
      %v691 = vpop.xlane.xlu0 %690
      %v692 = vsel %vm456, %v632, 0.0
      %693 = vadd.xlane.f32.xlu0 %v692
      %v694 = vpop.xlane.xlu0 %693
      %v695 = vsel %vm456, %v633, 0.0
      %696 = vadd.xlane.f32.xlu0 %v695
      %v697 = vpop.xlane.xlu0 %696
      %v698 = vsel %vm456, %v634, 0.0
      %699 = vadd.xlane.f32.xlu0 %v698
      %v700 = vpop.xlane.xlu0 %699
      %v701 = vsel %vm456, %v635, 0.0
      %702 = vadd.xlane.f32.xlu0 %v701
      %v703 = vpop.xlane.xlu0 %702
      %v704 = vsel %vm456, %v636, 0.0
      %705 = vadd.xlane.f32.xlu0 %v704
      %v706 = vpop.xlane.xlu0 %705
      %v707 = vsel %vm456, %v637, 0.0
      %708 = vadd.xlane.f32.xlu0 %v707
      %v709 = vpop.xlane.xlu0 %708
      %v710 = vsel %vm456, %v638, 0.0
      %711 = vadd.xlane.f32.xlu0 %v710
      %v712 = vpop.xlane.xlu0 %711
      %v713 = vsel %vm456, %v639, 0.0
      %714 = vadd.xlane.f32.xlu0 %v713
      %v715 = vpop.xlane.xlu0 %714
      %v716 = vsel %vm456, %v640, 0.0
      %717 = vadd.xlane.f32.xlu0 %v716
      %v718 = vpop.xlane.xlu0 %717
      %v719 = vsel %vm456, %v641, 0.0
      %720 = vadd.xlane.f32.xlu0 %v719
      %v721 = vpop.xlane.xlu0 %720
      %v722 = vsel %vm456, %v642, 0.0
      %723 = vadd.xlane.f32.xlu0 %v722
      %v724 = vpop.xlane.xlu0 %723
      %v725 = vsel %vm456, %v643, 0.0
      %726 = vadd.xlane.f32.xlu0 %v725
      %v727 = vpop.xlane.xlu0 %726
      %v728 = vsel %vm456, %v644, 0.0
      %729 = vadd.xlane.f32.xlu0 %v728
      %v730 = vpop.xlane.xlu0 %729
      %v731 = vsel %vm456, %v645, 0.0
      %732 = vadd.xlane.f32.xlu0 %v731
      %v733 = vpop.xlane.xlu0 %732
      %v734 = vsel %vm456, %v646, 0.0
      %735 = vadd.xlane.f32.xlu0 %v734
      %v736 = vpop.xlane.xlu0 %735
      %v737 = vsel %vm456, %v647, 0.0
      %738 = vadd.xlane.f32.xlu0 %v737
      %v739 = vpop.xlane.xlu0 %738
      %v740 = vsel %vm456, %v648, 0.0
      %741 = vadd.xlane.f32.xlu0 %v740
      %v742 = vpop.xlane.xlu0 %741
      %v743 = vsel %vm456, %v649, 0.0
      %744 = vadd.xlane.f32.xlu0 %v743
      %v745 = vpop.xlane.xlu0 %744
      %v746 = vmul.f32 %v652, %v553
      %v747 = vmul.f32 %v655, %v553
      %v748 = vmul.f32 %v658, %v553
      %v749 = vmul.f32 %v661, %v553
      %v750 = vmul.f32 %v664, %v553
      %v751 = vmul.f32 %v667, %v553
      %v752 = vmul.f32 %v670, %v553
      %v753 = vmul.f32 %v673, %v553
      %v754 = vmul.f32 %v676, %v553
      %v755 = vmul.f32 %v679, %v553
      %v756 = vmul.f32 %v682, %v553
      %v757 = vmul.f32 %v685, %v553
      %v758 = vmul.f32 %v688, %v553
      %v759 = vmul.f32 %v691, %v553
      %v760 = vmul.f32 %v694, %v553
      %v761 = vmul.f32 %v697, %v553
      %v762 = vmul.f32 %v700, %v553
      %v763 = vmul.f32 %v703, %v553
      %v764 = vmul.f32 %v706, %v553
      %v765 = vmul.f32 %v709, %v553
      %v766 = vmul.f32 %v712, %v553
      %v767 = vmul.f32 %v715, %v553
      %v768 = vmul.f32 %v718, %v553
      %v769 = vmul.f32 %v721, %v553
      %v770 = vmul.f32 %v724, %v553
      %v771 = vmul.f32 %v727, %v553
      %v772 = vmul.f32 %v730, %v553
      %v773 = vmul.f32 %v733, %v553
      %v774 = vmul.f32 %v736, %v553
      %v775 = vmul.f32 %v739, %v553
      %v776 = vmul.f32 %v742, %v553
      %v777 = vmul.f32 %v745, %v553
      %v778 = vadd.f32 %v746, 1e-05
      %v779 = vadd.f32 %v747, 1e-05
      %v780 = vadd.f32 %v748, 1e-05
      %v781 = vadd.f32 %v749, 1e-05
      %v782 = vadd.f32 %v750, 1e-05
      %v783 = vadd.f32 %v751, 1e-05
      %v784 = vadd.f32 %v752, 1e-05
      %v785 = vadd.f32 %v753, 1e-05
      %v786 = vadd.f32 %v754, 1e-05
      %v787 = vadd.f32 %v755, 1e-05
      %v788 = vadd.f32 %v756, 1e-05
      %v789 = vadd.f32 %v757, 1e-05
      %v790 = vadd.f32 %v758, 1e-05
      %v791 = vadd.f32 %v759, 1e-05
      %v792 = vadd.f32 %v760, 1e-05
      %v793 = vadd.f32 %v761, 1e-05
      %v794 = vadd.f32 %v762, 1e-05
      %v795 = vadd.f32 %v763, 1e-05
      %v796 = vadd.f32 %v764, 1e-05
      %v797 = vadd.f32 %v765, 1e-05
      %v798 = vadd.f32 %v766, 1e-05
      %v799 = vadd.f32 %v767, 1e-05
      %v800 = vadd.f32 %v768, 1e-05
      %v801 = vadd.f32 %v769, 1e-05
      %v802 = vadd.f32 %v770, 1e-05
      %v803 = vadd.f32 %v771, 1e-05
      %v804 = vadd.f32 %v772, 1e-05
      %v805 = vadd.f32 %v773, 1e-05
      %v806 = vadd.f32 %v774, 1e-05
      %v807 = vadd.f32 %v775, 1e-05
      %v808 = vadd.f32 %v776, 1e-05
      %v809 = vadd.f32 %v777, 1e-05
      %v810 = vrsqrt.pop %v778
      %v811 = vrsqrt.pop %v779
      %v812 = vrsqrt.pop %v780
      %v813 = vrsqrt.pop %v781
      %v814 = vrsqrt.pop %v782
      %v815 = vrsqrt.pop %v783
      %v816 = vrsqrt.pop %v784
      %v817 = vrsqrt.pop %v785
      %v818 = vrsqrt.pop %v786
      %v819 = vrsqrt.pop %v787
      %v820 = vrsqrt.pop %v788
      %v821 = vrsqrt.pop %v789
      %v822 = vrsqrt.pop %v790
      %v823 = vrsqrt.pop %v791
      %v824 = vrsqrt.pop %v792
      %v825 = vrsqrt.pop %v793
      %v826 = vrsqrt.pop %v794
      %v827 = vrsqrt.pop %v795
      %v828 = vrsqrt.pop %v796
      %v829 = vrsqrt.pop %v797
      %v830 = vrsqrt.pop %v798
      %v831 = vrsqrt.pop %v799
      %v832 = vrsqrt.pop %v800
      %v833 = vrsqrt.pop %v801
      %v834 = vrsqrt.pop %v802
      %v835 = vrsqrt.pop %v803
      %v836 = vrsqrt.pop %v804
      %v837 = vrsqrt.pop %v805
      %v838 = vrsqrt.pop %v806
      %v839 = vrsqrt.pop %v807
      %v840 = vrsqrt.pop %v808
      %v841 = vrsqrt.pop %v809
      %v842 = vmul.f32 %v586, %v810
      %v843 = vmul.f32 %v587, %v811
      %v844 = vmul.f32 %v588, %v812
      %v845 = vmul.f32 %v589, %v813
      %v846 = vmul.f32 %v590, %v814
      %v847 = vmul.f32 %v591, %v815
      %v848 = vmul.f32 %v592, %v816
      %v849 = vmul.f32 %v593, %v817
      %v850 = vmul.f32 %v594, %v818
      %v851 = vmul.f32 %v595, %v819
      %v852 = vmul.f32 %v596, %v820
      %v853 = vmul.f32 %v597, %v821
      %v854 = vmul.f32 %v598, %v822
      %v855 = vmul.f32 %v599, %v823
      %v856 = vmul.f32 %v600, %v824
      %v857 = vmul.f32 %v601, %v825
      %v858 = vmul.f32 %v602, %v826
      %v859 = vmul.f32 %v603, %v827
      %v860 = vmul.f32 %v604, %v828
      %v861 = vmul.f32 %v605, %v829
      %v862 = vmul.f32 %v606, %v830
      %v863 = vmul.f32 %v607, %v831
      %v864 = vmul.f32 %v608, %v832
      %v865 = vmul.f32 %v609, %v833
      %v866 = vmul.f32 %v610, %v834
      %v867 = vmul.f32 %v611, %v835
      %v868 = vmul.f32 %v612, %v836
      %v869 = vmul.f32 %v613, %v837
      %v870 = vmul.f32 %v614, %v838
      %v871 = vmul.f32 %v615, %v839
      %v872 = vmul.f32 %v616, %v840
      %v873 = vmul.f32 %v617, %v841
      %v875 = vlaneseq
      %v876 = vshrl.u32 %v875, 7
      %v877 = vsub.s32 0, %v876
      %v878 = vrot.slane %v454, %v877
      %v880 = vmul.f32 %v842, %v878
      %v881 = vmul.f32 %v843, %v878
      %v882 = vmul.f32 %v844, %v878
      %v883 = vmul.f32 %v845, %v878
      %v884 = vmul.f32 %v846, %v878
      %v885 = vmul.f32 %v847, %v878
      %v886 = vmul.f32 %v848, %v878
      %v887 = vmul.f32 %v849, %v878
      %v888 = vmul.f32 %v850, %v878
      %v889 = vmul.f32 %v851, %v878
      %v890 = vmul.f32 %v852, %v878
      %v891 = vmul.f32 %v853, %v878
      %v892 = vmul.f32 %v854, %v878
      %v893 = vmul.f32 %v855, %v878
      %v894 = vmul.f32 %v856, %v878
      %v895 = vmul.f32 %v857, %v878
      %v896 = vmul.f32 %v858, %v878
      %v897 = vmul.f32 %v859, %v878
      %v898 = vmul.f32 %v860, %v878
      %v899 = vmul.f32 %v861, %v878
      %v900 = vmul.f32 %v862, %v878
      %v901 = vmul.f32 %v863, %v878
      %v902 = vmul.f32 %v864, %v878
      %v903 = vmul.f32 %v865, %v878
      %v904 = vmul.f32 %v866, %v878
      %v905 = vmul.f32 %v867, %v878
      %v906 = vmul.f32 %v868, %v878
      %v907 = vmul.f32 %v869, %v878
      %v908 = vmul.f32 %v870, %v878
      %v909 = vmul.f32 %v871, %v878
      %v910 = vmul.f32 %v872, %v878
      %v911 = vmul.f32 %v873, %v878
      %v913 = vlaneseq
      %v914 = vshrl.u32 %v913, 7
      %v915 = vsub.s32 0, %v914
      %v916 = vrot.slane %v455, %v915
      %v918 = vadd.f32 %v880, %v916
      %v919 = vadd.f32 %v881, %v916
      %v920 = vadd.f32 %v882, %v916
      %v921 = vadd.f32 %v883, %v916
      %v922 = vadd.f32 %v884, %v916
      %v923 = vadd.f32 %v885, %v916
      %v924 = vadd.f32 %v886, %v916
      %v925 = vadd.f32 %v887, %v916
      %v926 = vadd.f32 %v888, %v916
      %v927 = vadd.f32 %v889, %v916
      %v928 = vadd.f32 %v890, %v916
      %v929 = vadd.f32 %v891, %v916
      %v930 = vadd.f32 %v892, %v916
      %v931 = vadd.f32 %v893, %v916
      %v932 = vadd.f32 %v894, %v916
      %v933 = vadd.f32 %v895, %v916
      %v934 = vadd.f32 %v896, %v916
      %v935 = vadd.f32 %v897, %v916
      %v936 = vadd.f32 %v898, %v916
      %v937 = vadd.f32 %v899, %v916
      %v938 = vadd.f32 %v900, %v916
      %v939 = vadd.f32 %v901, %v916
      %v940 = vadd.f32 %v902, %v916
      %v941 = vadd.f32 %v903, %v916
      %v942 = vadd.f32 %v904, %v916
      %v943 = vadd.f32 %v905, %v916
      %v944 = vadd.f32 %v906, %v916
      %v945 = vadd.f32 %v907, %v916
      %v946 = vadd.f32 %v908, %v916
      %v947 = vadd.f32 %v909, %v916
      %v948 = vadd.f32 %v910, %v916
      %v949 = vadd.f32 %v911, %v916
      %v950 = vld [vmem:[%s3] sm:$0xff]
      %v951 = vld [vmem:[%s3 + $0x8] sm:$0xff]
      %v952 = vld [vmem:[%s3 + $0x10] sm:$0xff]
      %v953 = vld [vmem:[%s3 + $0x18] sm:$0xff]
      %v955 = vsel %vm456, %v918, 0
      %v958 = vsel %vm456, %v919, 0
      %v961 = vsel %vm456, %v920, 0
      %v964 = vsel %vm456, %v921, 0
      %v967 = vsel %vm456, %v922, 0
      %v970 = vsel %vm456, %v923, 0
      %v973 = vsel %vm456, %v924, 0
      %v976 = vsel %vm456, %v925, 0
      %v979 = vsel %vm456, %v926, 0
      %v982 = vsel %vm456, %v927, 0
      %v985 = vsel %vm456, %v928, 0
      %v988 = vsel %vm456, %v929, 0
      %v991 = vsel %vm456, %v930, 0
      %v994 = vsel %vm456, %v931, 0
      %v997 = vsel %vm456, %v932, 0
      %v1000 = vsel %vm456, %v933, 0
      %v1003 = vsel %vm456, %v934, 0
      %v1006 = vsel %vm456, %v935, 0
      %v1009 = vsel %vm456, %v936, 0
      %v1012 = vsel %vm456, %v937, 0
      %v1015 = vsel %vm456, %v938, 0
      %v1018 = vsel %vm456, %v939, 0
      %v1021 = vsel %vm456, %v940, 0
      %v1024 = vsel %vm456, %v941, 0
      %v1027 = vsel %vm456, %v942, 0
      %v1030 = vsel %vm456, %v943, 0
      %v1033 = vsel %vm456, %v944, 0
      %v1036 = vsel %vm456, %v945, 0
      %v1039 = vsel %vm456, %v946, 0
      %v1042 = vsel %vm456, %v947, 0
      %v1045 = vsel %vm456, %v948, 0
      %v1048 = vsel %vm456, %v949, 0
      %1050 = vmatprep.subr.mxu0 0.0
      %1051 = vmatpush1.msra.mxu0 %v950
      %1052 = vmatprep.subr.mxu0 0.0
      %1053 = vmatpush1.msra.mxu0 %v951
      %1054 = vmatprep.subr.mxu0 0.0
      %1055 = vmatpush1.msra.mxu0 %v952
      %1056 = vmatprep.subr.mxu0 0.0
      %1057 = vmatpush1.msra.mxu0 %v953
      %1058 = vmatprep.subr.mxu0 0.0
      %1059 = vmatpush1.msra.mxu0 0.0
      %1060 = vmatprep.subr.mxu0 0.0
      %1061 = vmatpush1.msra.mxu0 0.0
      %1062 = vmatprep.subr.mxu0 0.0
      %1063 = vmatpush1.msra.mxu0 0.0
      %1064 = vmatprep.subr.mxu0 0.0
      %1065 = vmatpush1.msra.mxu0 0.0
      %1066 = vmatprep.subr.mxu0 0.0
      %1067 = vmatpush1.msra.mxu0 0.0
      %1068 = vmatprep.subr.mxu0 0.0
      %1069 = vmatpush1.msra.mxu0 0.0
      %1070 = vmatprep.subr.mxu0 0.0
      %1071 = vmatpush1.msra.mxu0 0.0
      %1072 = vmatprep.subr.mxu0 0.0
      %1073 = vmatpush1.msra.mxu0 0.0
      %1074 = vmatprep.subr.mxu0 0.0
      %1075 = vmatpush1.msra.mxu0 0.0
      %1076 = vmatprep.subr.mxu0 0.0
      %1077 = vmatpush1.msra.mxu0 0.0
      %1078 = vmatprep.subr.mxu0 0.0
      %1079 = vmatpush1.msra.mxu0 0.0
      %1080 = vmatprep.subr.mxu0 0.0
      %1081 = vmatpush1.msra.mxu0 0.0
      %1082 = vmatprep.subr.mxu0 0.0
      %1083 = vmatpush1.msra.mxu0 0.0
      %1084 = vmatprep.subr.mxu0 0.0
      %1085 = vmatpush1.msra.mxu0 0.0
      %1086 = vmatprep.subr.mxu0 0.0
      %1087 = vmatpush1.msra.mxu0 0.0
      %1088 = vmatprep.subr.mxu0 0.0
      %1089 = vmatpush1.msra.mxu0 0.0
      %1090 = vmatprep.subr.mxu0 0.0
      %1091 = vmatpush1.msra.mxu0 0.0
      %1092 = vmatprep.subr.mxu0 0.0
      %1093 = vmatpush1.msra.mxu0 0.0
      %1094 = vmatprep.subr.mxu0 0.0
      %1095 = vmatpush1.msra.mxu0 0.0
      %1096 = vmatprep.subr.mxu0 0.0
      %1097 = vmatpush1.msra.mxu0 0.0
      %1098 = vmatprep.subr.mxu0 0.0
      %1099 = vmatpush1.msra.mxu0 0.0
      %1100 = vmatprep.subr.mxu0 0.0
      %1101 = vmatpush1.msra.mxu0 0.0
      %1102 = vmatprep.subr.mxu0 0.0
      %1103 = vmatpush1.msra.mxu0 0.0
      %1104 = vmatprep.subr.mxu0 0.0
      %1105 = vmatpush1.msra.mxu0 0.0
      %1106 = vmatprep.subr.mxu0 0.0
      %1107 = vmatpush1.msra.mxu0 0.0
      %1108 = vmatprep.subr.mxu0 0.0
      %1109 = vmatpush1.msra.mxu0 0.0
      %1110 = vmatprep.subr.mxu0 0.0
      %1111 = vmatpush1.msra.mxu0 0.0
      %1112 = vmatprep.subr.mxu0 0.0
      %1113 = vmatpush1.msra.mxu0 0.0
      %1114 = vmatprep.mubr.f32.mxu0 0.0
      %1115 = vmatmul.mubr.f32.gmra.mrb[0].mxu0 %v955
      %v1116 = vpop.f32.mrb[0].mxu0
      %v1117 = vadd.f32 0.0, %v1116
      %v1118 = vpop.f32.mrb[0].mxu0
      %1119 = vmatprep.mubr.f32.mxu0 0.0
      %1120 = vmatmul.mubr.f32.gmra.mrb[0].mxu0 %v958
      %v1121 = vpop.f32.mrb[0].mxu0
      %v1122 = vadd.f32 0.0, %v1121
      %v1123 = vpop.f32.mrb[0].mxu0
      %1124 = vmatprep.mubr.f32.mxu0 0.0
      %1125 = vmatmul.mubr.f32.gmra.mrb[0].mxu0 %v961
      %v1126 = vpop.f32.mrb[0].mxu0
      %v1127 = vadd.f32 0.0, %v1126
      %v1128 = vpop.f32.mrb[0].mxu0
      %1129 = vmatprep.mubr.f32.mxu0 0.0
      %1130 = vmatmul.mubr.f32.gmra.mrb[0].mxu0 %v964
      %v1131 = vpop.f32.mrb[0].mxu0
      %v1132 = vadd.f32 0.0, %v1131
      %v1133 = vpop.f32.mrb[0].mxu0
      %1134 = vmatprep.mubr.f32.mxu0 0.0
      %1135 = vmatmul.mubr.f32.gmra.mrb[0].mxu0 %v967
      %v1136 = vpop.f32.mrb[0].mxu0
      %v1137 = vadd.f32 0.0, %v1136
      %v1138 = vpop.f32.mrb[0].mxu0
      %1139 = vmatprep.mubr.f32.mxu0 0.0
      %1140 = vmatmul.mubr.f32.gmra.mrb[0].mxu0 %v970
      %v1141 = vpop.f32.mrb[0].mxu0
      %v1142 = vadd.f32 0.0, %v1141
      %v1143 = vpop.f32.mrb[0].mxu0
      %1144 = vmatprep.mubr.f32.mxu0 0.0
      %1145 = vmatmul.mubr.f32.gmra.mrb[0].mxu0 %v973
      %v1146 = vpop.f32.mrb[0].mxu0
      %v1147 = vadd.f32 0.0, %v1146
      %v1148 = vpop.f32.mrb[0].mxu0
      %1149 = vmatprep.mubr.f32.mxu0 0.0
      %1150 = vmatmul.mubr.f32.gmra.mrb[0].mxu0 %v976
      %v1151 = vpop.f32.mrb[0].mxu0
      %v1152 = vadd.f32 0.0, %v1151
      %v1153 = vpop.f32.mrb[0].mxu0
      %1154 = vmatprep.mubr.f32.mxu0 0.0
      %1155 = vmatmul.mubr.f32.gmra.mrb[0].mxu0 %v979
      %v1156 = vpop.f32.mrb[0].mxu0
      %v1157 = vadd.f32 0.0, %v1156
      %v1158 = vpop.f32.mrb[0].mxu0
      %1159 = vmatprep.mubr.f32.mxu0 0.0
      %1160 = vmatmul.mubr.f32.gmra.mrb[0].mxu0 %v982
      %v1161 = vpop.f32.mrb[0].mxu0
      %v1162 = vadd.f32 0.0, %v1161
      %v1163 = vpop.f32.mrb[0].mxu0
      %1164 = vmatprep.mubr.f32.mxu0 0.0
      %1165 = vmatmul.mubr.f32.gmra.mrb[0].mxu0 %v985
      %v1166 = vpop.f32.mrb[0].mxu0
      %v1167 = vadd.f32 0.0, %v1166
      %v1168 = vpop.f32.mrb[0].mxu0
      %1169 = vmatprep.mubr.f32.mxu0 0.0
      %1170 = vmatmul.mubr.f32.gmra.mrb[0].mxu0 %v988
      %v1171 = vpop.f32.mrb[0].mxu0
      %v1172 = vadd.f32 0.0, %v1171
      %v1173 = vpop.f32.mrb[0].mxu0
      %1174 = vmatprep.mubr.f32.mxu0 0.0
      %1175 = vmatmul.mubr.f32.gmra.mrb[0].mxu0 %v991
      %v1176 = vpop.f32.mrb[0].mxu0
      %v1177 = vadd.f32 0.0, %v1176
      %v1178 = vpop.f32.mrb[0].mxu0
      %1179 = vmatprep.mubr.f32.mxu0 0.0
      %1180 = vmatmul.mubr.f32.gmra.mrb[0].mxu0 %v994
      %v1181 = vpop.f32.mrb[0].mxu0
      %v1182 = vadd.f32 0.0, %v1181
      %v1183 = vpop.f32.mrb[0].mxu0
      %1184 = vmatprep.mubr.f32.mxu0 0.0
      %1185 = vmatmul.mubr.f32.gmra.mrb[0].mxu0 %v997
      %v1186 = vpop.f32.mrb[0].mxu0
      %v1187 = vadd.f32 0.0, %v1186
      %v1188 = vpop.f32.mrb[0].mxu0
      %1189 = vmatprep.mubr.f32.mxu0 0.0
      %1190 = vmatmul.mubr.f32.gmra.mrb[0].mxu0 %v1000
      %v1191 = vpop.f32.mrb[0].mxu0
      %v1192 = vadd.f32 0.0, %v1191
      %v1193 = vpop.f32.mrb[0].mxu0
      %1194 = vmatprep.mubr.f32.mxu0 0.0
      %1195 = vmatmul.mubr.f32.gmra.mrb[0].mxu0 %v1003
      %v1196 = vpop.f32.mrb[0].mxu0
      %v1197 = vadd.f32 0.0, %v1196
      %v1198 = vpop.f32.mrb[0].mxu0
      %1199 = vmatprep.mubr.f32.mxu0 0.0
      %1200 = vmatmul.mubr.f32.gmra.mrb[0].mxu0 %v1006
      %v1201 = vpop.f32.mrb[0].mxu0
      %v1202 = vadd.f32 0.0, %v1201
      %v1203 = vpop.f32.mrb[0].mxu0
      %1204 = vmatprep.mubr.f32.mxu0 0.0
      %1205 = vmatmul.mubr.f32.gmra.mrb[0].mxu0 %v1009
      %v1206 = vpop.f32.mrb[0].mxu0
      %v1207 = vadd.f32 0.0, %v1206
      %v1208 = vpop.f32.mrb[0].mxu0
      %1209 = vmatprep.mubr.f32.mxu0 0.0
      %1210 = vmatmul.mubr.f32.gmra.mrb[0].mxu0 %v1012
      %v1211 = vpop.f32.mrb[0].mxu0
      %v1212 = vadd.f32 0.0, %v1211
      %v1213 = vpop.f32.mrb[0].mxu0
      %1214 = vmatprep.mubr.f32.mxu0 0.0
      %1215 = vmatmul.mubr.f32.gmra.mrb[0].mxu0 %v1015
      %v1216 = vpop.f32.mrb[0].mxu0
      %v1217 = vadd.f32 0.0, %v1216
      %v1218 = vpop.f32.mrb[0].mxu0
      %1219 = vmatprep.mubr.f32.mxu0 0.0
      %1220 = vmatmul.mubr.f32.gmra.mrb[0].mxu0 %v1018
      %v1221 = vpop.f32.mrb[0].mxu0
      %v1222 = vadd.f32 0.0, %v1221
      %v1223 = vpop.f32.mrb[0].mxu0
      %1224 = vmatprep.mubr.f32.mxu0 0.0
      %1225 = vmatmul.mubr.f32.gmra.mrb[0].mxu0 %v1021
      %v1226 = vpop.f32.mrb[0].mxu0
      %v1227 = vadd.f32 0.0, %v1226
      %v1228 = vpop.f32.mrb[0].mxu0
      %1229 = vmatprep.mubr.f32.mxu0 0.0
      %1230 = vmatmul.mubr.f32.gmra.mrb[0].mxu0 %v1024
      %v1231 = vpop.f32.mrb[0].mxu0
      %v1232 = vadd.f32 0.0, %v1231
      %v1233 = vpop.f32.mrb[0].mxu0
      %1234 = vmatprep.mubr.f32.mxu0 0.0
      %1235 = vmatmul.mubr.f32.gmra.mrb[0].mxu0 %v1027
      %v1236 = vpop.f32.mrb[0].mxu0
      %v1237 = vadd.f32 0.0, %v1236
      %v1238 = vpop.f32.mrb[0].mxu0
      %1239 = vmatprep.mubr.f32.mxu0 0.0
      %1240 = vmatmul.mubr.f32.gmra.mrb[0].mxu0 %v1030
      %v1241 = vpop.f32.mrb[0].mxu0
      %v1242 = vadd.f32 0.0, %v1241
      %v1243 = vpop.f32.mrb[0].mxu0
      %1244 = vmatprep.mubr.f32.mxu0 0.0
      %1245 = vmatmul.mubr.f32.gmra.mrb[0].mxu0 %v1033
      %v1246 = vpop.f32.mrb[0].mxu0
      %v1247 = vadd.f32 0.0, %v1246
      %v1248 = vpop.f32.mrb[0].mxu0
      %1249 = vmatprep.mubr.f32.mxu0 0.0
      %1250 = vmatmul.mubr.f32.gmra.mrb[0].mxu0 %v1036
      %v1251 = vpop.f32.mrb[0].mxu0
      %v1252 = vadd.f32 0.0, %v1251
      %v1253 = vpop.f32.mrb[0].mxu0
      %1254 = vmatprep.mubr.f32.mxu0 0.0
      %1255 = vmatmul.mubr.f32.gmra.mrb[0].mxu0 %v1039
      %v1256 = vpop.f32.mrb[0].mxu0
      %v1257 = vadd.f32 0.0, %v1256
      %v1258 = vpop.f32.mrb[0].mxu0
      %1259 = vmatprep.mubr.f32.mxu0 0.0
      %1260 = vmatmul.mubr.f32.gmra.mrb[0].mxu0 %v1042
      %v1261 = vpop.f32.mrb[0].mxu0
      %v1262 = vadd.f32 0.0, %v1261
      %v1263 = vpop.f32.mrb[0].mxu0
      %1264 = vmatprep.mubr.f32.mxu0 0.0
      %1265 = vmatmul.mubr.f32.gmra.mrb[0].mxu0 %v1045
      %v1266 = vpop.f32.mrb[0].mxu0
      %v1267 = vadd.f32 0.0, %v1266
      %v1268 = vpop.f32.mrb[0].mxu0
      %1269 = vmatprep.mubr.f32.mxu0 0.0
      %1270 = vmatmul.mubr.f32.gmra.mrb[0].mxu0 %v1048
      %v1271 = vpop.f32.mrb[0].mxu0
      %v1272 = vadd.f32 0.0, %v1271
      %v1273 = vpop.f32.mrb[0].mxu0
      %1274 = vdwg.mxu0
      %1307 = vrot.lane.b32.xlu0 %v1117, 120
      %v1308 = vpop.permute.xlu0 %1307
      %1309 = vrot.lane.b32.xlu0 %v1122, 120
      %v1310 = vpop.permute.xlu0 %1309
      %1311 = vrot.lane.b32.xlu0 %v1127, 120
      %v1312 = vpop.permute.xlu0 %1311
      %1313 = vrot.lane.b32.xlu0 %v1132, 120
      %v1314 = vpop.permute.xlu0 %1313
      %1315 = vrot.lane.b32.xlu0 %v1137, 120
      %v1316 = vpop.permute.xlu0 %1315
      %1317 = vrot.lane.b32.xlu0 %v1142, 120
      %v1318 = vpop.permute.xlu0 %1317
      %1319 = vrot.lane.b32.xlu0 %v1147, 120
      %v1320 = vpop.permute.xlu0 %1319
      %1321 = vrot.lane.b32.xlu0 %v1152, 120
      %v1322 = vpop.permute.xlu0 %1321
      %1323 = vrot.lane.b32.xlu0 %v1157, 120
      %v1324 = vpop.permute.xlu0 %1323
      %1325 = vrot.lane.b32.xlu0 %v1162, 120
      %v1326 = vpop.permute.xlu0 %1325
      %1327 = vrot.lane.b32.xlu0 %v1167, 120
      %v1328 = vpop.permute.xlu0 %1327
      %1329 = vrot.lane.b32.xlu0 %v1172, 120
      %v1330 = vpop.permute.xlu0 %1329
      %1331 = vrot.lane.b32.xlu0 %v1177, 120
      %v1332 = vpop.permute.xlu0 %1331
      %1333 = vrot.lane.b32.xlu0 %v1182, 120
      %v1334 = vpop.permute.xlu0 %1333
      %1335 = vrot.lane.b32.xlu0 %v1187, 120
      %v1336 = vpop.permute.xlu0 %1335
      %1337 = vrot.lane.b32.xlu0 %v1192, 120
      %v1338 = vpop.permute.xlu0 %1337
      %1339 = vrot.lane.b32.xlu0 %v1197, 120
      %v1340 = vpop.permute.xlu0 %1339
      %1341 = vrot.lane.b32.xlu0 %v1202, 120
      %v1342 = vpop.permute.xlu0 %1341
      %1343 = vrot.lane.b32.xlu0 %v1207, 120
      %v1344 = vpop.permute.xlu0 %1343
      %1345 = vrot.lane.b32.xlu0 %v1212, 120
      %v1346 = vpop.permute.xlu0 %1345
      %1347 = vrot.lane.b32.xlu0 %v1217, 120
      %v1348 = vpop.permute.xlu0 %1347
      %1349 = vrot.lane.b32.xlu0 %v1222, 120
      %v1350 = vpop.permute.xlu0 %1349
      %1351 = vrot.lane.b32.xlu0 %v1227, 120
      %v1352 = vpop.permute.xlu0 %1351
      %1353 = vrot.lane.b32.xlu0 %v1232, 120
      %v1354 = vpop.permute.xlu0 %1353
      %1355 = vrot.lane.b32.xlu0 %v1237, 120
      %v1356 = vpop.permute.xlu0 %1355
      %1357 = vrot.lane.b32.xlu0 %v1242, 120
      %v1358 = vpop.permute.xlu0 %1357
      %1359 = vrot.lane.b32.xlu0 %v1247, 120
      %v1360 = vpop.permute.xlu0 %1359
      %1361 = vrot.lane.b32.xlu0 %v1252, 120
      %v1362 = vpop.permute.xlu0 %1361
      %1363 = vrot.lane.b32.xlu0 %v1257, 120
      %v1364 = vpop.permute.xlu0 %1363
      %1365 = vrot.lane.b32.xlu0 %v1262, 120
      %v1366 = vpop.permute.xlu0 %1365
      %1367 = vrot.lane.b32.xlu0 %v1267, 120
      %v1368 = vpop.permute.xlu0 %1367
      %1369 = vrot.lane.b32.xlu0 %v1272, 120
      %v1370 = vpop.permute.xlu0 %1369
      %1371 = vrot.lane.b32.xlu0 %v1117, 112
      %v1372 = vpop.permute.xlu0 %1371
      %1373 = vrot.lane.b32.xlu0 %v1122, 112
      %v1374 = vpop.permute.xlu0 %1373
      %1375 = vrot.lane.b32.xlu0 %v1127, 112
      %v1376 = vpop.permute.xlu0 %1375
      %1377 = vrot.lane.b32.xlu0 %v1132, 112
      %v1378 = vpop.permute.xlu0 %1377
      %1379 = vrot.lane.b32.xlu0 %v1137, 112
      %v1380 = vpop.permute.xlu0 %1379
      %1381 = vrot.lane.b32.xlu0 %v1142, 112
      %v1382 = vpop.permute.xlu0 %1381
      %1383 = vrot.lane.b32.xlu0 %v1147, 112
      %v1384 = vpop.permute.xlu0 %1383
      %1385 = vrot.lane.b32.xlu0 %v1152, 112
      %v1386 = vpop.permute.xlu0 %1385
      %1387 = vrot.lane.b32.xlu0 %v1157, 112
      %v1388 = vpop.permute.xlu0 %1387
      %1389 = vrot.lane.b32.xlu0 %v1162, 112
      %v1390 = vpop.permute.xlu0 %1389
      %1391 = vrot.lane.b32.xlu0 %v1167, 112
      %v1392 = vpop.permute.xlu0 %1391
      %1393 = vrot.lane.b32.xlu0 %v1172, 112
      %v1394 = vpop.permute.xlu0 %1393
      %1395 = vrot.lane.b32.xlu0 %v1177, 112
      %v1396 = vpop.permute.xlu0 %1395
      %1397 = vrot.lane.b32.xlu0 %v1182, 112
      %v1398 = vpop.permute.xlu0 %1397
      %1399 = vrot.lane.b32.xlu0 %v1187, 112
      %v1400 = vpop.permute.xlu0 %1399
      %1401 = vrot.lane.b32.xlu0 %v1192, 112
      %v1402 = vpop.permute.xlu0 %1401
      %1403 = vrot.lane.b32.xlu0 %v1197, 112
      %v1404 = vpop.permute.xlu0 %1403
      %1405 = vrot.lane.b32.xlu0 %v1202, 112
      %v1406 = vpop.permute.xlu0 %1405
      %1407 = vrot.lane.b32.xlu0 %v1207, 112
      %v1408 = vpop.permute.xlu0 %1407
      %1409 = vrot.lane.b32.xlu0 %v1212, 112
      %v1410 = vpop.permute.xlu0 %1409
      %1411 = vrot.lane.b32.xlu0 %v1217, 112
      %v1412 = vpop.permute.xlu0 %1411
      %1413 = vrot.lane.b32.xlu0 %v1222, 112
      %v1414 = vpop.permute.xlu0 %1413
      %1415 = vrot.lane.b32.xlu0 %v1227, 112
      %v1416 = vpop.permute.xlu0 %1415
      %1417 = vrot.lane.b32.xlu0 %v1232, 112
      %v1418 = vpop.permute.xlu0 %1417
      %1419 = vrot.lane.b32.xlu0 %v1237, 112
      %v1420 = vpop.permute.xlu0 %1419
      %1421 = vrot.lane.b32.xlu0 %v1242, 112
      %v1422 = vpop.permute.xlu0 %1421
      %1423 = vrot.lane.b32.xlu0 %v1247, 112
      %v1424 = vpop.permute.xlu0 %1423
      %1425 = vrot.lane.b32.xlu0 %v1252, 112
      %v1426 = vpop.permute.xlu0 %1425
      %1427 = vrot.lane.b32.xlu0 %v1257, 112
      %v1428 = vpop.permute.xlu0 %1427
      %1429 = vrot.lane.b32.xlu0 %v1262, 112
      %v1430 = vpop.permute.xlu0 %1429
      %1431 = vrot.lane.b32.xlu0 %v1267, 112
      %v1432 = vpop.permute.xlu0 %1431
      %1433 = vrot.lane.b32.xlu0 %v1272, 112
      %v1434 = vpop.permute.xlu0 %1433
      %1435 = vrot.lane.b32.xlu0 %v1117, 104
      %v1436 = vpop.permute.xlu0 %1435
      %1437 = vrot.lane.b32.xlu0 %v1122, 104
      %v1438 = vpop.permute.xlu0 %1437
      %1439 = vrot.lane.b32.xlu0 %v1127, 104
      %v1440 = vpop.permute.xlu0 %1439
      %1441 = vrot.lane.b32.xlu0 %v1132, 104
      %v1442 = vpop.permute.xlu0 %1441
      %1443 = vrot.lane.b32.xlu0 %v1137, 104
      %v1444 = vpop.permute.xlu0 %1443
      %1445 = vrot.lane.b32.xlu0 %v1142, 104
      %v1446 = vpop.permute.xlu0 %1445
      %1447 = vrot.lane.b32.xlu0 %v1147, 104
      %v1448 = vpop.permute.xlu0 %1447
      %1449 = vrot.lane.b32.xlu0 %v1152, 104
      %v1450 = vpop.permute.xlu0 %1449
      %1451 = vrot.lane.b32.xlu0 %v1157, 104
      %v1452 = vpop.permute.xlu0 %1451
      %1453 = vrot.lane.b32.xlu0 %v1162, 104
      %v1454 = vpop.permute.xlu0 %1453
      %1455 = vrot.lane.b32.xlu0 %v1167, 104
      %v1456 = vpop.permute.xlu0 %1455
      %1457 = vrot.lane.b32.xlu0 %v1172, 104
      %v1458 = vpop.permute.xlu0 %1457
      %1459 = vrot.lane.b32.xlu0 %v1177, 104
      %v1460 = vpop.permute.xlu0 %1459
      %1461 = vrot.lane.b32.xlu0 %v1182, 104
      %v1462 = vpop.permute.xlu0 %1461
      %1463 = vrot.lane.b32.xlu0 %v1187, 104
      %v1464 = vpop.permute.xlu0 %1463
      %1465 = vrot.lane.b32.xlu0 %v1192, 104
      %v1466 = vpop.permute.xlu0 %1465
      %1467 = vrot.lane.b32.xlu0 %v1197, 104
      %v1468 = vpop.permute.xlu0 %1467
      %1469 = vrot.lane.b32.xlu0 %v1202, 104
      %v1470 = vpop.permute.xlu0 %1469
      %1471 = vrot.lane.b32.xlu0 %v1207, 104
      %v1472 = vpop.permute.xlu0 %1471
      %1473 = vrot.lane.b32.xlu0 %v1212, 104
      %v1474 = vpop.permute.xlu0 %1473
      %1475 = vrot.lane.b32.xlu0 %v1217, 104
      %v1476 = vpop.permute.xlu0 %1475
      %1477 = vrot.lane.b32.xlu0 %v1222, 104
      %v1478 = vpop.permute.xlu0 %1477
      %1479 = vrot.lane.b32.xlu0 %v1227, 104
      %v1480 = vpop.permute.xlu0 %1479
      %1481 = vrot.lane.b32.xlu0 %v1232, 104
      %v1482 = vpop.permute.xlu0 %1481
      %1483 = vrot.lane.b32.xlu0 %v1237, 104
      %v1484 = vpop.permute.xlu0 %1483
      %1485 = vrot.lane.b32.xlu0 %v1242, 104
      %v1486 = vpop.permute.xlu0 %1485
      %1487 = vrot.lane.b32.xlu0 %v1247, 104
      %v1488 = vpop.permute.xlu0 %1487
      %1489 = vrot.lane.b32.xlu0 %v1252, 104
      %v1490 = vpop.permute.xlu0 %1489
      %1491 = vrot.lane.b32.xlu0 %v1257, 104
      %v1492 = vpop.permute.xlu0 %1491
      %1493 = vrot.lane.b32.xlu0 %v1262, 104
      %v1494 = vpop.permute.xlu0 %1493
      %1495 = vrot.lane.b32.xlu0 %v1267, 104
      %v1496 = vpop.permute.xlu0 %1495
      %1497 = vrot.lane.b32.xlu0 %v1272, 104
      %v1498 = vpop.permute.xlu0 %1497
      %1499 = vrot.lane.b32.xlu0 %v1117, 96
      %v1500 = vpop.permute.xlu0 %1499
      %1501 = vrot.lane.b32.xlu0 %v1122, 96
      %v1502 = vpop.permute.xlu0 %1501
      %1503 = vrot.lane.b32.xlu0 %v1127, 96
      %v1504 = vpop.permute.xlu0 %1503
      %1505 = vrot.lane.b32.xlu0 %v1132, 96
      %v1506 = vpop.permute.xlu0 %1505
      %1507 = vrot.lane.b32.xlu0 %v1137, 96
      %v1508 = vpop.permute.xlu0 %1507
      %1509 = vrot.lane.b32.xlu0 %v1142, 96
      %v1510 = vpop.permute.xlu0 %1509
      %1511 = vrot.lane.b32.xlu0 %v1147, 96
      %v1512 = vpop.permute.xlu0 %1511
      %1513 = vrot.lane.b32.xlu0 %v1152, 96
      %v1514 = vpop.permute.xlu0 %1513
      %vm1515 = vcmask 64512
      %v1516 = vsel %vm1515, %v1117, 0
      %v1518 = vsel %vm1515, %v1122, 0
      %v1520 = vsel %vm1515, %v1127, 0
      %v1522 = vsel %vm1515, %v1132, 0
      %v1524 = vsel %vm1515, %v1137, 0
      %v1526 = vsel %vm1515, %v1142, 0
      %v1528 = vsel %vm1515, %v1147, 0
      %v1530 = vsel %vm1515, %v1152, 0
      %v1532 = vsel %vm1515, %v1500, 0
      %v1534 = vsel %vm1515, %v1502, 0
      %v1536 = vsel %vm1515, %v1504, 0
      %v1538 = vsel %vm1515, %v1506, 0
      %v1540 = vsel %vm1515, %v1508, 0
      %v1542 = vsel %vm1515, %v1510, 0
      %v1544 = vsel %vm1515, %v1512, 0
      %v1546 = vsel %vm1515, %v1514, 0
      %1548 = vmatprep.subr.mxu0 0.0
      %1549 = vmatpush1.xpose.msra.mxu0 %v1532
      %1550 = vmatprep.subr.mxu0 0.0
      %1551 = vmatpush1.xpose.msra.mxu0 %v1534
      %1552 = vmatprep.subr.mxu0 0.0
      %1553 = vmatpush1.xpose.msra.mxu0 %v1536
      %1554 = vmatprep.subr.mxu0 0.0
      %1555 = vmatpush1.xpose.msra.mxu0 %v1538
      %1556 = vmatprep.subr.mxu0 0.0
      %1557 = vmatpush1.xpose.msra.mxu0 %v1540
      %1558 = vmatprep.subr.mxu0 0.0
      %1559 = vmatpush1.xpose.msra.mxu0 %v1542
      %1560 = vmatprep.subr.mxu0 0.0
      %1561 = vmatpush1.xpose.msra.mxu0 %v1544
      %1562 = vmatprep.subr.mxu0 0.0
      %1563 = vmatpush1.xpose.msra.mxu0 %v1546
      %1564 = vmatprep.subr.mxu0 0.0
      %1565 = vmatpush1.xpose.msra.mxu0 0.0
      %1566 = vmatprep.subr.mxu0 0.0
      %1567 = vmatpush1.xpose.msra.mxu0 0.0
      %1568 = vmatprep.subr.mxu0 0.0
      %1569 = vmatpush1.xpose.msra.mxu0 0.0
      %1570 = vmatprep.subr.mxu0 0.0
      %1571 = vmatpush1.xpose.msra.mxu0 0.0
      %1572 = vmatprep.subr.mxu0 0.0
      %1573 = vmatpush1.xpose.msra.mxu0 0.0
      %1574 = vmatprep.subr.mxu0 0.0
      %1575 = vmatpush1.xpose.msra.mxu0 0.0
      %1576 = vmatprep.subr.mxu0 0.0
      %1577 = vmatpush1.xpose.msra.mxu0 0.0
      %1578 = vmatprep.subr.mxu0 0.0
      %1579 = vmatpush1.xpose.msra.mxu0 0.0
      %1580 = vmatprep.subr.mxu0 0.0
      %1581 = vmatpush1.xpose.msra.mxu0 0.0
      %1582 = vmatprep.subr.mxu0 0.0
      %1583 = vmatpush1.xpose.msra.mxu0 0.0
      %1584 = vmatprep.subr.mxu0 0.0
      %1585 = vmatpush1.xpose.msra.mxu0 0.0
      %1586 = vmatprep.subr.mxu0 0.0
      %1587 = vmatpush1.xpose.msra.mxu0 0.0
      %1588 = vmatprep.subr.mxu0 0.0
      %1589 = vmatpush1.xpose.msra.mxu0 0.0
      %1590 = vmatprep.subr.mxu0 0.0
      %1591 = vmatpush1.xpose.msra.mxu0 0.0
      %1592 = vmatprep.subr.mxu0 0.0
      %1593 = vmatpush1.xpose.msra.mxu0 0.0
      %1594 = vmatprep.subr.mxu0 0.0
      %1595 = vmatpush1.xpose.msra.mxu0 0.0
      %1596 = vmatprep.subr.mxu0 0.0
      %1597 = vmatpush1.xpose.msra.mxu0 0.0
      %1598 = vmatprep.subr.mxu0 0.0
      %1599 = vmatpush1.xpose.msra.mxu0 0.0
      %1600 = vmatprep.subr.mxu0 0.0
      %1601 = vmatpush1.xpose.msra.mxu0 0.0
      %1602 = vmatprep.subr.mxu0 0.0
      %1603 = vmatpush1.xpose.msra.mxu0 0.0
      %1604 = vmatprep.subr.mxu0 0.0
      %1605 = vmatpush1.xpose.msra.mxu0 0.0
      %1606 = vmatprep.subr.mxu0 0.0
      %1607 = vmatpush1.xpose.msra.mxu0 0.0
      %1608 = vmatprep.subr.mxu0 0.0
      %1609 = vmatpush1.xpose.msra.mxu0 0.0
      %1610 = vmatprep.subr.mxu0 0.0
      %1611 = vmatpush1.xpose.msra.mxu0 0.0
      %1612 = vmatprep.mubr.f32.mxu0 0.0
      %1613 = vmatmul.mubr.f32.gmra.mrb[0].mxu0 %v1516
      %v1614 = vpop.f32.mrb[0].mxu0
      %v1615 = vadd.f32 0.0, %v1614
      %v1616 = vpop.f32.mrb[0].mxu0
      %1617 = vmatprep.mubr.f32.mxu0 0.0
      %1618 = vmatmul.mubr.f32.gmra.mrb[0].mxu0 %v1518
      %v1619 = vpop.f32.mrb[0].mxu0
      %v1620 = vadd.f32 0.0, %v1619
      %v1621 = vpop.f32.mrb[0].mxu0
      %1622 = vmatprep.mubr.f32.mxu0 0.0
      %1623 = vmatmul.mubr.f32.gmra.mrb[0].mxu0 %v1520
      %v1624 = vpop.f32.mrb[0].mxu0
      %v1625 = vadd.f32 0.0, %v1624
      %v1626 = vpop.f32.mrb[0].mxu0
      %1627 = vmatprep.mubr.f32.mxu0 0.0
      %1628 = vmatmul.mubr.f32.gmra.mrb[0].mxu0 %v1522
      %v1629 = vpop.f32.mrb[0].mxu0
      %v1630 = vadd.f32 0.0, %v1629
      %v1631 = vpop.f32.mrb[0].mxu0
      %1632 = vmatprep.mubr.f32.mxu0 0.0
      %1633 = vmatmul.mubr.f32.gmra.mrb[0].mxu0 %v1524
      %v1634 = vpop.f32.mrb[0].mxu0
      %v1635 = vadd.f32 0.0, %v1634
      %v1636 = vpop.f32.mrb[0].mxu0
      %1637 = vmatprep.mubr.f32.mxu0 0.0
      %1638 = vmatmul.mubr.f32.gmra.mrb[0].mxu0 %v1526
      %v1639 = vpop.f32.mrb[0].mxu0
      %v1640 = vadd.f32 0.0, %v1639
      %v1641 = vpop.f32.mrb[0].mxu0
      %1642 = vmatprep.mubr.f32.mxu0 0.0
      %1643 = vmatmul.mubr.f32.gmra.mrb[0].mxu0 %v1528
      %v1644 = vpop.f32.mrb[0].mxu0
      %v1645 = vadd.f32 0.0, %v1644
      %v1646 = vpop.f32.mrb[0].mxu0
      %1647 = vmatprep.mubr.f32.mxu0 0.0
      %1648 = vmatmul.mubr.f32.gmra.mrb[0].mxu0 %v1530
      %v1649 = vpop.f32.mrb[0].mxu0
      %v1650 = vadd.f32 0.0, %v1649
      %v1651 = vpop.f32.mrb[0].mxu0
      %1652 = vdwg.mxu0
      %1653 = vrot.lane.b32.xlu0 %v1157, 96
      %v1654 = vpop.permute.xlu0 %1653
      %1655 = vrot.lane.b32.xlu0 %v1162, 96
      %v1656 = vpop.permute.xlu0 %1655
      %1657 = vrot.lane.b32.xlu0 %v1167, 96
      %v1658 = vpop.permute.xlu0 %1657
      %1659 = vrot.lane.b32.xlu0 %v1172, 96
      %v1660 = vpop.permute.xlu0 %1659
      %1661 = vrot.lane.b32.xlu0 %v1177, 96
      %v1662 = vpop.permute.xlu0 %1661
      %1663 = vrot.lane.b32.xlu0 %v1182, 96
      %v1664 = vpop.permute.xlu0 %1663
      %1665 = vrot.lane.b32.xlu0 %v1187, 96
      %v1666 = vpop.permute.xlu0 %1665
      %1667 = vrot.lane.b32.xlu0 %v1192, 96
      %v1668 = vpop.permute.xlu0 %1667
      %v1669 = vsel %vm1515, %v1157, 0
      %v1671 = vsel %vm1515, %v1162, 0
      %v1673 = vsel %vm1515, %v1167, 0
      %v1675 = vsel %vm1515, %v1172, 0
      %v1677 = vsel %vm1515, %v1177, 0
      %v1679 = vsel %vm1515, %v1182, 0
      %v1681 = vsel %vm1515, %v1187, 0
      %v1683 = vsel %vm1515, %v1192, 0
      %v1685 = vsel %vm1515, %v1654, 0
      %v1687 = vsel %vm1515, %v1656, 0
      %v1689 = vsel %vm1515, %v1658, 0
      %v1691 = vsel %vm1515, %v1660, 0
      %v1693 = vsel %vm1515, %v1662, 0
      %v1695 = vsel %vm1515, %v1664, 0
      %v1697 = vsel %vm1515, %v1666, 0
      %v1699 = vsel %vm1515, %v1668, 0
      %1701 = vmatprep.subr.mxu0 0.0
      %1702 = vmatpush1.xpose.msra.mxu0 %v1685
      %1703 = vmatprep.subr.mxu0 0.0
      %1704 = vmatpush1.xpose.msra.mxu0 %v1687
      %1705 = vmatprep.subr.mxu0 0.0
      %1706 = vmatpush1.xpose.msra.mxu0 %v1689
      %1707 = vmatprep.subr.mxu0 0.0
      %1708 = vmatpush1.xpose.msra.mxu0 %v1691
      %1709 = vmatprep.subr.mxu0 0.0
      %1710 = vmatpush1.xpose.msra.mxu0 %v1693
      %1711 = vmatprep.subr.mxu0 0.0
      %1712 = vmatpush1.xpose.msra.mxu0 %v1695
      %1713 = vmatprep.subr.mxu0 0.0
      %1714 = vmatpush1.xpose.msra.mxu0 %v1697
      %1715 = vmatprep.subr.mxu0 0.0
      %1716 = vmatpush1.xpose.msra.mxu0 %v1699
      %1717 = vmatprep.subr.mxu0 0.0
      %1718 = vmatpush1.xpose.msra.mxu0 0.0
      %1719 = vmatprep.subr.mxu0 0.0
      %1720 = vmatpush1.xpose.msra.mxu0 0.0
      %1721 = vmatprep.subr.mxu0 0.0
      %1722 = vmatpush1.xpose.msra.mxu0 0.0
      %1723 = vmatprep.subr.mxu0 0.0
      %1724 = vmatpush1.xpose.msra.mxu0 0.0
      %1725 = vmatprep.subr.mxu0 0.0
      %1726 = vmatpush1.xpose.msra.mxu0 0.0
      %1727 = vmatprep.subr.mxu0 0.0
      %1728 = vmatpush1.xpose.msra.mxu0 0.0
      %1729 = vmatprep.subr.mxu0 0.0
      %1730 = vmatpush1.xpose.msra.mxu0 0.0
      %1731 = vmatprep.subr.mxu0 0.0
      %1732 = vmatpush1.xpose.msra.mxu0 0.0
      %1733 = vmatprep.subr.mxu0 0.0
      %1734 = vmatpush1.xpose.msra.mxu0 0.0
      %1735 = vmatprep.subr.mxu0 0.0
      %1736 = vmatpush1.xpose.msra.mxu0 0.0
      %1737 = vmatprep.subr.mxu0 0.0
      %1738 = vmatpush1.xpose.msra.mxu0 0.0
      %1739 = vmatprep.subr.mxu0 0.0
      %1740 = vmatpush1.xpose.msra.mxu0 0.0
      %1741 = vmatprep.subr.mxu0 0.0
      %1742 = vmatpush1.xpose.msra.mxu0 0.0
      %1743 = vmatprep.subr.mxu0 0.0
      %1744 = vmatpush1.xpose.msra.mxu0 0.0
      %1745 = vmatprep.subr.mxu0 0.0
      %1746 = vmatpush1.xpose.msra.mxu0 0.0
      %1747 = vmatprep.subr.mxu0 0.0
      %1748 = vmatpush1.xpose.msra.mxu0 0.0
      %1749 = vmatprep.subr.mxu0 0.0
      %1750 = vmatpush1.xpose.msra.mxu0 0.0
      %1751 = vmatprep.subr.mxu0 0.0
      %1752 = vmatpush1.xpose.msra.mxu0 0.0
      %1753 = vmatprep.subr.mxu0 0.0
      %1754 = vmatpush1.xpose.msra.mxu0 0.0
      %1755 = vmatprep.subr.mxu0 0.0
      %1756 = vmatpush1.xpose.msra.mxu0 0.0
      %1757 = vmatprep.subr.mxu0 0.0
      %1758 = vmatpush1.xpose.msra.mxu0 0.0
      %1759 = vmatprep.subr.mxu0 0.0
      %1760 = vmatpush1.xpose.msra.mxu0 0.0
      %1761 = vmatprep.subr.mxu0 0.0
      %1762 = vmatpush1.xpose.msra.mxu0 0.0
      %1763 = vmatprep.subr.mxu0 0.0
      %1764 = vmatpush1.xpose.msra.mxu0 0.0
      %1765 = vmatprep.mubr.f32.mxu0 0.0
      %1766 = vmatmul.mubr.f32.gmra.mrb[0].mxu0 %v1669
      %v1767 = vpop.f32.mrb[0].mxu0
      %v1768 = vadd.f32 0.0, %v1767
      %v1769 = vpop.f32.mrb[0].mxu0
      %1770 = vmatprep.mubr.f32.mxu0 0.0
      %1771 = vmatmul.mubr.f32.gmra.mrb[0].mxu0 %v1671
      %v1772 = vpop.f32.mrb[0].mxu0
      %v1773 = vadd.f32 0.0, %v1772
      %v1774 = vpop.f32.mrb[0].mxu0
      %1775 = vmatprep.mubr.f32.mxu0 0.0
      %1776 = vmatmul.mubr.f32.gmra.mrb[0].mxu0 %v1673
      %v1777 = vpop.f32.mrb[0].mxu0
      %v1778 = vadd.f32 0.0, %v1777
      %v1779 = vpop.f32.mrb[0].mxu0
      %1780 = vmatprep.mubr.f32.mxu0 0.0
      %1781 = vmatmul.mubr.f32.gmra.mrb[0].mxu0 %v1675
      %v1782 = vpop.f32.mrb[0].mxu0
      %v1783 = vadd.f32 0.0, %v1782
      %v1784 = vpop.f32.mrb[0].mxu0
      %1785 = vmatprep.mubr.f32.mxu0 0.0
      %1786 = vmatmul.mubr.f32.gmra.mrb[0].mxu0 %v1677
      %v1787 = vpop.f32.mrb[0].mxu0
      %v1788 = vadd.f32 0.0, %v1787
      %v1789 = vpop.f32.mrb[0].mxu0
      %1790 = vmatprep.mubr.f32.mxu0 0.0
      %1791 = vmatmul.mubr.f32.gmra.mrb[0].mxu0 %v1679
      %v1792 = vpop.f32.mrb[0].mxu0
      %v1793 = vadd.f32 0.0, %v1792
      %v1794 = vpop.f32.mrb[0].mxu0
      %1795 = vmatprep.mubr.f32.mxu0 0.0
      %1796 = vmatmul.mubr.f32.gmra.mrb[0].mxu0 %v1681
      %v1797 = vpop.f32.mrb[0].mxu0
      %v1798 = vadd.f32 0.0, %v1797
      %v1799 = vpop.f32.mrb[0].mxu0
      %1800 = vmatprep.mubr.f32.mxu0 0.0
      %1801 = vmatmul.mubr.f32.gmra.mrb[0].mxu0 %v1683
      %v1802 = vpop.f32.mrb[0].mxu0
      %v1803 = vadd.f32 0.0, %v1802
      %v1804 = vpop.f32.mrb[0].mxu0
      %1805 = vdwg.mxu0
      %1806 = vrot.lane.b32.xlu0 %v1197, 96
      %v1807 = vpop.permute.xlu0 %1806
      %1808 = vrot.lane.b32.xlu0 %v1202, 96
      %v1809 = vpop.permute.xlu0 %1808
      %1810 = vrot.lane.b32.xlu0 %v1207, 96
      %v1811 = vpop.permute.xlu0 %1810
      %1812 = vrot.lane.b32.xlu0 %v1212, 96
      %v1813 = vpop.permute.xlu0 %1812
      %1814 = vrot.lane.b32.xlu0 %v1217, 96
      %v1815 = vpop.permute.xlu0 %1814
      %1816 = vrot.lane.b32.xlu0 %v1222, 96
      %v1817 = vpop.permute.xlu0 %1816
      %1818 = vrot.lane.b32.xlu0 %v1227, 96
      %v1819 = vpop.permute.xlu0 %1818
      %1820 = vrot.lane.b32.xlu0 %v1232, 96
      %v1821 = vpop.permute.xlu0 %1820
      %v1822 = vsel %vm1515, %v1197, 0
      %v1824 = vsel %vm1515, %v1202, 0
      %v1826 = vsel %vm1515, %v1207, 0
      %v1828 = vsel %vm1515, %v1212, 0
      %v1830 = vsel %vm1515, %v1217, 0
      %v1832 = vsel %vm1515, %v1222, 0
      %v1834 = vsel %vm1515, %v1227, 0
      %v1836 = vsel %vm1515, %v1232, 0
      %v1838 = vsel %vm1515, %v1807, 0
      %v1840 = vsel %vm1515, %v1809, 0
      %v1842 = vsel %vm1515, %v1811, 0
      %v1844 = vsel %vm1515, %v1813, 0
      %v1846 = vsel %vm1515, %v1815, 0
      %v1848 = vsel %vm1515, %v1817, 0
      %v1850 = vsel %vm1515, %v1819, 0
      %v1852 = vsel %vm1515, %v1821, 0
      %1854 = vmatprep.subr.mxu0 0.0
      %1855 = vmatpush1.xpose.msra.mxu0 %v1838
      %1856 = vmatprep.subr.mxu0 0.0
      %1857 = vmatpush1.xpose.msra.mxu0 %v1840
      %1858 = vmatprep.subr.mxu0 0.0
      %1859 = vmatpush1.xpose.msra.mxu0 %v1842
      %1860 = vmatprep.subr.mxu0 0.0
      %1861 = vmatpush1.xpose.msra.mxu0 %v1844
      %1862 = vmatprep.subr.mxu0 0.0
      %1863 = vmatpush1.xpose.msra.mxu0 %v1846
      %1864 = vmatprep.subr.mxu0 0.0
      %1865 = vmatpush1.xpose.msra.mxu0 %v1848
      %1866 = vmatprep.subr.mxu0 0.0
      %1867 = vmatpush1.xpose.msra.mxu0 %v1850
      %1868 = vmatprep.subr.mxu0 0.0
      %1869 = vmatpush1.xpose.msra.mxu0 %v1852
      %1870 = vmatprep.subr.mxu0 0.0
      %1871 = vmatpush1.xpose.msra.mxu0 0.0
      %1872 = vmatprep.subr.mxu0 0.0
      %1873 = vmatpush1.xpose.msra.mxu0 0.0
      %1874 = vmatprep.subr.mxu0 0.0
      %1875 = vmatpush1.xpose.msra.mxu0 0.0
      %1876 = vmatprep.subr.mxu0 0.0
      %1877 = vmatpush1.xpose.msra.mxu0 0.0
      %1878 = vmatprep.subr.mxu0 0.0
      %1879 = vmatpush1.xpose.msra.mxu0 0.0
      %1880 = vmatprep.subr.mxu0 0.0
      %1881 = vmatpush1.xpose.msra.mxu0 0.0
      %1882 = vmatprep.subr.mxu0 0.0
      %1883 = vmatpush1.xpose.msra.mxu0 0.0
      %1884 = vmatprep.subr.mxu0 0.0
      %1885 = vmatpush1.xpose.msra.mxu0 0.0
      %1886 = vmatprep.subr.mxu0 0.0
      %1887 = vmatpush1.xpose.msra.mxu0 0.0
      %1888 = vmatprep.subr.mxu0 0.0
      %1889 = vmatpush1.xpose.msra.mxu0 0.0
      %1890 = vmatprep.subr.mxu0 0.0
      %1891 = vmatpush1.xpose.msra.mxu0 0.0
      %1892 = vmatprep.subr.mxu0 0.0
      %1893 = vmatpush1.xpose.msra.mxu0 0.0
      %1894 = vmatprep.subr.mxu0 0.0
      %1895 = vmatpush1.xpose.msra.mxu0 0.0
      %1896 = vmatprep.subr.mxu0 0.0
      %1897 = vmatpush1.xpose.msra.mxu0 0.0
      %1898 = vmatprep.subr.mxu0 0.0
      %1899 = vmatpush1.xpose.msra.mxu0 0.0
      %1900 = vmatprep.subr.mxu0 0.0
      %1901 = vmatpush1.xpose.msra.mxu0 0.0
      %1902 = vmatprep.subr.mxu0 0.0
      %1903 = vmatpush1.xpose.msra.mxu0 0.0
      %1904 = vmatprep.subr.mxu0 0.0
      %1905 = vmatpush1.xpose.msra.mxu0 0.0
      %1906 = vmatprep.subr.mxu0 0.0
      %1907 = vmatpush1.xpose.msra.mxu0 0.0
      %1908 = vmatprep.subr.mxu0 0.0
      %1909 = vmatpush1.xpose.msra.mxu0 0.0
      %1910 = vmatprep.subr.mxu0 0.0
      %1911 = vmatpush1.xpose.msra.mxu0 0.0
      %1912 = vmatprep.subr.mxu0 0.0
      %1913 = vmatpush1.xpose.msra.mxu0 0.0
      %1914 = vmatprep.subr.mxu0 0.0
      %1915 = vmatpush1.xpose.msra.mxu0 0.0
      %1916 = vmatprep.subr.mxu0 0.0
      %1917 = vmatpush1.xpose.msra.mxu0 0.0
      %1918 = vmatprep.mubr.f32.mxu0 0.0
      %1919 = vmatmul.mubr.f32.gmra.mrb[0].mxu0 %v1822
      %v1920 = vpop.f32.mrb[0].mxu0
      %v1921 = vadd.f32 0.0, %v1920
      %v1922 = vpop.f32.mrb[0].mxu0
      %1923 = vmatprep.mubr.f32.mxu0 0.0
      %1924 = vmatmul.mubr.f32.gmra.mrb[0].mxu0 %v1824
      %v1925 = vpop.f32.mrb[0].mxu0
      %v1926 = vadd.f32 0.0, %v1925
      %v1927 = vpop.f32.mrb[0].mxu0
      %1928 = vmatprep.mubr.f32.mxu0 0.0
      %1929 = vmatmul.mubr.f32.gmra.mrb[0].mxu0 %v1826
      %v1930 = vpop.f32.mrb[0].mxu0
      %v1931 = vadd.f32 0.0, %v1930
      %v1932 = vpop.f32.mrb[0].mxu0
      %1933 = vmatprep.mubr.f32.mxu0 0.0
      %1934 = vmatmul.mubr.f32.gmra.mrb[0].mxu0 %v1828
      %v1935 = vpop.f32.mrb[0].mxu0
      %v1936 = vadd.f32 0.0, %v1935
      %v1937 = vpop.f32.mrb[0].mxu0
      %1938 = vmatprep.mubr.f32.mxu0 0.0
      %1939 = vmatmul.mubr.f32.gmra.mrb[0].mxu0 %v1830
      %v1940 = vpop.f32.mrb[0].mxu0
      %v1941 = vadd.f32 0.0, %v1940
      %v1942 = vpop.f32.mrb[0].mxu0
      %1943 = vmatprep.mubr.f32.mxu0 0.0
      %1944 = vmatmul.mubr.f32.gmra.mrb[0].mxu0 %v1832
      %v1945 = vpop.f32.mrb[0].mxu0
      %v1946 = vadd.f32 0.0, %v1945
      %v1947 = vpop.f32.mrb[0].mxu0
      %1948 = vmatprep.mubr.f32.mxu0 0.0
      %1949 = vmatmul.mubr.f32.gmra.mrb[0].mxu0 %v1834
      %v1950 = vpop.f32.mrb[0].mxu0
      %v1951 = vadd.f32 0.0, %v1950
      %v1952 = vpop.f32.mrb[0].mxu0
      %1953 = vmatprep.mubr.f32.mxu0 0.0
      %1954 = vmatmul.mubr.f32.gmra.mrb[0].mxu0 %v1836
      %v1955 = vpop.f32.mrb[0].mxu0
      %v1956 = vadd.f32 0.0, %v1955
      %v1957 = vpop.f32.mrb[0].mxu0
      %1958 = vdwg.mxu0
      %1959 = vrot.lane.b32.xlu0 %v1237, 96
      %v1960 = vpop.permute.xlu0 %1959
      %1961 = vrot.lane.b32.xlu0 %v1242, 96
      %v1962 = vpop.permute.xlu0 %1961
      %1963 = vrot.lane.b32.xlu0 %v1247, 96
      %v1964 = vpop.permute.xlu0 %1963
      %1965 = vrot.lane.b32.xlu0 %v1252, 96
      %v1966 = vpop.permute.xlu0 %1965
      %1967 = vrot.lane.b32.xlu0 %v1257, 96
      %v1968 = vpop.permute.xlu0 %1967
      %1969 = vrot.lane.b32.xlu0 %v1262, 96
      %v1970 = vpop.permute.xlu0 %1969
      %1971 = vrot.lane.b32.xlu0 %v1267, 96
      %v1972 = vpop.permute.xlu0 %1971
      %1973 = vrot.lane.b32.xlu0 %v1272, 96
      %v1974 = vpop.permute.xlu0 %1973
      %v1975 = vsel %vm1515, %v1237, 0
      %v1977 = vsel %vm1515, %v1242, 0
      %v1979 = vsel %vm1515, %v1247, 0
      %v1981 = vsel %vm1515, %v1252, 0
      %v1983 = vsel %vm1515, %v1257, 0
      %v1985 = vsel %vm1515, %v1262, 0
      %v1987 = vsel %vm1515, %v1267, 0
      %v1989 = vsel %vm1515, %v1272, 0
      %v1991 = vsel %vm1515, %v1960, 0
      %v1993 = vsel %vm1515, %v1962, 0
      %v1995 = vsel %vm1515, %v1964, 0
      %v1997 = vsel %vm1515, %v1966, 0
      %v1999 = vsel %vm1515, %v1968, 0
      %v2001 = vsel %vm1515, %v1970, 0
      %v2003 = vsel %vm1515, %v1972, 0
      %v2005 = vsel %vm1515, %v1974, 0
      %2007 = vmatprep.subr.mxu0 0.0
      %2008 = vmatpush1.xpose.msra.mxu0 %v1991
      %2009 = vmatprep.subr.mxu0 0.0
      %2010 = vmatpush1.xpose.msra.mxu0 %v1993
      %2011 = vmatprep.subr.mxu0 0.0
      %2012 = vmatpush1.xpose.msra.mxu0 %v1995
      %2013 = vmatprep.subr.mxu0 0.0
      %2014 = vmatpush1.xpose.msra.mxu0 %v1997
      %2015 = vmatprep.subr.mxu0 0.0
      %2016 = vmatpush1.xpose.msra.mxu0 %v1999
      %2017 = vmatprep.subr.mxu0 0.0
      %2018 = vmatpush1.xpose.msra.mxu0 %v2001
      %2019 = vmatprep.subr.mxu0 0.0
      %2020 = vmatpush1.xpose.msra.mxu0 %v2003
      %2021 = vmatprep.subr.mxu0 0.0
      %2022 = vmatpush1.xpose.msra.mxu0 %v2005
      %2023 = vmatprep.subr.mxu0 0.0
      %2024 = vmatpush1.xpose.msra.mxu0 0.0
      %2025 = vmatprep.subr.mxu0 0.0
      %2026 = vmatpush1.xpose.msra.mxu0 0.0
      %2027 = vmatprep.subr.mxu0 0.0
      %2028 = vmatpush1.xpose.msra.mxu0 0.0
      %2029 = vmatprep.subr.mxu0 0.0
      %2030 = vmatpush1.xpose.msra.mxu0 0.0
      %2031 = vmatprep.subr.mxu0 0.0
      %2032 = vmatpush1.xpose.msra.mxu0 0.0
      %2033 = vmatprep.subr.mxu0 0.0
      %2034 = vmatpush1.xpose.msra.mxu0 0.0
      %2035 = vmatprep.subr.mxu0 0.0
      %2036 = vmatpush1.xpose.msra.mxu0 0.0
      %2037 = vmatprep.subr.mxu0 0.0
      %2038 = vmatpush1.xpose.msra.mxu0 0.0
      %2039 = vmatprep.subr.mxu0 0.0
      %2040 = vmatpush1.xpose.msra.mxu0 0.0
      %2041 = vmatprep.subr.mxu0 0.0
      %2042 = vmatpush1.xpose.msra.mxu0 0.0
      %2043 = vmatprep.subr.mxu0 0.0
      %2044 = vmatpush1.xpose.msra.mxu0 0.0
      %2045 = vmatprep.subr.mxu0 0.0
      %2046 = vmatpush1.xpose.msra.mxu0 0.0
      %2047 = vmatprep.subr.mxu0 0.0
      %2048 = vmatpush1.xpose.msra.mxu0 0.0
      %2049 = vmatprep.subr.mxu0 0.0
      %2050 = vmatpush1.xpose.msra.mxu0 0.0
      %2051 = vmatprep.subr.mxu0 0.0
      %2052 = vmatpush1.xpose.msra.mxu0 0.0
      %2053 = vmatprep.subr.mxu0 0.0
      %2054 = vmatpush1.xpose.msra.mxu0 0.0
      %2055 = vmatprep.subr.mxu0 0.0
      %2056 = vmatpush1.xpose.msra.mxu0 0.0
      %2057 = vmatprep.subr.mxu0 0.0
      %2058 = vmatpush1.xpose.msra.mxu0 0.0
      %2059 = vmatprep.subr.mxu0 0.0
      %2060 = vmatpush1.xpose.msra.mxu0 0.0
      %2061 = vmatprep.subr.mxu0 0.0
      %2062 = vmatpush1.xpose.msra.mxu0 0.0
      %2063 = vmatprep.subr.mxu0 0.0
      %2064 = vmatpush1.xpose.msra.mxu0 0.0
      %2065 = vmatprep.subr.mxu0 0.0
      %2066 = vmatpush1.xpose.msra.mxu0 0.0
      %2067 = vmatprep.subr.mxu0 0.0
      %2068 = vmatpush1.xpose.msra.mxu0 0.0
      %2069 = vmatprep.subr.mxu0 0.0
      %2070 = vmatpush1.xpose.msra.mxu0 0.0
      %2071 = vmatprep.mubr.f32.mxu0 0.0
      %2072 = vmatmul.mubr.f32.gmra.mrb[0].mxu0 %v1975
      %v2073 = vpop.f32.mrb[0].mxu0
      %v2074 = vadd.f32 0.0, %v2073
      %v2075 = vpop.f32.mrb[0].mxu0
      %2076 = vmatprep.mubr.f32.mxu0 0.0
      %2077 = vmatmul.mubr.f32.gmra.mrb[0].mxu0 %v1977
      %v2078 = vpop.f32.mrb[0].mxu0
      %v2079 = vadd.f32 0.0, %v2078
      %v2080 = vpop.f32.mrb[0].mxu0
      %2081 = vmatprep.mubr.f32.mxu0 0.0
      %2082 = vmatmul.mubr.f32.gmra.mrb[0].mxu0 %v1979
      %v2083 = vpop.f32.mrb[0].mxu0
      %v2084 = vadd.f32 0.0, %v2083
      %v2085 = vpop.f32.mrb[0].mxu0
      %2086 = vmatprep.mubr.f32.mxu0 0.0
      %2087 = vmatmul.mubr.f32.gmra.mrb[0].mxu0 %v1981
      %v2088 = vpop.f32.mrb[0].mxu0
      %v2089 = vadd.f32 0.0, %v2088
      %v2090 = vpop.f32.mrb[0].mxu0
      %2091 = vmatprep.mubr.f32.mxu0 0.0
      %2092 = vmatmul.mubr.f32.gmra.mrb[0].mxu0 %v1983
      %v2093 = vpop.f32.mrb[0].mxu0
      %v2094 = vadd.f32 0.0, %v2093
      %v2095 = vpop.f32.mrb[0].mxu0
      %2096 = vmatprep.mubr.f32.mxu0 0.0
      %2097 = vmatmul.mubr.f32.gmra.mrb[0].mxu0 %v1985
      %v2098 = vpop.f32.mrb[0].mxu0
      %v2099 = vadd.f32 0.0, %v2098
      %v2100 = vpop.f32.mrb[0].mxu0
      %2101 = vmatprep.mubr.f32.mxu0 0.0
      %2102 = vmatmul.mubr.f32.gmra.mrb[0].mxu0 %v1987
      %v2103 = vpop.f32.mrb[0].mxu0
      %v2104 = vadd.f32 0.0, %v2103
      %v2105 = vpop.f32.mrb[0].mxu0
      %2106 = vmatprep.mubr.f32.mxu0 0.0
      %2107 = vmatmul.mubr.f32.gmra.mrb[0].mxu0 %v1989
      %v2108 = vpop.f32.mrb[0].mxu0
      %v2109 = vadd.f32 0.0, %v2108
      %v2110 = vpop.f32.mrb[0].mxu0
      %2111 = vdwg.mxu0
      %2112 = vrot.lane.b32.xlu0 %v1308, 96
      %v2113 = vpop.permute.xlu0 %2112
      %2114 = vrot.lane.b32.xlu0 %v1310, 96
      %v2115 = vpop.permute.xlu0 %2114
      %2116 = vrot.lane.b32.xlu0 %v1312, 96
      %v2117 = vpop.permute.xlu0 %2116
      %2118 = vrot.lane.b32.xlu0 %v1314, 96
      %v2119 = vpop.permute.xlu0 %2118
      %2120 = vrot.lane.b32.xlu0 %v1316, 96
      %v2121 = vpop.permute.xlu0 %2120
      %2122 = vrot.lane.b32.xlu0 %v1318, 96
      %v2123 = vpop.permute.xlu0 %2122
      %2124 = vrot.lane.b32.xlu0 %v1320, 96
      %v2125 = vpop.permute.xlu0 %2124
      %2126 = vrot.lane.b32.xlu0 %v1322, 96
      %v2127 = vpop.permute.xlu0 %2126
      %v2128 = vsel %vm1515, %v1308, 0
      %v2130 = vsel %vm1515, %v1310, 0
      %v2132 = vsel %vm1515, %v1312, 0
      %v2134 = vsel %vm1515, %v1314, 0
      %v2136 = vsel %vm1515, %v1316, 0
      %v2138 = vsel %vm1515, %v1318, 0
      %v2140 = vsel %vm1515, %v1320, 0
      %v2142 = vsel %vm1515, %v1322, 0
      %v2144 = vsel %vm1515, %v2113, 0
      %v2146 = vsel %vm1515, %v2115, 0
      %v2148 = vsel %vm1515, %v2117, 0
      %v2150 = vsel %vm1515, %v2119, 0
      %v2152 = vsel %vm1515, %v2121, 0
      %v2154 = vsel %vm1515, %v2123, 0
      %v2156 = vsel %vm1515, %v2125, 0
      %v2158 = vsel %vm1515, %v2127, 0
      %2160 = vmatprep.subr.mxu0 0.0
      %2161 = vmatpush1.xpose.msra.mxu0 %v2144
      %2162 = vmatprep.subr.mxu0 0.0
      %2163 = vmatpush1.xpose.msra.mxu0 %v2146
      %2164 = vmatprep.subr.mxu0 0.0
      %2165 = vmatpush1.xpose.msra.mxu0 %v2148
      %2166 = vmatprep.subr.mxu0 0.0
      %2167 = vmatpush1.xpose.msra.mxu0 %v2150
      %2168 = vmatprep.subr.mxu0 0.0
      %2169 = vmatpush1.xpose.msra.mxu0 %v2152
      %2170 = vmatprep.subr.mxu0 0.0
      %2171 = vmatpush1.xpose.msra.mxu0 %v2154
      %2172 = vmatprep.subr.mxu0 0.0
      %2173 = vmatpush1.xpose.msra.mxu0 %v2156
      %2174 = vmatprep.subr.mxu0 0.0
      %2175 = vmatpush1.xpose.msra.mxu0 %v2158
      %2176 = vmatprep.subr.mxu0 0.0
      %2177 = vmatpush1.xpose.msra.mxu0 0.0
      %2178 = vmatprep.subr.mxu0 0.0
      %2179 = vmatpush1.xpose.msra.mxu0 0.0
      %2180 = vmatprep.subr.mxu0 0.0
      %2181 = vmatpush1.xpose.msra.mxu0 0.0
      %2182 = vmatprep.subr.mxu0 0.0
      %2183 = vmatpush1.xpose.msra.mxu0 0.0
      %2184 = vmatprep.subr.mxu0 0.0
      %2185 = vmatpush1.xpose.msra.mxu0 0.0
      %2186 = vmatprep.subr.mxu0 0.0
      %2187 = vmatpush1.xpose.msra.mxu0 0.0
      %2188 = vmatprep.subr.mxu0 0.0
      %2189 = vmatpush1.xpose.msra.mxu0 0.0
      %2190 = vmatprep.subr.mxu0 0.0
      %2191 = vmatpush1.xpose.msra.mxu0 0.0
      %2192 = vmatprep.subr.mxu0 0.0
      %2193 = vmatpush1.xpose.msra.mxu0 0.0
      %2194 = vmatprep.subr.mxu0 0.0
      %2195 = vmatpush1.xpose.msra.mxu0 0.0
      %2196 = vmatprep.subr.mxu0 0.0
      %2197 = vmatpush1.xpose.msra.mxu0 0.0
      %2198 = vmatprep.subr.mxu0 0.0
      %2199 = vmatpush1.xpose.msra.mxu0 0.0
      %2200 = vmatprep.subr.mxu0 0.0
      %2201 = vmatpush1.xpose.msra.mxu0 0.0
      %2202 = vmatprep.subr.mxu0 0.0
      %2203 = vmatpush1.xpose.msra.mxu0 0.0
      %2204 = vmatprep.subr.mxu0 0.0
      %2205 = vmatpush1.xpose.msra.mxu0 0.0
      %2206 = vmatprep.subr.mxu0 0.0
      %2207 = vmatpush1.xpose.msra.mxu0 0.0
      %2208 = vmatprep.subr.mxu0 0.0
      %2209 = vmatpush1.xpose.msra.mxu0 0.0
      %2210 = vmatprep.subr.mxu0 0.0
      %2211 = vmatpush1.xpose.msra.mxu0 0.0
      %2212 = vmatprep.subr.mxu0 0.0
      %2213 = vmatpush1.xpose.msra.mxu0 0.0
      %2214 = vmatprep.subr.mxu0 0.0
      %2215 = vmatpush1.xpose.msra.mxu0 0.0
      %2216 = vmatprep.subr.mxu0 0.0
      %2217 = vmatpush1.xpose.msra.mxu0 0.0
      %2218 = vmatprep.subr.mxu0 0.0
      %2219 = vmatpush1.xpose.msra.mxu0 0.0
      %2220 = vmatprep.subr.mxu0 0.0
      %2221 = vmatpush1.xpose.msra.mxu0 0.0
      %2222 = vmatprep.subr.mxu0 0.0
      %2223 = vmatpush1.xpose.msra.mxu0 0.0
      %2224 = vmatprep.mubr.f32.mxu0 0.0
      %2225 = vmatmul.mubr.f32.gmra.mrb[0].mxu0 %v2128
      %v2226 = vpop.f32.mrb[0].mxu0
      %v2227 = vadd.f32 0.0, %v2226
      %v2228 = vpop.f32.mrb[0].mxu0
      %2229 = vmatprep.mubr.f32.mxu0 0.0
      %2230 = vmatmul.mubr.f32.gmra.mrb[0].mxu0 %v2130
      %v2231 = vpop.f32.mrb[0].mxu0
      %v2232 = vadd.f32 0.0, %v2231
      %v2233 = vpop.f32.mrb[0].mxu0
      %2234 = vmatprep.mubr.f32.mxu0 0.0
      %2235 = vmatmul.mubr.f32.gmra.mrb[0].mxu0 %v2132
      %v2236 = vpop.f32.mrb[0].mxu0
      %v2237 = vadd.f32 0.0, %v2236
      %v2238 = vpop.f32.mrb[0].mxu0
      %2239 = vmatprep.mubr.f32.mxu0 0.0
      %2240 = vmatmul.mubr.f32.gmra.mrb[0].mxu0 %v2134
      %v2241 = vpop.f32.mrb[0].mxu0
      %v2242 = vadd.f32 0.0, %v2241
      %v2243 = vpop.f32.mrb[0].mxu0
      %2244 = vmatprep.mubr.f32.mxu0 0.0
      %2245 = vmatmul.mubr.f32.gmra.mrb[0].mxu0 %v2136
      %v2246 = vpop.f32.mrb[0].mxu0
      %v2247 = vadd.f32 0.0, %v2246
      %v2248 = vpop.f32.mrb[0].mxu0
      %2249 = vmatprep.mubr.f32.mxu0 0.0
      %2250 = vmatmul.mubr.f32.gmra.mrb[0].mxu0 %v2138
      %v2251 = vpop.f32.mrb[0].mxu0
      %v2252 = vadd.f32 0.0, %v2251
      %v2253 = vpop.f32.mrb[0].mxu0
      %2254 = vmatprep.mubr.f32.mxu0 0.0
      %2255 = vmatmul.mubr.f32.gmra.mrb[0].mxu0 %v2140
      %v2256 = vpop.f32.mrb[0].mxu0
      %v2257 = vadd.f32 0.0, %v2256
      %v2258 = vpop.f32.mrb[0].mxu0
      %2259 = vmatprep.mubr.f32.mxu0 0.0
      %2260 = vmatmul.mubr.f32.gmra.mrb[0].mxu0 %v2142
      %v2261 = vpop.f32.mrb[0].mxu0
      %v2262 = vadd.f32 0.0, %v2261
      %v2263 = vpop.f32.mrb[0].mxu0
      %2264 = vdwg.mxu0
      %2265 = vrot.lane.b32.xlu0 %v1324, 96
      %v2266 = vpop.permute.xlu0 %2265
      %2267 = vrot.lane.b32.xlu0 %v1326, 96
      %v2268 = vpop.permute.xlu0 %2267
      %2269 = vrot.lane.b32.xlu0 %v1328, 96
      %v2270 = vpop.permute.xlu0 %2269
      %2271 = vrot.lane.b32.xlu0 %v1330, 96
      %v2272 = vpop.permute.xlu0 %2271
      %2273 = vrot.lane.b32.xlu0 %v1332, 96
      %v2274 = vpop.permute.xlu0 %2273
      %2275 = vrot.lane.b32.xlu0 %v1334, 96
      %v2276 = vpop.permute.xlu0 %2275
      %2277 = vrot.lane.b32.xlu0 %v1336, 96
      %v2278 = vpop.permute.xlu0 %2277
      %2279 = vrot.lane.b32.xlu0 %v1338, 96
      %v2280 = vpop.permute.xlu0 %2279
      %v2281 = vsel %vm1515, %v1324, 0
      %v2283 = vsel %vm1515, %v1326, 0
      %v2285 = vsel %vm1515, %v1328, 0
      %v2287 = vsel %vm1515, %v1330, 0
      %v2289 = vsel %vm1515, %v1332, 0
      %v2291 = vsel %vm1515, %v1334, 0
      %v2293 = vsel %vm1515, %v1336, 0
      %v2295 = vsel %vm1515, %v1338, 0
      %v2297 = vsel %vm1515, %v2266, 0
      %v2299 = vsel %vm1515, %v2268, 0
      %v2301 = vsel %vm1515, %v2270, 0
      %v2303 = vsel %vm1515, %v2272, 0
      %v2305 = vsel %vm1515, %v2274, 0
      %v2307 = vsel %vm1515, %v2276, 0
      %v2309 = vsel %vm1515, %v2278, 0
      %v2311 = vsel %vm1515, %v2280, 0
      %2313 = vmatprep.subr.mxu0 0.0
      %2314 = vmatpush1.xpose.msra.mxu0 %v2297
      %2315 = vmatprep.subr.mxu0 0.0
      %2316 = vmatpush1.xpose.msra.mxu0 %v2299
      %2317 = vmatprep.subr.mxu0 0.0
      %2318 = vmatpush1.xpose.msra.mxu0 %v2301
      %2319 = vmatprep.subr.mxu0 0.0
      %2320 = vmatpush1.xpose.msra.mxu0 %v2303
      %2321 = vmatprep.subr.mxu0 0.0
      %2322 = vmatpush1.xpose.msra.mxu0 %v2305
      %2323 = vmatprep.subr.mxu0 0.0
      %2324 = vmatpush1.xpose.msra.mxu0 %v2307
      %2325 = vmatprep.subr.mxu0 0.0
      %2326 = vmatpush1.xpose.msra.mxu0 %v2309
      %2327 = vmatprep.subr.mxu0 0.0
      %2328 = vmatpush1.xpose.msra.mxu0 %v2311
      %2329 = vmatprep.subr.mxu0 0.0
      %2330 = vmatpush1.xpose.msra.mxu0 0.0
      %2331 = vmatprep.subr.mxu0 0.0
      %2332 = vmatpush1.xpose.msra.mxu0 0.0
      %2333 = vmatprep.subr.mxu0 0.0
      %2334 = vmatpush1.xpose.msra.mxu0 0.0
      %2335 = vmatprep.subr.mxu0 0.0
      %2336 = vmatpush1.xpose.msra.mxu0 0.0
      %2337 = vmatprep.subr.mxu0 0.0
      %2338 = vmatpush1.xpose.msra.mxu0 0.0
      %2339 = vmatprep.subr.mxu0 0.0
      %2340 = vmatpush1.xpose.msra.mxu0 0.0
      %2341 = vmatprep.subr.mxu0 0.0
      %2342 = vmatpush1.xpose.msra.mxu0 0.0
      %2343 = vmatprep.subr.mxu0 0.0
      %2344 = vmatpush1.xpose.msra.mxu0 0.0
      %2345 = vmatprep.subr.mxu0 0.0
      %2346 = vmatpush1.xpose.msra.mxu0 0.0
      %2347 = vmatprep.subr.mxu0 0.0
      %2348 = vmatpush1.xpose.msra.mxu0 0.0
      %2349 = vmatprep.subr.mxu0 0.0
      %2350 = vmatpush1.xpose.msra.mxu0 0.0
      %2351 = vmatprep.subr.mxu0 0.0
      %2352 = vmatpush1.xpose.msra.mxu0 0.0
      %2353 = vmatprep.subr.mxu0 0.0
      %2354 = vmatpush1.xpose.msra.mxu0 0.0
      %2355 = vmatprep.subr.mxu0 0.0
      %2356 = vmatpush1.xpose.msra.mxu0 0.0
      %2357 = vmatprep.subr.mxu0 0.0
      %2358 = vmatpush1.xpose.msra.mxu0 0.0
      %2359 = vmatprep.subr.mxu0 0.0
      %2360 = vmatpush1.xpose.msra.mxu0 0.0
      %2361 = vmatprep.subr.mxu0 0.0
      %2362 = vmatpush1.xpose.msra.mxu0 0.0
      %2363 = vmatprep.subr.mxu0 0.0
      %2364 = vmatpush1.xpose.msra.mxu0 0.0
      %2365 = vmatprep.subr.mxu0 0.0
      %2366 = vmatpush1.xpose.msra.mxu0 0.0
      %2367 = vmatprep.subr.mxu0 0.0
      %2368 = vmatpush1.xpose.msra.mxu0 0.0
      %2369 = vmatprep.subr.mxu0 0.0
      %2370 = vmatpush1.xpose.msra.mxu0 0.0
      %2371 = vmatprep.subr.mxu0 0.0
      %2372 = vmatpush1.xpose.msra.mxu0 0.0
      %2373 = vmatprep.subr.mxu0 0.0
      %2374 = vmatpush1.xpose.msra.mxu0 0.0
      %2375 = vmatprep.subr.mxu0 0.0
      %2376 = vmatpush1.xpose.msra.mxu0 0.0
      %2377 = vmatprep.mubr.f32.mxu0 0.0
      %2378 = vmatmul.mubr.f32.gmra.mrb[0].mxu0 %v2281
      %v2379 = vpop.f32.mrb[0].mxu0
      %v2380 = vadd.f32 0.0, %v2379
      %v2381 = vpop.f32.mrb[0].mxu0
      %2382 = vmatprep.mubr.f32.mxu0 0.0
      %2383 = vmatmul.mubr.f32.gmra.mrb[0].mxu0 %v2283
      %v2384 = vpop.f32.mrb[0].mxu0
      %v2385 = vadd.f32 0.0, %v2384
      %v2386 = vpop.f32.mrb[0].mxu0
      %2387 = vmatprep.mubr.f32.mxu0 0.0
      %2388 = vmatmul.mubr.f32.gmra.mrb[0].mxu0 %v2285
      %v2389 = vpop.f32.mrb[0].mxu0
      %v2390 = vadd.f32 0.0, %v2389
      %v2391 = vpop.f32.mrb[0].mxu0
      %2392 = vmatprep.mubr.f32.mxu0 0.0
      %2393 = vmatmul.mubr.f32.gmra.mrb[0].mxu0 %v2287
      %v2394 = vpop.f32.mrb[0].mxu0
      %v2395 = vadd.f32 0.0, %v2394
      %v2396 = vpop.f32.mrb[0].mxu0
      %2397 = vmatprep.mubr.f32.mxu0 0.0
      %2398 = vmatmul.mubr.f32.gmra.mrb[0].mxu0 %v2289
      %v2399 = vpop.f32.mrb[0].mxu0
      %v2400 = vadd.f32 0.0, %v2399
      %v2401 = vpop.f32.mrb[0].mxu0
      %2402 = vmatprep.mubr.f32.mxu0 0.0
      %2403 = vmatmul.mubr.f32.gmra.mrb[0].mxu0 %v2291
      %v2404 = vpop.f32.mrb[0].mxu0
      %v2405 = vadd.f32 0.0, %v2404
      %v2406 = vpop.f32.mrb[0].mxu0
      %2407 = vmatprep.mubr.f32.mxu0 0.0
      %2408 = vmatmul.mubr.f32.gmra.mrb[0].mxu0 %v2293
      %v2409 = vpop.f32.mrb[0].mxu0
      %v2410 = vadd.f32 0.0, %v2409
      %v2411 = vpop.f32.mrb[0].mxu0
      %2412 = vmatprep.mubr.f32.mxu0 0.0
      %2413 = vmatmul.mubr.f32.gmra.mrb[0].mxu0 %v2295
      %v2414 = vpop.f32.mrb[0].mxu0
      %v2415 = vadd.f32 0.0, %v2414
      %v2416 = vpop.f32.mrb[0].mxu0
      %2417 = vdwg.mxu0
      %2418 = vrot.lane.b32.xlu0 %v1340, 96
      %v2419 = vpop.permute.xlu0 %2418
      %2420 = vrot.lane.b32.xlu0 %v1342, 96
      %v2421 = vpop.permute.xlu0 %2420
      %2422 = vrot.lane.b32.xlu0 %v1344, 96
      %v2423 = vpop.permute.xlu0 %2422
      %2424 = vrot.lane.b32.xlu0 %v1346, 96
      %v2425 = vpop.permute.xlu0 %2424
      %2426 = vrot.lane.b32.xlu0 %v1348, 96
      %v2427 = vpop.permute.xlu0 %2426
      %2428 = vrot.lane.b32.xlu0 %v1350, 96
      %v2429 = vpop.permute.xlu0 %2428
      %2430 = vrot.lane.b32.xlu0 %v1352, 96
      %v2431 = vpop.permute.xlu0 %2430
      %2432 = vrot.lane.b32.xlu0 %v1354, 96
      %v2433 = vpop.permute.xlu0 %2432
      %v2434 = vsel %vm1515, %v1340, 0
      %v2436 = vsel %vm1515, %v1342, 0
      %v2438 = vsel %vm1515, %v1344, 0
      %v2440 = vsel %vm1515, %v1346, 0
      %v2442 = vsel %vm1515, %v1348, 0
      %v2444 = vsel %vm1515, %v1350, 0
      %v2446 = vsel %vm1515, %v1352, 0
      %v2448 = vsel %vm1515, %v1354, 0
      %v2450 = vsel %vm1515, %v2419, 0
      %v2452 = vsel %vm1515, %v2421, 0
      %v2454 = vsel %vm1515, %v2423, 0
      %v2456 = vsel %vm1515, %v2425, 0
      %v2458 = vsel %vm1515, %v2427, 0
      %v2460 = vsel %vm1515, %v2429, 0
      %v2462 = vsel %vm1515, %v2431, 0
      %v2464 = vsel %vm1515, %v2433, 0
      %2466 = vmatprep.subr.mxu0 0.0
      %2467 = vmatpush1.xpose.msra.mxu0 %v2450
      %2468 = vmatprep.subr.mxu0 0.0
      %2469 = vmatpush1.xpose.msra.mxu0 %v2452
      %2470 = vmatprep.subr.mxu0 0.0
      %2471 = vmatpush1.xpose.msra.mxu0 %v2454
      %2472 = vmatprep.subr.mxu0 0.0
      %2473 = vmatpush1.xpose.msra.mxu0 %v2456
      %2474 = vmatprep.subr.mxu0 0.0
      %2475 = vmatpush1.xpose.msra.mxu0 %v2458
      %2476 = vmatprep.subr.mxu0 0.0
      %2477 = vmatpush1.xpose.msra.mxu0 %v2460
      %2478 = vmatprep.subr.mxu0 0.0
      %2479 = vmatpush1.xpose.msra.mxu0 %v2462
      %2480 = vmatprep.subr.mxu0 0.0
      %2481 = vmatpush1.xpose.msra.mxu0 %v2464
      %2482 = vmatprep.subr.mxu0 0.0
      %2483 = vmatpush1.xpose.msra.mxu0 0.0
      %2484 = vmatprep.subr.mxu0 0.0
      %2485 = vmatpush1.xpose.msra.mxu0 0.0
      %2486 = vmatprep.subr.mxu0 0.0
      %2487 = vmatpush1.xpose.msra.mxu0 0.0
      %2488 = vmatprep.subr.mxu0 0.0
      %2489 = vmatpush1.xpose.msra.mxu0 0.0
      %2490 = vmatprep.subr.mxu0 0.0
      %2491 = vmatpush1.xpose.msra.mxu0 0.0
      %2492 = vmatprep.subr.mxu0 0.0
      %2493 = vmatpush1.xpose.msra.mxu0 0.0
      %2494 = vmatprep.subr.mxu0 0.0
      %2495 = vmatpush1.xpose.msra.mxu0 0.0
      %2496 = vmatprep.subr.mxu0 0.0
      %2497 = vmatpush1.xpose.msra.mxu0 0.0
      %2498 = vmatprep.subr.mxu0 0.0
      %2499 = vmatpush1.xpose.msra.mxu0 0.0
      %2500 = vmatprep.subr.mxu0 0.0
      %2501 = vmatpush1.xpose.msra.mxu0 0.0
      %2502 = vmatprep.subr.mxu0 0.0
      %2503 = vmatpush1.xpose.msra.mxu0 0.0
      %2504 = vmatprep.subr.mxu0 0.0
      %2505 = vmatpush1.xpose.msra.mxu0 0.0
      %2506 = vmatprep.subr.mxu0 0.0
      %2507 = vmatpush1.xpose.msra.mxu0 0.0
      %2508 = vmatprep.subr.mxu0 0.0
      %2509 = vmatpush1.xpose.msra.mxu0 0.0
      %2510 = vmatprep.subr.mxu0 0.0
      %2511 = vmatpush1.xpose.msra.mxu0 0.0
      %2512 = vmatprep.subr.mxu0 0.0
      %2513 = vmatpush1.xpose.msra.mxu0 0.0
      %2514 = vmatprep.subr.mxu0 0.0
      %2515 = vmatpush1.xpose.msra.mxu0 0.0
      %2516 = vmatprep.subr.mxu0 0.0
      %2517 = vmatpush1.xpose.msra.mxu0 0.0
      %2518 = vmatprep.subr.mxu0 0.0
      %2519 = vmatpush1.xpose.msra.mxu0 0.0
      %2520 = vmatprep.subr.mxu0 0.0
      %2521 = vmatpush1.xpose.msra.mxu0 0.0
      %2522 = vmatprep.subr.mxu0 0.0
      %2523 = vmatpush1.xpose.msra.mxu0 0.0
      %2524 = vmatprep.subr.mxu0 0.0
      %2525 = vmatpush1.xpose.msra.mxu0 0.0
      %2526 = vmatprep.subr.mxu0 0.0
      %2527 = vmatpush1.xpose.msra.mxu0 0.0
      %2528 = vmatprep.subr.mxu0 0.0
      %2529 = vmatpush1.xpose.msra.mxu0 0.0
      %2530 = vmatprep.mubr.f32.mxu0 0.0
      %2531 = vmatmul.mubr.f32.gmra.mrb[0].mxu0 %v2434
      %v2532 = vpop.f32.mrb[0].mxu0
      %v2533 = vadd.f32 0.0, %v2532
      %v2534 = vpop.f32.mrb[0].mxu0
      %2535 = vmatprep.mubr.f32.mxu0 0.0
      %2536 = vmatmul.mubr.f32.gmra.mrb[0].mxu0 %v2436
      %v2537 = vpop.f32.mrb[0].mxu0
      %v2538 = vadd.f32 0.0, %v2537
      %v2539 = vpop.f32.mrb[0].mxu0
      %2540 = vmatprep.mubr.f32.mxu0 0.0
      %2541 = vmatmul.mubr.f32.gmra.mrb[0].mxu0 %v2438
      %v2542 = vpop.f32.mrb[0].mxu0
      %v2543 = vadd.f32 0.0, %v2542
      %v2544 = vpop.f32.mrb[0].mxu0
      %2545 = vmatprep.mubr.f32.mxu0 0.0
      %2546 = vmatmul.mubr.f32.gmra.mrb[0].mxu0 %v2440
      %v2547 = vpop.f32.mrb[0].mxu0
      %v2548 = vadd.f32 0.0, %v2547
      %v2549 = vpop.f32.mrb[0].mxu0
      %2550 = vmatprep.mubr.f32.mxu0 0.0
      %2551 = vmatmul.mubr.f32.gmra.mrb[0].mxu0 %v2442
      %v2552 = vpop.f32.mrb[0].mxu0
      %v2553 = vadd.f32 0.0, %v2552
      %v2554 = vpop.f32.mrb[0].mxu0
      %2555 = vmatprep.mubr.f32.mxu0 0.0
      %2556 = vmatmul.mubr.f32.gmra.mrb[0].mxu0 %v2444
      %v2557 = vpop.f32.mrb[0].mxu0
      %v2558 = vadd.f32 0.0, %v2557
      %v2559 = vpop.f32.mrb[0].mxu0
      %2560 = vmatprep.mubr.f32.mxu0 0.0
      %2561 = vmatmul.mubr.f32.gmra.mrb[0].mxu0 %v2446
      %v2562 = vpop.f32.mrb[0].mxu0
      %v2563 = vadd.f32 0.0, %v2562
      %v2564 = vpop.f32.mrb[0].mxu0
      %2565 = vmatprep.mubr.f32.mxu0 0.0
      %2566 = vmatmul.mubr.f32.gmra.mrb[0].mxu0 %v2448
      %v2567 = vpop.f32.mrb[0].mxu0
      %v2568 = vadd.f32 0.0, %v2567
      %v2569 = vpop.f32.mrb[0].mxu0
      %2570 = vdwg.mxu0
      %2571 = vrot.lane.b32.xlu0 %v1356, 96
      %v2572 = vpop.permute.xlu0 %2571
      %2573 = vrot.lane.b32.xlu0 %v1358, 96
      %v2574 = vpop.permute.xlu0 %2573
      %2575 = vrot.lane.b32.xlu0 %v1360, 96
      %v2576 = vpop.permute.xlu0 %2575
      %2577 = vrot.lane.b32.xlu0 %v1362, 96
      %v2578 = vpop.permute.xlu0 %2577
      %2579 = vrot.lane.b32.xlu0 %v1364, 96
      %v2580 = vpop.permute.xlu0 %2579
      %2581 = vrot.lane.b32.xlu0 %v1366, 96
      %v2582 = vpop.permute.xlu0 %2581
      %2583 = vrot.lane.b32.xlu0 %v1368, 96
      %v2584 = vpop.permute.xlu0 %2583
      %2585 = vrot.lane.b32.xlu0 %v1370, 96
      %v2586 = vpop.permute.xlu0 %2585
      %v2587 = vsel %vm1515, %v1356, 0
      %v2589 = vsel %vm1515, %v1358, 0
      %v2591 = vsel %vm1515, %v1360, 0
      %v2593 = vsel %vm1515, %v1362, 0
      %v2595 = vsel %vm1515, %v1364, 0
      %v2597 = vsel %vm1515, %v1366, 0
      %v2599 = vsel %vm1515, %v1368, 0
      %v2601 = vsel %vm1515, %v1370, 0
      %v2603 = vsel %vm1515, %v2572, 0
      %v2605 = vsel %vm1515, %v2574, 0
      %v2607 = vsel %vm1515, %v2576, 0
      %v2609 = vsel %vm1515, %v2578, 0
      %v2611 = vsel %vm1515, %v2580, 0
      %v2613 = vsel %vm1515, %v2582, 0
      %v2615 = vsel %vm1515, %v2584, 0
      %v2617 = vsel %vm1515, %v2586, 0
      %2619 = vmatprep.subr.mxu0 0.0
      %2620 = vmatpush1.xpose.msra.mxu0 %v2603
      %2621 = vmatprep.subr.mxu0 0.0
      %2622 = vmatpush1.xpose.msra.mxu0 %v2605
      %2623 = vmatprep.subr.mxu0 0.0
      %2624 = vmatpush1.xpose.msra.mxu0 %v2607
      %2625 = vmatprep.subr.mxu0 0.0
      %2626 = vmatpush1.xpose.msra.mxu0 %v2609
      %2627 = vmatprep.subr.mxu0 0.0
      %2628 = vmatpush1.xpose.msra.mxu0 %v2611
      %2629 = vmatprep.subr.mxu0 0.0
      %2630 = vmatpush1.xpose.msra.mxu0 %v2613
      %2631 = vmatprep.subr.mxu0 0.0
      %2632 = vmatpush1.xpose.msra.mxu0 %v2615
      %2633 = vmatprep.subr.mxu0 0.0
      %2634 = vmatpush1.xpose.msra.mxu0 %v2617
      %2635 = vmatprep.subr.mxu0 0.0
      %2636 = vmatpush1.xpose.msra.mxu0 0.0
      %2637 = vmatprep.subr.mxu0 0.0
      %2638 = vmatpush1.xpose.msra.mxu0 0.0
      %2639 = vmatprep.subr.mxu0 0.0
      %2640 = vmatpush1.xpose.msra.mxu0 0.0
      %2641 = vmatprep.subr.mxu0 0.0
      %2642 = vmatpush1.xpose.msra.mxu0 0.0
      %2643 = vmatprep.subr.mxu0 0.0
      %2644 = vmatpush1.xpose.msra.mxu0 0.0
      %2645 = vmatprep.subr.mxu0 0.0
      %2646 = vmatpush1.xpose.msra.mxu0 0.0
      %2647 = vmatprep.subr.mxu0 0.0
      %2648 = vmatpush1.xpose.msra.mxu0 0.0
      %2649 = vmatprep.subr.mxu0 0.0
      %2650 = vmatpush1.xpose.msra.mxu0 0.0
      %2651 = vmatprep.subr.mxu0 0.0
      %2652 = vmatpush1.xpose.msra.mxu0 0.0
      %2653 = vmatprep.subr.mxu0 0.0
      %2654 = vmatpush1.xpose.msra.mxu0 0.0
      %2655 = vmatprep.subr.mxu0 0.0
      %2656 = vmatpush1.xpose.msra.mxu0 0.0
      %2657 = vmatprep.subr.mxu0 0.0
      %2658 = vmatpush1.xpose.msra.mxu0 0.0
      %2659 = vmatprep.subr.mxu0 0.0
      %2660 = vmatpush1.xpose.msra.mxu0 0.0
      %2661 = vmatprep.subr.mxu0 0.0
      %2662 = vmatpush1.xpose.msra.mxu0 0.0
      %2663 = vmatprep.subr.mxu0 0.0
      %2664 = vmatpush1.xpose.msra.mxu0 0.0
      %2665 = vmatprep.subr.mxu0 0.0
      %2666 = vmatpush1.xpose.msra.mxu0 0.0
      %2667 = vmatprep.subr.mxu0 0.0
      %2668 = vmatpush1.xpose.msra.mxu0 0.0
      %2669 = vmatprep.subr.mxu0 0.0
      %2670 = vmatpush1.xpose.msra.mxu0 0.0
      %2671 = vmatprep.subr.mxu0 0.0
      %2672 = vmatpush1.xpose.msra.mxu0 0.0
      %2673 = vmatprep.subr.mxu0 0.0
      %2674 = vmatpush1.xpose.msra.mxu0 0.0
      %2675 = vmatprep.subr.mxu0 0.0
      %2676 = vmatpush1.xpose.msra.mxu0 0.0
      %2677 = vmatprep.subr.mxu0 0.0
      %2678 = vmatpush1.xpose.msra.mxu0 0.0
      %2679 = vmatprep.subr.mxu0 0.0
      %2680 = vmatpush1.xpose.msra.mxu0 0.0
      %2681 = vmatprep.subr.mxu0 0.0
      %2682 = vmatpush1.xpose.msra.mxu0 0.0
      %2683 = vmatprep.mubr.f32.mxu0 0.0
      %2684 = vmatmul.mubr.f32.gmra.mrb[0].mxu0 %v2587
      %v2685 = vpop.f32.mrb[0].mxu0
      %v2686 = vadd.f32 0.0, %v2685
      %v2687 = vpop.f32.mrb[0].mxu0
      %2688 = vmatprep.mubr.f32.mxu0 0.0
      %2689 = vmatmul.mubr.f32.gmra.mrb[0].mxu0 %v2589
      %v2690 = vpop.f32.mrb[0].mxu0
      %v2691 = vadd.f32 0.0, %v2690
      %v2692 = vpop.f32.mrb[0].mxu0
      %2693 = vmatprep.mubr.f32.mxu0 0.0
      %2694 = vmatmul.mubr.f32.gmra.mrb[0].mxu0 %v2591
      %v2695 = vpop.f32.mrb[0].mxu0
      %v2696 = vadd.f32 0.0, %v2695
      %v2697 = vpop.f32.mrb[0].mxu0
      %2698 = vmatprep.mubr.f32.mxu0 0.0
      %2699 = vmatmul.mubr.f32.gmra.mrb[0].mxu0 %v2593
      %v2700 = vpop.f32.mrb[0].mxu0
      %v2701 = vadd.f32 0.0, %v2700
      %v2702 = vpop.f32.mrb[0].mxu0
      %2703 = vmatprep.mubr.f32.mxu0 0.0
      %2704 = vmatmul.mubr.f32.gmra.mrb[0].mxu0 %v2595
      %v2705 = vpop.f32.mrb[0].mxu0
      %v2706 = vadd.f32 0.0, %v2705
      %v2707 = vpop.f32.mrb[0].mxu0
      %2708 = vmatprep.mubr.f32.mxu0 0.0
      %2709 = vmatmul.mubr.f32.gmra.mrb[0].mxu0 %v2597
      %v2710 = vpop.f32.mrb[0].mxu0
      %v2711 = vadd.f32 0.0, %v2710
      %v2712 = vpop.f32.mrb[0].mxu0
      %2713 = vmatprep.mubr.f32.mxu0 0.0
      %2714 = vmatmul.mubr.f32.gmra.mrb[0].mxu0 %v2599
      %v2715 = vpop.f32.mrb[0].mxu0
      %v2716 = vadd.f32 0.0, %v2715
      %v2717 = vpop.f32.mrb[0].mxu0
      %2718 = vmatprep.mubr.f32.mxu0 0.0
      %2719 = vmatmul.mubr.f32.gmra.mrb[0].mxu0 %v2601
      %v2720 = vpop.f32.mrb[0].mxu0
      %v2721 = vadd.f32 0.0, %v2720
      %v2722 = vpop.f32.mrb[0].mxu0
      %2723 = vdwg.mxu0
      %2724 = vrot.lane.b32.xlu0 %v1372, 96
      %v2725 = vpop.permute.xlu0 %2724
      %2726 = vrot.lane.b32.xlu0 %v1374, 96
      %v2727 = vpop.permute.xlu0 %2726
      %2728 = vrot.lane.b32.xlu0 %v1376, 96
      %v2729 = vpop.permute.xlu0 %2728
      %2730 = vrot.lane.b32.xlu0 %v1378, 96
      %v2731 = vpop.permute.xlu0 %2730
      %2732 = vrot.lane.b32.xlu0 %v1380, 96
      %v2733 = vpop.permute.xlu0 %2732
      %2734 = vrot.lane.b32.xlu0 %v1382, 96
      %v2735 = vpop.permute.xlu0 %2734
      %2736 = vrot.lane.b32.xlu0 %v1384, 96
      %v2737 = vpop.permute.xlu0 %2736
      %2738 = vrot.lane.b32.xlu0 %v1386, 96
      %v2739 = vpop.permute.xlu0 %2738
      %v2740 = vsel %vm1515, %v1372, 0
      %v2742 = vsel %vm1515, %v1374, 0
      %v2744 = vsel %vm1515, %v1376, 0
      %v2746 = vsel %vm1515, %v1378, 0
      %v2748 = vsel %vm1515, %v1380, 0
      %v2750 = vsel %vm1515, %v1382, 0
      %v2752 = vsel %vm1515, %v1384, 0
      %v2754 = vsel %vm1515, %v1386, 0
      %v2756 = vsel %vm1515, %v2725, 0
      %v2758 = vsel %vm1515, %v2727, 0
      %v2760 = vsel %vm1515, %v2729, 0
      %v2762 = vsel %vm1515, %v2731, 0
      %v2764 = vsel %vm1515, %v2733, 0
      %v2766 = vsel %vm1515, %v2735, 0
      %v2768 = vsel %vm1515, %v2737, 0
      %v2770 = vsel %vm1515, %v2739, 0
      %2772 = vmatprep.subr.mxu0 0.0
      %2773 = vmatpush1.xpose.msra.mxu0 %v2756
      %2774 = vmatprep.subr.mxu0 0.0
      %2775 = vmatpush1.xpose.msra.mxu0 %v2758
      %2776 = vmatprep.subr.mxu0 0.0
      %2777 = vmatpush1.xpose.msra.mxu0 %v2760
      %2778 = vmatprep.subr.mxu0 0.0
      %2779 = vmatpush1.xpose.msra.mxu0 %v2762
      %2780 = vmatprep.subr.mxu0 0.0
      %2781 = vmatpush1.xpose.msra.mxu0 %v2764
      %2782 = vmatprep.subr.mxu0 0.0
      %2783 = vmatpush1.xpose.msra.mxu0 %v2766
      %2784 = vmatprep.subr.mxu0 0.0
      %2785 = vmatpush1.xpose.msra.mxu0 %v2768
      %2786 = vmatprep.subr.mxu0 0.0
      %2787 = vmatpush1.xpose.msra.mxu0 %v2770
      %2788 = vmatprep.subr.mxu0 0.0
      %2789 = vmatpush1.xpose.msra.mxu0 0.0
      %2790 = vmatprep.subr.mxu0 0.0
      %2791 = vmatpush1.xpose.msra.mxu0 0.0
      %2792 = vmatprep.subr.mxu0 0.0
      %2793 = vmatpush1.xpose.msra.mxu0 0.0
      %2794 = vmatprep.subr.mxu0 0.0
      %2795 = vmatpush1.xpose.msra.mxu0 0.0
      %2796 = vmatprep.subr.mxu0 0.0
      %2797 = vmatpush1.xpose.msra.mxu0 0.0
      %2798 = vmatprep.subr.mxu0 0.0
      %2799 = vmatpush1.xpose.msra.mxu0 0.0
      %2800 = vmatprep.subr.mxu0 0.0
      %2801 = vmatpush1.xpose.msra.mxu0 0.0
      %2802 = vmatprep.subr.mxu0 0.0
      %2803 = vmatpush1.xpose.msra.mxu0 0.0
      %2804 = vmatprep.subr.mxu0 0.0
      %2805 = vmatpush1.xpose.msra.mxu0 0.0
      %2806 = vmatprep.subr.mxu0 0.0
      %2807 = vmatpush1.xpose.msra.mxu0 0.0
      %2808 = vmatprep.subr.mxu0 0.0
      %2809 = vmatpush1.xpose.msra.mxu0 0.0
      %2810 = vmatprep.subr.mxu0 0.0
      %2811 = vmatpush1.xpose.msra.mxu0 0.0
      %2812 = vmatprep.subr.mxu0 0.0
      %2813 = vmatpush1.xpose.msra.mxu0 0.0
      %2814 = vmatprep.subr.mxu0 0.0
      %2815 = vmatpush1.xpose.msra.mxu0 0.0
      %2816 = vmatprep.subr.mxu0 0.0
      %2817 = vmatpush1.xpose.msra.mxu0 0.0
      %2818 = vmatprep.subr.mxu0 0.0
      %2819 = vmatpush1.xpose.msra.mxu0 0.0
      %2820 = vmatprep.subr.mxu0 0.0
      %2821 = vmatpush1.xpose.msra.mxu0 0.0
      %2822 = vmatprep.subr.mxu0 0.0
      %2823 = vmatpush1.xpose.msra.mxu0 0.0
      %2824 = vmatprep.subr.mxu0 0.0
      %2825 = vmatpush1.xpose.msra.mxu0 0.0
      %2826 = vmatprep.subr.mxu0 0.0
      %2827 = vmatpush1.xpose.msra.mxu0 0.0
      %2828 = vmatprep.subr.mxu0 0.0
      %2829 = vmatpush1.xpose.msra.mxu0 0.0
      %2830 = vmatprep.subr.mxu0 0.0
      %2831 = vmatpush1.xpose.msra.mxu0 0.0
      %2832 = vmatprep.subr.mxu0 0.0
      %2833 = vmatpush1.xpose.msra.mxu0 0.0
      %2834 = vmatprep.subr.mxu0 0.0
      %2835 = vmatpush1.xpose.msra.mxu0 0.0
      %2836 = vmatprep.mubr.f32.mxu0 0.0
      %2837 = vmatmul.mubr.f32.gmra.mrb[0].mxu0 %v2740
      %v2838 = vpop.f32.mrb[0].mxu0
      %v2839 = vadd.f32 0.0, %v2838
      %v2840 = vpop.f32.mrb[0].mxu0
      %2841 = vmatprep.mubr.f32.mxu0 0.0
      %2842 = vmatmul.mubr.f32.gmra.mrb[0].mxu0 %v2742
      %v2843 = vpop.f32.mrb[0].mxu0
      %v2844 = vadd.f32 0.0, %v2843
      %v2845 = vpop.f32.mrb[0].mxu0
      %2846 = vmatprep.mubr.f32.mxu0 0.0
      %2847 = vmatmul.mubr.f32.gmra.mrb[0].mxu0 %v2744
      %v2848 = vpop.f32.mrb[0].mxu0
      %v2849 = vadd.f32 0.0, %v2848
      %v2850 = vpop.f32.mrb[0].mxu0
      %2851 = vmatprep.mubr.f32.mxu0 0.0
      %2852 = vmatmul.mubr.f32.gmra.mrb[0].mxu0 %v2746
      %v2853 = vpop.f32.mrb[0].mxu0
      %v2854 = vadd.f32 0.0, %v2853
      %v2855 = vpop.f32.mrb[0].mxu0
      %2856 = vmatprep.mubr.f32.mxu0 0.0
      %2857 = vmatmul.mubr.f32.gmra.mrb[0].mxu0 %v2748
      %v2858 = vpop.f32.mrb[0].mxu0
      %v2859 = vadd.f32 0.0, %v2858
      %v2860 = vpop.f32.mrb[0].mxu0
      %2861 = vmatprep.mubr.f32.mxu0 0.0
      %2862 = vmatmul.mubr.f32.gmra.mrb[0].mxu0 %v2750
      %v2863 = vpop.f32.mrb[0].mxu0
      %v2864 = vadd.f32 0.0, %v2863
      %v2865 = vpop.f32.mrb[0].mxu0
      %2866 = vmatprep.mubr.f32.mxu0 0.0
      %2867 = vmatmul.mubr.f32.gmra.mrb[0].mxu0 %v2752
      %v2868 = vpop.f32.mrb[0].mxu0
      %v2869 = vadd.f32 0.0, %v2868
      %v2870 = vpop.f32.mrb[0].mxu0
      %2871 = vmatprep.mubr.f32.mxu0 0.0
      %2872 = vmatmul.mubr.f32.gmra.mrb[0].mxu0 %v2754
      %v2873 = vpop.f32.mrb[0].mxu0
      %v2874 = vadd.f32 0.0, %v2873
      %v2875 = vpop.f32.mrb[0].mxu0
      %2876 = vdwg.mxu0
      %2877 = vrot.lane.b32.xlu0 %v1388, 96
      %v2878 = vpop.permute.xlu0 %2877
      %2879 = vrot.lane.b32.xlu0 %v1390, 96
      %v2880 = vpop.permute.xlu0 %2879
      %2881 = vrot.lane.b32.xlu0 %v1392, 96
      %v2882 = vpop.permute.xlu0 %2881
      %2883 = vrot.lane.b32.xlu0 %v1394, 96
      %v2884 = vpop.permute.xlu0 %2883
      %2885 = vrot.lane.b32.xlu0 %v1396, 96
      %v2886 = vpop.permute.xlu0 %2885
      %2887 = vrot.lane.b32.xlu0 %v1398, 96
      %v2888 = vpop.permute.xlu0 %2887
      %2889 = vrot.lane.b32.xlu0 %v1400, 96
      %v2890 = vpop.permute.xlu0 %2889
      %2891 = vrot.lane.b32.xlu0 %v1402, 96
      %v2892 = vpop.permute.xlu0 %2891
      %v2893 = vsel %vm1515, %v1388, 0
      %v2895 = vsel %vm1515, %v1390, 0
      %v2897 = vsel %vm1515, %v1392, 0
      %v2899 = vsel %vm1515, %v1394, 0
      %v2901 = vsel %vm1515, %v1396, 0
      %v2903 = vsel %vm1515, %v1398, 0
      %v2905 = vsel %vm1515, %v1400, 0
      %v2907 = vsel %vm1515, %v1402, 0
      %v2909 = vsel %vm1515, %v2878, 0
      %v2911 = vsel %vm1515, %v2880, 0
      %v2913 = vsel %vm1515, %v2882, 0
      %v2915 = vsel %vm1515, %v2884, 0
      %v2917 = vsel %vm1515, %v2886, 0
      %v2919 = vsel %vm1515, %v2888, 0
      %v2921 = vsel %vm1515, %v2890, 0
      %v2923 = vsel %vm1515, %v2892, 0
      %2925 = vmatprep.subr.mxu0 0.0
      %2926 = vmatpush1.xpose.msra.mxu0 %v2909
      %2927 = vmatprep.subr.mxu0 0.0
      %2928 = vmatpush1.xpose.msra.mxu0 %v2911
      %2929 = vmatprep.subr.mxu0 0.0
      %2930 = vmatpush1.xpose.msra.mxu0 %v2913
      %2931 = vmatprep.subr.mxu0 0.0
      %2932 = vmatpush1.xpose.msra.mxu0 %v2915
      %2933 = vmatprep.subr.mxu0 0.0
      %2934 = vmatpush1.xpose.msra.mxu0 %v2917
      %2935 = vmatprep.subr.mxu0 0.0
      %2936 = vmatpush1.xpose.msra.mxu0 %v2919
      %2937 = vmatprep.subr.mxu0 0.0
      %2938 = vmatpush1.xpose.msra.mxu0 %v2921
      %2939 = vmatprep.subr.mxu0 0.0
      %2940 = vmatpush1.xpose.msra.mxu0 %v2923
      %2941 = vmatprep.subr.mxu0 0.0
      %2942 = vmatpush1.xpose.msra.mxu0 0.0
      %2943 = vmatprep.subr.mxu0 0.0
      %2944 = vmatpush1.xpose.msra.mxu0 0.0
      %2945 = vmatprep.subr.mxu0 0.0
      %2946 = vmatpush1.xpose.msra.mxu0 0.0
      %2947 = vmatprep.subr.mxu0 0.0
      %2948 = vmatpush1.xpose.msra.mxu0 0.0
      %2949 = vmatprep.subr.mxu0 0.0
      %2950 = vmatpush1.xpose.msra.mxu0 0.0
      %2951 = vmatprep.subr.mxu0 0.0
      %2952 = vmatpush1.xpose.msra.mxu0 0.0
      %2953 = vmatprep.subr.mxu0 0.0
      %2954 = vmatpush1.xpose.msra.mxu0 0.0
      %2955 = vmatprep.subr.mxu0 0.0
      %2956 = vmatpush1.xpose.msra.mxu0 0.0
      %2957 = vmatprep.subr.mxu0 0.0
      %2958 = vmatpush1.xpose.msra.mxu0 0.0
      %2959 = vmatprep.subr.mxu0 0.0
      %2960 = vmatpush1.xpose.msra.mxu0 0.0
      %2961 = vmatprep.subr.mxu0 0.0
      %2962 = vmatpush1.xpose.msra.mxu0 0.0
      %2963 = vmatprep.subr.mxu0 0.0
      %2964 = vmatpush1.xpose.msra.mxu0 0.0
      %2965 = vmatprep.subr.mxu0 0.0
      %2966 = vmatpush1.xpose.msra.mxu0 0.0
      %2967 = vmatprep.subr.mxu0 0.0
      %2968 = vmatpush1.xpose.msra.mxu0 0.0
      %2969 = vmatprep.subr.mxu0 0.0
      %2970 = vmatpush1.xpose.msra.mxu0 0.0
      %2971 = vmatprep.subr.mxu0 0.0
      %2972 = vmatpush1.xpose.msra.mxu0 0.0
      %2973 = vmatprep.subr.mxu0 0.0
      %2974 = vmatpush1.xpose.msra.mxu0 0.0
      %2975 = vmatprep.subr.mxu0 0.0
      %2976 = vmatpush1.xpose.msra.mxu0 0.0
      %2977 = vmatprep.subr.mxu0 0.0
      %2978 = vmatpush1.xpose.msra.mxu0 0.0
      %2979 = vmatprep.subr.mxu0 0.0
      %2980 = vmatpush1.xpose.msra.mxu0 0.0
      %2981 = vmatprep.subr.mxu0 0.0
      %2982 = vmatpush1.xpose.msra.mxu0 0.0
      %2983 = vmatprep.subr.mxu0 0.0
      %2984 = vmatpush1.xpose.msra.mxu0 0.0
      %2985 = vmatprep.subr.mxu0 0.0
      %2986 = vmatpush1.xpose.msra.mxu0 0.0
      %2987 = vmatprep.subr.mxu0 0.0
      %2988 = vmatpush1.xpose.msra.mxu0 0.0
      %2989 = vmatprep.mubr.f32.mxu0 0.0
      %2990 = vmatmul.mubr.f32.gmra.mrb[0].mxu0 %v2893
      %v2991 = vpop.f32.mrb[0].mxu0
      %v2992 = vadd.f32 0.0, %v2991
      %v2993 = vpop.f32.mrb[0].mxu0
      %2994 = vmatprep.mubr.f32.mxu0 0.0
      %2995 = vmatmul.mubr.f32.gmra.mrb[0].mxu0 %v2895
      %v2996 = vpop.f32.mrb[0].mxu0
      %v2997 = vadd.f32 0.0, %v2996
      %v2998 = vpop.f32.mrb[0].mxu0
      %2999 = vmatprep.mubr.f32.mxu0 0.0
      %3000 = vmatmul.mubr.f32.gmra.mrb[0].mxu0 %v2897
      %v3001 = vpop.f32.mrb[0].mxu0
      %v3002 = vadd.f32 0.0, %v3001
      %v3003 = vpop.f32.mrb[0].mxu0
      %3004 = vmatprep.mubr.f32.mxu0 0.0
      %3005 = vmatmul.mubr.f32.gmra.mrb[0].mxu0 %v2899
      %v3006 = vpop.f32.mrb[0].mxu0
      %v3007 = vadd.f32 0.0, %v3006
      %v3008 = vpop.f32.mrb[0].mxu0
      %3009 = vmatprep.mubr.f32.mxu0 0.0
      %3010 = vmatmul.mubr.f32.gmra.mrb[0].mxu0 %v2901
      %v3011 = vpop.f32.mrb[0].mxu0
      %v3012 = vadd.f32 0.0, %v3011
      %v3013 = vpop.f32.mrb[0].mxu0
      %3014 = vmatprep.mubr.f32.mxu0 0.0
      %3015 = vmatmul.mubr.f32.gmra.mrb[0].mxu0 %v2903
      %v3016 = vpop.f32.mrb[0].mxu0
      %v3017 = vadd.f32 0.0, %v3016
      %v3018 = vpop.f32.mrb[0].mxu0
      %3019 = vmatprep.mubr.f32.mxu0 0.0
      %3020 = vmatmul.mubr.f32.gmra.mrb[0].mxu0 %v2905
      %v3021 = vpop.f32.mrb[0].mxu0
      %v3022 = vadd.f32 0.0, %v3021
      %v3023 = vpop.f32.mrb[0].mxu0
      %3024 = vmatprep.mubr.f32.mxu0 0.0
      %3025 = vmatmul.mubr.f32.gmra.mrb[0].mxu0 %v2907
      %v3026 = vpop.f32.mrb[0].mxu0
      %v3027 = vadd.f32 0.0, %v3026
      %v3028 = vpop.f32.mrb[0].mxu0
      %3029 = vdwg.mxu0
      %3030 = vrot.lane.b32.xlu0 %v1404, 96
      %v3031 = vpop.permute.xlu0 %3030
      %3032 = vrot.lane.b32.xlu0 %v1406, 96
      %v3033 = vpop.permute.xlu0 %3032
      %3034 = vrot.lane.b32.xlu0 %v1408, 96
      %v3035 = vpop.permute.xlu0 %3034
      %3036 = vrot.lane.b32.xlu0 %v1410, 96
      %v3037 = vpop.permute.xlu0 %3036
      %3038 = vrot.lane.b32.xlu0 %v1412, 96
      %v3039 = vpop.permute.xlu0 %3038
      %3040 = vrot.lane.b32.xlu0 %v1414, 96
      %v3041 = vpop.permute.xlu0 %3040
      %3042 = vrot.lane.b32.xlu0 %v1416, 96
      %v3043 = vpop.permute.xlu0 %3042
      %3044 = vrot.lane.b32.xlu0 %v1418, 96
      %v3045 = vpop.permute.xlu0 %3044
      %v3046 = vsel %vm1515, %v1404, 0
      %v3048 = vsel %vm1515, %v1406, 0
      %v3050 = vsel %vm1515, %v1408, 0
      %v3052 = vsel %vm1515, %v1410, 0
      %v3054 = vsel %vm1515, %v1412, 0
      %v3056 = vsel %vm1515, %v1414, 0
      %v3058 = vsel %vm1515, %v1416, 0
      %v3060 = vsel %vm1515, %v1418, 0
      %v3062 = vsel %vm1515, %v3031, 0
      %v3064 = vsel %vm1515, %v3033, 0
      %v3066 = vsel %vm1515, %v3035, 0
      %v3068 = vsel %vm1515, %v3037, 0
      %v3070 = vsel %vm1515, %v3039, 0
      %v3072 = vsel %vm1515, %v3041, 0
      %v3074 = vsel %vm1515, %v3043, 0
      %v3076 = vsel %vm1515, %v3045, 0
      %3078 = vmatprep.subr.mxu0 0.0
      %3079 = vmatpush1.xpose.msra.mxu0 %v3062
      %3080 = vmatprep.subr.mxu0 0.0
      %3081 = vmatpush1.xpose.msra.mxu0 %v3064
      %3082 = vmatprep.subr.mxu0 0.0
      %3083 = vmatpush1.xpose.msra.mxu0 %v3066
      %3084 = vmatprep.subr.mxu0 0.0
      %3085 = vmatpush1.xpose.msra.mxu0 %v3068
      %3086 = vmatprep.subr.mxu0 0.0
      %3087 = vmatpush1.xpose.msra.mxu0 %v3070
      %3088 = vmatprep.subr.mxu0 0.0
      %3089 = vmatpush1.xpose.msra.mxu0 %v3072
      %3090 = vmatprep.subr.mxu0 0.0
      %3091 = vmatpush1.xpose.msra.mxu0 %v3074
      %3092 = vmatprep.subr.mxu0 0.0
      %3093 = vmatpush1.xpose.msra.mxu0 %v3076
      %3094 = vmatprep.subr.mxu0 0.0
      %3095 = vmatpush1.xpose.msra.mxu0 0.0
      %3096 = vmatprep.subr.mxu0 0.0
      %3097 = vmatpush1.xpose.msra.mxu0 0.0
      %3098 = vmatprep.subr.mxu0 0.0
      %3099 = vmatpush1.xpose.msra.mxu0 0.0
      %3100 = vmatprep.subr.mxu0 0.0
      %3101 = vmatpush1.xpose.msra.mxu0 0.0
      %3102 = vmatprep.subr.mxu0 0.0
      %3103 = vmatpush1.xpose.msra.mxu0 0.0
      %3104 = vmatprep.subr.mxu0 0.0
      %3105 = vmatpush1.xpose.msra.mxu0 0.0
      %3106 = vmatprep.subr.mxu0 0.0
      %3107 = vmatpush1.xpose.msra.mxu0 0.0
      %3108 = vmatprep.subr.mxu0 0.0
      %3109 = vmatpush1.xpose.msra.mxu0 0.0
      %3110 = vmatprep.subr.mxu0 0.0
      %3111 = vmatpush1.xpose.msra.mxu0 0.0
      %3112 = vmatprep.subr.mxu0 0.0
      %3113 = vmatpush1.xpose.msra.mxu0 0.0
      %3114 = vmatprep.subr.mxu0 0.0
      %3115 = vmatpush1.xpose.msra.mxu0 0.0
      %3116 = vmatprep.subr.mxu0 0.0
      %3117 = vmatpush1.xpose.msra.mxu0 0.0
      %3118 = vmatprep.subr.mxu0 0.0
      %3119 = vmatpush1.xpose.msra.mxu0 0.0
      %3120 = vmatprep.subr.mxu0 0.0
      %3121 = vmatpush1.xpose.msra.mxu0 0.0
      %3122 = vmatprep.subr.mxu0 0.0
      %3123 = vmatpush1.xpose.msra.mxu0 0.0
      %3124 = vmatprep.subr.mxu0 0.0
      %3125 = vmatpush1.xpose.msra.mxu0 0.0
      %3126 = vmatprep.subr.mxu0 0.0
      %3127 = vmatpush1.xpose.msra.mxu0 0.0
      %3128 = vmatprep.subr.mxu0 0.0
      %3129 = vmatpush1.xpose.msra.mxu0 0.0
      %3130 = vmatprep.subr.mxu0 0.0
      %3131 = vmatpush1.xpose.msra.mxu0 0.0
      %3132 = vmatprep.subr.mxu0 0.0
      %3133 = vmatpush1.xpose.msra.mxu0 0.0
      %3134 = vmatprep.subr.mxu0 0.0
      %3135 = vmatpush1.xpose.msra.mxu0 0.0
      %3136 = vmatprep.subr.mxu0 0.0
      %3137 = vmatpush1.xpose.msra.mxu0 0.0
      %3138 = vmatprep.subr.mxu0 0.0
      %3139 = vmatpush1.xpose.msra.mxu0 0.0
      %3140 = vmatprep.subr.mxu0 0.0
      %3141 = vmatpush1.xpose.msra.mxu0 0.0
      %3142 = vmatprep.mubr.f32.mxu0 0.0
      %3143 = vmatmul.mubr.f32.gmra.mrb[0].mxu0 %v3046
      %v3144 = vpop.f32.mrb[0].mxu0
      %v3145 = vadd.f32 0.0, %v3144
      %v3146 = vpop.f32.mrb[0].mxu0
      %3147 = vmatprep.mubr.f32.mxu0 0.0
      %3148 = vmatmul.mubr.f32.gmra.mrb[0].mxu0 %v3048
      %v3149 = vpop.f32.mrb[0].mxu0
      %v3150 = vadd.f32 0.0, %v3149
      %v3151 = vpop.f32.mrb[0].mxu0
      %3152 = vmatprep.mubr.f32.mxu0 0.0
      %3153 = vmatmul.mubr.f32.gmra.mrb[0].mxu0 %v3050
      %v3154 = vpop.f32.mrb[0].mxu0
      %v3155 = vadd.f32 0.0, %v3154
      %v3156 = vpop.f32.mrb[0].mxu0
      %3157 = vmatprep.mubr.f32.mxu0 0.0
      %3158 = vmatmul.mubr.f32.gmra.mrb[0].mxu0 %v3052
      %v3159 = vpop.f32.mrb[0].mxu0
      %v3160 = vadd.f32 0.0, %v3159
      %v3161 = vpop.f32.mrb[0].mxu0
      %3162 = vmatprep.mubr.f32.mxu0 0.0
      %3163 = vmatmul.mubr.f32.gmra.mrb[0].mxu0 %v3054
      %v3164 = vpop.f32.mrb[0].mxu0
      %v3165 = vadd.f32 0.0, %v3164
      %v3166 = vpop.f32.mrb[0].mxu0
      %3167 = vmatprep.mubr.f32.mxu0 0.0
      %3168 = vmatmul.mubr.f32.gmra.mrb[0].mxu0 %v3056
      %v3169 = vpop.f32.mrb[0].mxu0
      %v3170 = vadd.f32 0.0, %v3169
      %v3171 = vpop.f32.mrb[0].mxu0
      %3172 = vmatprep.mubr.f32.mxu0 0.0
      %3173 = vmatmul.mubr.f32.gmra.mrb[0].mxu0 %v3058
      %v3174 = vpop.f32.mrb[0].mxu0
      %v3175 = vadd.f32 0.0, %v3174
      %v3176 = vpop.f32.mrb[0].mxu0
      %3177 = vmatprep.mubr.f32.mxu0 0.0
      %3178 = vmatmul.mubr.f32.gmra.mrb[0].mxu0 %v3060
      %v3179 = vpop.f32.mrb[0].mxu0
      %v3180 = vadd.f32 0.0, %v3179
      %v3181 = vpop.f32.mrb[0].mxu0
      %3182 = vdwg.mxu0
      %3183 = vrot.lane.b32.xlu0 %v1420, 96
      %v3184 = vpop.permute.xlu0 %3183
      %3185 = vrot.lane.b32.xlu0 %v1422, 96
      %v3186 = vpop.permute.xlu0 %3185
      %3187 = vrot.lane.b32.xlu0 %v1424, 96
      %v3188 = vpop.permute.xlu0 %3187
      %3189 = vrot.lane.b32.xlu0 %v1426, 96
      %v3190 = vpop.permute.xlu0 %3189
      %3191 = vrot.lane.b32.xlu0 %v1428, 96
      %v3192 = vpop.permute.xlu0 %3191
      %3193 = vrot.lane.b32.xlu0 %v1430, 96
      %v3194 = vpop.permute.xlu0 %3193
      %3195 = vrot.lane.b32.xlu0 %v1432, 96
      %v3196 = vpop.permute.xlu0 %3195
      %3197 = vrot.lane.b32.xlu0 %v1434, 96
      %v3198 = vpop.permute.xlu0 %3197
      %v3199 = vsel %vm1515, %v1420, 0
      %v3201 = vsel %vm1515, %v1422, 0
      %v3203 = vsel %vm1515, %v1424, 0
      %v3205 = vsel %vm1515, %v1426, 0
      %v3207 = vsel %vm1515, %v1428, 0
      %v3209 = vsel %vm1515, %v1430, 0
      %v3211 = vsel %vm1515, %v1432, 0
      %v3213 = vsel %vm1515, %v1434, 0
      %v3215 = vsel %vm1515, %v3184, 0
      %v3217 = vsel %vm1515, %v3186, 0
      %v3219 = vsel %vm1515, %v3188, 0
      %v3221 = vsel %vm1515, %v3190, 0
      %v3223 = vsel %vm1515, %v3192, 0
      %v3225 = vsel %vm1515, %v3194, 0
      %v3227 = vsel %vm1515, %v3196, 0
      %v3229 = vsel %vm1515, %v3198, 0
      %3231 = vmatprep.subr.mxu0 0.0
      %3232 = vmatpush1.xpose.msra.mxu0 %v3215
      %3233 = vmatprep.subr.mxu0 0.0
      %3234 = vmatpush1.xpose.msra.mxu0 %v3217
      %3235 = vmatprep.subr.mxu0 0.0
      %3236 = vmatpush1.xpose.msra.mxu0 %v3219
      %3237 = vmatprep.subr.mxu0 0.0
      %3238 = vmatpush1.xpose.msra.mxu0 %v3221
      %3239 = vmatprep.subr.mxu0 0.0
      %3240 = vmatpush1.xpose.msra.mxu0 %v3223
      %3241 = vmatprep.subr.mxu0 0.0
      %3242 = vmatpush1.xpose.msra.mxu0 %v3225
      %3243 = vmatprep.subr.mxu0 0.0
      %3244 = vmatpush1.xpose.msra.mxu0 %v3227
      %3245 = vmatprep.subr.mxu0 0.0
      %3246 = vmatpush1.xpose.msra.mxu0 %v3229
      %3247 = vmatprep.subr.mxu0 0.0
      %3248 = vmatpush1.xpose.msra.mxu0 0.0
      %3249 = vmatprep.subr.mxu0 0.0
      %3250 = vmatpush1.xpose.msra.mxu0 0.0
      %3251 = vmatprep.subr.mxu0 0.0
      %3252 = vmatpush1.xpose.msra.mxu0 0.0
      %3253 = vmatprep.subr.mxu0 0.0
      %3254 = vmatpush1.xpose.msra.mxu0 0.0
      %3255 = vmatprep.subr.mxu0 0.0
      %3256 = vmatpush1.xpose.msra.mxu0 0.0
      %3257 = vmatprep.subr.mxu0 0.0
      %3258 = vmatpush1.xpose.msra.mxu0 0.0
      %3259 = vmatprep.subr.mxu0 0.0
      %3260 = vmatpush1.xpose.msra.mxu0 0.0
      %3261 = vmatprep.subr.mxu0 0.0
      %3262 = vmatpush1.xpose.msra.mxu0 0.0
      %3263 = vmatprep.subr.mxu0 0.0
      %3264 = vmatpush1.xpose.msra.mxu0 0.0
      %3265 = vmatprep.subr.mxu0 0.0
      %3266 = vmatpush1.xpose.msra.mxu0 0.0
      %3267 = vmatprep.subr.mxu0 0.0
      %3268 = vmatpush1.xpose.msra.mxu0 0.0
      %3269 = vmatprep.subr.mxu0 0.0
      %3270 = vmatpush1.xpose.msra.mxu0 0.0
      %3271 = vmatprep.subr.mxu0 0.0
      %3272 = vmatpush1.xpose.msra.mxu0 0.0
      %3273 = vmatprep.subr.mxu0 0.0
      %3274 = vmatpush1.xpose.msra.mxu0 0.0
      %3275 = vmatprep.subr.mxu0 0.0
      %3276 = vmatpush1.xpose.msra.mxu0 0.0
      %3277 = vmatprep.subr.mxu0 0.0
      %3278 = vmatpush1.xpose.msra.mxu0 0.0
      %3279 = vmatprep.subr.mxu0 0.0
      %3280 = vmatpush1.xpose.msra.mxu0 0.0
      %3281 = vmatprep.subr.mxu0 0.0
      %3282 = vmatpush1.xpose.msra.mxu0 0.0
      %3283 = vmatprep.subr.mxu0 0.0
      %3284 = vmatpush1.xpose.msra.mxu0 0.0
      %3285 = vmatprep.subr.mxu0 0.0
      %3286 = vmatpush1.xpose.msra.mxu0 0.0
      %3287 = vmatprep.subr.mxu0 0.0
      %3288 = vmatpush1.xpose.msra.mxu0 0.0
      %3289 = vmatprep.subr.mxu0 0.0
      %3290 = vmatpush1.xpose.msra.mxu0 0.0
      %3291 = vmatprep.subr.mxu0 0.0
      %3292 = vmatpush1.xpose.msra.mxu0 0.0
      %3293 = vmatprep.subr.mxu0 0.0
      %3294 = vmatpush1.xpose.msra.mxu0 0.0
      %3295 = vmatprep.mubr.f32.mxu0 0.0
      %3296 = vmatmul.mubr.f32.gmra.mrb[0].mxu0 %v3199
      %v3297 = vpop.f32.mrb[0].mxu0
      %v3298 = vadd.f32 0.0, %v3297
      %v3299 = vpop.f32.mrb[0].mxu0
      %3300 = vmatprep.mubr.f32.mxu0 0.0
      %3301 = vmatmul.mubr.f32.gmra.mrb[0].mxu0 %v3201
      %v3302 = vpop.f32.mrb[0].mxu0
      %v3303 = vadd.f32 0.0, %v3302
      %v3304 = vpop.f32.mrb[0].mxu0
      %3305 = vmatprep.mubr.f32.mxu0 0.0
      %3306 = vmatmul.mubr.f32.gmra.mrb[0].mxu0 %v3203
      %v3307 = vpop.f32.mrb[0].mxu0
      %v3308 = vadd.f32 0.0, %v3307
      %v3309 = vpop.f32.mrb[0].mxu0
      %3310 = vmatprep.mubr.f32.mxu0 0.0
      %3311 = vmatmul.mubr.f32.gmra.mrb[0].mxu0 %v3205
      %v3312 = vpop.f32.mrb[0].mxu0
      %v3313 = vadd.f32 0.0, %v3312
      %v3314 = vpop.f32.mrb[0].mxu0
      %3315 = vmatprep.mubr.f32.mxu0 0.0
      %3316 = vmatmul.mubr.f32.gmra.mrb[0].mxu0 %v3207
      %v3317 = vpop.f32.mrb[0].mxu0
      %v3318 = vadd.f32 0.0, %v3317
      %v3319 = vpop.f32.mrb[0].mxu0
      %3320 = vmatprep.mubr.f32.mxu0 0.0
      %3321 = vmatmul.mubr.f32.gmra.mrb[0].mxu0 %v3209
      %v3322 = vpop.f32.mrb[0].mxu0
      %v3323 = vadd.f32 0.0, %v3322
      %v3324 = vpop.f32.mrb[0].mxu0
      %3325 = vmatprep.mubr.f32.mxu0 0.0
      %3326 = vmatmul.mubr.f32.gmra.mrb[0].mxu0 %v3211
      %v3327 = vpop.f32.mrb[0].mxu0
      %v3328 = vadd.f32 0.0, %v3327
      %v3329 = vpop.f32.mrb[0].mxu0
      %3330 = vmatprep.mubr.f32.mxu0 0.0
      %3331 = vmatmul.mubr.f32.gmra.mrb[0].mxu0 %v3213
      %v3332 = vpop.f32.mrb[0].mxu0
      %v3333 = vadd.f32 0.0, %v3332
      %v3334 = vpop.f32.mrb[0].mxu0
      %3335 = vdwg.mxu0
      %3336 = vrot.lane.b32.xlu0 %v1436, 96
      %v3337 = vpop.permute.xlu0 %3336
      %3338 = vrot.lane.b32.xlu0 %v1438, 96
      %v3339 = vpop.permute.xlu0 %3338
      %3340 = vrot.lane.b32.xlu0 %v1440, 96
      %v3341 = vpop.permute.xlu0 %3340
      %3342 = vrot.lane.b32.xlu0 %v1442, 96
      %v3343 = vpop.permute.xlu0 %3342
      %3344 = vrot.lane.b32.xlu0 %v1444, 96
      %v3345 = vpop.permute.xlu0 %3344
      %3346 = vrot.lane.b32.xlu0 %v1446, 96
      %v3347 = vpop.permute.xlu0 %3346
      %3348 = vrot.lane.b32.xlu0 %v1448, 96
      %v3349 = vpop.permute.xlu0 %3348
      %3350 = vrot.lane.b32.xlu0 %v1450, 96
      %v3351 = vpop.permute.xlu0 %3350
      %v3352 = vsel %vm1515, %v1436, 0
      %v3354 = vsel %vm1515, %v1438, 0
      %v3356 = vsel %vm1515, %v1440, 0
      %v3358 = vsel %vm1515, %v1442, 0
      %v3360 = vsel %vm1515, %v1444, 0
      %v3362 = vsel %vm1515, %v1446, 0
      %v3364 = vsel %vm1515, %v1448, 0
      %v3366 = vsel %vm1515, %v1450, 0
      %v3368 = vsel %vm1515, %v3337, 0
      %v3370 = vsel %vm1515, %v3339, 0
      %v3372 = vsel %vm1515, %v3341, 0
      %v3374 = vsel %vm1515, %v3343, 0
      %v3376 = vsel %vm1515, %v3345, 0
      %v3378 = vsel %vm1515, %v3347, 0
      %v3380 = vsel %vm1515, %v3349, 0
      %v3382 = vsel %vm1515, %v3351, 0
      %3384 = vmatprep.subr.mxu0 0.0
      %3385 = vmatpush1.xpose.msra.mxu0 %v3368
      %3386 = vmatprep.subr.mxu0 0.0
      %3387 = vmatpush1.xpose.msra.mxu0 %v3370
      %3388 = vmatprep.subr.mxu0 0.0
      %3389 = vmatpush1.xpose.msra.mxu0 %v3372
      %3390 = vmatprep.subr.mxu0 0.0
      %3391 = vmatpush1.xpose.msra.mxu0 %v3374
      %3392 = vmatprep.subr.mxu0 0.0
      %3393 = vmatpush1.xpose.msra.mxu0 %v3376
      %3394 = vmatprep.subr.mxu0 0.0
      %3395 = vmatpush1.xpose.msra.mxu0 %v3378
      %3396 = vmatprep.subr.mxu0 0.0
      %3397 = vmatpush1.xpose.msra.mxu0 %v3380
      %3398 = vmatprep.subr.mxu0 0.0
      %3399 = vmatpush1.xpose.msra.mxu0 %v3382
      %3400 = vmatprep.subr.mxu0 0.0
      %3401 = vmatpush1.xpose.msra.mxu0 0.0
      %3402 = vmatprep.subr.mxu0 0.0
      %3403 = vmatpush1.xpose.msra.mxu0 0.0
      %3404 = vmatprep.subr.mxu0 0.0
      %3405 = vmatpush1.xpose.msra.mxu0 0.0
      %3406 = vmatprep.subr.mxu0 0.0
      %3407 = vmatpush1.xpose.msra.mxu0 0.0
      %3408 = vmatprep.subr.mxu0 0.0
      %3409 = vmatpush1.xpose.msra.mxu0 0.0
      %3410 = vmatprep.subr.mxu0 0.0
      %3411 = vmatpush1.xpose.msra.mxu0 0.0
      %3412 = vmatprep.subr.mxu0 0.0
      %3413 = vmatpush1.xpose.msra.mxu0 0.0
      %3414 = vmatprep.subr.mxu0 0.0
      %3415 = vmatpush1.xpose.msra.mxu0 0.0
      %3416 = vmatprep.subr.mxu0 0.0
      %3417 = vmatpush1.xpose.msra.mxu0 0.0
      %3418 = vmatprep.subr.mxu0 0.0
      %3419 = vmatpush1.xpose.msra.mxu0 0.0
      %3420 = vmatprep.subr.mxu0 0.0
      %3421 = vmatpush1.xpose.msra.mxu0 0.0
      %3422 = vmatprep.subr.mxu0 0.0
      %3423 = vmatpush1.xpose.msra.mxu0 0.0
      %3424 = vmatprep.subr.mxu0 0.0
      %3425 = vmatpush1.xpose.msra.mxu0 0.0
      %3426 = vmatprep.subr.mxu0 0.0
      %3427 = vmatpush1.xpose.msra.mxu0 0.0
      %3428 = vmatprep.subr.mxu0 0.0
      %3429 = vmatpush1.xpose.msra.mxu0 0.0
      %3430 = vmatprep.subr.mxu0 0.0
      %3431 = vmatpush1.xpose.msra.mxu0 0.0
      %3432 = vmatprep.subr.mxu0 0.0
      %3433 = vmatpush1.xpose.msra.mxu0 0.0
      %3434 = vmatprep.subr.mxu0 0.0
      %3435 = vmatpush1.xpose.msra.mxu0 0.0
      %3436 = vmatprep.subr.mxu0 0.0
      %3437 = vmatpush1.xpose.msra.mxu0 0.0
      %3438 = vmatprep.subr.mxu0 0.0
      %3439 = vmatpush1.xpose.msra.mxu0 0.0
      %3440 = vmatprep.subr.mxu0 0.0
      %3441 = vmatpush1.xpose.msra.mxu0 0.0
      %3442 = vmatprep.subr.mxu0 0.0
      %3443 = vmatpush1.xpose.msra.mxu0 0.0
      %3444 = vmatprep.subr.mxu0 0.0
      %3445 = vmatpush1.xpose.msra.mxu0 0.0
      %3446 = vmatprep.subr.mxu0 0.0
      %3447 = vmatpush1.xpose.msra.mxu0 0.0
      %3448 = vmatprep.mubr.f32.mxu0 0.0
      %3449 = vmatmul.mubr.f32.gmra.mrb[0].mxu0 %v3352
      %v3450 = vpop.f32.mrb[0].mxu0
      %v3451 = vadd.f32 0.0, %v3450
      %v3452 = vpop.f32.mrb[0].mxu0
      %3453 = vmatprep.mubr.f32.mxu0 0.0
      %3454 = vmatmul.mubr.f32.gmra.mrb[0].mxu0 %v3354
      %v3455 = vpop.f32.mrb[0].mxu0
      %v3456 = vadd.f32 0.0, %v3455
      %v3457 = vpop.f32.mrb[0].mxu0
      %3458 = vmatprep.mubr.f32.mxu0 0.0
      %3459 = vmatmul.mubr.f32.gmra.mrb[0].mxu0 %v3356
      %v3460 = vpop.f32.mrb[0].mxu0
      %v3461 = vadd.f32 0.0, %v3460
      %v3462 = vpop.f32.mrb[0].mxu0
      %3463 = vmatprep.mubr.f32.mxu0 0.0
      %3464 = vmatmul.mubr.f32.gmra.mrb[0].mxu0 %v3358
      %v3465 = vpop.f32.mrb[0].mxu0
      %v3466 = vadd.f32 0.0, %v3465
      %v3467 = vpop.f32.mrb[0].mxu0
      %3468 = vmatprep.mubr.f32.mxu0 0.0
      %3469 = vmatmul.mubr.f32.gmra.mrb[0].mxu0 %v3360
      %v3470 = vpop.f32.mrb[0].mxu0
      %v3471 = vadd.f32 0.0, %v3470
      %v3472 = vpop.f32.mrb[0].mxu0
      %3473 = vmatprep.mubr.f32.mxu0 0.0
      %3474 = vmatmul.mubr.f32.gmra.mrb[0].mxu0 %v3362
      %v3475 = vpop.f32.mrb[0].mxu0
      %v3476 = vadd.f32 0.0, %v3475
      %v3477 = vpop.f32.mrb[0].mxu0
      %3478 = vmatprep.mubr.f32.mxu0 0.0
      %3479 = vmatmul.mubr.f32.gmra.mrb[0].mxu0 %v3364
      %v3480 = vpop.f32.mrb[0].mxu0
      %v3481 = vadd.f32 0.0, %v3480
      %v3482 = vpop.f32.mrb[0].mxu0
      %3483 = vmatprep.mubr.f32.mxu0 0.0
      %3484 = vmatmul.mubr.f32.gmra.mrb[0].mxu0 %v3366
      %v3485 = vpop.f32.mrb[0].mxu0
      %v3486 = vadd.f32 0.0, %v3485
      %v3487 = vpop.f32.mrb[0].mxu0
      %3488 = vdwg.mxu0
      %3489 = vrot.lane.b32.xlu0 %v1452, 96
      %v3490 = vpop.permute.xlu0 %3489
      %3491 = vrot.lane.b32.xlu0 %v1454, 96
      %v3492 = vpop.permute.xlu0 %3491
      %3493 = vrot.lane.b32.xlu0 %v1456, 96
      %v3494 = vpop.permute.xlu0 %3493
      %3495 = vrot.lane.b32.xlu0 %v1458, 96
      %v3496 = vpop.permute.xlu0 %3495
      %3497 = vrot.lane.b32.xlu0 %v1460, 96
      %v3498 = vpop.permute.xlu0 %3497
      %3499 = vrot.lane.b32.xlu0 %v1462, 96
      %v3500 = vpop.permute.xlu0 %3499
      %3501 = vrot.lane.b32.xlu0 %v1464, 96
      %v3502 = vpop.permute.xlu0 %3501
      %3503 = vrot.lane.b32.xlu0 %v1466, 96
      %v3504 = vpop.permute.xlu0 %3503
      %v3505 = vsel %vm1515, %v1452, 0
      %v3507 = vsel %vm1515, %v1454, 0
      %v3509 = vsel %vm1515, %v1456, 0
      %v3511 = vsel %vm1515, %v1458, 0
      %v3513 = vsel %vm1515, %v1460, 0
      %v3515 = vsel %vm1515, %v1462, 0
      %v3517 = vsel %vm1515, %v1464, 0
      %v3519 = vsel %vm1515, %v1466, 0
      %v3521 = vsel %vm1515, %v3490, 0
      %v3523 = vsel %vm1515, %v3492, 0
      %v3525 = vsel %vm1515, %v3494, 0
      %v3527 = vsel %vm1515, %v3496, 0
      %v3529 = vsel %vm1515, %v3498, 0
      %v3531 = vsel %vm1515, %v3500, 0
      %v3533 = vsel %vm1515, %v3502, 0
      %v3535 = vsel %vm1515, %v3504, 0
      %3537 = vmatprep.subr.mxu0 0.0
      %3538 = vmatpush1.xpose.msra.mxu0 %v3521
      %3539 = vmatprep.subr.mxu0 0.0
      %3540 = vmatpush1.xpose.msra.mxu0 %v3523
      %3541 = vmatprep.subr.mxu0 0.0
      %3542 = vmatpush1.xpose.msra.mxu0 %v3525
      %3543 = vmatprep.subr.mxu0 0.0
      %3544 = vmatpush1.xpose.msra.mxu0 %v3527
      %3545 = vmatprep.subr.mxu0 0.0
      %3546 = vmatpush1.xpose.msra.mxu0 %v3529
      %3547 = vmatprep.subr.mxu0 0.0
      %3548 = vmatpush1.xpose.msra.mxu0 %v3531
      %3549 = vmatprep.subr.mxu0 0.0
      %3550 = vmatpush1.xpose.msra.mxu0 %v3533
      %3551 = vmatprep.subr.mxu0 0.0
      %3552 = vmatpush1.xpose.msra.mxu0 %v3535
      %3553 = vmatprep.subr.mxu0 0.0
      %3554 = vmatpush1.xpose.msra.mxu0 0.0
      %3555 = vmatprep.subr.mxu0 0.0
      %3556 = vmatpush1.xpose.msra.mxu0 0.0
      %3557 = vmatprep.subr.mxu0 0.0
      %3558 = vmatpush1.xpose.msra.mxu0 0.0
      %3559 = vmatprep.subr.mxu0 0.0
      %3560 = vmatpush1.xpose.msra.mxu0 0.0
      %3561 = vmatprep.subr.mxu0 0.0
      %3562 = vmatpush1.xpose.msra.mxu0 0.0
      %3563 = vmatprep.subr.mxu0 0.0
      %3564 = vmatpush1.xpose.msra.mxu0 0.0
      %3565 = vmatprep.subr.mxu0 0.0
      %3566 = vmatpush1.xpose.msra.mxu0 0.0
      %3567 = vmatprep.subr.mxu0 0.0
      %3568 = vmatpush1.xpose.msra.mxu0 0.0
      %3569 = vmatprep.subr.mxu0 0.0
      %3570 = vmatpush1.xpose.msra.mxu0 0.0
      %3571 = vmatprep.subr.mxu0 0.0
      %3572 = vmatpush1.xpose.msra.mxu0 0.0
      %3573 = vmatprep.subr.mxu0 0.0
      %3574 = vmatpush1.xpose.msra.mxu0 0.0
      %3575 = vmatprep.subr.mxu0 0.0
      %3576 = vmatpush1.xpose.msra.mxu0 0.0
      %3577 = vmatprep.subr.mxu0 0.0
      %3578 = vmatpush1.xpose.msra.mxu0 0.0
      %3579 = vmatprep.subr.mxu0 0.0
      %3580 = vmatpush1.xpose.msra.mxu0 0.0
      %3581 = vmatprep.subr.mxu0 0.0
      %3582 = vmatpush1.xpose.msra.mxu0 0.0
      %3583 = vmatprep.subr.mxu0 0.0
      %3584 = vmatpush1.xpose.msra.mxu0 0.0
      %3585 = vmatprep.subr.mxu0 0.0
      %3586 = vmatpush1.xpose.msra.mxu0 0.0
      %3587 = vmatprep.subr.mxu0 0.0
      %3588 = vmatpush1.xpose.msra.mxu0 0.0
      %3589 = vmatprep.subr.mxu0 0.0
      %3590 = vmatpush1.xpose.msra.mxu0 0.0
      %3591 = vmatprep.subr.mxu0 0.0
      %3592 = vmatpush1.xpose.msra.mxu0 0.0
      %3593 = vmatprep.subr.mxu0 0.0
      %3594 = vmatpush1.xpose.msra.mxu0 0.0
      %3595 = vmatprep.subr.mxu0 0.0
      %3596 = vmatpush1.xpose.msra.mxu0 0.0
      %3597 = vmatprep.subr.mxu0 0.0
      %3598 = vmatpush1.xpose.msra.mxu0 0.0
      %3599 = vmatprep.subr.mxu0 0.0
      %3600 = vmatpush1.xpose.msra.mxu0 0.0
      %3601 = vmatprep.mubr.f32.mxu0 0.0
      %3602 = vmatmul.mubr.f32.gmra.mrb[0].mxu0 %v3505
      %v3603 = vpop.f32.mrb[0].mxu0
      %v3604 = vadd.f32 0.0, %v3603
      %v3605 = vpop.f32.mrb[0].mxu0
      %3606 = vmatprep.mubr.f32.mxu0 0.0
      %3607 = vmatmul.mubr.f32.gmra.mrb[0].mxu0 %v3507
      %v3608 = vpop.f32.mrb[0].mxu0
      %v3609 = vadd.f32 0.0, %v3608
      %v3610 = vpop.f32.mrb[0].mxu0
      %3611 = vmatprep.mubr.f32.mxu0 0.0
      %3612 = vmatmul.mubr.f32.gmra.mrb[0].mxu0 %v3509
      %v3613 = vpop.f32.mrb[0].mxu0
      %v3614 = vadd.f32 0.0, %v3613
      %v3615 = vpop.f32.mrb[0].mxu0
      %3616 = vmatprep.mubr.f32.mxu0 0.0
      %3617 = vmatmul.mubr.f32.gmra.mrb[0].mxu0 %v3511
      %v3618 = vpop.f32.mrb[0].mxu0
      %v3619 = vadd.f32 0.0, %v3618
      %v3620 = vpop.f32.mrb[0].mxu0
      %3621 = vmatprep.mubr.f32.mxu0 0.0
      %3622 = vmatmul.mubr.f32.gmra.mrb[0].mxu0 %v3513
      %v3623 = vpop.f32.mrb[0].mxu0
      %v3624 = vadd.f32 0.0, %v3623
      %v3625 = vpop.f32.mrb[0].mxu0
      %3626 = vmatprep.mubr.f32.mxu0 0.0
      %3627 = vmatmul.mubr.f32.gmra.mrb[0].mxu0 %v3515
      %v3628 = vpop.f32.mrb[0].mxu0
      %v3629 = vadd.f32 0.0, %v3628
      %v3630 = vpop.f32.mrb[0].mxu0
      %3631 = vmatprep.mubr.f32.mxu0 0.0
      %3632 = vmatmul.mubr.f32.gmra.mrb[0].mxu0 %v3517
      %v3633 = vpop.f32.mrb[0].mxu0
      %v3634 = vadd.f32 0.0, %v3633
      %v3635 = vpop.f32.mrb[0].mxu0
      %3636 = vmatprep.mubr.f32.mxu0 0.0
      %3637 = vmatmul.mubr.f32.gmra.mrb[0].mxu0 %v3519
      %v3638 = vpop.f32.mrb[0].mxu0
      %v3639 = vadd.f32 0.0, %v3638
      %v3640 = vpop.f32.mrb[0].mxu0
      %3641 = vdwg.mxu0
      %3642 = vrot.lane.b32.xlu0 %v1468, 96
      %v3643 = vpop.permute.xlu0 %3642
      %3644 = vrot.lane.b32.xlu0 %v1470, 96
      %v3645 = vpop.permute.xlu0 %3644
      %3646 = vrot.lane.b32.xlu0 %v1472, 96
      %v3647 = vpop.permute.xlu0 %3646
      %3648 = vrot.lane.b32.xlu0 %v1474, 96
      %v3649 = vpop.permute.xlu0 %3648
      %3650 = vrot.lane.b32.xlu0 %v1476, 96
      %v3651 = vpop.permute.xlu0 %3650
      %3652 = vrot.lane.b32.xlu0 %v1478, 96
      %v3653 = vpop.permute.xlu0 %3652
      %3654 = vrot.lane.b32.xlu0 %v1480, 96
      %v3655 = vpop.permute.xlu0 %3654
      %3656 = vrot.lane.b32.xlu0 %v1482, 96
      %v3657 = vpop.permute.xlu0 %3656
      %v3658 = vsel %vm1515, %v1468, 0
      %v3660 = vsel %vm1515, %v1470, 0
      %v3662 = vsel %vm1515, %v1472, 0
      %v3664 = vsel %vm1515, %v1474, 0
      %v3666 = vsel %vm1515, %v1476, 0
      %v3668 = vsel %vm1515, %v1478, 0
      %v3670 = vsel %vm1515, %v1480, 0
      %v3672 = vsel %vm1515, %v1482, 0
      %v3674 = vsel %vm1515, %v3643, 0
      %v3676 = vsel %vm1515, %v3645, 0
      %v3678 = vsel %vm1515, %v3647, 0
      %v3680 = vsel %vm1515, %v3649, 0
      %v3682 = vsel %vm1515, %v3651, 0
      %v3684 = vsel %vm1515, %v3653, 0
      %v3686 = vsel %vm1515, %v3655, 0
      %v3688 = vsel %vm1515, %v3657, 0
      %3690 = vmatprep.subr.mxu0 0.0
      %3691 = vmatpush1.xpose.msra.mxu0 %v3674
      %3692 = vmatprep.subr.mxu0 0.0
      %3693 = vmatpush1.xpose.msra.mxu0 %v3676
      %3694 = vmatprep.subr.mxu0 0.0
      %3695 = vmatpush1.xpose.msra.mxu0 %v3678
      %3696 = vmatprep.subr.mxu0 0.0
      %3697 = vmatpush1.xpose.msra.mxu0 %v3680
      %3698 = vmatprep.subr.mxu0 0.0
      %3699 = vmatpush1.xpose.msra.mxu0 %v3682
      %3700 = vmatprep.subr.mxu0 0.0
      %3701 = vmatpush1.xpose.msra.mxu0 %v3684
      %3702 = vmatprep.subr.mxu0 0.0
      %3703 = vmatpush1.xpose.msra.mxu0 %v3686
      %3704 = vmatprep.subr.mxu0 0.0
      %3705 = vmatpush1.xpose.msra.mxu0 %v3688
      %3706 = vmatprep.subr.mxu0 0.0
      %3707 = vmatpush1.xpose.msra.mxu0 0.0
      %3708 = vmatprep.subr.mxu0 0.0
      %3709 = vmatpush1.xpose.msra.mxu0 0.0
      %3710 = vmatprep.subr.mxu0 0.0
      %3711 = vmatpush1.xpose.msra.mxu0 0.0
      %3712 = vmatprep.subr.mxu0 0.0
      %3713 = vmatpush1.xpose.msra.mxu0 0.0
      %3714 = vmatprep.subr.mxu0 0.0
      %3715 = vmatpush1.xpose.msra.mxu0 0.0
      %3716 = vmatprep.subr.mxu0 0.0
      %3717 = vmatpush1.xpose.msra.mxu0 0.0
      %3718 = vmatprep.subr.mxu0 0.0
      %3719 = vmatpush1.xpose.msra.mxu0 0.0
      %3720 = vmatprep.subr.mxu0 0.0
      %3721 = vmatpush1.xpose.msra.mxu0 0.0
      %3722 = vmatprep.subr.mxu0 0.0
      %3723 = vmatpush1.xpose.msra.mxu0 0.0
      %3724 = vmatprep.subr.mxu0 0.0
      %3725 = vmatpush1.xpose.msra.mxu0 0.0
      %3726 = vmatprep.subr.mxu0 0.0
      %3727 = vmatpush1.xpose.msra.mxu0 0.0
      %3728 = vmatprep.subr.mxu0 0.0
      %3729 = vmatpush1.xpose.msra.mxu0 0.0
      %3730 = vmatprep.subr.mxu0 0.0
      %3731 = vmatpush1.xpose.msra.mxu0 0.0
      %3732 = vmatprep.subr.mxu0 0.0
      %3733 = vmatpush1.xpose.msra.mxu0 0.0
      %3734 = vmatprep.subr.mxu0 0.0
      %3735 = vmatpush1.xpose.msra.mxu0 0.0
      %3736 = vmatprep.subr.mxu0 0.0
      %3737 = vmatpush1.xpose.msra.mxu0 0.0
      %3738 = vmatprep.subr.mxu0 0.0
      %3739 = vmatpush1.xpose.msra.mxu0 0.0
      %3740 = vmatprep.subr.mxu0 0.0
      %3741 = vmatpush1.xpose.msra.mxu0 0.0
      %3742 = vmatprep.subr.mxu0 0.0
      %3743 = vmatpush1.xpose.msra.mxu0 0.0
      %3744 = vmatprep.subr.mxu0 0.0
      %3745 = vmatpush1.xpose.msra.mxu0 0.0
      %3746 = vmatprep.subr.mxu0 0.0
      %3747 = vmatpush1.xpose.msra.mxu0 0.0
      %3748 = vmatprep.subr.mxu0 0.0
      %3749 = vmatpush1.xpose.msra.mxu0 0.0
      %3750 = vmatprep.subr.mxu0 0.0
      %3751 = vmatpush1.xpose.msra.mxu0 0.0
      %3752 = vmatprep.subr.mxu0 0.0
      %3753 = vmatpush1.xpose.msra.mxu0 0.0
      %3754 = vmatprep.mubr.f32.mxu0 0.0
      %3755 = vmatmul.mubr.f32.gmra.mrb[0].mxu0 %v3658
      %v3756 = vpop.f32.mrb[0].mxu0
      %v3757 = vadd.f32 0.0, %v3756
      %v3758 = vpop.f32.mrb[0].mxu0
      %3759 = vmatprep.mubr.f32.mxu0 0.0
      %3760 = vmatmul.mubr.f32.gmra.mrb[0].mxu0 %v3660
      %v3761 = vpop.f32.mrb[0].mxu0
      %v3762 = vadd.f32 0.0, %v3761
      %v3763 = vpop.f32.mrb[0].mxu0
      %3764 = vmatprep.mubr.f32.mxu0 0.0
      %3765 = vmatmul.mubr.f32.gmra.mrb[0].mxu0 %v3662
      %v3766 = vpop.f32.mrb[0].mxu0
      %v3767 = vadd.f32 0.0, %v3766
      %v3768 = vpop.f32.mrb[0].mxu0
      %3769 = vmatprep.mubr.f32.mxu0 0.0
      %3770 = vmatmul.mubr.f32.gmra.mrb[0].mxu0 %v3664
      %v3771 = vpop.f32.mrb[0].mxu0
      %v3772 = vadd.f32 0.0, %v3771
      %v3773 = vpop.f32.mrb[0].mxu0
      %3774 = vmatprep.mubr.f32.mxu0 0.0
      %3775 = vmatmul.mubr.f32.gmra.mrb[0].mxu0 %v3666
      %v3776 = vpop.f32.mrb[0].mxu0
      %v3777 = vadd.f32 0.0, %v3776
      %v3778 = vpop.f32.mrb[0].mxu0
      %3779 = vmatprep.mubr.f32.mxu0 0.0
      %3780 = vmatmul.mubr.f32.gmra.mrb[0].mxu0 %v3668
      %v3781 = vpop.f32.mrb[0].mxu0
      %v3782 = vadd.f32 0.0, %v3781
      %v3783 = vpop.f32.mrb[0].mxu0
      %3784 = vmatprep.mubr.f32.mxu0 0.0
      %3785 = vmatmul.mubr.f32.gmra.mrb[0].mxu0 %v3670
      %v3786 = vpop.f32.mrb[0].mxu0
      %v3787 = vadd.f32 0.0, %v3786
      %v3788 = vpop.f32.mrb[0].mxu0
      %3789 = vmatprep.mubr.f32.mxu0 0.0
      %3790 = vmatmul.mubr.f32.gmra.mrb[0].mxu0 %v3672
      %v3791 = vpop.f32.mrb[0].mxu0
      %v3792 = vadd.f32 0.0, %v3791
      %v3793 = vpop.f32.mrb[0].mxu0
      %3794 = vdwg.mxu0
      %3795 = vrot.lane.b32.xlu0 %v1484, 96
      %v3796 = vpop.permute.xlu0 %3795
      %3797 = vrot.lane.b32.xlu0 %v1486, 96
      %v3798 = vpop.permute.xlu0 %3797
      %3799 = vrot.lane.b32.xlu0 %v1488, 96
      %v3800 = vpop.permute.xlu0 %3799
      %3801 = vrot.lane.b32.xlu0 %v1490, 96
      %v3802 = vpop.permute.xlu0 %3801
      %3803 = vrot.lane.b32.xlu0 %v1492, 96
      %v3804 = vpop.permute.xlu0 %3803
      %3805 = vrot.lane.b32.xlu0 %v1494, 96
      %v3806 = vpop.permute.xlu0 %3805
      %3807 = vrot.lane.b32.xlu0 %v1496, 96
      %v3808 = vpop.permute.xlu0 %3807
      %3809 = vrot.lane.b32.xlu0 %v1498, 96
      %v3810 = vpop.permute.xlu0 %3809
      %v3811 = vsel %vm1515, %v1484, 0
      %v3813 = vsel %vm1515, %v1486, 0
      %v3815 = vsel %vm1515, %v1488, 0
      %v3817 = vsel %vm1515, %v1490, 0
      %v3819 = vsel %vm1515, %v1492, 0
      %v3821 = vsel %vm1515, %v1494, 0
      %v3823 = vsel %vm1515, %v1496, 0
      %v3825 = vsel %vm1515, %v1498, 0
      %v3827 = vsel %vm1515, %v3796, 0
      %v3829 = vsel %vm1515, %v3798, 0
      %v3831 = vsel %vm1515, %v3800, 0
      %v3833 = vsel %vm1515, %v3802, 0
      %v3835 = vsel %vm1515, %v3804, 0
      %v3837 = vsel %vm1515, %v3806, 0
      %v3839 = vsel %vm1515, %v3808, 0
      %v3841 = vsel %vm1515, %v3810, 0
      %3843 = vmatprep.subr.mxu0 0.0
      %3844 = vmatpush1.xpose.msra.mxu0 %v3827
      %3845 = vmatprep.subr.mxu0 0.0
      %3846 = vmatpush1.xpose.msra.mxu0 %v3829
      %3847 = vmatprep.subr.mxu0 0.0
      %3848 = vmatpush1.xpose.msra.mxu0 %v3831
      %3849 = vmatprep.subr.mxu0 0.0
      %3850 = vmatpush1.xpose.msra.mxu0 %v3833
      %3851 = vmatprep.subr.mxu0 0.0
      %3852 = vmatpush1.xpose.msra.mxu0 %v3835
      %3853 = vmatprep.subr.mxu0 0.0
      %3854 = vmatpush1.xpose.msra.mxu0 %v3837
      %3855 = vmatprep.subr.mxu0 0.0
      %3856 = vmatpush1.xpose.msra.mxu0 %v3839
      %3857 = vmatprep.subr.mxu0 0.0
      %3858 = vmatpush1.xpose.msra.mxu0 %v3841
      %3859 = vmatprep.subr.mxu0 0.0
      %3860 = vmatpush1.xpose.msra.mxu0 0.0
      %3861 = vmatprep.subr.mxu0 0.0
      %3862 = vmatpush1.xpose.msra.mxu0 0.0
      %3863 = vmatprep.subr.mxu0 0.0
      %3864 = vmatpush1.xpose.msra.mxu0 0.0
      %3865 = vmatprep.subr.mxu0 0.0
      %3866 = vmatpush1.xpose.msra.mxu0 0.0
      %3867 = vmatprep.subr.mxu0 0.0
      %3868 = vmatpush1.xpose.msra.mxu0 0.0
      %3869 = vmatprep.subr.mxu0 0.0
      %3870 = vmatpush1.xpose.msra.mxu0 0.0
      %3871 = vmatprep.subr.mxu0 0.0
      %3872 = vmatpush1.xpose.msra.mxu0 0.0
      %3873 = vmatprep.subr.mxu0 0.0
      %3874 = vmatpush1.xpose.msra.mxu0 0.0
      %3875 = vmatprep.subr.mxu0 0.0
      %3876 = vmatpush1.xpose.msra.mxu0 0.0
      %3877 = vmatprep.subr.mxu0 0.0
      %3878 = vmatpush1.xpose.msra.mxu0 0.0
      %3879 = vmatprep.subr.mxu0 0.0
      %3880 = vmatpush1.xpose.msra.mxu0 0.0
      %3881 = vmatprep.subr.mxu0 0.0
      %3882 = vmatpush1.xpose.msra.mxu0 0.0
      %3883 = vmatprep.subr.mxu0 0.0
      %3884 = vmatpush1.xpose.msra.mxu0 0.0
      %3885 = vmatprep.subr.mxu0 0.0
      %3886 = vmatpush1.xpose.msra.mxu0 0.0
      %3887 = vmatprep.subr.mxu0 0.0
      %3888 = vmatpush1.xpose.msra.mxu0 0.0
      %3889 = vmatprep.subr.mxu0 0.0
      %3890 = vmatpush1.xpose.msra.mxu0 0.0
      %3891 = vmatprep.subr.mxu0 0.0
      %3892 = vmatpush1.xpose.msra.mxu0 0.0
      %3893 = vmatprep.subr.mxu0 0.0
      %3894 = vmatpush1.xpose.msra.mxu0 0.0
      %3895 = vmatprep.subr.mxu0 0.0
      %3896 = vmatpush1.xpose.msra.mxu0 0.0
      %3897 = vmatprep.subr.mxu0 0.0
      %3898 = vmatpush1.xpose.msra.mxu0 0.0
      %3899 = vmatprep.subr.mxu0 0.0
      %3900 = vmatpush1.xpose.msra.mxu0 0.0
      %3901 = vmatprep.subr.mxu0 0.0
      %3902 = vmatpush1.xpose.msra.mxu0 0.0
      %3903 = vmatprep.subr.mxu0 0.0
      %3904 = vmatpush1.xpose.msra.mxu0 0.0
      %3905 = vmatprep.subr.mxu0 0.0
      %3906 = vmatpush1.xpose.msra.mxu0 0.0
      %3907 = vmatprep.mubr.f32.mxu0 0.0
      %3908 = vmatmul.mubr.f32.gmra.mrb[0].mxu0 %v3811
      %v3909 = vpop.f32.mrb[0].mxu0
      %v3910 = vadd.f32 0.0, %v3909
      %v3911 = vpop.f32.mrb[0].mxu0
      %3912 = vmatprep.mubr.f32.mxu0 0.0
      %3913 = vmatmul.mubr.f32.gmra.mrb[0].mxu0 %v3813
      %v3914 = vpop.f32.mrb[0].mxu0
      %v3915 = vadd.f32 0.0, %v3914
      %v3916 = vpop.f32.mrb[0].mxu0
      %3917 = vmatprep.mubr.f32.mxu0 0.0
      %3918 = vmatmul.mubr.f32.gmra.mrb[0].mxu0 %v3815
      %v3919 = vpop.f32.mrb[0].mxu0
      %v3920 = vadd.f32 0.0, %v3919
      %v3921 = vpop.f32.mrb[0].mxu0
      %3922 = vmatprep.mubr.f32.mxu0 0.0
      %3923 = vmatmul.mubr.f32.gmra.mrb[0].mxu0 %v3817
      %v3924 = vpop.f32.mrb[0].mxu0
      %v3925 = vadd.f32 0.0, %v3924
      %v3926 = vpop.f32.mrb[0].mxu0
      %3927 = vmatprep.mubr.f32.mxu0 0.0
      %3928 = vmatmul.mubr.f32.gmra.mrb[0].mxu0 %v3819
      %v3929 = vpop.f32.mrb[0].mxu0
      %v3930 = vadd.f32 0.0, %v3929
      %v3931 = vpop.f32.mrb[0].mxu0
      %3932 = vmatprep.mubr.f32.mxu0 0.0
      %3933 = vmatmul.mubr.f32.gmra.mrb[0].mxu0 %v3821
      %v3934 = vpop.f32.mrb[0].mxu0
      %v3935 = vadd.f32 0.0, %v3934
      %v3936 = vpop.f32.mrb[0].mxu0
      %3937 = vmatprep.mubr.f32.mxu0 0.0
      %3938 = vmatmul.mubr.f32.gmra.mrb[0].mxu0 %v3823
      %v3939 = vpop.f32.mrb[0].mxu0
      %v3940 = vadd.f32 0.0, %v3939
      %v3941 = vpop.f32.mrb[0].mxu0
      %3942 = vmatprep.mubr.f32.mxu0 0.0
      %3943 = vmatmul.mubr.f32.gmra.mrb[0].mxu0 %v3825
      %v3944 = vpop.f32.mrb[0].mxu0
      %v3945 = vadd.f32 0.0, %v3944
      %v3946 = vpop.f32.mrb[0].mxu0
      %3947 = vdwg.mxu0
      %v3948 = vmul.f32 %v1615, 0.35355338
      %v3949 = vmul.f32 %v1620, 0.35355338
      %v3950 = vmul.f32 %v1625, 0.35355338
      %v3951 = vmul.f32 %v1630, 0.35355338
      %v3952 = vmul.f32 %v1635, 0.35355338
      %v3953 = vmul.f32 %v1640, 0.35355338
      %v3954 = vmul.f32 %v1645, 0.35355338
      %v3955 = vmul.f32 %v1650, 0.35355338
      %v3956 = vmul.f32 %v1768, 0.35355338
      %v3957 = vmul.f32 %v1773, 0.35355338
      %v3958 = vmul.f32 %v1778, 0.35355338
      %v3959 = vmul.f32 %v1783, 0.35355338
      %v3960 = vmul.f32 %v1788, 0.35355338
      %v3961 = vmul.f32 %v1793, 0.35355338
      %v3962 = vmul.f32 %v1798, 0.35355338
      %v3963 = vmul.f32 %v1803, 0.35355338
      %v3964 = vmul.f32 %v1921, 0.35355338
      %v3965 = vmul.f32 %v1926, 0.35355338
      %v3966 = vmul.f32 %v1931, 0.35355338
      %v3967 = vmul.f32 %v1936, 0.35355338
      %v3968 = vmul.f32 %v1941, 0.35355338
      %v3969 = vmul.f32 %v1946, 0.35355338
      %v3970 = vmul.f32 %v1951, 0.35355338
      %v3971 = vmul.f32 %v1956, 0.35355338
      %v3972 = vmul.f32 %v2074, 0.35355338
      %v3973 = vmul.f32 %v2079, 0.35355338
      %v3974 = vmul.f32 %v2084, 0.35355338
      %v3975 = vmul.f32 %v2089, 0.35355338
      %v3976 = vmul.f32 %v2094, 0.35355338
      %v3977 = vmul.f32 %v2099, 0.35355338
      %v3978 = vmul.f32 %v2104, 0.35355338
      %v3979 = vmul.f32 %v2109, 0.35355338
      %v3980 = vmul.f32 %v2227, 0.35355338
      %v3981 = vmul.f32 %v2232, 0.35355338
      %v3982 = vmul.f32 %v2237, 0.35355338
      %v3983 = vmul.f32 %v2242, 0.35355338
      %v3984 = vmul.f32 %v2247, 0.35355338
      %v3985 = vmul.f32 %v2252, 0.35355338
      %v3986 = vmul.f32 %v2257, 0.35355338
      %v3987 = vmul.f32 %v2262, 0.35355338
      %v3988 = vmul.f32 %v2380, 0.35355338
      %v3989 = vmul.f32 %v2385, 0.35355338
      %v3990 = vmul.f32 %v2390, 0.35355338
      %v3991 = vmul.f32 %v2395, 0.35355338
      %v3992 = vmul.f32 %v2400, 0.35355338
      %v3993 = vmul.f32 %v2405, 0.35355338
      %v3994 = vmul.f32 %v2410, 0.35355338
      %v3995 = vmul.f32 %v2415, 0.35355338
      %v3996 = vmul.f32 %v2533, 0.35355338
      %v3997 = vmul.f32 %v2538, 0.35355338
      %v3998 = vmul.f32 %v2543, 0.35355338
      %v3999 = vmul.f32 %v2548, 0.35355338
      %v4000 = vmul.f32 %v2553, 0.35355338
      %v4001 = vmul.f32 %v2558, 0.35355338
      %v4002 = vmul.f32 %v2563, 0.35355338
      %v4003 = vmul.f32 %v2568, 0.35355338
      %v4004 = vmul.f32 %v2686, 0.35355338
      %v4005 = vmul.f32 %v2691, 0.35355338
      %v4006 = vmul.f32 %v2696, 0.35355338
      %v4007 = vmul.f32 %v2701, 0.35355338
      %v4008 = vmul.f32 %v2706, 0.35355338
      %v4009 = vmul.f32 %v2711, 0.35355338
      %v4010 = vmul.f32 %v2716, 0.35355338
      %v4011 = vmul.f32 %v2721, 0.35355338
      %v4012 = vmul.f32 %v2839, 0.35355338
      %v4013 = vmul.f32 %v2844, 0.35355338
      %v4014 = vmul.f32 %v2849, 0.35355338
      %v4015 = vmul.f32 %v2854, 0.35355338
      %v4016 = vmul.f32 %v2859, 0.35355338
      %v4017 = vmul.f32 %v2864, 0.35355338
      %v4018 = vmul.f32 %v2869, 0.35355338
      %v4019 = vmul.f32 %v2874, 0.35355338
      %v4020 = vmul.f32 %v2992, 0.35355338
      %v4021 = vmul.f32 %v2997, 0.35355338
      %v4022 = vmul.f32 %v3002, 0.35355338
      %v4023 = vmul.f32 %v3007, 0.35355338
      %v4024 = vmul.f32 %v3012, 0.35355338
      %v4025 = vmul.f32 %v3017, 0.35355338
      %v4026 = vmul.f32 %v3022, 0.35355338
      %v4027 = vmul.f32 %v3027, 0.35355338
      %v4028 = vmul.f32 %v3145, 0.35355338
      %v4029 = vmul.f32 %v3150, 0.35355338
      %v4030 = vmul.f32 %v3155, 0.35355338
      %v4031 = vmul.f32 %v3160, 0.35355338
      %v4032 = vmul.f32 %v3165, 0.35355338
      %v4033 = vmul.f32 %v3170, 0.35355338
      %v4034 = vmul.f32 %v3175, 0.35355338
      %v4035 = vmul.f32 %v3180, 0.35355338
      %v4036 = vmul.f32 %v3298, 0.35355338
      %v4037 = vmul.f32 %v3303, 0.35355338
      %v4038 = vmul.f32 %v3308, 0.35355338
      %v4039 = vmul.f32 %v3313, 0.35355338
      %v4040 = vmul.f32 %v3318, 0.35355338
      %v4041 = vmul.f32 %v3323, 0.35355338
      %v4042 = vmul.f32 %v3328, 0.35355338
      %v4043 = vmul.f32 %v3333, 0.35355338
      %v4044 = vmul.f32 %v3451, 0.35355338
      %v4045 = vmul.f32 %v3456, 0.35355338
      %v4046 = vmul.f32 %v3461, 0.35355338
      %v4047 = vmul.f32 %v3466, 0.35355338
      %v4048 = vmul.f32 %v3471, 0.35355338
      %v4049 = vmul.f32 %v3476, 0.35355338
      %v4050 = vmul.f32 %v3481, 0.35355338
      %v4051 = vmul.f32 %v3486, 0.35355338
      %v4052 = vmul.f32 %v3604, 0.35355338
      %v4053 = vmul.f32 %v3609, 0.35355338
      %v4054 = vmul.f32 %v3614, 0.35355338
      %v4055 = vmul.f32 %v3619, 0.35355338
      %v4056 = vmul.f32 %v3624, 0.35355338
      %v4057 = vmul.f32 %v3629, 0.35355338
      %v4058 = vmul.f32 %v3634, 0.35355338
      %v4059 = vmul.f32 %v3639, 0.35355338
      %v4060 = vmul.f32 %v3757, 0.35355338
      %v4061 = vmul.f32 %v3762, 0.35355338
      %v4062 = vmul.f32 %v3767, 0.35355338
      %v4063 = vmul.f32 %v3772, 0.35355338
      %v4064 = vmul.f32 %v3777, 0.35355338
      %v4065 = vmul.f32 %v3782, 0.35355338
      %v4066 = vmul.f32 %v3787, 0.35355338
      %v4067 = vmul.f32 %v3792, 0.35355338
      %v4068 = vmul.f32 %v3910, 0.35355338
      %v4069 = vmul.f32 %v3915, 0.35355338
      %v4070 = vmul.f32 %v3920, 0.35355338
      %v4071 = vmul.f32 %v3925, 0.35355338
      %v4072 = vmul.f32 %v3930, 0.35355338
      %v4073 = vmul.f32 %v3935, 0.35355338
      %v4074 = vmul.f32 %v3940, 0.35355338
      %v4075 = vmul.f32 %v3945, 0.35355338
      %vm4076 = vcmask 523264
      %v4077 = vsel %vm4076, %v3948, -inf
      %4078 = vmax.xlane.f32.xlu0 %v4077
      %v4079 = vpop.xlane.xlu0 %4078
      %v4080 = vsel %vm4076, %v3949, -inf
      %4081 = vmax.xlane.f32.xlu0 %v4080
      %v4082 = vpop.xlane.xlu0 %4081
      %v4083 = vsel %vm4076, %v3950, -inf
      %4084 = vmax.xlane.f32.xlu0 %v4083
      %v4085 = vpop.xlane.xlu0 %4084
      %v4086 = vsel %vm4076, %v3951, -inf
      %4087 = vmax.xlane.f32.xlu0 %v4086
      %v4088 = vpop.xlane.xlu0 %4087
      %v4089 = vsel %vm4076, %v3952, -inf
      %4090 = vmax.xlane.f32.xlu0 %v4089
      %v4091 = vpop.xlane.xlu0 %4090
      %v4092 = vsel %vm4076, %v3953, -inf
      %4093 = vmax.xlane.f32.xlu0 %v4092
      %v4094 = vpop.xlane.xlu0 %4093
      %v4095 = vsel %vm4076, %v3954, -inf
      %4096 = vmax.xlane.f32.xlu0 %v4095
      %v4097 = vpop.xlane.xlu0 %4096
      %v4098 = vsel %vm4076, %v3955, -inf
      %4099 = vmax.xlane.f32.xlu0 %v4098
      %v4100 = vpop.xlane.xlu0 %4099
      %v4101 = vsel %vm4076, %v3956, -inf
      %4102 = vmax.xlane.f32.xlu0 %v4101
      %v4103 = vpop.xlane.xlu0 %4102
      %v4104 = vsel %vm4076, %v3957, -inf
      %4105 = vmax.xlane.f32.xlu0 %v4104
      %v4106 = vpop.xlane.xlu0 %4105
      %v4107 = vsel %vm4076, %v3958, -inf
      %4108 = vmax.xlane.f32.xlu0 %v4107
      %v4109 = vpop.xlane.xlu0 %4108
      %v4110 = vsel %vm4076, %v3959, -inf
      %4111 = vmax.xlane.f32.xlu0 %v4110
      %v4112 = vpop.xlane.xlu0 %4111
      %v4113 = vsel %vm4076, %v3960, -inf
      %4114 = vmax.xlane.f32.xlu0 %v4113
      %v4115 = vpop.xlane.xlu0 %4114
      %v4116 = vsel %vm4076, %v3961, -inf
      %4117 = vmax.xlane.f32.xlu0 %v4116
      %v4118 = vpop.xlane.xlu0 %4117
      %v4119 = vsel %vm4076, %v3962, -inf
      %4120 = vmax.xlane.f32.xlu0 %v4119
      %v4121 = vpop.xlane.xlu0 %4120
      %v4122 = vsel %vm4076, %v3963, -inf
      %4123 = vmax.xlane.f32.xlu0 %v4122
      %v4124 = vpop.xlane.xlu0 %4123
      %v4125 = vsel %vm4076, %v3964, -inf
      %4126 = vmax.xlane.f32.xlu0 %v4125
      %v4127 = vpop.xlane.xlu0 %4126
      %v4128 = vsel %vm4076, %v3965, -inf
      %4129 = vmax.xlane.f32.xlu0 %v4128
      %v4130 = vpop.xlane.xlu0 %4129
      %v4131 = vsel %vm4076, %v3966, -inf
      %4132 = vmax.xlane.f32.xlu0 %v4131
      %v4133 = vpop.xlane.xlu0 %4132
      %v4134 = vsel %vm4076, %v3967, -inf
      %4135 = vmax.xlane.f32.xlu0 %v4134
      %v4136 = vpop.xlane.xlu0 %4135
      %v4137 = vsel %vm4076, %v3968, -inf
      %4138 = vmax.xlane.f32.xlu0 %v4137
      %v4139 = vpop.xlane.xlu0 %4138
      %v4140 = vsel %vm4076, %v3969, -inf
      %4141 = vmax.xlane.f32.xlu0 %v4140
      %v4142 = vpop.xlane.xlu0 %4141
      %v4143 = vsel %vm4076, %v3970, -inf
      %4144 = vmax.xlane.f32.xlu0 %v4143
      %v4145 = vpop.xlane.xlu0 %4144
      %v4146 = vsel %vm4076, %v3971, -inf
      %4147 = vmax.xlane.f32.xlu0 %v4146
      %v4148 = vpop.xlane.xlu0 %4147
      %v4149 = vsel %vm4076, %v3972, -inf
      %4150 = vmax.xlane.f32.xlu0 %v4149
      %v4151 = vpop.xlane.xlu0 %4150
      %v4152 = vsel %vm4076, %v3973, -inf
      %4153 = vmax.xlane.f32.xlu0 %v4152
      %v4154 = vpop.xlane.xlu0 %4153
      %v4155 = vsel %vm4076, %v3974, -inf
      %4156 = vmax.xlane.f32.xlu0 %v4155
      %v4157 = vpop.xlane.xlu0 %4156
      %v4158 = vsel %vm4076, %v3975, -inf
      %4159 = vmax.xlane.f32.xlu0 %v4158
      %v4160 = vpop.xlane.xlu0 %4159
      %v4161 = vsel %vm4076, %v3976, -inf
      %4162 = vmax.xlane.f32.xlu0 %v4161
      %v4163 = vpop.xlane.xlu0 %4162
      %v4164 = vsel %vm4076, %v3977, -inf
      %4165 = vmax.xlane.f32.xlu0 %v4164
      %v4166 = vpop.xlane.xlu0 %4165
      %v4167 = vsel %vm4076, %v3978, -inf
      %4168 = vmax.xlane.f32.xlu0 %v4167
      %v4169 = vpop.xlane.xlu0 %4168
      %v4170 = vsel %vm4076, %v3979, -inf
      %4171 = vmax.xlane.f32.xlu0 %v4170
      %v4172 = vpop.xlane.xlu0 %4171
      %v4173 = vsel %vm4076, %v3980, -inf
      %4174 = vmax.xlane.f32.xlu0 %v4173
      %v4175 = vpop.xlane.xlu0 %4174
      %v4176 = vsel %vm4076, %v3981, -inf
      %4177 = vmax.xlane.f32.xlu0 %v4176
      %v4178 = vpop.xlane.xlu0 %4177
      %v4179 = vsel %vm4076, %v3982, -inf
      %4180 = vmax.xlane.f32.xlu0 %v4179
      %v4181 = vpop.xlane.xlu0 %4180
      %v4182 = vsel %vm4076, %v3983, -inf
      %4183 = vmax.xlane.f32.xlu0 %v4182
      %v4184 = vpop.xlane.xlu0 %4183
      %v4185 = vsel %vm4076, %v3984, -inf
      %4186 = vmax.xlane.f32.xlu0 %v4185
      %v4187 = vpop.xlane.xlu0 %4186
      %v4188 = vsel %vm4076, %v3985, -inf
      %4189 = vmax.xlane.f32.xlu0 %v4188
      %v4190 = vpop.xlane.xlu0 %4189
      %v4191 = vsel %vm4076, %v3986, -inf
      %4192 = vmax.xlane.f32.xlu0 %v4191
      %v4193 = vpop.xlane.xlu0 %4192
      %v4194 = vsel %vm4076, %v3987, -inf
      %4195 = vmax.xlane.f32.xlu0 %v4194
      %v4196 = vpop.xlane.xlu0 %4195
      %v4197 = vsel %vm4076, %v3988, -inf
      %4198 = vmax.xlane.f32.xlu0 %v4197
      %v4199 = vpop.xlane.xlu0 %4198
      %v4200 = vsel %vm4076, %v3989, -inf
      %4201 = vmax.xlane.f32.xlu0 %v4200
      %v4202 = vpop.xlane.xlu0 %4201
      %v4203 = vsel %vm4076, %v3990, -inf
      %4204 = vmax.xlane.f32.xlu0 %v4203
      %v4205 = vpop.xlane.xlu0 %4204
      %v4206 = vsel %vm4076, %v3991, -inf
      %4207 = vmax.xlane.f32.xlu0 %v4206
      %v4208 = vpop.xlane.xlu0 %4207
      %v4209 = vsel %vm4076, %v3992, -inf
      %4210 = vmax.xlane.f32.xlu0 %v4209
      %v4211 = vpop.xlane.xlu0 %4210
      %v4212 = vsel %vm4076, %v3993, -inf
      %4213 = vmax.xlane.f32.xlu0 %v4212
      %v4214 = vpop.xlane.xlu0 %4213
      %v4215 = vsel %vm4076, %v3994, -inf
      %4216 = vmax.xlane.f32.xlu0 %v4215
      %v4217 = vpop.xlane.xlu0 %4216
      %v4218 = vsel %vm4076, %v3995, -inf
      %4219 = vmax.xlane.f32.xlu0 %v4218
      %v4220 = vpop.xlane.xlu0 %4219
      %v4221 = vsel %vm4076, %v3996, -inf
      %4222 = vmax.xlane.f32.xlu0 %v4221
      %v4223 = vpop.xlane.xlu0 %4222
      %v4224 = vsel %vm4076, %v3997, -inf
      %4225 = vmax.xlane.f32.xlu0 %v4224
      %v4226 = vpop.xlane.xlu0 %4225
      %v4227 = vsel %vm4076, %v3998, -inf
      %4228 = vmax.xlane.f32.xlu0 %v4227
      %v4229 = vpop.xlane.xlu0 %4228
      %v4230 = vsel %vm4076, %v3999, -inf
      %4231 = vmax.xlane.f32.xlu0 %v4230
      %v4232 = vpop.xlane.xlu0 %4231
      %v4233 = vsel %vm4076, %v4000, -inf
      %4234 = vmax.xlane.f32.xlu0 %v4233
      %v4235 = vpop.xlane.xlu0 %4234
      %v4236 = vsel %vm4076, %v4001, -inf
      %4237 = vmax.xlane.f32.xlu0 %v4236
      %v4238 = vpop.xlane.xlu0 %4237
      %v4239 = vsel %vm4076, %v4002, -inf
      %4240 = vmax.xlane.f32.xlu0 %v4239
      %v4241 = vpop.xlane.xlu0 %4240
      %v4242 = vsel %vm4076, %v4003, -inf
      %4243 = vmax.xlane.f32.xlu0 %v4242
      %v4244 = vpop.xlane.xlu0 %4243
      %v4245 = vsel %vm4076, %v4004, -inf
      %4246 = vmax.xlane.f32.xlu0 %v4245
      %v4247 = vpop.xlane.xlu0 %4246
      %v4248 = vsel %vm4076, %v4005, -inf
      %4249 = vmax.xlane.f32.xlu0 %v4248
      %v4250 = vpop.xlane.xlu0 %4249
      %v4251 = vsel %vm4076, %v4006, -inf
      %4252 = vmax.xlane.f32.xlu0 %v4251
      %v4253 = vpop.xlane.xlu0 %4252
      %v4254 = vsel %vm4076, %v4007, -inf
      %4255 = vmax.xlane.f32.xlu0 %v4254
      %v4256 = vpop.xlane.xlu0 %4255
      %v4257 = vsel %vm4076, %v4008, -inf
      %4258 = vmax.xlane.f32.xlu0 %v4257
      %v4259 = vpop.xlane.xlu0 %4258
      %v4260 = vsel %vm4076, %v4009, -inf
      %4261 = vmax.xlane.f32.xlu0 %v4260
      %v4262 = vpop.xlane.xlu0 %4261
      %v4263 = vsel %vm4076, %v4010, -inf
      %4264 = vmax.xlane.f32.xlu0 %v4263
      %v4265 = vpop.xlane.xlu0 %4264
      %v4266 = vsel %vm4076, %v4011, -inf
      %4267 = vmax.xlane.f32.xlu0 %v4266
      %v4268 = vpop.xlane.xlu0 %4267
      %v4269 = vsel %vm4076, %v4012, -inf
      %4270 = vmax.xlane.f32.xlu0 %v4269
      %v4271 = vpop.xlane.xlu0 %4270
      %v4272 = vsel %vm4076, %v4013, -inf
      %4273 = vmax.xlane.f32.xlu0 %v4272
      %v4274 = vpop.xlane.xlu0 %4273
      %v4275 = vsel %vm4076, %v4014, -inf
      %4276 = vmax.xlane.f32.xlu0 %v4275
      %v4277 = vpop.xlane.xlu0 %4276
      %v4278 = vsel %vm4076, %v4015, -inf
      %4279 = vmax.xlane.f32.xlu0 %v4278
      %v4280 = vpop.xlane.xlu0 %4279
      %v4281 = vsel %vm4076, %v4016, -inf
      %4282 = vmax.xlane.f32.xlu0 %v4281
      %v4283 = vpop.xlane.xlu0 %4282
      %v4284 = vsel %vm4076, %v4017, -inf
      %4285 = vmax.xlane.f32.xlu0 %v4284
      %v4286 = vpop.xlane.xlu0 %4285
      %v4287 = vsel %vm4076, %v4018, -inf
      %4288 = vmax.xlane.f32.xlu0 %v4287
      %v4289 = vpop.xlane.xlu0 %4288
      %v4290 = vsel %vm4076, %v4019, -inf
      %4291 = vmax.xlane.f32.xlu0 %v4290
      %v4292 = vpop.xlane.xlu0 %4291
      %v4293 = vsel %vm4076, %v4020, -inf
      %4294 = vmax.xlane.f32.xlu0 %v4293
      %v4295 = vpop.xlane.xlu0 %4294
      %v4296 = vsel %vm4076, %v4021, -inf
      %4297 = vmax.xlane.f32.xlu0 %v4296
      %v4298 = vpop.xlane.xlu0 %4297
      %v4299 = vsel %vm4076, %v4022, -inf
      %4300 = vmax.xlane.f32.xlu0 %v4299
      %v4301 = vpop.xlane.xlu0 %4300
      %v4302 = vsel %vm4076, %v4023, -inf
      %4303 = vmax.xlane.f32.xlu0 %v4302
      %v4304 = vpop.xlane.xlu0 %4303
      %v4305 = vsel %vm4076, %v4024, -inf
      %4306 = vmax.xlane.f32.xlu0 %v4305
      %v4307 = vpop.xlane.xlu0 %4306
      %v4308 = vsel %vm4076, %v4025, -inf
      %4309 = vmax.xlane.f32.xlu0 %v4308
      %v4310 = vpop.xlane.xlu0 %4309
      %v4311 = vsel %vm4076, %v4026, -inf
      %4312 = vmax.xlane.f32.xlu0 %v4311
      %v4313 = vpop.xlane.xlu0 %4312
      %v4314 = vsel %vm4076, %v4027, -inf
      %4315 = vmax.xlane.f32.xlu0 %v4314
      %v4316 = vpop.xlane.xlu0 %4315
      %v4317 = vsel %vm4076, %v4028, -inf
      %4318 = vmax.xlane.f32.xlu0 %v4317
      %v4319 = vpop.xlane.xlu0 %4318
      %v4320 = vsel %vm4076, %v4029, -inf
      %4321 = vmax.xlane.f32.xlu0 %v4320
      %v4322 = vpop.xlane.xlu0 %4321
      %v4323 = vsel %vm4076, %v4030, -inf
      %4324 = vmax.xlane.f32.xlu0 %v4323
      %v4325 = vpop.xlane.xlu0 %4324
      %v4326 = vsel %vm4076, %v4031, -inf
      %4327 = vmax.xlane.f32.xlu0 %v4326
      %v4328 = vpop.xlane.xlu0 %4327
      %v4329 = vsel %vm4076, %v4032, -inf
      %4330 = vmax.xlane.f32.xlu0 %v4329
      %v4331 = vpop.xlane.xlu0 %4330
      %v4332 = vsel %vm4076, %v4033, -inf
      %4333 = vmax.xlane.f32.xlu0 %v4332
      %v4334 = vpop.xlane.xlu0 %4333
      %v4335 = vsel %vm4076, %v4034, -inf
      %4336 = vmax.xlane.f32.xlu0 %v4335
      %v4337 = vpop.xlane.xlu0 %4336
      %v4338 = vsel %vm4076, %v4035, -inf
      %4339 = vmax.xlane.f32.xlu0 %v4338
      %v4340 = vpop.xlane.xlu0 %4339
      %v4341 = vsel %vm4076, %v4036, -inf
      %4342 = vmax.xlane.f32.xlu0 %v4341
      %v4343 = vpop.xlane.xlu0 %4342
      %v4344 = vsel %vm4076, %v4037, -inf
      %4345 = vmax.xlane.f32.xlu0 %v4344
      %v4346 = vpop.xlane.xlu0 %4345
      %v4347 = vsel %vm4076, %v4038, -inf
      %4348 = vmax.xlane.f32.xlu0 %v4347
      %v4349 = vpop.xlane.xlu0 %4348
      %v4350 = vsel %vm4076, %v4039, -inf
      %4351 = vmax.xlane.f32.xlu0 %v4350
      %v4352 = vpop.xlane.xlu0 %4351
      %v4353 = vsel %vm4076, %v4040, -inf
      %4354 = vmax.xlane.f32.xlu0 %v4353
      %v4355 = vpop.xlane.xlu0 %4354
      %v4356 = vsel %vm4076, %v4041, -inf
      %4357 = vmax.xlane.f32.xlu0 %v4356
      %v4358 = vpop.xlane.xlu0 %4357
      %v4359 = vsel %vm4076, %v4042, -inf
      %4360 = vmax.xlane.f32.xlu0 %v4359
      %v4361 = vpop.xlane.xlu0 %4360
      %v4362 = vsel %vm4076, %v4043, -inf
      %4363 = vmax.xlane.f32.xlu0 %v4362
      %v4364 = vpop.xlane.xlu0 %4363
      %v4365 = vsel %vm4076, %v4044, -inf
      %4366 = vmax.xlane.f32.xlu0 %v4365
      %v4367 = vpop.xlane.xlu0 %4366
      %v4368 = vsel %vm4076, %v4045, -inf
      %4369 = vmax.xlane.f32.xlu0 %v4368
      %v4370 = vpop.xlane.xlu0 %4369
      %v4371 = vsel %vm4076, %v4046, -inf
      %4372 = vmax.xlane.f32.xlu0 %v4371
      %v4373 = vpop.xlane.xlu0 %4372
      %v4374 = vsel %vm4076, %v4047, -inf
      %4375 = vmax.xlane.f32.xlu0 %v4374
      %v4376 = vpop.xlane.xlu0 %4375
      %v4377 = vsel %vm4076, %v4048, -inf
      %4378 = vmax.xlane.f32.xlu0 %v4377
      %v4379 = vpop.xlane.xlu0 %4378
      %v4380 = vsel %vm4076, %v4049, -inf
      %4381 = vmax.xlane.f32.xlu0 %v4380
      %v4382 = vpop.xlane.xlu0 %4381
      %v4383 = vsel %vm4076, %v4050, -inf
      %4384 = vmax.xlane.f32.xlu0 %v4383
      %v4385 = vpop.xlane.xlu0 %4384
      %v4386 = vsel %vm4076, %v4051, -inf
      %4387 = vmax.xlane.f32.xlu0 %v4386
      %v4388 = vpop.xlane.xlu0 %4387
      %v4389 = vsel %vm4076, %v4052, -inf
      %4390 = vmax.xlane.f32.xlu0 %v4389
      %v4391 = vpop.xlane.xlu0 %4390
      %v4392 = vsel %vm4076, %v4053, -inf
      %4393 = vmax.xlane.f32.xlu0 %v4392
      %v4394 = vpop.xlane.xlu0 %4393
      %v4395 = vsel %vm4076, %v4054, -inf
      %4396 = vmax.xlane.f32.xlu0 %v4395
      %v4397 = vpop.xlane.xlu0 %4396
      %v4398 = vsel %vm4076, %v4055, -inf
      %4399 = vmax.xlane.f32.xlu0 %v4398
      %v4400 = vpop.xlane.xlu0 %4399
      %v4401 = vsel %vm4076, %v4056, -inf
      %4402 = vmax.xlane.f32.xlu0 %v4401
      %v4403 = vpop.xlane.xlu0 %4402
      %v4404 = vsel %vm4076, %v4057, -inf
      %4405 = vmax.xlane.f32.xlu0 %v4404
      %v4406 = vpop.xlane.xlu0 %4405
      %v4407 = vsel %vm4076, %v4058, -inf
      %4408 = vmax.xlane.f32.xlu0 %v4407
      %v4409 = vpop.xlane.xlu0 %4408
      %v4410 = vsel %vm4076, %v4059, -inf
      %4411 = vmax.xlane.f32.xlu0 %v4410
      %v4412 = vpop.xlane.xlu0 %4411
      %v4413 = vsel %vm4076, %v4060, -inf
      %4414 = vmax.xlane.f32.xlu0 %v4413
      %v4415 = vpop.xlane.xlu0 %4414
      %v4416 = vsel %vm4076, %v4061, -inf
      %4417 = vmax.xlane.f32.xlu0 %v4416
      %v4418 = vpop.xlane.xlu0 %4417
      %v4419 = vsel %vm4076, %v4062, -inf
      %4420 = vmax.xlane.f32.xlu0 %v4419
      %v4421 = vpop.xlane.xlu0 %4420
      %v4422 = vsel %vm4076, %v4063, -inf
      %4423 = vmax.xlane.f32.xlu0 %v4422
      %v4424 = vpop.xlane.xlu0 %4423
      %v4425 = vsel %vm4076, %v4064, -inf
      %4426 = vmax.xlane.f32.xlu0 %v4425
      %v4427 = vpop.xlane.xlu0 %4426
      %v4428 = vsel %vm4076, %v4065, -inf
      %4429 = vmax.xlane.f32.xlu0 %v4428
      %v4430 = vpop.xlane.xlu0 %4429
      %v4431 = vsel %vm4076, %v4066, -inf
      %4432 = vmax.xlane.f32.xlu0 %v4431
      %v4433 = vpop.xlane.xlu0 %4432
      %v4434 = vsel %vm4076, %v4067, -inf
      %4435 = vmax.xlane.f32.xlu0 %v4434
      %v4436 = vpop.xlane.xlu0 %4435
      %v4437 = vsel %vm4076, %v4068, -inf
      %4438 = vmax.xlane.f32.xlu0 %v4437
      %v4439 = vpop.xlane.xlu0 %4438
      %v4440 = vsel %vm4076, %v4069, -inf
      %4441 = vmax.xlane.f32.xlu0 %v4440
      %v4442 = vpop.xlane.xlu0 %4441
      %v4443 = vsel %vm4076, %v4070, -inf
      %4444 = vmax.xlane.f32.xlu0 %v4443
      %v4445 = vpop.xlane.xlu0 %4444
      %v4446 = vsel %vm4076, %v4071, -inf
      %4447 = vmax.xlane.f32.xlu0 %v4446
      %v4448 = vpop.xlane.xlu0 %4447
      %v4449 = vsel %vm4076, %v4072, -inf
      %4450 = vmax.xlane.f32.xlu0 %v4449
      %v4451 = vpop.xlane.xlu0 %4450
      %v4452 = vsel %vm4076, %v4073, -inf
      %4453 = vmax.xlane.f32.xlu0 %v4452
      %v4454 = vpop.xlane.xlu0 %4453
      %v4455 = vsel %vm4076, %v4074, -inf
      %4456 = vmax.xlane.f32.xlu0 %v4455
      %v4457 = vpop.xlane.xlu0 %4456
      %v4458 = vsel %vm4076, %v4075, -inf
      %4459 = vmax.xlane.f32.xlu0 %v4458
      %v4460 = vpop.xlane.xlu0 %4459
      %v4461 = vsub.f32 %v3948, %v4079
      %v4462 = vsub.f32 %v3949, %v4082
      %v4463 = vsub.f32 %v3950, %v4085
      %v4464 = vsub.f32 %v3951, %v4088
      %v4465 = vsub.f32 %v3952, %v4091
      %v4466 = vsub.f32 %v3953, %v4094
      %v4467 = vsub.f32 %v3954, %v4097
      %v4468 = vsub.f32 %v3955, %v4100
      %v4469 = vsub.f32 %v3956, %v4103
      %v4470 = vsub.f32 %v3957, %v4106
      %v4471 = vsub.f32 %v3958, %v4109
      %v4472 = vsub.f32 %v3959, %v4112
      %v4473 = vsub.f32 %v3960, %v4115
      %v4474 = vsub.f32 %v3961, %v4118
      %v4475 = vsub.f32 %v3962, %v4121
      %v4476 = vsub.f32 %v3963, %v4124
      %v4477 = vsub.f32 %v3964, %v4127
      %v4478 = vsub.f32 %v3965, %v4130
      %v4479 = vsub.f32 %v3966, %v4133
      %v4480 = vsub.f32 %v3967, %v4136
      %v4481 = vsub.f32 %v3968, %v4139
      %v4482 = vsub.f32 %v3969, %v4142
      %v4483 = vsub.f32 %v3970, %v4145
      %v4484 = vsub.f32 %v3971, %v4148
      %v4485 = vsub.f32 %v3972, %v4151
      %v4486 = vsub.f32 %v3973, %v4154
      %v4487 = vsub.f32 %v3974, %v4157
      %v4488 = vsub.f32 %v3975, %v4160
      %v4489 = vsub.f32 %v3976, %v4163
      %v4490 = vsub.f32 %v3977, %v4166
      %v4491 = vsub.f32 %v3978, %v4169
      %v4492 = vsub.f32 %v3979, %v4172
      %v4493 = vsub.f32 %v3980, %v4175
      %v4494 = vsub.f32 %v3981, %v4178
      %v4495 = vsub.f32 %v3982, %v4181
      %v4496 = vsub.f32 %v3983, %v4184
      %v4497 = vsub.f32 %v3984, %v4187
      %v4498 = vsub.f32 %v3985, %v4190
      %v4499 = vsub.f32 %v3986, %v4193
      %v4500 = vsub.f32 %v3987, %v4196
      %v4501 = vsub.f32 %v3988, %v4199
      %v4502 = vsub.f32 %v3989, %v4202
      %v4503 = vsub.f32 %v3990, %v4205
      %v4504 = vsub.f32 %v3991, %v4208
      %v4505 = vsub.f32 %v3992, %v4211
      %v4506 = vsub.f32 %v3993, %v4214
      %v4507 = vsub.f32 %v3994, %v4217
      %v4508 = vsub.f32 %v3995, %v4220
      %v4509 = vsub.f32 %v3996, %v4223
      %v4510 = vsub.f32 %v3997, %v4226
      %v4511 = vsub.f32 %v3998, %v4229
      %v4512 = vsub.f32 %v3999, %v4232
      %v4513 = vsub.f32 %v4000, %v4235
      %v4514 = vsub.f32 %v4001, %v4238
      %v4515 = vsub.f32 %v4002, %v4241
      %v4516 = vsub.f32 %v4003, %v4244
      %v4517 = vsub.f32 %v4004, %v4247
      %v4518 = vsub.f32 %v4005, %v4250
      %v4519 = vsub.f32 %v4006, %v4253
      %v4520 = vsub.f32 %v4007, %v4256
      %v4521 = vsub.f32 %v4008, %v4259
      %v4522 = vsub.f32 %v4009, %v4262
      %v4523 = vsub.f32 %v4010, %v4265
      %v4524 = vsub.f32 %v4011, %v4268
      %v4525 = vsub.f32 %v4012, %v4271
      %v4526 = vsub.f32 %v4013, %v4274
      %v4527 = vsub.f32 %v4014, %v4277
      %v4528 = vsub.f32 %v4015, %v4280
      %v4529 = vsub.f32 %v4016, %v4283
      %v4530 = vsub.f32 %v4017, %v4286
      %v4531 = vsub.f32 %v4018, %v4289
      %v4532 = vsub.f32 %v4019, %v4292
      %v4533 = vsub.f32 %v4020, %v4295
      %v4534 = vsub.f32 %v4021, %v4298
      %v4535 = vsub.f32 %v4022, %v4301
      %v4536 = vsub.f32 %v4023, %v4304
      %v4537 = vsub.f32 %v4024, %v4307
      %v4538 = vsub.f32 %v4025, %v4310
      %v4539 = vsub.f32 %v4026, %v4313
      %v4540 = vsub.f32 %v4027, %v4316
      %v4541 = vsub.f32 %v4028, %v4319
      %v4542 = vsub.f32 %v4029, %v4322
      %v4543 = vsub.f32 %v4030, %v4325
      %v4544 = vsub.f32 %v4031, %v4328
      %v4545 = vsub.f32 %v4032, %v4331
      %v4546 = vsub.f32 %v4033, %v4334
      %v4547 = vsub.f32 %v4034, %v4337
      %v4548 = vsub.f32 %v4035, %v4340
      %v4549 = vsub.f32 %v4036, %v4343
      %v4550 = vsub.f32 %v4037, %v4346
      %v4551 = vsub.f32 %v4038, %v4349
      %v4552 = vsub.f32 %v4039, %v4352
      %v4553 = vsub.f32 %v4040, %v4355
      %v4554 = vsub.f32 %v4041, %v4358
      %v4555 = vsub.f32 %v4042, %v4361
      %v4556 = vsub.f32 %v4043, %v4364
      %v4557 = vsub.f32 %v4044, %v4367
      %v4558 = vsub.f32 %v4045, %v4370
      %v4559 = vsub.f32 %v4046, %v4373
      %v4560 = vsub.f32 %v4047, %v4376
      %v4561 = vsub.f32 %v4048, %v4379
      %v4562 = vsub.f32 %v4049, %v4382
      %v4563 = vsub.f32 %v4050, %v4385
      %v4564 = vsub.f32 %v4051, %v4388
      %v4565 = vsub.f32 %v4052, %v4391
      %v4566 = vsub.f32 %v4053, %v4394
      %v4567 = vsub.f32 %v4054, %v4397
      %v4568 = vsub.f32 %v4055, %v4400
      %v4569 = vsub.f32 %v4056, %v4403
      %v4570 = vsub.f32 %v4057, %v4406
      %v4571 = vsub.f32 %v4058, %v4409
      %v4572 = vsub.f32 %v4059, %v4412
      %v4573 = vsub.f32 %v4060, %v4415
      %v4574 = vsub.f32 %v4061, %v4418
      %v4575 = vsub.f32 %v4062, %v4421
      %v4576 = vsub.f32 %v4063, %v4424
      %v4577 = vsub.f32 %v4064, %v4427
      %v4578 = vsub.f32 %v4065, %v4430
      %v4579 = vsub.f32 %v4066, %v4433
      %v4580 = vsub.f32 %v4067, %v4436
      %v4581 = vsub.f32 %v4068, %v4439
      %v4582 = vsub.f32 %v4069, %v4442
      %v4583 = vsub.f32 %v4070, %v4445
      %v4584 = vsub.f32 %v4071, %v4448
      %v4585 = vsub.f32 %v4072, %v4451
      %v4586 = vsub.f32 %v4073, %v4454
      %v4587 = vsub.f32 %v4074, %v4457
      %v4588 = vsub.f32 %v4075, %v4460
      %v4589 = vmul.f32 %v4461, 1.442695
      %v4590 = vpow.pop %v4589
      %v4591 = vmul.f32 %v4462, 1.442695
      %v4592 = vpow.pop %v4591
      %v4593 = vmul.f32 %v4463, 1.442695
      %v4594 = vpow.pop %v4593
      %v4595 = vmul.f32 %v4464, 1.442695
      %v4596 = vpow.pop %v4595
      %v4597 = vmul.f32 %v4465, 1.442695
      %v4598 = vpow.pop %v4597
      %v4599 = vmul.f32 %v4466, 1.442695
      %v4600 = vpow.pop %v4599
      %v4601 = vmul.f32 %v4467, 1.442695
      %v4602 = vpow.pop %v4601
      %v4603 = vmul.f32 %v4468, 1.442695
      %v4604 = vpow.pop %v4603
      %v4605 = vmul.f32 %v4469, 1.442695
      %v4606 = vpow.pop %v4605
      %v4607 = vmul.f32 %v4470, 1.442695
      %v4608 = vpow.pop %v4607
      %v4609 = vmul.f32 %v4471, 1.442695
      %v4610 = vpow.pop %v4609
      %v4611 = vmul.f32 %v4472, 1.442695
      %v4612 = vpow.pop %v4611
      %v4613 = vmul.f32 %v4473, 1.442695
      %v4614 = vpow.pop %v4613
      %v4615 = vmul.f32 %v4474, 1.442695
      %v4616 = vpow.pop %v4615
      %v4617 = vmul.f32 %v4475, 1.442695
      %v4618 = vpow.pop %v4617
      %v4619 = vmul.f32 %v4476, 1.442695
      %v4620 = vpow.pop %v4619
      %v4621 = vmul.f32 %v4477, 1.442695
      %v4622 = vpow.pop %v4621
      %v4623 = vmul.f32 %v4478, 1.442695
      %v4624 = vpow.pop %v4623
      %v4625 = vmul.f32 %v4479, 1.442695
      %v4626 = vpow.pop %v4625
      %v4627 = vmul.f32 %v4480, 1.442695
      %v4628 = vpow.pop %v4627
      %v4629 = vmul.f32 %v4481, 1.442695
      %v4630 = vpow.pop %v4629
      %v4631 = vmul.f32 %v4482, 1.442695
      %v4632 = vpow.pop %v4631
      %v4633 = vmul.f32 %v4483, 1.442695
      %v4634 = vpow.pop %v4633
      %v4635 = vmul.f32 %v4484, 1.442695
      %v4636 = vpow.pop %v4635
      %v4637 = vmul.f32 %v4485, 1.442695
      %v4638 = vpow.pop %v4637
      %v4639 = vmul.f32 %v4486, 1.442695
      %v4640 = vpow.pop %v4639
      %v4641 = vmul.f32 %v4487, 1.442695
      %v4642 = vpow.pop %v4641
      %v4643 = vmul.f32 %v4488, 1.442695
      %v4644 = vpow.pop %v4643
      %v4645 = vmul.f32 %v4489, 1.442695
      %v4646 = vpow.pop %v4645
      %v4647 = vmul.f32 %v4490, 1.442695
      %v4648 = vpow.pop %v4647
      %v4649 = vmul.f32 %v4491, 1.442695
      %v4650 = vpow.pop %v4649
      %v4651 = vmul.f32 %v4492, 1.442695
      %v4652 = vpow.pop %v4651
      %v4653 = vmul.f32 %v4493, 1.442695
      %v4654 = vpow.pop %v4653
      %v4655 = vmul.f32 %v4494, 1.442695
      %v4656 = vpow.pop %v4655
      %v4657 = vmul.f32 %v4495, 1.442695
      %v4658 = vpow.pop %v4657
      %v4659 = vmul.f32 %v4496, 1.442695
      %v4660 = vpow.pop %v4659
      %v4661 = vmul.f32 %v4497, 1.442695
      %v4662 = vpow.pop %v4661
      %v4663 = vmul.f32 %v4498, 1.442695
      %v4664 = vpow.pop %v4663
      %v4665 = vmul.f32 %v4499, 1.442695
      %v4666 = vpow.pop %v4665
      %v4667 = vmul.f32 %v4500, 1.442695
      %v4668 = vpow.pop %v4667
      %v4669 = vmul.f32 %v4501, 1.442695
      %v4670 = vpow.pop %v4669
      %v4671 = vmul.f32 %v4502, 1.442695
      %v4672 = vpow.pop %v4671
      %v4673 = vmul.f32 %v4503, 1.442695
      %v4674 = vpow.pop %v4673
      %v4675 = vmul.f32 %v4504, 1.442695
      %v4676 = vpow.pop %v4675
      %v4677 = vmul.f32 %v4505, 1.442695
      %v4678 = vpow.pop %v4677
      %v4679 = vmul.f32 %v4506, 1.442695
      %v4680 = vpow.pop %v4679
      %v4681 = vmul.f32 %v4507, 1.442695
      %v4682 = vpow.pop %v4681
      %v4683 = vmul.f32 %v4508, 1.442695
      %v4684 = vpow.pop %v4683
      %v4685 = vmul.f32 %v4509, 1.442695
      %v4686 = vpow.pop %v4685
      %v4687 = vmul.f32 %v4510, 1.442695
      %v4688 = vpow.pop %v4687
      %v4689 = vmul.f32 %v4511, 1.442695
      %v4690 = vpow.pop %v4689
      %v4691 = vmul.f32 %v4512, 1.442695
      %v4692 = vpow.pop %v4691
      %v4693 = vmul.f32 %v4513, 1.442695
      %v4694 = vpow.pop %v4693
      %v4695 = vmul.f32 %v4514, 1.442695
      %v4696 = vpow.pop %v4695
      %v4697 = vmul.f32 %v4515, 1.442695
      %v4698 = vpow.pop %v4697
      %v4699 = vmul.f32 %v4516, 1.442695
      %v4700 = vpow.pop %v4699
      %v4701 = vmul.f32 %v4517, 1.442695
      %v4702 = vpow.pop %v4701
      %v4703 = vmul.f32 %v4518, 1.442695
      %v4704 = vpow.pop %v4703
      %v4705 = vmul.f32 %v4519, 1.442695
      %v4706 = vpow.pop %v4705
      %v4707 = vmul.f32 %v4520, 1.442695
      %v4708 = vpow.pop %v4707
      %v4709 = vmul.f32 %v4521, 1.442695
      %v4710 = vpow.pop %v4709
      %v4711 = vmul.f32 %v4522, 1.442695
      %v4712 = vpow.pop %v4711
      %v4713 = vmul.f32 %v4523, 1.442695
      %v4714 = vpow.pop %v4713
      %v4715 = vmul.f32 %v4524, 1.442695
      %v4716 = vpow.pop %v4715
      %v4717 = vmul.f32 %v4525, 1.442695
      %v4718 = vpow.pop %v4717
      %v4719 = vmul.f32 %v4526, 1.442695
      %v4720 = vpow.pop %v4719
      %v4721 = vmul.f32 %v4527, 1.442695
      %v4722 = vpow.pop %v4721
      %v4723 = vmul.f32 %v4528, 1.442695
      %v4724 = vpow.pop %v4723
      %v4725 = vmul.f32 %v4529, 1.442695
      %v4726 = vpow.pop %v4725
      %v4727 = vmul.f32 %v4530, 1.442695
      %v4728 = vpow.pop %v4727
      %v4729 = vmul.f32 %v4531, 1.442695
      %v4730 = vpow.pop %v4729
      %v4731 = vmul.f32 %v4532, 1.442695
      %v4732 = vpow.pop %v4731
      %v4733 = vmul.f32 %v4533, 1.442695
      %v4734 = vpow.pop %v4733
      %v4735 = vmul.f32 %v4534, 1.442695
      %v4736 = vpow.pop %v4735
      %v4737 = vmul.f32 %v4535, 1.442695
      %v4738 = vpow.pop %v4737
      %v4739 = vmul.f32 %v4536, 1.442695
      %v4740 = vpow.pop %v4739
      %v4741 = vmul.f32 %v4537, 1.442695
      %v4742 = vpow.pop %v4741
      %v4743 = vmul.f32 %v4538, 1.442695
      %v4744 = vpow.pop %v4743
      %v4745 = vmul.f32 %v4539, 1.442695
      %v4746 = vpow.pop %v4745
      %v4747 = vmul.f32 %v4540, 1.442695
      %v4748 = vpow.pop %v4747
      %v4749 = vmul.f32 %v4541, 1.442695
      %v4750 = vpow.pop %v4749
      %v4751 = vmul.f32 %v4542, 1.442695
      %v4752 = vpow.pop %v4751
      %v4753 = vmul.f32 %v4543, 1.442695
      %v4754 = vpow.pop %v4753
      %v4755 = vmul.f32 %v4544, 1.442695
      %v4756 = vpow.pop %v4755
      %v4757 = vmul.f32 %v4545, 1.442695
      %v4758 = vpow.pop %v4757
      %v4759 = vmul.f32 %v4546, 1.442695
      %v4760 = vpow.pop %v4759
      %v4761 = vmul.f32 %v4547, 1.442695
      %v4762 = vpow.pop %v4761
      %v4763 = vmul.f32 %v4548, 1.442695
      %v4764 = vpow.pop %v4763
      %v4765 = vmul.f32 %v4549, 1.442695
      %v4766 = vpow.pop %v4765
      %v4767 = vmul.f32 %v4550, 1.442695
      %v4768 = vpow.pop %v4767
      %v4769 = vmul.f32 %v4551, 1.442695
      %v4770 = vpow.pop %v4769
      %v4771 = vmul.f32 %v4552, 1.442695
      %v4772 = vpow.pop %v4771
      %v4773 = vmul.f32 %v4553, 1.442695
      %v4774 = vpow.pop %v4773
      %v4775 = vmul.f32 %v4554, 1.442695
      %v4776 = vpow.pop %v4775
      %v4777 = vmul.f32 %v4555, 1.442695
      %v4778 = vpow.pop %v4777
      %v4779 = vmul.f32 %v4556, 1.442695
      %v4780 = vpow.pop %v4779
      %v4781 = vmul.f32 %v4557, 1.442695
      %v4782 = vpow.pop %v4781
      %v4783 = vmul.f32 %v4558, 1.442695
      %v4784 = vpow.pop %v4783
      %v4785 = vmul.f32 %v4559, 1.442695
      %v4786 = vpow.pop %v4785
      %v4787 = vmul.f32 %v4560, 1.442695
      %v4788 = vpow.pop %v4787
      %v4789 = vmul.f32 %v4561, 1.442695
      %v4790 = vpow.pop %v4789
      %v4791 = vmul.f32 %v4562, 1.442695
      %v4792 = vpow.pop %v4791
      %v4793 = vmul.f32 %v4563, 1.442695
      %v4794 = vpow.pop %v4793
      %v4795 = vmul.f32 %v4564, 1.442695
      %v4796 = vpow.pop %v4795
      %v4797 = vmul.f32 %v4565, 1.442695
      %v4798 = vpow.pop %v4797
      %v4799 = vmul.f32 %v4566, 1.442695
      %v4800 = vpow.pop %v4799
      %v4801 = vmul.f32 %v4567, 1.442695
      %v4802 = vpow.pop %v4801
      %v4803 = vmul.f32 %v4568, 1.442695
      %v4804 = vpow.pop %v4803
      %v4805 = vmul.f32 %v4569, 1.442695
      %v4806 = vpow.pop %v4805
      %v4807 = vmul.f32 %v4570, 1.442695
      %v4808 = vpow.pop %v4807
      %v4809 = vmul.f32 %v4571, 1.442695
      %v4810 = vpow.pop %v4809
      %v4811 = vmul.f32 %v4572, 1.442695
      %v4812 = vpow.pop %v4811
      %v4813 = vmul.f32 %v4573, 1.442695
      %v4814 = vpow.pop %v4813
      %v4815 = vmul.f32 %v4574, 1.442695
      %v4816 = vpow.pop %v4815
      %v4817 = vmul.f32 %v4575, 1.442695
      %v4818 = vpow.pop %v4817
      %v4819 = vmul.f32 %v4576, 1.442695
      %v4820 = vpow.pop %v4819
      %v4821 = vmul.f32 %v4577, 1.442695
      %v4822 = vpow.pop %v4821
      %v4823 = vmul.f32 %v4578, 1.442695
      %v4824 = vpow.pop %v4823
      %v4825 = vmul.f32 %v4579, 1.442695
      %v4826 = vpow.pop %v4825
      %v4827 = vmul.f32 %v4580, 1.442695
      %v4828 = vpow.pop %v4827
      %v4829 = vmul.f32 %v4581, 1.442695
      %v4830 = vpow.pop %v4829
      %v4831 = vmul.f32 %v4582, 1.442695
      %v4832 = vpow.pop %v4831
      %v4833 = vmul.f32 %v4583, 1.442695
      %v4834 = vpow.pop %v4833
      %v4835 = vmul.f32 %v4584, 1.442695
      %v4836 = vpow.pop %v4835
      %v4837 = vmul.f32 %v4585, 1.442695
      %v4838 = vpow.pop %v4837
      %v4839 = vmul.f32 %v4586, 1.442695
      %v4840 = vpow.pop %v4839
      %v4841 = vmul.f32 %v4587, 1.442695
      %v4842 = vpow.pop %v4841
      %v4843 = vmul.f32 %v4588, 1.442695
      %v4844 = vpow.pop %v4843
      %v4845 = vsel %vm4076, %v4590, 0.0
      %4846 = vadd.xlane.f32.xlu0 %v4845
      %v4847 = vpop.xlane.xlu0 %4846
      %v4848 = vsel %vm4076, %v4592, 0.0
      %4849 = vadd.xlane.f32.xlu0 %v4848
      %v4850 = vpop.xlane.xlu0 %4849
      %v4851 = vsel %vm4076, %v4594, 0.0
      %4852 = vadd.xlane.f32.xlu0 %v4851
      %v4853 = vpop.xlane.xlu0 %4852
      %v4854 = vsel %vm4076, %v4596, 0.0
      %4855 = vadd.xlane.f32.xlu0 %v4854
      %v4856 = vpop.xlane.xlu0 %4855
      %v4857 = vsel %vm4076, %v4598, 0.0
      %4858 = vadd.xlane.f32.xlu0 %v4857
      %v4859 = vpop.xlane.xlu0 %4858
      %v4860 = vsel %vm4076, %v4600, 0.0
      %4861 = vadd.xlane.f32.xlu0 %v4860
      %v4862 = vpop.xlane.xlu0 %4861
      %v4863 = vsel %vm4076, %v4602, 0.0
      %4864 = vadd.xlane.f32.xlu0 %v4863
      %v4865 = vpop.xlane.xlu0 %4864
      %v4866 = vsel %vm4076, %v4604, 0.0
      %4867 = vadd.xlane.f32.xlu0 %v4866
      %v4868 = vpop.xlane.xlu0 %4867
      %v4869 = vsel %vm4076, %v4606, 0.0
      %4870 = vadd.xlane.f32.xlu0 %v4869
      %v4871 = vpop.xlane.xlu0 %4870
      %v4872 = vsel %vm4076, %v4608, 0.0
      %4873 = vadd.xlane.f32.xlu0 %v4872
      %v4874 = vpop.xlane.xlu0 %4873
      %v4875 = vsel %vm4076, %v4610, 0.0
      %4876 = vadd.xlane.f32.xlu0 %v4875
      %v4877 = vpop.xlane.xlu0 %4876
      %v4878 = vsel %vm4076, %v4612, 0.0
      %4879 = vadd.xlane.f32.xlu0 %v4878
      %v4880 = vpop.xlane.xlu0 %4879
      %v4881 = vsel %vm4076, %v4614, 0.0
      %4882 = vadd.xlane.f32.xlu0 %v4881
      %v4883 = vpop.xlane.xlu0 %4882
      %v4884 = vsel %vm4076, %v4616, 0.0
      %4885 = vadd.xlane.f32.xlu0 %v4884
      %v4886 = vpop.xlane.xlu0 %4885
      %v4887 = vsel %vm4076, %v4618, 0.0
      %4888 = vadd.xlane.f32.xlu0 %v4887
      %v4889 = vpop.xlane.xlu0 %4888
      %v4890 = vsel %vm4076, %v4620, 0.0
      %4891 = vadd.xlane.f32.xlu0 %v4890
      %v4892 = vpop.xlane.xlu0 %4891
      %v4893 = vsel %vm4076, %v4622, 0.0
      %4894 = vadd.xlane.f32.xlu0 %v4893
      %v4895 = vpop.xlane.xlu0 %4894
      %v4896 = vsel %vm4076, %v4624, 0.0
      %4897 = vadd.xlane.f32.xlu0 %v4896
      %v4898 = vpop.xlane.xlu0 %4897
      %v4899 = vsel %vm4076, %v4626, 0.0
      %4900 = vadd.xlane.f32.xlu0 %v4899
      %v4901 = vpop.xlane.xlu0 %4900
      %v4902 = vsel %vm4076, %v4628, 0.0
      %4903 = vadd.xlane.f32.xlu0 %v4902
      %v4904 = vpop.xlane.xlu0 %4903
      %v4905 = vsel %vm4076, %v4630, 0.0
      %4906 = vadd.xlane.f32.xlu0 %v4905
      %v4907 = vpop.xlane.xlu0 %4906
      %v4908 = vsel %vm4076, %v4632, 0.0
      %4909 = vadd.xlane.f32.xlu0 %v4908
      %v4910 = vpop.xlane.xlu0 %4909
      %v4911 = vsel %vm4076, %v4634, 0.0
      %4912 = vadd.xlane.f32.xlu0 %v4911
      %v4913 = vpop.xlane.xlu0 %4912
      %v4914 = vsel %vm4076, %v4636, 0.0
      %4915 = vadd.xlane.f32.xlu0 %v4914
      %v4916 = vpop.xlane.xlu0 %4915
      %v4917 = vsel %vm4076, %v4638, 0.0
      %4918 = vadd.xlane.f32.xlu0 %v4917
      %v4919 = vpop.xlane.xlu0 %4918
      %v4920 = vsel %vm4076, %v4640, 0.0
      %4921 = vadd.xlane.f32.xlu0 %v4920
      %v4922 = vpop.xlane.xlu0 %4921
      %v4923 = vsel %vm4076, %v4642, 0.0
      %4924 = vadd.xlane.f32.xlu0 %v4923
      %v4925 = vpop.xlane.xlu0 %4924
      %v4926 = vsel %vm4076, %v4644, 0.0
      %4927 = vadd.xlane.f32.xlu0 %v4926
      %v4928 = vpop.xlane.xlu0 %4927
      %v4929 = vsel %vm4076, %v4646, 0.0
      %4930 = vadd.xlane.f32.xlu0 %v4929
      %v4931 = vpop.xlane.xlu0 %4930
      %v4932 = vsel %vm4076, %v4648, 0.0
      %4933 = vadd.xlane.f32.xlu0 %v4932
      %v4934 = vpop.xlane.xlu0 %4933
      %v4935 = vsel %vm4076, %v4650, 0.0
      %4936 = vadd.xlane.f32.xlu0 %v4935
      %v4937 = vpop.xlane.xlu0 %4936
      %v4938 = vsel %vm4076, %v4652, 0.0
      %4939 = vadd.xlane.f32.xlu0 %v4938
      %v4940 = vpop.xlane.xlu0 %4939
      %v4941 = vsel %vm4076, %v4654, 0.0
      %4942 = vadd.xlane.f32.xlu0 %v4941
      %v4943 = vpop.xlane.xlu0 %4942
      %v4944 = vsel %vm4076, %v4656, 0.0
      %4945 = vadd.xlane.f32.xlu0 %v4944
      %v4946 = vpop.xlane.xlu0 %4945
      %v4947 = vsel %vm4076, %v4658, 0.0
      %4948 = vadd.xlane.f32.xlu0 %v4947
      %v4949 = vpop.xlane.xlu0 %4948
      %v4950 = vsel %vm4076, %v4660, 0.0
      %4951 = vadd.xlane.f32.xlu0 %v4950
      %v4952 = vpop.xlane.xlu0 %4951
      %v4953 = vsel %vm4076, %v4662, 0.0
      %4954 = vadd.xlane.f32.xlu0 %v4953
      %v4955 = vpop.xlane.xlu0 %4954
      %v4956 = vsel %vm4076, %v4664, 0.0
      %4957 = vadd.xlane.f32.xlu0 %v4956
      %v4958 = vpop.xlane.xlu0 %4957
      %v4959 = vsel %vm4076, %v4666, 0.0
      %4960 = vadd.xlane.f32.xlu0 %v4959
      %v4961 = vpop.xlane.xlu0 %4960
      %v4962 = vsel %vm4076, %v4668, 0.0
      %4963 = vadd.xlane.f32.xlu0 %v4962
      %v4964 = vpop.xlane.xlu0 %4963
      %v4965 = vsel %vm4076, %v4670, 0.0
      %4966 = vadd.xlane.f32.xlu0 %v4965
      %v4967 = vpop.xlane.xlu0 %4966
      %v4968 = vsel %vm4076, %v4672, 0.0
      %4969 = vadd.xlane.f32.xlu0 %v4968
      %v4970 = vpop.xlane.xlu0 %4969
      %v4971 = vsel %vm4076, %v4674, 0.0
      %4972 = vadd.xlane.f32.xlu0 %v4971
      %v4973 = vpop.xlane.xlu0 %4972
      %v4974 = vsel %vm4076, %v4676, 0.0
      %4975 = vadd.xlane.f32.xlu0 %v4974
      %v4976 = vpop.xlane.xlu0 %4975
      %v4977 = vsel %vm4076, %v4678, 0.0
      %4978 = vadd.xlane.f32.xlu0 %v4977
      %v4979 = vpop.xlane.xlu0 %4978
      %v4980 = vsel %vm4076, %v4680, 0.0
      %4981 = vadd.xlane.f32.xlu0 %v4980
      %v4982 = vpop.xlane.xlu0 %4981
      %v4983 = vsel %vm4076, %v4682, 0.0
      %4984 = vadd.xlane.f32.xlu0 %v4983
      %v4985 = vpop.xlane.xlu0 %4984
      %v4986 = vsel %vm4076, %v4684, 0.0
      %4987 = vadd.xlane.f32.xlu0 %v4986
      %v4988 = vpop.xlane.xlu0 %4987
      %v4989 = vsel %vm4076, %v4686, 0.0
      %4990 = vadd.xlane.f32.xlu0 %v4989
      %v4991 = vpop.xlane.xlu0 %4990
      %v4992 = vsel %vm4076, %v4688, 0.0
      %4993 = vadd.xlane.f32.xlu0 %v4992
      %v4994 = vpop.xlane.xlu0 %4993
      %v4995 = vsel %vm4076, %v4690, 0.0
      %4996 = vadd.xlane.f32.xlu0 %v4995
      %v4997 = vpop.xlane.xlu0 %4996
      %v4998 = vsel %vm4076, %v4692, 0.0
      %4999 = vadd.xlane.f32.xlu0 %v4998
      %v5000 = vpop.xlane.xlu0 %4999
      %v5001 = vsel %vm4076, %v4694, 0.0
      %5002 = vadd.xlane.f32.xlu0 %v5001
      %v5003 = vpop.xlane.xlu0 %5002
      %v5004 = vsel %vm4076, %v4696, 0.0
      %5005 = vadd.xlane.f32.xlu0 %v5004
      %v5006 = vpop.xlane.xlu0 %5005
      %v5007 = vsel %vm4076, %v4698, 0.0
      %5008 = vadd.xlane.f32.xlu0 %v5007
      %v5009 = vpop.xlane.xlu0 %5008
      %v5010 = vsel %vm4076, %v4700, 0.0
      %5011 = vadd.xlane.f32.xlu0 %v5010
      %v5012 = vpop.xlane.xlu0 %5011
      %v5013 = vsel %vm4076, %v4702, 0.0
      %5014 = vadd.xlane.f32.xlu0 %v5013
      %v5015 = vpop.xlane.xlu0 %5014
      %v5016 = vsel %vm4076, %v4704, 0.0
      %5017 = vadd.xlane.f32.xlu0 %v5016
      %v5018 = vpop.xlane.xlu0 %5017
      %v5019 = vsel %vm4076, %v4706, 0.0
      %5020 = vadd.xlane.f32.xlu0 %v5019
      %v5021 = vpop.xlane.xlu0 %5020
      %v5022 = vsel %vm4076, %v4708, 0.0
      %5023 = vadd.xlane.f32.xlu0 %v5022
      %v5024 = vpop.xlane.xlu0 %5023
      %v5025 = vsel %vm4076, %v4710, 0.0
      %5026 = vadd.xlane.f32.xlu0 %v5025
      %v5027 = vpop.xlane.xlu0 %5026
      %v5028 = vsel %vm4076, %v4712, 0.0
      %5029 = vadd.xlane.f32.xlu0 %v5028
      %v5030 = vpop.xlane.xlu0 %5029
      %v5031 = vsel %vm4076, %v4714, 0.0
      %5032 = vadd.xlane.f32.xlu0 %v5031
      %v5033 = vpop.xlane.xlu0 %5032
      %v5034 = vsel %vm4076, %v4716, 0.0
      %5035 = vadd.xlane.f32.xlu0 %v5034
      %v5036 = vpop.xlane.xlu0 %5035
      %v5037 = vsel %vm4076, %v4718, 0.0
      %5038 = vadd.xlane.f32.xlu0 %v5037
      %v5039 = vpop.xlane.xlu0 %5038
      %v5040 = vsel %vm4076, %v4720, 0.0
      %5041 = vadd.xlane.f32.xlu0 %v5040
      %v5042 = vpop.xlane.xlu0 %5041
      %v5043 = vsel %vm4076, %v4722, 0.0
      %5044 = vadd.xlane.f32.xlu0 %v5043
      %v5045 = vpop.xlane.xlu0 %5044
      %v5046 = vsel %vm4076, %v4724, 0.0
      %5047 = vadd.xlane.f32.xlu0 %v5046
      %v5048 = vpop.xlane.xlu0 %5047
      %v5049 = vsel %vm4076, %v4726, 0.0
      %5050 = vadd.xlane.f32.xlu0 %v5049
      %v5051 = vpop.xlane.xlu0 %5050
      %v5052 = vsel %vm4076, %v4728, 0.0
      %5053 = vadd.xlane.f32.xlu0 %v5052
      %v5054 = vpop.xlane.xlu0 %5053
      %v5055 = vsel %vm4076, %v4730, 0.0
      %5056 = vadd.xlane.f32.xlu0 %v5055
      %v5057 = vpop.xlane.xlu0 %5056
      %v5058 = vsel %vm4076, %v4732, 0.0
      %5059 = vadd.xlane.f32.xlu0 %v5058
      %v5060 = vpop.xlane.xlu0 %5059
      %v5061 = vsel %vm4076, %v4734, 0.0
      %5062 = vadd.xlane.f32.xlu0 %v5061
      %v5063 = vpop.xlane.xlu0 %5062
      %v5064 = vsel %vm4076, %v4736, 0.0
      %5065 = vadd.xlane.f32.xlu0 %v5064
      %v5066 = vpop.xlane.xlu0 %5065
      %v5067 = vsel %vm4076, %v4738, 0.0
      %5068 = vadd.xlane.f32.xlu0 %v5067
      %v5069 = vpop.xlane.xlu0 %5068
      %v5070 = vsel %vm4076, %v4740, 0.0
      %5071 = vadd.xlane.f32.xlu0 %v5070
      %v5072 = vpop.xlane.xlu0 %5071
      %v5073 = vsel %vm4076, %v4742, 0.0
      %5074 = vadd.xlane.f32.xlu0 %v5073
      %v5075 = vpop.xlane.xlu0 %5074
      %v5076 = vsel %vm4076, %v4744, 0.0
      %5077 = vadd.xlane.f32.xlu0 %v5076
      %v5078 = vpop.xlane.xlu0 %5077
      %v5079 = vsel %vm4076, %v4746, 0.0
      %5080 = vadd.xlane.f32.xlu0 %v5079
      %v5081 = vpop.xlane.xlu0 %5080
      %v5082 = vsel %vm4076, %v4748, 0.0
      %5083 = vadd.xlane.f32.xlu0 %v5082
      %v5084 = vpop.xlane.xlu0 %5083
      %v5085 = vsel %vm4076, %v4750, 0.0
      %5086 = vadd.xlane.f32.xlu0 %v5085
      %v5087 = vpop.xlane.xlu0 %5086
      %v5088 = vsel %vm4076, %v4752, 0.0
      %5089 = vadd.xlane.f32.xlu0 %v5088
      %v5090 = vpop.xlane.xlu0 %5089
      %v5091 = vsel %vm4076, %v4754, 0.0
      %5092 = vadd.xlane.f32.xlu0 %v5091
      %v5093 = vpop.xlane.xlu0 %5092
      %v5094 = vsel %vm4076, %v4756, 0.0
      %5095 = vadd.xlane.f32.xlu0 %v5094
      %v5096 = vpop.xlane.xlu0 %5095
      %v5097 = vsel %vm4076, %v4758, 0.0
      %5098 = vadd.xlane.f32.xlu0 %v5097
      %v5099 = vpop.xlane.xlu0 %5098
      %v5100 = vsel %vm4076, %v4760, 0.0
      %5101 = vadd.xlane.f32.xlu0 %v5100
      %v5102 = vpop.xlane.xlu0 %5101
      %v5103 = vsel %vm4076, %v4762, 0.0
      %5104 = vadd.xlane.f32.xlu0 %v5103
      %v5105 = vpop.xlane.xlu0 %5104
      %v5106 = vsel %vm4076, %v4764, 0.0
      %5107 = vadd.xlane.f32.xlu0 %v5106
      %v5108 = vpop.xlane.xlu0 %5107
      %v5109 = vsel %vm4076, %v4766, 0.0
      %5110 = vadd.xlane.f32.xlu0 %v5109
      %v5111 = vpop.xlane.xlu0 %5110
      %v5112 = vsel %vm4076, %v4768, 0.0
      %5113 = vadd.xlane.f32.xlu0 %v5112
      %v5114 = vpop.xlane.xlu0 %5113
      %v5115 = vsel %vm4076, %v4770, 0.0
      %5116 = vadd.xlane.f32.xlu0 %v5115
      %v5117 = vpop.xlane.xlu0 %5116
      %v5118 = vsel %vm4076, %v4772, 0.0
      %5119 = vadd.xlane.f32.xlu0 %v5118
      %v5120 = vpop.xlane.xlu0 %5119
      %v5121 = vsel %vm4076, %v4774, 0.0
      %5122 = vadd.xlane.f32.xlu0 %v5121
      %v5123 = vpop.xlane.xlu0 %5122
      %v5124 = vsel %vm4076, %v4776, 0.0
      %5125 = vadd.xlane.f32.xlu0 %v5124
      %v5126 = vpop.xlane.xlu0 %5125
      %v5127 = vsel %vm4076, %v4778, 0.0
      %5128 = vadd.xlane.f32.xlu0 %v5127
      %v5129 = vpop.xlane.xlu0 %5128
      %v5130 = vsel %vm4076, %v4780, 0.0
      %5131 = vadd.xlane.f32.xlu0 %v5130
      %v5132 = vpop.xlane.xlu0 %5131
      %v5133 = vsel %vm4076, %v4782, 0.0
      %5134 = vadd.xlane.f32.xlu0 %v5133
      %v5135 = vpop.xlane.xlu0 %5134
      %v5136 = vsel %vm4076, %v4784, 0.0
      %5137 = vadd.xlane.f32.xlu0 %v5136
      %v5138 = vpop.xlane.xlu0 %5137
      %v5139 = vsel %vm4076, %v4786, 0.0
      %5140 = vadd.xlane.f32.xlu0 %v5139
      %v5141 = vpop.xlane.xlu0 %5140
      %v5142 = vsel %vm4076, %v4788, 0.0
      %5143 = vadd.xlane.f32.xlu0 %v5142
      %v5144 = vpop.xlane.xlu0 %5143
      %v5145 = vsel %vm4076, %v4790, 0.0
      %5146 = vadd.xlane.f32.xlu0 %v5145
      %v5147 = vpop.xlane.xlu0 %5146
      %v5148 = vsel %vm4076, %v4792, 0.0
      %5149 = vadd.xlane.f32.xlu0 %v5148
      %v5150 = vpop.xlane.xlu0 %5149
      %v5151 = vsel %vm4076, %v4794, 0.0
      %5152 = vadd.xlane.f32.xlu0 %v5151
      %v5153 = vpop.xlane.xlu0 %5152
      %v5154 = vsel %vm4076, %v4796, 0.0
      %5155 = vadd.xlane.f32.xlu0 %v5154
      %v5156 = vpop.xlane.xlu0 %5155
      %v5157 = vsel %vm4076, %v4798, 0.0
      %5158 = vadd.xlane.f32.xlu0 %v5157
      %v5159 = vpop.xlane.xlu0 %5158
      %v5160 = vsel %vm4076, %v4800, 0.0
      %5161 = vadd.xlane.f32.xlu0 %v5160
      %v5162 = vpop.xlane.xlu0 %5161
      %v5163 = vsel %vm4076, %v4802, 0.0
      %5164 = vadd.xlane.f32.xlu0 %v5163
      %v5165 = vpop.xlane.xlu0 %5164
      %v5166 = vsel %vm4076, %v4804, 0.0
      %5167 = vadd.xlane.f32.xlu0 %v5166
      %v5168 = vpop.xlane.xlu0 %5167
      %v5169 = vsel %vm4076, %v4806, 0.0
      %5170 = vadd.xlane.f32.xlu0 %v5169
      %v5171 = vpop.xlane.xlu0 %5170
      %v5172 = vsel %vm4076, %v4808, 0.0
      %5173 = vadd.xlane.f32.xlu0 %v5172
      %v5174 = vpop.xlane.xlu0 %5173
      %v5175 = vsel %vm4076, %v4810, 0.0
      %5176 = vadd.xlane.f32.xlu0 %v5175
      %v5177 = vpop.xlane.xlu0 %5176
      %v5178 = vsel %vm4076, %v4812, 0.0
      %5179 = vadd.xlane.f32.xlu0 %v5178
      %v5180 = vpop.xlane.xlu0 %5179
      %v5181 = vsel %vm4076, %v4814, 0.0
      %5182 = vadd.xlane.f32.xlu0 %v5181
      %v5183 = vpop.xlane.xlu0 %5182
      %v5184 = vsel %vm4076, %v4816, 0.0
      %5185 = vadd.xlane.f32.xlu0 %v5184
      %v5186 = vpop.xlane.xlu0 %5185
      %v5187 = vsel %vm4076, %v4818, 0.0
      %5188 = vadd.xlane.f32.xlu0 %v5187
      %v5189 = vpop.xlane.xlu0 %5188
      %v5190 = vsel %vm4076, %v4820, 0.0
      %5191 = vadd.xlane.f32.xlu0 %v5190
      %v5192 = vpop.xlane.xlu0 %5191
      %v5193 = vsel %vm4076, %v4822, 0.0
      %5194 = vadd.xlane.f32.xlu0 %v5193
      %v5195 = vpop.xlane.xlu0 %5194
      %v5196 = vsel %vm4076, %v4824, 0.0
      %5197 = vadd.xlane.f32.xlu0 %v5196
      %v5198 = vpop.xlane.xlu0 %5197
      %v5199 = vsel %vm4076, %v4826, 0.0
      %5200 = vadd.xlane.f32.xlu0 %v5199
      %v5201 = vpop.xlane.xlu0 %5200
      %v5202 = vsel %vm4076, %v4828, 0.0
      %5203 = vadd.xlane.f32.xlu0 %v5202
      %v5204 = vpop.xlane.xlu0 %5203
      %v5205 = vsel %vm4076, %v4830, 0.0
      %5206 = vadd.xlane.f32.xlu0 %v5205
      %v5207 = vpop.xlane.xlu0 %5206
      %v5208 = vsel %vm4076, %v4832, 0.0
      %5209 = vadd.xlane.f32.xlu0 %v5208
      %v5210 = vpop.xlane.xlu0 %5209
      %v5211 = vsel %vm4076, %v4834, 0.0
      %5212 = vadd.xlane.f32.xlu0 %v5211
      %v5213 = vpop.xlane.xlu0 %5212
      %v5214 = vsel %vm4076, %v4836, 0.0
      %5215 = vadd.xlane.f32.xlu0 %v5214
      %v5216 = vpop.xlane.xlu0 %5215
      %v5217 = vsel %vm4076, %v4838, 0.0
      %5218 = vadd.xlane.f32.xlu0 %v5217
      %v5219 = vpop.xlane.xlu0 %5218
      %v5220 = vsel %vm4076, %v4840, 0.0
      %5221 = vadd.xlane.f32.xlu0 %v5220
      %v5222 = vpop.xlane.xlu0 %5221
      %v5223 = vsel %vm4076, %v4842, 0.0
      %5224 = vadd.xlane.f32.xlu0 %v5223
      %v5225 = vpop.xlane.xlu0 %5224
      %v5226 = vsel %vm4076, %v4844, 0.0
      %5227 = vadd.xlane.f32.xlu0 %v5226
      %v5228 = vpop.xlane.xlu0 %5227
      %v5229 = vrcp.pop %v4847
      %v5230 = vrcp.pop %v4850
      %v5231 = vrcp.pop %v4853
      %v5232 = vrcp.pop %v4856
      %v5233 = vrcp.pop %v4859
      %v5234 = vrcp.pop %v4862
      %v5235 = vrcp.pop %v4865
      %v5236 = vrcp.pop %v4868
      %v5237 = vrcp.pop %v4871
      %v5238 = vrcp.pop %v4874
      %v5239 = vrcp.pop %v4877
      %v5240 = vrcp.pop %v4880
      %v5241 = vrcp.pop %v4883
      %v5242 = vrcp.pop %v4886
      %v5243 = vrcp.pop %v4889
      %v5244 = vrcp.pop %v4892
      %v5245 = vrcp.pop %v4895
      %v5246 = vrcp.pop %v4898
      %v5247 = vrcp.pop %v4901
      %v5248 = vrcp.pop %v4904
      %v5249 = vrcp.pop %v4907
      %v5250 = vrcp.pop %v4910
      %v5251 = vrcp.pop %v4913
      %v5252 = vrcp.pop %v4916
      %v5253 = vrcp.pop %v4919
      %v5254 = vrcp.pop %v4922
      %v5255 = vrcp.pop %v4925
      %v5256 = vrcp.pop %v4928
      %v5257 = vrcp.pop %v4931
      %v5258 = vrcp.pop %v4934
      %v5259 = vrcp.pop %v4937
      %v5260 = vrcp.pop %v4940
      %v5261 = vrcp.pop %v4943
      %v5262 = vrcp.pop %v4946
      %v5263 = vrcp.pop %v4949
      %v5264 = vrcp.pop %v4952
      %v5265 = vrcp.pop %v4955
      %v5266 = vrcp.pop %v4958
      %v5267 = vrcp.pop %v4961
      %v5268 = vrcp.pop %v4964
      %v5269 = vrcp.pop %v4967
      %v5270 = vrcp.pop %v4970
      %v5271 = vrcp.pop %v4973
      %v5272 = vrcp.pop %v4976
      %v5273 = vrcp.pop %v4979
      %v5274 = vrcp.pop %v4982
      %v5275 = vrcp.pop %v4985
      %v5276 = vrcp.pop %v4988
      %v5277 = vrcp.pop %v4991
      %v5278 = vrcp.pop %v4994
      %v5279 = vrcp.pop %v4997
      %v5280 = vrcp.pop %v5000
      %v5281 = vrcp.pop %v5003
      %v5282 = vrcp.pop %v5006
      %v5283 = vrcp.pop %v5009
      %v5284 = vrcp.pop %v5012
      %v5285 = vrcp.pop %v5015
      %v5286 = vrcp.pop %v5018
      %v5287 = vrcp.pop %v5021
      %v5288 = vrcp.pop %v5024
      %v5289 = vrcp.pop %v5027
      %v5290 = vrcp.pop %v5030
      %v5291 = vrcp.pop %v5033
      %v5292 = vrcp.pop %v5036
      %v5293 = vrcp.pop %v5039
      %v5294 = vrcp.pop %v5042
      %v5295 = vrcp.pop %v5045
      %v5296 = vrcp.pop %v5048
      %v5297 = vrcp.pop %v5051
      %v5298 = vrcp.pop %v5054
      %v5299 = vrcp.pop %v5057
      %v5300 = vrcp.pop %v5060
      %v5301 = vrcp.pop %v5063
      %v5302 = vrcp.pop %v5066
      %v5303 = vrcp.pop %v5069
      %v5304 = vrcp.pop %v5072
      %v5305 = vrcp.pop %v5075
      %v5306 = vrcp.pop %v5078
      %v5307 = vrcp.pop %v5081
      %v5308 = vrcp.pop %v5084
      %v5309 = vrcp.pop %v5087
      %v5310 = vrcp.pop %v5090
      %v5311 = vrcp.pop %v5093
      %v5312 = vrcp.pop %v5096
      %v5313 = vrcp.pop %v5099
      %v5314 = vrcp.pop %v5102
      %v5315 = vrcp.pop %v5105
      %v5316 = vrcp.pop %v5108
      %v5317 = vrcp.pop %v5111
      %v5318 = vrcp.pop %v5114
      %v5319 = vrcp.pop %v5117
      %v5320 = vrcp.pop %v5120
      %v5321 = vrcp.pop %v5123
      %v5322 = vrcp.pop %v5126
      %v5323 = vrcp.pop %v5129
      %v5324 = vrcp.pop %v5132
      %v5325 = vrcp.pop %v5135
      %v5326 = vrcp.pop %v5138
      %v5327 = vrcp.pop %v5141
      %v5328 = vrcp.pop %v5144
      %v5329 = vrcp.pop %v5147
      %v5330 = vrcp.pop %v5150
      %v5331 = vrcp.pop %v5153
      %v5332 = vrcp.pop %v5156
      %v5333 = vrcp.pop %v5159
      %v5334 = vrcp.pop %v5162
      %v5335 = vrcp.pop %v5165
      %v5336 = vrcp.pop %v5168
      %v5337 = vrcp.pop %v5171
      %v5338 = vrcp.pop %v5174
      %v5339 = vrcp.pop %v5177
      %v5340 = vrcp.pop %v5180
      %v5341 = vrcp.pop %v5183
      %v5342 = vrcp.pop %v5186
      %v5343 = vrcp.pop %v5189
      %v5344 = vrcp.pop %v5192
      %v5345 = vrcp.pop %v5195
      %v5346 = vrcp.pop %v5198
      %v5347 = vrcp.pop %v5201
      %v5348 = vrcp.pop %v5204
      %v5349 = vrcp.pop %v5207
      %v5350 = vrcp.pop %v5210
      %v5351 = vrcp.pop %v5213
      %v5352 = vrcp.pop %v5216
      %v5353 = vrcp.pop %v5219
      %v5354 = vrcp.pop %v5222
      %v5355 = vrcp.pop %v5225
      %v5356 = vrcp.pop %v5228
      %v5357 = vmul.f32 %v4590, %v5229
      %v5358 = vmul.f32 %v4592, %v5230
      %v5359 = vmul.f32 %v4594, %v5231
      %v5360 = vmul.f32 %v4596, %v5232
      %v5361 = vmul.f32 %v4598, %v5233
      %v5362 = vmul.f32 %v4600, %v5234
      %v5363 = vmul.f32 %v4602, %v5235
      %v5364 = vmul.f32 %v4604, %v5236
      %v5365 = vmul.f32 %v4606, %v5237
      %v5366 = vmul.f32 %v4608, %v5238
      %v5367 = vmul.f32 %v4610, %v5239
      %v5368 = vmul.f32 %v4612, %v5240
      %v5369 = vmul.f32 %v4614, %v5241
      %v5370 = vmul.f32 %v4616, %v5242
      %v5371 = vmul.f32 %v4618, %v5243
      %v5372 = vmul.f32 %v4620, %v5244
      %v5373 = vmul.f32 %v4622, %v5245
      %v5374 = vmul.f32 %v4624, %v5246
      %v5375 = vmul.f32 %v4626, %v5247
      %v5376 = vmul.f32 %v4628, %v5248
      %v5377 = vmul.f32 %v4630, %v5249
      %v5378 = vmul.f32 %v4632, %v5250
      %v5379 = vmul.f32 %v4634, %v5251
      %v5380 = vmul.f32 %v4636, %v5252
      %v5381 = vmul.f32 %v4638, %v5253
      %v5382 = vmul.f32 %v4640, %v5254
      %v5383 = vmul.f32 %v4642, %v5255
      %v5384 = vmul.f32 %v4644, %v5256
      %v5385 = vmul.f32 %v4646, %v5257
      %v5386 = vmul.f32 %v4648, %v5258
      %v5387 = vmul.f32 %v4650, %v5259
      %v5388 = vmul.f32 %v4652, %v5260
      %v5389 = vmul.f32 %v4654, %v5261
      %v5390 = vmul.f32 %v4656, %v5262
      %v5391 = vmul.f32 %v4658, %v5263
      %v5392 = vmul.f32 %v4660, %v5264
      %v5393 = vmul.f32 %v4662, %v5265
      %v5394 = vmul.f32 %v4664, %v5266
      %v5395 = vmul.f32 %v4666, %v5267
      %v5396 = vmul.f32 %v4668, %v5268
      %v5397 = vmul.f32 %v4670, %v5269
      %v5398 = vmul.f32 %v4672, %v5270
      %v5399 = vmul.f32 %v4674, %v5271
      %v5400 = vmul.f32 %v4676, %v5272
      %v5401 = vmul.f32 %v4678, %v5273
      %v5402 = vmul.f32 %v4680, %v5274
      %v5403 = vmul.f32 %v4682, %v5275
      %v5404 = vmul.f32 %v4684, %v5276
      %v5405 = vmul.f32 %v4686, %v5277
      %v5406 = vmul.f32 %v4688, %v5278
      %v5407 = vmul.f32 %v4690, %v5279
      %v5408 = vmul.f32 %v4692, %v5280
      %v5409 = vmul.f32 %v4694, %v5281
      %v5410 = vmul.f32 %v4696, %v5282
      %v5411 = vmul.f32 %v4698, %v5283
      %v5412 = vmul.f32 %v4700, %v5284
      %v5413 = vmul.f32 %v4702, %v5285
      %v5414 = vmul.f32 %v4704, %v5286
      %v5415 = vmul.f32 %v4706, %v5287
      %v5416 = vmul.f32 %v4708, %v5288
      %v5417 = vmul.f32 %v4710, %v5289
      %v5418 = vmul.f32 %v4712, %v5290
      %v5419 = vmul.f32 %v4714, %v5291
      %v5420 = vmul.f32 %v4716, %v5292
      %v5421 = vmul.f32 %v4718, %v5293
      %v5422 = vmul.f32 %v4720, %v5294
      %v5423 = vmul.f32 %v4722, %v5295
      %v5424 = vmul.f32 %v4724, %v5296
      %v5425 = vmul.f32 %v4726, %v5297
      %v5426 = vmul.f32 %v4728, %v5298
      %v5427 = vmul.f32 %v4730, %v5299
      %v5428 = vmul.f32 %v4732, %v5300
      %v5429 = vmul.f32 %v4734, %v5301
      %v5430 = vmul.f32 %v4736, %v5302
      %v5431 = vmul.f32 %v4738, %v5303
      %v5432 = vmul.f32 %v4740, %v5304
      %v5433 = vmul.f32 %v4742, %v5305
      %v5434 = vmul.f32 %v4744, %v5306
      %v5435 = vmul.f32 %v4746, %v5307
      %v5436 = vmul.f32 %v4748, %v5308
      %v5437 = vmul.f32 %v4750, %v5309
      %v5438 = vmul.f32 %v4752, %v5310
      %v5439 = vmul.f32 %v4754, %v5311
      %v5440 = vmul.f32 %v4756, %v5312
      %v5441 = vmul.f32 %v4758, %v5313
      %v5442 = vmul.f32 %v4760, %v5314
      %v5443 = vmul.f32 %v4762, %v5315
      %v5444 = vmul.f32 %v4764, %v5316
      %v5445 = vmul.f32 %v4766, %v5317
      %v5446 = vmul.f32 %v4768, %v5318
      %v5447 = vmul.f32 %v4770, %v5319
      %v5448 = vmul.f32 %v4772, %v5320
      %v5449 = vmul.f32 %v4774, %v5321
      %v5450 = vmul.f32 %v4776, %v5322
      %v5451 = vmul.f32 %v4778, %v5323
      %v5452 = vmul.f32 %v4780, %v5324
      %v5453 = vmul.f32 %v4782, %v5325
      %v5454 = vmul.f32 %v4784, %v5326
      %v5455 = vmul.f32 %v4786, %v5327
      %v5456 = vmul.f32 %v4788, %v5328
      %v5457 = vmul.f32 %v4790, %v5329
      %v5458 = vmul.f32 %v4792, %v5330
      %v5459 = vmul.f32 %v4794, %v5331
      %v5460 = vmul.f32 %v4796, %v5332
      %v5461 = vmul.f32 %v4798, %v5333
      %v5462 = vmul.f32 %v4800, %v5334
      %v5463 = vmul.f32 %v4802, %v5335
      %v5464 = vmul.f32 %v4804, %v5336
      %v5465 = vmul.f32 %v4806, %v5337
      %v5466 = vmul.f32 %v4808, %v5338
      %v5467 = vmul.f32 %v4810, %v5339
      %v5468 = vmul.f32 %v4812, %v5340
      %v5469 = vmul.f32 %v4814, %v5341
      %v5470 = vmul.f32 %v4816, %v5342
      %v5471 = vmul.f32 %v4818, %v5343
      %v5472 = vmul.f32 %v4820, %v5344
      %v5473 = vmul.f32 %v4822, %v5345
      %v5474 = vmul.f32 %v4824, %v5346
      %v5475 = vmul.f32 %v4826, %v5347
      %v5476 = vmul.f32 %v4828, %v5348
      %v5477 = vmul.f32 %v4830, %v5349
      %v5478 = vmul.f32 %v4832, %v5350
      %v5479 = vmul.f32 %v4834, %v5351
      %v5480 = vmul.f32 %v4836, %v5352
      %v5481 = vmul.f32 %v4838, %v5353
      %v5482 = vmul.f32 %v4840, %v5354
      %v5483 = vmul.f32 %v4842, %v5355
      %v5484 = vmul.f32 %v4844, %v5356
      %5485 = vrot.lane.b32.xlu0 %v1117, 64
      %v5486 = vpop.permute.xlu0 %5485
      %5487 = vrot.lane.b32.xlu0 %v1122, 64
      %v5488 = vpop.permute.xlu0 %5487
      %5489 = vrot.lane.b32.xlu0 %v1127, 64
      %v5490 = vpop.permute.xlu0 %5489
      %5491 = vrot.lane.b32.xlu0 %v1132, 64
      %v5492 = vpop.permute.xlu0 %5491
      %5493 = vrot.lane.b32.xlu0 %v1137, 64
      %v5494 = vpop.permute.xlu0 %5493
      %5495 = vrot.lane.b32.xlu0 %v1142, 64
      %v5496 = vpop.permute.xlu0 %5495
      %5497 = vrot.lane.b32.xlu0 %v1147, 64
      %v5498 = vpop.permute.xlu0 %5497
      %5499 = vrot.lane.b32.xlu0 %v1152, 64
      %v5500 = vpop.permute.xlu0 %5499
      %v5510 = vsel %vm4076, %v5357, 0
      %v5513 = vsel %vm4076, %v5358, 0
      %v5516 = vsel %vm4076, %v5359, 0
      %v5519 = vsel %vm4076, %v5360, 0
      %v5522 = vsel %vm4076, %v5361, 0
      %v5525 = vsel %vm4076, %v5362, 0
      %v5528 = vsel %vm4076, %v5363, 0
      %v5531 = vsel %vm4076, %v5364, 0
      %5533 = vmatprep.subr.mxu0 0.0
      %5534 = vmatpush1.msra.mxu0 %v5486
      %5535 = vmatprep.subr.mxu0 0.0
      %5536 = vmatpush1.msra.mxu0 %v5488
      %5537 = vmatprep.subr.mxu0 0.0
      %5538 = vmatpush1.msra.mxu0 %v5490
      %5539 = vmatprep.subr.mxu0 0.0
      %5540 = vmatpush1.msra.mxu0 %v5492
      %5541 = vmatprep.subr.mxu0 0.0
      %5542 = vmatpush1.msra.mxu0 %v5494
      %5543 = vmatprep.subr.mxu0 0.0
      %5544 = vmatpush1.msra.mxu0 %v5496
      %5545 = vmatprep.subr.mxu0 0.0
      %5546 = vmatpush1.msra.mxu0 %v5498
      %5547 = vmatprep.subr.mxu0 0.0
      %5548 = vmatpush1.msra.mxu0 %v5500
      %5549 = vmatprep.subr.mxu0 0.0
      %5550 = vmatpush1.msra.mxu0 0.0
      %5551 = vmatprep.subr.mxu0 0.0
      %5552 = vmatpush1.msra.mxu0 0.0
      %5553 = vmatprep.subr.mxu0 0.0
      %5554 = vmatpush1.msra.mxu0 0.0
      %5555 = vmatprep.subr.mxu0 0.0
      %5556 = vmatpush1.msra.mxu0 0.0
      %5557 = vmatprep.subr.mxu0 0.0
      %5558 = vmatpush1.msra.mxu0 0.0
      %5559 = vmatprep.subr.mxu0 0.0
      %5560 = vmatpush1.msra.mxu0 0.0
      %5561 = vmatprep.subr.mxu0 0.0
      %5562 = vmatpush1.msra.mxu0 0.0
      %5563 = vmatprep.subr.mxu0 0.0
      %5564 = vmatpush1.msra.mxu0 0.0
      %5565 = vmatprep.subr.mxu0 0.0
      %5566 = vmatpush1.msra.mxu0 0.0
      %5567 = vmatprep.subr.mxu0 0.0
      %5568 = vmatpush1.msra.mxu0 0.0
      %5569 = vmatprep.subr.mxu0 0.0
      %5570 = vmatpush1.msra.mxu0 0.0
      %5571 = vmatprep.subr.mxu0 0.0
      %5572 = vmatpush1.msra.mxu0 0.0
      %5573 = vmatprep.subr.mxu0 0.0
      %5574 = vmatpush1.msra.mxu0 0.0
      %5575 = vmatprep.subr.mxu0 0.0
      %5576 = vmatpush1.msra.mxu0 0.0
      %5577 = vmatprep.subr.mxu0 0.0
      %5578 = vmatpush1.msra.mxu0 0.0
      %5579 = vmatprep.subr.mxu0 0.0
      %5580 = vmatpush1.msra.mxu0 0.0
      %5581 = vmatprep.subr.mxu0 0.0
      %5582 = vmatpush1.msra.mxu0 0.0
      %5583 = vmatprep.subr.mxu0 0.0
      %5584 = vmatpush1.msra.mxu0 0.0
      %5585 = vmatprep.subr.mxu0 0.0
      %5586 = vmatpush1.msra.mxu0 0.0
      %5587 = vmatprep.subr.mxu0 0.0
      %5588 = vmatpush1.msra.mxu0 0.0
      %5589 = vmatprep.subr.mxu0 0.0
      %5590 = vmatpush1.msra.mxu0 0.0
      %5591 = vmatprep.subr.mxu0 0.0
      %5592 = vmatpush1.msra.mxu0 0.0
      %5593 = vmatprep.subr.mxu0 0.0
      %5594 = vmatpush1.msra.mxu0 0.0
      %5595 = vmatprep.subr.mxu0 0.0
      %5596 = vmatpush1.msra.mxu0 0.0
      %5597 = vmatprep.mubr.f32.mxu0 0.0
      %5598 = vmatmul.mubr.f32.gmra.mrb[0].mxu0 %v5510
      %v5599 = vpop.f32.mrb[0].mxu0
      %v5600 = vadd.f32 0.0, %v5599
      %v5601 = vpop.f32.mrb[0].mxu0
      %5602 = vmatprep.mubr.f32.mxu0 0.0
      %5603 = vmatmul.mubr.f32.gmra.mrb[0].mxu0 %v5513
      %v5604 = vpop.f32.mrb[0].mxu0
      %v5605 = vadd.f32 0.0, %v5604
      %v5606 = vpop.f32.mrb[0].mxu0
      %5607 = vmatprep.mubr.f32.mxu0 0.0
      %5608 = vmatmul.mubr.f32.gmra.mrb[0].mxu0 %v5516
      %v5609 = vpop.f32.mrb[0].mxu0
      %v5610 = vadd.f32 0.0, %v5609
      %v5611 = vpop.f32.mrb[0].mxu0
      %5612 = vmatprep.mubr.f32.mxu0 0.0
      %5613 = vmatmul.mubr.f32.gmra.mrb[0].mxu0 %v5519
      %v5614 = vpop.f32.mrb[0].mxu0
      %v5615 = vadd.f32 0.0, %v5614
      %v5616 = vpop.f32.mrb[0].mxu0
      %5617 = vmatprep.mubr.f32.mxu0 0.0
      %5618 = vmatmul.mubr.f32.gmra.mrb[0].mxu0 %v5522
      %v5619 = vpop.f32.mrb[0].mxu0
      %v5620 = vadd.f32 0.0, %v5619
      %v5621 = vpop.f32.mrb[0].mxu0
      %5622 = vmatprep.mubr.f32.mxu0 0.0
      %5623 = vmatmul.mubr.f32.gmra.mrb[0].mxu0 %v5525
      %v5624 = vpop.f32.mrb[0].mxu0
      %v5625 = vadd.f32 0.0, %v5624
      %v5626 = vpop.f32.mrb[0].mxu0
      %5627 = vmatprep.mubr.f32.mxu0 0.0
      %5628 = vmatmul.mubr.f32.gmra.mrb[0].mxu0 %v5528
      %v5629 = vpop.f32.mrb[0].mxu0
      %v5630 = vadd.f32 0.0, %v5629
      %v5631 = vpop.f32.mrb[0].mxu0
      %5632 = vmatprep.mubr.f32.mxu0 0.0
      %5633 = vmatmul.mubr.f32.gmra.mrb[0].mxu0 %v5531
      %v5634 = vpop.f32.mrb[0].mxu0
      %v5635 = vadd.f32 0.0, %v5634
      %v5636 = vpop.f32.mrb[0].mxu0
      %5637 = vdwg.mxu0
      %5638 = vrot.lane.b32.xlu0 %v1157, 64
      %v5639 = vpop.permute.xlu0 %5638
      %5640 = vrot.lane.b32.xlu0 %v1162, 64
      %v5641 = vpop.permute.xlu0 %5640
      %5642 = vrot.lane.b32.xlu0 %v1167, 64
      %v5643 = vpop.permute.xlu0 %5642
      %5644 = vrot.lane.b32.xlu0 %v1172, 64
      %v5645 = vpop.permute.xlu0 %5644
      %5646 = vrot.lane.b32.xlu0 %v1177, 64
      %v5647 = vpop.permute.xlu0 %5646
      %5648 = vrot.lane.b32.xlu0 %v1182, 64
      %v5649 = vpop.permute.xlu0 %5648
      %5650 = vrot.lane.b32.xlu0 %v1187, 64
      %v5651 = vpop.permute.xlu0 %5650
      %5652 = vrot.lane.b32.xlu0 %v1192, 64
      %v5653 = vpop.permute.xlu0 %5652
      %v5663 = vsel %vm4076, %v5365, 0
      %v5666 = vsel %vm4076, %v5366, 0
      %v5669 = vsel %vm4076, %v5367, 0
      %v5672 = vsel %vm4076, %v5368, 0
      %v5675 = vsel %vm4076, %v5369, 0
      %v5678 = vsel %vm4076, %v5370, 0
      %v5681 = vsel %vm4076, %v5371, 0
      %v5684 = vsel %vm4076, %v5372, 0
      %5686 = vmatprep.subr.mxu0 0.0
      %5687 = vmatpush1.msra.mxu0 %v5639
      %5688 = vmatprep.subr.mxu0 0.0
      %5689 = vmatpush1.msra.mxu0 %v5641
      %5690 = vmatprep.subr.mxu0 0.0
      %5691 = vmatpush1.msra.mxu0 %v5643
      %5692 = vmatprep.subr.mxu0 0.0
      %5693 = vmatpush1.msra.mxu0 %v5645
      %5694 = vmatprep.subr.mxu0 0.0
      %5695 = vmatpush1.msra.mxu0 %v5647
      %5696 = vmatprep.subr.mxu0 0.0
      %5697 = vmatpush1.msra.mxu0 %v5649
      %5698 = vmatprep.subr.mxu0 0.0
      %5699 = vmatpush1.msra.mxu0 %v5651
      %5700 = vmatprep.subr.mxu0 0.0
      %5701 = vmatpush1.msra.mxu0 %v5653
      %5702 = vmatprep.subr.mxu0 0.0
      %5703 = vmatpush1.msra.mxu0 0.0
      %5704 = vmatprep.subr.mxu0 0.0
      %5705 = vmatpush1.msra.mxu0 0.0
      %5706 = vmatprep.subr.mxu0 0.0
      %5707 = vmatpush1.msra.mxu0 0.0
      %5708 = vmatprep.subr.mxu0 0.0
      %5709 = vmatpush1.msra.mxu0 0.0
      %5710 = vmatprep.subr.mxu0 0.0
      %5711 = vmatpush1.msra.mxu0 0.0
      %5712 = vmatprep.subr.mxu0 0.0
      %5713 = vmatpush1.msra.mxu0 0.0
      %5714 = vmatprep.subr.mxu0 0.0
      %5715 = vmatpush1.msra.mxu0 0.0
      %5716 = vmatprep.subr.mxu0 0.0
      %5717 = vmatpush1.msra.mxu0 0.0
      %5718 = vmatprep.subr.mxu0 0.0
      %5719 = vmatpush1.msra.mxu0 0.0
      %5720 = vmatprep.subr.mxu0 0.0
      %5721 = vmatpush1.msra.mxu0 0.0
      %5722 = vmatprep.subr.mxu0 0.0
      %5723 = vmatpush1.msra.mxu0 0.0
      %5724 = vmatprep.subr.mxu0 0.0
      %5725 = vmatpush1.msra.mxu0 0.0
      %5726 = vmatprep.subr.mxu0 0.0
      %5727 = vmatpush1.msra.mxu0 0.0
      %5728 = vmatprep.subr.mxu0 0.0
      %5729 = vmatpush1.msra.mxu0 0.0
      %5730 = vmatprep.subr.mxu0 0.0
      %5731 = vmatpush1.msra.mxu0 0.0
      %5732 = vmatprep.subr.mxu0 0.0
      %5733 = vmatpush1.msra.mxu0 0.0
      %5734 = vmatprep.subr.mxu0 0.0
      %5735 = vmatpush1.msra.mxu0 0.0
      %5736 = vmatprep.subr.mxu0 0.0
      %5737 = vmatpush1.msra.mxu0 0.0
      %5738 = vmatprep.subr.mxu0 0.0
      %5739 = vmatpush1.msra.mxu0 0.0
      %5740 = vmatprep.subr.mxu0 0.0
      %5741 = vmatpush1.msra.mxu0 0.0
      %5742 = vmatprep.subr.mxu0 0.0
      %5743 = vmatpush1.msra.mxu0 0.0
      %5744 = vmatprep.subr.mxu0 0.0
      %5745 = vmatpush1.msra.mxu0 0.0
      %5746 = vmatprep.subr.mxu0 0.0
      %5747 = vmatpush1.msra.mxu0 0.0
      %5748 = vmatprep.subr.mxu0 0.0
      %5749 = vmatpush1.msra.mxu0 0.0
      %5750 = vmatprep.mubr.f32.mxu0 0.0
      %5751 = vmatmul.mubr.f32.gmra.mrb[0].mxu0 %v5663
      %v5752 = vpop.f32.mrb[0].mxu0
      %v5753 = vadd.f32 0.0, %v5752
      %v5754 = vpop.f32.mrb[0].mxu0
      %5755 = vmatprep.mubr.f32.mxu0 0.0
      %5756 = vmatmul.mubr.f32.gmra.mrb[0].mxu0 %v5666
      %v5757 = vpop.f32.mrb[0].mxu0
      %v5758 = vadd.f32 0.0, %v5757
      %v5759 = vpop.f32.mrb[0].mxu0
      %5760 = vmatprep.mubr.f32.mxu0 0.0
      %5761 = vmatmul.mubr.f32.gmra.mrb[0].mxu0 %v5669
      %v5762 = vpop.f32.mrb[0].mxu0
      %v5763 = vadd.f32 0.0, %v5762
      %v5764 = vpop.f32.mrb[0].mxu0
      %5765 = vmatprep.mubr.f32.mxu0 0.0
      %5766 = vmatmul.mubr.f32.gmra.mrb[0].mxu0 %v5672
      %v5767 = vpop.f32.mrb[0].mxu0
      %v5768 = vadd.f32 0.0, %v5767
      %v5769 = vpop.f32.mrb[0].mxu0
      %5770 = vmatprep.mubr.f32.mxu0 0.0
      %5771 = vmatmul.mubr.f32.gmra.mrb[0].mxu0 %v5675
      %v5772 = vpop.f32.mrb[0].mxu0
      %v5773 = vadd.f32 0.0, %v5772
      %v5774 = vpop.f32.mrb[0].mxu0
      %5775 = vmatprep.mubr.f32.mxu0 0.0
      %5776 = vmatmul.mubr.f32.gmra.mrb[0].mxu0 %v5678
      %v5777 = vpop.f32.mrb[0].mxu0
      %v5778 = vadd.f32 0.0, %v5777
      %v5779 = vpop.f32.mrb[0].mxu0
      %5780 = vmatprep.mubr.f32.mxu0 0.0
      %5781 = vmatmul.mubr.f32.gmra.mrb[0].mxu0 %v5681
      %v5782 = vpop.f32.mrb[0].mxu0
      %v5783 = vadd.f32 0.0, %v5782
      %v5784 = vpop.f32.mrb[0].mxu0
      %5785 = vmatprep.mubr.f32.mxu0 0.0
      %5786 = vmatmul.mubr.f32.gmra.mrb[0].mxu0 %v5684
      %v5787 = vpop.f32.mrb[0].mxu0
      %v5788 = vadd.f32 0.0, %v5787
      %v5789 = vpop.f32.mrb[0].mxu0
      %5790 = vdwg.mxu0
      %5791 = vrot.lane.b32.xlu0 %v1197, 64
      %v5792 = vpop.permute.xlu0 %5791
      %5793 = vrot.lane.b32.xlu0 %v1202, 64
      %v5794 = vpop.permute.xlu0 %5793
      %5795 = vrot.lane.b32.xlu0 %v1207, 64
      %v5796 = vpop.permute.xlu0 %5795
      %5797 = vrot.lane.b32.xlu0 %v1212, 64
      %v5798 = vpop.permute.xlu0 %5797
      %5799 = vrot.lane.b32.xlu0 %v1217, 64
      %v5800 = vpop.permute.xlu0 %5799
      %5801 = vrot.lane.b32.xlu0 %v1222, 64
      %v5802 = vpop.permute.xlu0 %5801
      %5803 = vrot.lane.b32.xlu0 %v1227, 64
      %v5804 = vpop.permute.xlu0 %5803
      %5805 = vrot.lane.b32.xlu0 %v1232, 64
      %v5806 = vpop.permute.xlu0 %5805
      %v5816 = vsel %vm4076, %v5373, 0
      %v5819 = vsel %vm4076, %v5374, 0
      %v5822 = vsel %vm4076, %v5375, 0
      %v5825 = vsel %vm4076, %v5376, 0
      %v5828 = vsel %vm4076, %v5377, 0
      %v5831 = vsel %vm4076, %v5378, 0
      %v5834 = vsel %vm4076, %v5379, 0
      %v5837 = vsel %vm4076, %v5380, 0
      %5839 = vmatprep.subr.mxu0 0.0
      %5840 = vmatpush1.msra.mxu0 %v5792
      %5841 = vmatprep.subr.mxu0 0.0
      %5842 = vmatpush1.msra.mxu0 %v5794
      %5843 = vmatprep.subr.mxu0 0.0
      %5844 = vmatpush1.msra.mxu0 %v5796
      %5845 = vmatprep.subr.mxu0 0.0
      %5846 = vmatpush1.msra.mxu0 %v5798
      %5847 = vmatprep.subr.mxu0 0.0
      %5848 = vmatpush1.msra.mxu0 %v5800
      %5849 = vmatprep.subr.mxu0 0.0
      %5850 = vmatpush1.msra.mxu0 %v5802
      %5851 = vmatprep.subr.mxu0 0.0
      %5852 = vmatpush1.msra.mxu0 %v5804
      %5853 = vmatprep.subr.mxu0 0.0
      %5854 = vmatpush1.msra.mxu0 %v5806
      %5855 = vmatprep.subr.mxu0 0.0
      %5856 = vmatpush1.msra.mxu0 0.0
      %5857 = vmatprep.subr.mxu0 0.0
      %5858 = vmatpush1.msra.mxu0 0.0
      %5859 = vmatprep.subr.mxu0 0.0
      %5860 = vmatpush1.msra.mxu0 0.0
      %5861 = vmatprep.subr.mxu0 0.0
      %5862 = vmatpush1.msra.mxu0 0.0
      %5863 = vmatprep.subr.mxu0 0.0
      %5864 = vmatpush1.msra.mxu0 0.0
      %5865 = vmatprep.subr.mxu0 0.0
      %5866 = vmatpush1.msra.mxu0 0.0
      %5867 = vmatprep.subr.mxu0 0.0
      %5868 = vmatpush1.msra.mxu0 0.0
      %5869 = vmatprep.subr.mxu0 0.0
      %5870 = vmatpush1.msra.mxu0 0.0
      %5871 = vmatprep.subr.mxu0 0.0
      %5872 = vmatpush1.msra.mxu0 0.0
      %5873 = vmatprep.subr.mxu0 0.0
      %5874 = vmatpush1.msra.mxu0 0.0
      %5875 = vmatprep.subr.mxu0 0.0
      %5876 = vmatpush1.msra.mxu0 0.0
      %5877 = vmatprep.subr.mxu0 0.0
      %5878 = vmatpush1.msra.mxu0 0.0
      %5879 = vmatprep.subr.mxu0 0.0
      %5880 = vmatpush1.msra.mxu0 0.0
      %5881 = vmatprep.subr.mxu0 0.0
      %5882 = vmatpush1.msra.mxu0 0.0
      %5883 = vmatprep.subr.mxu0 0.0
      %5884 = vmatpush1.msra.mxu0 0.0
      %5885 = vmatprep.subr.mxu0 0.0
      %5886 = vmatpush1.msra.mxu0 0.0
      %5887 = vmatprep.subr.mxu0 0.0
      %5888 = vmatpush1.msra.mxu0 0.0
      %5889 = vmatprep.subr.mxu0 0.0
      %5890 = vmatpush1.msra.mxu0 0.0
      %5891 = vmatprep.subr.mxu0 0.0
      %5892 = vmatpush1.msra.mxu0 0.0
      %5893 = vmatprep.subr.mxu0 0.0
      %5894 = vmatpush1.msra.mxu0 0.0
      %5895 = vmatprep.subr.mxu0 0.0
      %5896 = vmatpush1.msra.mxu0 0.0
      %5897 = vmatprep.subr.mxu0 0.0
      %5898 = vmatpush1.msra.mxu0 0.0
      %5899 = vmatprep.subr.mxu0 0.0
      %5900 = vmatpush1.msra.mxu0 0.0
      %5901 = vmatprep.subr.mxu0 0.0
      %5902 = vmatpush1.msra.mxu0 0.0
      %5903 = vmatprep.mubr.f32.mxu0 0.0
      %5904 = vmatmul.mubr.f32.gmra.mrb[0].mxu0 %v5816
      %v5905 = vpop.f32.mrb[0].mxu0
      %v5906 = vadd.f32 0.0, %v5905
      %v5907 = vpop.f32.mrb[0].mxu0
      %5908 = vmatprep.mubr.f32.mxu0 0.0
      %5909 = vmatmul.mubr.f32.gmra.mrb[0].mxu0 %v5819
      %v5910 = vpop.f32.mrb[0].mxu0
      %v5911 = vadd.f32 0.0, %v5910
      %v5912 = vpop.f32.mrb[0].mxu0
      %5913 = vmatprep.mubr.f32.mxu0 0.0
      %5914 = vmatmul.mubr.f32.gmra.mrb[0].mxu0 %v5822
      %v5915 = vpop.f32.mrb[0].mxu0
      %v5916 = vadd.f32 0.0, %v5915
      %v5917 = vpop.f32.mrb[0].mxu0
      %5918 = vmatprep.mubr.f32.mxu0 0.0
      %5919 = vmatmul.mubr.f32.gmra.mrb[0].mxu0 %v5825
      %v5920 = vpop.f32.mrb[0].mxu0
      %v5921 = vadd.f32 0.0, %v5920
      %v5922 = vpop.f32.mrb[0].mxu0
      %5923 = vmatprep.mubr.f32.mxu0 0.0
      %5924 = vmatmul.mubr.f32.gmra.mrb[0].mxu0 %v5828
      %v5925 = vpop.f32.mrb[0].mxu0
      %v5926 = vadd.f32 0.0, %v5925
      %v5927 = vpop.f32.mrb[0].mxu0
      %5928 = vmatprep.mubr.f32.mxu0 0.0
      %5929 = vmatmul.mubr.f32.gmra.mrb[0].mxu0 %v5831
      %v5930 = vpop.f32.mrb[0].mxu0
      %v5931 = vadd.f32 0.0, %v5930
      %v5932 = vpop.f32.mrb[0].mxu0
      %5933 = vmatprep.mubr.f32.mxu0 0.0
      %5934 = vmatmul.mubr.f32.gmra.mrb[0].mxu0 %v5834
      %v5935 = vpop.f32.mrb[0].mxu0
      %v5936 = vadd.f32 0.0, %v5935
      %v5937 = vpop.f32.mrb[0].mxu0
      %5938 = vmatprep.mubr.f32.mxu0 0.0
      %5939 = vmatmul.mubr.f32.gmra.mrb[0].mxu0 %v5837
      %v5940 = vpop.f32.mrb[0].mxu0
      %v5941 = vadd.f32 0.0, %v5940
      %v5942 = vpop.f32.mrb[0].mxu0
      %5943 = vdwg.mxu0
      %5944 = vrot.lane.b32.xlu0 %v1237, 64
      %v5945 = vpop.permute.xlu0 %5944
      %5946 = vrot.lane.b32.xlu0 %v1242, 64
      %v5947 = vpop.permute.xlu0 %5946
      %5948 = vrot.lane.b32.xlu0 %v1247, 64
      %v5949 = vpop.permute.xlu0 %5948
      %5950 = vrot.lane.b32.xlu0 %v1252, 64
      %v5951 = vpop.permute.xlu0 %5950
      %5952 = vrot.lane.b32.xlu0 %v1257, 64
      %v5953 = vpop.permute.xlu0 %5952
      %5954 = vrot.lane.b32.xlu0 %v1262, 64
      %v5955 = vpop.permute.xlu0 %5954
      %5956 = vrot.lane.b32.xlu0 %v1267, 64
      %v5957 = vpop.permute.xlu0 %5956
      %5958 = vrot.lane.b32.xlu0 %v1272, 64
      %v5959 = vpop.permute.xlu0 %5958
      %v5969 = vsel %vm4076, %v5381, 0
      %v5972 = vsel %vm4076, %v5382, 0
      %v5975 = vsel %vm4076, %v5383, 0
      %v5978 = vsel %vm4076, %v5384, 0
      %v5981 = vsel %vm4076, %v5385, 0
      %v5984 = vsel %vm4076, %v5386, 0
      %v5987 = vsel %vm4076, %v5387, 0
      %v5990 = vsel %vm4076, %v5388, 0
      %5992 = vmatprep.subr.mxu0 0.0
      %5993 = vmatpush1.msra.mxu0 %v5945
      %5994 = vmatprep.subr.mxu0 0.0
      %5995 = vmatpush1.msra.mxu0 %v5947
      %5996 = vmatprep.subr.mxu0 0.0
      %5997 = vmatpush1.msra.mxu0 %v5949
      %5998 = vmatprep.subr.mxu0 0.0
      %5999 = vmatpush1.msra.mxu0 %v5951
      %6000 = vmatprep.subr.mxu0 0.0
      %6001 = vmatpush1.msra.mxu0 %v5953
      %6002 = vmatprep.subr.mxu0 0.0
      %6003 = vmatpush1.msra.mxu0 %v5955
      %6004 = vmatprep.subr.mxu0 0.0
      %6005 = vmatpush1.msra.mxu0 %v5957
      %6006 = vmatprep.subr.mxu0 0.0
      %6007 = vmatpush1.msra.mxu0 %v5959
      %6008 = vmatprep.subr.mxu0 0.0
      %6009 = vmatpush1.msra.mxu0 0.0
      %6010 = vmatprep.subr.mxu0 0.0
      %6011 = vmatpush1.msra.mxu0 0.0
      %6012 = vmatprep.subr.mxu0 0.0
      %6013 = vmatpush1.msra.mxu0 0.0
      %6014 = vmatprep.subr.mxu0 0.0
      %6015 = vmatpush1.msra.mxu0 0.0
      %6016 = vmatprep.subr.mxu0 0.0
      %6017 = vmatpush1.msra.mxu0 0.0
      %6018 = vmatprep.subr.mxu0 0.0
      %6019 = vmatpush1.msra.mxu0 0.0
      %6020 = vmatprep.subr.mxu0 0.0
      %6021 = vmatpush1.msra.mxu0 0.0
      %6022 = vmatprep.subr.mxu0 0.0
      %6023 = vmatpush1.msra.mxu0 0.0
      %6024 = vmatprep.subr.mxu0 0.0
      %6025 = vmatpush1.msra.mxu0 0.0
      %6026 = vmatprep.subr.mxu0 0.0
      %6027 = vmatpush1.msra.mxu0 0.0
      %6028 = vmatprep.subr.mxu0 0.0
      %6029 = vmatpush1.msra.mxu0 0.0
      %6030 = vmatprep.subr.mxu0 0.0
      %6031 = vmatpush1.msra.mxu0 0.0
      %6032 = vmatprep.subr.mxu0 0.0
      %6033 = vmatpush1.msra.mxu0 0.0
      %6034 = vmatprep.subr.mxu0 0.0
      %6035 = vmatpush1.msra.mxu0 0.0
      %6036 = vmatprep.subr.mxu0 0.0
      %6037 = vmatpush1.msra.mxu0 0.0
      %6038 = vmatprep.subr.mxu0 0.0
      %6039 = vmatpush1.msra.mxu0 0.0
      %6040 = vmatprep.subr.mxu0 0.0
      %6041 = vmatpush1.msra.mxu0 0.0
      %6042 = vmatprep.subr.mxu0 0.0
      %6043 = vmatpush1.msra.mxu0 0.0
      %6044 = vmatprep.subr.mxu0 0.0
      %6045 = vmatpush1.msra.mxu0 0.0
      %6046 = vmatprep.subr.mxu0 0.0
      %6047 = vmatpush1.msra.mxu0 0.0
      %6048 = vmatprep.subr.mxu0 0.0
      %6049 = vmatpush1.msra.mxu0 0.0
      %6050 = vmatprep.subr.mxu0 0.0
      %6051 = vmatpush1.msra.mxu0 0.0
      %6052 = vmatprep.subr.mxu0 0.0
      %6053 = vmatpush1.msra.mxu0 0.0
      %6054 = vmatprep.subr.mxu0 0.0
      %6055 = vmatpush1.msra.mxu0 0.0
      %6056 = vmatprep.mubr.f32.mxu0 0.0
      %6057 = vmatmul.mubr.f32.gmra.mrb[0].mxu0 %v5969
      %v6058 = vpop.f32.mrb[0].mxu0
      %v6059 = vadd.f32 0.0, %v6058
      %v6060 = vpop.f32.mrb[0].mxu0
      %6061 = vmatprep.mubr.f32.mxu0 0.0
      %6062 = vmatmul.mubr.f32.gmra.mrb[0].mxu0 %v5972
      %v6063 = vpop.f32.mrb[0].mxu0
      %v6064 = vadd.f32 0.0, %v6063
      %v6065 = vpop.f32.mrb[0].mxu0
      %6066 = vmatprep.mubr.f32.mxu0 0.0
      %6067 = vmatmul.mubr.f32.gmra.mrb[0].mxu0 %v5975
      %v6068 = vpop.f32.mrb[0].mxu0
      %v6069 = vadd.f32 0.0, %v6068
      %v6070 = vpop.f32.mrb[0].mxu0
      %6071 = vmatprep.mubr.f32.mxu0 0.0
      %6072 = vmatmul.mubr.f32.gmra.mrb[0].mxu0 %v5978
      %v6073 = vpop.f32.mrb[0].mxu0
      %v6074 = vadd.f32 0.0, %v6073
      %v6075 = vpop.f32.mrb[0].mxu0
      %6076 = vmatprep.mubr.f32.mxu0 0.0
      %6077 = vmatmul.mubr.f32.gmra.mrb[0].mxu0 %v5981
      %v6078 = vpop.f32.mrb[0].mxu0
      %v6079 = vadd.f32 0.0, %v6078
      %v6080 = vpop.f32.mrb[0].mxu0
      %6081 = vmatprep.mubr.f32.mxu0 0.0
      %6082 = vmatmul.mubr.f32.gmra.mrb[0].mxu0 %v5984
      %v6083 = vpop.f32.mrb[0].mxu0
      %v6084 = vadd.f32 0.0, %v6083
      %v6085 = vpop.f32.mrb[0].mxu0
      %6086 = vmatprep.mubr.f32.mxu0 0.0
      %6087 = vmatmul.mubr.f32.gmra.mrb[0].mxu0 %v5987
      %v6088 = vpop.f32.mrb[0].mxu0
      %v6089 = vadd.f32 0.0, %v6088
      %v6090 = vpop.f32.mrb[0].mxu0
      %6091 = vmatprep.mubr.f32.mxu0 0.0
      %6092 = vmatmul.mubr.f32.gmra.mrb[0].mxu0 %v5990
      %v6093 = vpop.f32.mrb[0].mxu0
      %v6094 = vadd.f32 0.0, %v6093
      %v6095 = vpop.f32.mrb[0].mxu0
      %6096 = vdwg.mxu0
      %6097 = vrot.lane.b32.xlu0 %v1308, 64
      %v6098 = vpop.permute.xlu0 %6097
      %6099 = vrot.lane.b32.xlu0 %v1310, 64
      %v6100 = vpop.permute.xlu0 %6099
      %6101 = vrot.lane.b32.xlu0 %v1312, 64
      %v6102 = vpop.permute.xlu0 %6101
      %6103 = vrot.lane.b32.xlu0 %v1314, 64
      %v6104 = vpop.permute.xlu0 %6103
      %6105 = vrot.lane.b32.xlu0 %v1316, 64
      %v6106 = vpop.permute.xlu0 %6105
      %6107 = vrot.lane.b32.xlu0 %v1318, 64
      %v6108 = vpop.permute.xlu0 %6107
      %6109 = vrot.lane.b32.xlu0 %v1320, 64
      %v6110 = vpop.permute.xlu0 %6109
      %6111 = vrot.lane.b32.xlu0 %v1322, 64
      %v6112 = vpop.permute.xlu0 %6111
      %v6122 = vsel %vm4076, %v5389, 0
      %v6125 = vsel %vm4076, %v5390, 0
      %v6128 = vsel %vm4076, %v5391, 0
      %v6131 = vsel %vm4076, %v5392, 0
      %v6134 = vsel %vm4076, %v5393, 0
      %v6137 = vsel %vm4076, %v5394, 0
      %v6140 = vsel %vm4076, %v5395, 0
      %v6143 = vsel %vm4076, %v5396, 0
      %6145 = vmatprep.subr.mxu0 0.0
      %6146 = vmatpush1.msra.mxu0 %v6098
      %6147 = vmatprep.subr.mxu0 0.0
      %6148 = vmatpush1.msra.mxu0 %v6100
      %6149 = vmatprep.subr.mxu0 0.0
      %6150 = vmatpush1.msra.mxu0 %v6102
      %6151 = vmatprep.subr.mxu0 0.0
      %6152 = vmatpush1.msra.mxu0 %v6104
      %6153 = vmatprep.subr.mxu0 0.0
      %6154 = vmatpush1.msra.mxu0 %v6106
      %6155 = vmatprep.subr.mxu0 0.0
      %6156 = vmatpush1.msra.mxu0 %v6108
      %6157 = vmatprep.subr.mxu0 0.0
      %6158 = vmatpush1.msra.mxu0 %v6110
      %6159 = vmatprep.subr.mxu0 0.0
      %6160 = vmatpush1.msra.mxu0 %v6112
      %6161 = vmatprep.subr.mxu0 0.0
      %6162 = vmatpush1.msra.mxu0 0.0
      %6163 = vmatprep.subr.mxu0 0.0
      %6164 = vmatpush1.msra.mxu0 0.0
      %6165 = vmatprep.subr.mxu0 0.0
      %6166 = vmatpush1.msra.mxu0 0.0
      %6167 = vmatprep.subr.mxu0 0.0
      %6168 = vmatpush1.msra.mxu0 0.0
      %6169 = vmatprep.subr.mxu0 0.0
      %6170 = vmatpush1.msra.mxu0 0.0
      %6171 = vmatprep.subr.mxu0 0.0
      %6172 = vmatpush1.msra.mxu0 0.0
      %6173 = vmatprep.subr.mxu0 0.0
      %6174 = vmatpush1.msra.mxu0 0.0
      %6175 = vmatprep.subr.mxu0 0.0
      %6176 = vmatpush1.msra.mxu0 0.0
      %6177 = vmatprep.subr.mxu0 0.0
      %6178 = vmatpush1.msra.mxu0 0.0
      %6179 = vmatprep.subr.mxu0 0.0
      %6180 = vmatpush1.msra.mxu0 0.0
      %6181 = vmatprep.subr.mxu0 0.0
      %6182 = vmatpush1.msra.mxu0 0.0
      %6183 = vmatprep.subr.mxu0 0.0
      %6184 = vmatpush1.msra.mxu0 0.0
      %6185 = vmatprep.subr.mxu0 0.0
      %6186 = vmatpush1.msra.mxu0 0.0
      %6187 = vmatprep.subr.mxu0 0.0
      %6188 = vmatpush1.msra.mxu0 0.0
      %6189 = vmatprep.subr.mxu0 0.0
      %6190 = vmatpush1.msra.mxu0 0.0
      %6191 = vmatprep.subr.mxu0 0.0
      %6192 = vmatpush1.msra.mxu0 0.0
      %6193 = vmatprep.subr.mxu0 0.0
      %6194 = vmatpush1.msra.mxu0 0.0
      %6195 = vmatprep.subr.mxu0 0.0
      %6196 = vmatpush1.msra.mxu0 0.0
      %6197 = vmatprep.subr.mxu0 0.0
      %6198 = vmatpush1.msra.mxu0 0.0
      %6199 = vmatprep.subr.mxu0 0.0
      %6200 = vmatpush1.msra.mxu0 0.0
      %6201 = vmatprep.subr.mxu0 0.0
      %6202 = vmatpush1.msra.mxu0 0.0
      %6203 = vmatprep.subr.mxu0 0.0
      %6204 = vmatpush1.msra.mxu0 0.0
      %6205 = vmatprep.subr.mxu0 0.0
      %6206 = vmatpush1.msra.mxu0 0.0
      %6207 = vmatprep.subr.mxu0 0.0
      %6208 = vmatpush1.msra.mxu0 0.0
      %6209 = vmatprep.mubr.f32.mxu0 0.0
      %6210 = vmatmul.mubr.f32.gmra.mrb[0].mxu0 %v6122
      %v6211 = vpop.f32.mrb[0].mxu0
      %v6212 = vadd.f32 0.0, %v6211
      %v6213 = vpop.f32.mrb[0].mxu0
      %6214 = vmatprep.mubr.f32.mxu0 0.0
      %6215 = vmatmul.mubr.f32.gmra.mrb[0].mxu0 %v6125
      %v6216 = vpop.f32.mrb[0].mxu0
      %v6217 = vadd.f32 0.0, %v6216
      %v6218 = vpop.f32.mrb[0].mxu0
      %6219 = vmatprep.mubr.f32.mxu0 0.0
      %6220 = vmatmul.mubr.f32.gmra.mrb[0].mxu0 %v6128
      %v6221 = vpop.f32.mrb[0].mxu0
      %v6222 = vadd.f32 0.0, %v6221
      %v6223 = vpop.f32.mrb[0].mxu0
      %6224 = vmatprep.mubr.f32.mxu0 0.0
      %6225 = vmatmul.mubr.f32.gmra.mrb[0].mxu0 %v6131
      %v6226 = vpop.f32.mrb[0].mxu0
      %v6227 = vadd.f32 0.0, %v6226
      %v6228 = vpop.f32.mrb[0].mxu0
      %6229 = vmatprep.mubr.f32.mxu0 0.0
      %6230 = vmatmul.mubr.f32.gmra.mrb[0].mxu0 %v6134
      %v6231 = vpop.f32.mrb[0].mxu0
      %v6232 = vadd.f32 0.0, %v6231
      %v6233 = vpop.f32.mrb[0].mxu0
      %6234 = vmatprep.mubr.f32.mxu0 0.0
      %6235 = vmatmul.mubr.f32.gmra.mrb[0].mxu0 %v6137
      %v6236 = vpop.f32.mrb[0].mxu0
      %v6237 = vadd.f32 0.0, %v6236
      %v6238 = vpop.f32.mrb[0].mxu0
      %6239 = vmatprep.mubr.f32.mxu0 0.0
      %6240 = vmatmul.mubr.f32.gmra.mrb[0].mxu0 %v6140
      %v6241 = vpop.f32.mrb[0].mxu0
      %v6242 = vadd.f32 0.0, %v6241
      %v6243 = vpop.f32.mrb[0].mxu0
      %6244 = vmatprep.mubr.f32.mxu0 0.0
      %6245 = vmatmul.mubr.f32.gmra.mrb[0].mxu0 %v6143
      %v6246 = vpop.f32.mrb[0].mxu0
      %v6247 = vadd.f32 0.0, %v6246
      %v6248 = vpop.f32.mrb[0].mxu0
      %6249 = vdwg.mxu0
      %6250 = vrot.lane.b32.xlu0 %v1324, 64
      %v6251 = vpop.permute.xlu0 %6250
      %6252 = vrot.lane.b32.xlu0 %v1326, 64
      %v6253 = vpop.permute.xlu0 %6252
      %6254 = vrot.lane.b32.xlu0 %v1328, 64
      %v6255 = vpop.permute.xlu0 %6254
      %6256 = vrot.lane.b32.xlu0 %v1330, 64
      %v6257 = vpop.permute.xlu0 %6256
      %6258 = vrot.lane.b32.xlu0 %v1332, 64
      %v6259 = vpop.permute.xlu0 %6258
      %6260 = vrot.lane.b32.xlu0 %v1334, 64
      %v6261 = vpop.permute.xlu0 %6260
      %6262 = vrot.lane.b32.xlu0 %v1336, 64
      %v6263 = vpop.permute.xlu0 %6262
      %6264 = vrot.lane.b32.xlu0 %v1338, 64
      %v6265 = vpop.permute.xlu0 %6264
      %v6275 = vsel %vm4076, %v5397, 0
      %v6278 = vsel %vm4076, %v5398, 0
      %v6281 = vsel %vm4076, %v5399, 0
      %v6284 = vsel %vm4076, %v5400, 0
      %v6287 = vsel %vm4076, %v5401, 0
      %v6290 = vsel %vm4076, %v5402, 0
      %v6293 = vsel %vm4076, %v5403, 0
      %v6296 = vsel %vm4076, %v5404, 0
      %6298 = vmatprep.subr.mxu0 0.0
      %6299 = vmatpush1.msra.mxu0 %v6251
      %6300 = vmatprep.subr.mxu0 0.0
      %6301 = vmatpush1.msra.mxu0 %v6253
      %6302 = vmatprep.subr.mxu0 0.0
      %6303 = vmatpush1.msra.mxu0 %v6255
      %6304 = vmatprep.subr.mxu0 0.0
      %6305 = vmatpush1.msra.mxu0 %v6257
      %6306 = vmatprep.subr.mxu0 0.0
      %6307 = vmatpush1.msra.mxu0 %v6259
      %6308 = vmatprep.subr.mxu0 0.0
      %6309 = vmatpush1.msra.mxu0 %v6261
      %6310 = vmatprep.subr.mxu0 0.0
      %6311 = vmatpush1.msra.mxu0 %v6263
      %6312 = vmatprep.subr.mxu0 0.0
      %6313 = vmatpush1.msra.mxu0 %v6265
      %6314 = vmatprep.subr.mxu0 0.0
      %6315 = vmatpush1.msra.mxu0 0.0
      %6316 = vmatprep.subr.mxu0 0.0
      %6317 = vmatpush1.msra.mxu0 0.0
      %6318 = vmatprep.subr.mxu0 0.0
      %6319 = vmatpush1.msra.mxu0 0.0
      %6320 = vmatprep.subr.mxu0 0.0
      %6321 = vmatpush1.msra.mxu0 0.0
      %6322 = vmatprep.subr.mxu0 0.0
      %6323 = vmatpush1.msra.mxu0 0.0
      %6324 = vmatprep.subr.mxu0 0.0
      %6325 = vmatpush1.msra.mxu0 0.0
      %6326 = vmatprep.subr.mxu0 0.0
      %6327 = vmatpush1.msra.mxu0 0.0
      %6328 = vmatprep.subr.mxu0 0.0
      %6329 = vmatpush1.msra.mxu0 0.0
      %6330 = vmatprep.subr.mxu0 0.0
      %6331 = vmatpush1.msra.mxu0 0.0
      %6332 = vmatprep.subr.mxu0 0.0
      %6333 = vmatpush1.msra.mxu0 0.0
      %6334 = vmatprep.subr.mxu0 0.0
      %6335 = vmatpush1.msra.mxu0 0.0
      %6336 = vmatprep.subr.mxu0 0.0
      %6337 = vmatpush1.msra.mxu0 0.0
      %6338 = vmatprep.subr.mxu0 0.0
      %6339 = vmatpush1.msra.mxu0 0.0
      %6340 = vmatprep.subr.mxu0 0.0
      %6341 = vmatpush1.msra.mxu0 0.0
      %6342 = vmatprep.subr.mxu0 0.0
      %6343 = vmatpush1.msra.mxu0 0.0
      %6344 = vmatprep.subr.mxu0 0.0
      %6345 = vmatpush1.msra.mxu0 0.0
      %6346 = vmatprep.subr.mxu0 0.0
      %6347 = vmatpush1.msra.mxu0 0.0
      %6348 = vmatprep.subr.mxu0 0.0
      %6349 = vmatpush1.msra.mxu0 0.0
      %6350 = vmatprep.subr.mxu0 0.0
      %6351 = vmatpush1.msra.mxu0 0.0
      %6352 = vmatprep.subr.mxu0 0.0
      %6353 = vmatpush1.msra.mxu0 0.0
      %6354 = vmatprep.subr.mxu0 0.0
      %6355 = vmatpush1.msra.mxu0 0.0
      %6356 = vmatprep.subr.mxu0 0.0
      %6357 = vmatpush1.msra.mxu0 0.0
      %6358 = vmatprep.subr.mxu0 0.0
      %6359 = vmatpush1.msra.mxu0 0.0
      %6360 = vmatprep.subr.mxu0 0.0
      %6361 = vmatpush1.msra.mxu0 0.0
      %6362 = vmatprep.mubr.f32.mxu0 0.0
      %6363 = vmatmul.mubr.f32.gmra.mrb[0].mxu0 %v6275
      %v6364 = vpop.f32.mrb[0].mxu0
      %v6365 = vadd.f32 0.0, %v6364
      %v6366 = vpop.f32.mrb[0].mxu0
      %6367 = vmatprep.mubr.f32.mxu0 0.0
      %6368 = vmatmul.mubr.f32.gmra.mrb[0].mxu0 %v6278
      %v6369 = vpop.f32.mrb[0].mxu0
      %v6370 = vadd.f32 0.0, %v6369
      %v6371 = vpop.f32.mrb[0].mxu0
      %6372 = vmatprep.mubr.f32.mxu0 0.0
      %6373 = vmatmul.mubr.f32.gmra.mrb[0].mxu0 %v6281
      %v6374 = vpop.f32.mrb[0].mxu0
      %v6375 = vadd.f32 0.0, %v6374
      %v6376 = vpop.f32.mrb[0].mxu0
      %6377 = vmatprep.mubr.f32.mxu0 0.0
      %6378 = vmatmul.mubr.f32.gmra.mrb[0].mxu0 %v6284
      %v6379 = vpop.f32.mrb[0].mxu0
      %v6380 = vadd.f32 0.0, %v6379
      %v6381 = vpop.f32.mrb[0].mxu0
      %6382 = vmatprep.mubr.f32.mxu0 0.0
      %6383 = vmatmul.mubr.f32.gmra.mrb[0].mxu0 %v6287
      %v6384 = vpop.f32.mrb[0].mxu0
      %v6385 = vadd.f32 0.0, %v6384
      %v6386 = vpop.f32.mrb[0].mxu0
      %6387 = vmatprep.mubr.f32.mxu0 0.0
      %6388 = vmatmul.mubr.f32.gmra.mrb[0].mxu0 %v6290
      %v6389 = vpop.f32.mrb[0].mxu0
      %v6390 = vadd.f32 0.0, %v6389
      %v6391 = vpop.f32.mrb[0].mxu0
      %6392 = vmatprep.mubr.f32.mxu0 0.0
      %6393 = vmatmul.mubr.f32.gmra.mrb[0].mxu0 %v6293
      %v6394 = vpop.f32.mrb[0].mxu0
      %v6395 = vadd.f32 0.0, %v6394
      %v6396 = vpop.f32.mrb[0].mxu0
      %6397 = vmatprep.mubr.f32.mxu0 0.0
      %6398 = vmatmul.mubr.f32.gmra.mrb[0].mxu0 %v6296
      %v6399 = vpop.f32.mrb[0].mxu0
      %v6400 = vadd.f32 0.0, %v6399
      %v6401 = vpop.f32.mrb[0].mxu0
      %6402 = vdwg.mxu0
      %6403 = vrot.lane.b32.xlu0 %v1340, 64
      %v6404 = vpop.permute.xlu0 %6403
      %6405 = vrot.lane.b32.xlu0 %v1342, 64
      %v6406 = vpop.permute.xlu0 %6405
      %6407 = vrot.lane.b32.xlu0 %v1344, 64
      %v6408 = vpop.permute.xlu0 %6407
      %6409 = vrot.lane.b32.xlu0 %v1346, 64
      %v6410 = vpop.permute.xlu0 %6409
      %6411 = vrot.lane.b32.xlu0 %v1348, 64
      %v6412 = vpop.permute.xlu0 %6411
      %6413 = vrot.lane.b32.xlu0 %v1350, 64
      %v6414 = vpop.permute.xlu0 %6413
      %6415 = vrot.lane.b32.xlu0 %v1352, 64
      %v6416 = vpop.permute.xlu0 %6415
      %6417 = vrot.lane.b32.xlu0 %v1354, 64
      %v6418 = vpop.permute.xlu0 %6417
      %v6428 = vsel %vm4076, %v5405, 0
      %v6431 = vsel %vm4076, %v5406, 0
      %v6434 = vsel %vm4076, %v5407, 0
      %v6437 = vsel %vm4076, %v5408, 0
      %v6440 = vsel %vm4076, %v5409, 0
      %v6443 = vsel %vm4076, %v5410, 0
      %v6446 = vsel %vm4076, %v5411, 0
      %v6449 = vsel %vm4076, %v5412, 0
      %6451 = vmatprep.subr.mxu0 0.0
      %6452 = vmatpush1.msra.mxu0 %v6404
      %6453 = vmatprep.subr.mxu0 0.0
      %6454 = vmatpush1.msra.mxu0 %v6406
      %6455 = vmatprep.subr.mxu0 0.0
      %6456 = vmatpush1.msra.mxu0 %v6408
      %6457 = vmatprep.subr.mxu0 0.0
      %6458 = vmatpush1.msra.mxu0 %v6410
      %6459 = vmatprep.subr.mxu0 0.0
      %6460 = vmatpush1.msra.mxu0 %v6412
      %6461 = vmatprep.subr.mxu0 0.0
      %6462 = vmatpush1.msra.mxu0 %v6414
      %6463 = vmatprep.subr.mxu0 0.0
      %6464 = vmatpush1.msra.mxu0 %v6416
      %6465 = vmatprep.subr.mxu0 0.0
      %6466 = vmatpush1.msra.mxu0 %v6418
      %6467 = vmatprep.subr.mxu0 0.0
      %6468 = vmatpush1.msra.mxu0 0.0
      %6469 = vmatprep.subr.mxu0 0.0
      %6470 = vmatpush1.msra.mxu0 0.0
      %6471 = vmatprep.subr.mxu0 0.0
      %6472 = vmatpush1.msra.mxu0 0.0
      %6473 = vmatprep.subr.mxu0 0.0
      %6474 = vmatpush1.msra.mxu0 0.0
      %6475 = vmatprep.subr.mxu0 0.0
      %6476 = vmatpush1.msra.mxu0 0.0
      %6477 = vmatprep.subr.mxu0 0.0
      %6478 = vmatpush1.msra.mxu0 0.0
      %6479 = vmatprep.subr.mxu0 0.0
      %6480 = vmatpush1.msra.mxu0 0.0
      %6481 = vmatprep.subr.mxu0 0.0
      %6482 = vmatpush1.msra.mxu0 0.0
      %6483 = vmatprep.subr.mxu0 0.0
      %6484 = vmatpush1.msra.mxu0 0.0
      %6485 = vmatprep.subr.mxu0 0.0
      %6486 = vmatpush1.msra.mxu0 0.0
      %6487 = vmatprep.subr.mxu0 0.0
      %6488 = vmatpush1.msra.mxu0 0.0
      %6489 = vmatprep.subr.mxu0 0.0
      %6490 = vmatpush1.msra.mxu0 0.0
      %6491 = vmatprep.subr.mxu0 0.0
      %6492 = vmatpush1.msra.mxu0 0.0
      %6493 = vmatprep.subr.mxu0 0.0
      %6494 = vmatpush1.msra.mxu0 0.0
      %6495 = vmatprep.subr.mxu0 0.0
      %6496 = vmatpush1.msra.mxu0 0.0
      %6497 = vmatprep.subr.mxu0 0.0
      %6498 = vmatpush1.msra.mxu0 0.0
      %6499 = vmatprep.subr.mxu0 0.0
      %6500 = vmatpush1.msra.mxu0 0.0
      %6501 = vmatprep.subr.mxu0 0.0
      %6502 = vmatpush1.msra.mxu0 0.0
      %6503 = vmatprep.subr.mxu0 0.0
      %6504 = vmatpush1.msra.mxu0 0.0
      %6505 = vmatprep.subr.mxu0 0.0
      %6506 = vmatpush1.msra.mxu0 0.0
      %6507 = vmatprep.subr.mxu0 0.0
      %6508 = vmatpush1.msra.mxu0 0.0
      %6509 = vmatprep.subr.mxu0 0.0
      %6510 = vmatpush1.msra.mxu0 0.0
      %6511 = vmatprep.subr.mxu0 0.0
      %6512 = vmatpush1.msra.mxu0 0.0
      %6513 = vmatprep.subr.mxu0 0.0
      %6514 = vmatpush1.msra.mxu0 0.0
      %6515 = vmatprep.mubr.f32.mxu0 0.0
      %6516 = vmatmul.mubr.f32.gmra.mrb[0].mxu0 %v6428
      %v6517 = vpop.f32.mrb[0].mxu0
      %v6518 = vadd.f32 0.0, %v6517
      %v6519 = vpop.f32.mrb[0].mxu0
      %6520 = vmatprep.mubr.f32.mxu0 0.0
      %6521 = vmatmul.mubr.f32.gmra.mrb[0].mxu0 %v6431
      %v6522 = vpop.f32.mrb[0].mxu0
      %v6523 = vadd.f32 0.0, %v6522
      %v6524 = vpop.f32.mrb[0].mxu0
      %6525 = vmatprep.mubr.f32.mxu0 0.0
      %6526 = vmatmul.mubr.f32.gmra.mrb[0].mxu0 %v6434
      %v6527 = vpop.f32.mrb[0].mxu0
      %v6528 = vadd.f32 0.0, %v6527
      %v6529 = vpop.f32.mrb[0].mxu0
      %6530 = vmatprep.mubr.f32.mxu0 0.0
      %6531 = vmatmul.mubr.f32.gmra.mrb[0].mxu0 %v6437
      %v6532 = vpop.f32.mrb[0].mxu0
      %v6533 = vadd.f32 0.0, %v6532
      %v6534 = vpop.f32.mrb[0].mxu0
      %6535 = vmatprep.mubr.f32.mxu0 0.0
      %6536 = vmatmul.mubr.f32.gmra.mrb[0].mxu0 %v6440
      %v6537 = vpop.f32.mrb[0].mxu0
      %v6538 = vadd.f32 0.0, %v6537
      %v6539 = vpop.f32.mrb[0].mxu0
      %6540 = vmatprep.mubr.f32.mxu0 0.0
      %6541 = vmatmul.mubr.f32.gmra.mrb[0].mxu0 %v6443
      %v6542 = vpop.f32.mrb[0].mxu0
      %v6543 = vadd.f32 0.0, %v6542
      %v6544 = vpop.f32.mrb[0].mxu0
      %6545 = vmatprep.mubr.f32.mxu0 0.0
      %6546 = vmatmul.mubr.f32.gmra.mrb[0].mxu0 %v6446
      %v6547 = vpop.f32.mrb[0].mxu0
      %v6548 = vadd.f32 0.0, %v6547
      %v6549 = vpop.f32.mrb[0].mxu0
      %6550 = vmatprep.mubr.f32.mxu0 0.0
      %6551 = vmatmul.mubr.f32.gmra.mrb[0].mxu0 %v6449
      %v6552 = vpop.f32.mrb[0].mxu0
      %v6553 = vadd.f32 0.0, %v6552
      %v6554 = vpop.f32.mrb[0].mxu0
      %6555 = vdwg.mxu0
      %6556 = vrot.lane.b32.xlu0 %v1356, 64
      %v6557 = vpop.permute.xlu0 %6556
      %6558 = vrot.lane.b32.xlu0 %v1358, 64
      %v6559 = vpop.permute.xlu0 %6558
      %6560 = vrot.lane.b32.xlu0 %v1360, 64
      %v6561 = vpop.permute.xlu0 %6560
      %6562 = vrot.lane.b32.xlu0 %v1362, 64
      %v6563 = vpop.permute.xlu0 %6562
      %6564 = vrot.lane.b32.xlu0 %v1364, 64
      %v6565 = vpop.permute.xlu0 %6564
      %6566 = vrot.lane.b32.xlu0 %v1366, 64
      %v6567 = vpop.permute.xlu0 %6566
      %6568 = vrot.lane.b32.xlu0 %v1368, 64
      %v6569 = vpop.permute.xlu0 %6568
      %6570 = vrot.lane.b32.xlu0 %v1370, 64
      %v6571 = vpop.permute.xlu0 %6570
      %v6581 = vsel %vm4076, %v5413, 0
      %v6584 = vsel %vm4076, %v5414, 0
      %v6587 = vsel %vm4076, %v5415, 0
      %v6590 = vsel %vm4076, %v5416, 0
      %v6593 = vsel %vm4076, %v5417, 0
      %v6596 = vsel %vm4076, %v5418, 0
      %v6599 = vsel %vm4076, %v5419, 0
      %v6602 = vsel %vm4076, %v5420, 0
      %6604 = vmatprep.subr.mxu0 0.0
      %6605 = vmatpush1.msra.mxu0 %v6557
      %6606 = vmatprep.subr.mxu0 0.0
      %6607 = vmatpush1.msra.mxu0 %v6559
      %6608 = vmatprep.subr.mxu0 0.0
      %6609 = vmatpush1.msra.mxu0 %v6561
      %6610 = vmatprep.subr.mxu0 0.0
      %6611 = vmatpush1.msra.mxu0 %v6563
      %6612 = vmatprep.subr.mxu0 0.0
      %6613 = vmatpush1.msra.mxu0 %v6565
      %6614 = vmatprep.subr.mxu0 0.0
      %6615 = vmatpush1.msra.mxu0 %v6567
      %6616 = vmatprep.subr.mxu0 0.0
      %6617 = vmatpush1.msra.mxu0 %v6569
      %6618 = vmatprep.subr.mxu0 0.0
      %6619 = vmatpush1.msra.mxu0 %v6571
      %6620 = vmatprep.subr.mxu0 0.0
      %6621 = vmatpush1.msra.mxu0 0.0
      %6622 = vmatprep.subr.mxu0 0.0
      %6623 = vmatpush1.msra.mxu0 0.0
      %6624 = vmatprep.subr.mxu0 0.0
      %6625 = vmatpush1.msra.mxu0 0.0
      %6626 = vmatprep.subr.mxu0 0.0
      %6627 = vmatpush1.msra.mxu0 0.0
      %6628 = vmatprep.subr.mxu0 0.0
      %6629 = vmatpush1.msra.mxu0 0.0
      %6630 = vmatprep.subr.mxu0 0.0
      %6631 = vmatpush1.msra.mxu0 0.0
      %6632 = vmatprep.subr.mxu0 0.0
      %6633 = vmatpush1.msra.mxu0 0.0
      %6634 = vmatprep.subr.mxu0 0.0
      %6635 = vmatpush1.msra.mxu0 0.0
      %6636 = vmatprep.subr.mxu0 0.0
      %6637 = vmatpush1.msra.mxu0 0.0
      %6638 = vmatprep.subr.mxu0 0.0
      %6639 = vmatpush1.msra.mxu0 0.0
      %6640 = vmatprep.subr.mxu0 0.0
      %6641 = vmatpush1.msra.mxu0 0.0
      %6642 = vmatprep.subr.mxu0 0.0
      %6643 = vmatpush1.msra.mxu0 0.0
      %6644 = vmatprep.subr.mxu0 0.0
      %6645 = vmatpush1.msra.mxu0 0.0
      %6646 = vmatprep.subr.mxu0 0.0
      %6647 = vmatpush1.msra.mxu0 0.0
      %6648 = vmatprep.subr.mxu0 0.0
      %6649 = vmatpush1.msra.mxu0 0.0
      %6650 = vmatprep.subr.mxu0 0.0
      %6651 = vmatpush1.msra.mxu0 0.0
      %6652 = vmatprep.subr.mxu0 0.0
      %6653 = vmatpush1.msra.mxu0 0.0
      %6654 = vmatprep.subr.mxu0 0.0
      %6655 = vmatpush1.msra.mxu0 0.0
      %6656 = vmatprep.subr.mxu0 0.0
      %6657 = vmatpush1.msra.mxu0 0.0
      %6658 = vmatprep.subr.mxu0 0.0
      %6659 = vmatpush1.msra.mxu0 0.0
      %6660 = vmatprep.subr.mxu0 0.0
      %6661 = vmatpush1.msra.mxu0 0.0
      %6662 = vmatprep.subr.mxu0 0.0
      %6663 = vmatpush1.msra.mxu0 0.0
      %6664 = vmatprep.subr.mxu0 0.0
      %6665 = vmatpush1.msra.mxu0 0.0
      %6666 = vmatprep.subr.mxu0 0.0
      %6667 = vmatpush1.msra.mxu0 0.0
      %6668 = vmatprep.mubr.f32.mxu0 0.0
      %6669 = vmatmul.mubr.f32.gmra.mrb[0].mxu0 %v6581
      %v6670 = vpop.f32.mrb[0].mxu0
      %v6671 = vadd.f32 0.0, %v6670
      %v6672 = vpop.f32.mrb[0].mxu0
      %6673 = vmatprep.mubr.f32.mxu0 0.0
      %6674 = vmatmul.mubr.f32.gmra.mrb[0].mxu0 %v6584
      %v6675 = vpop.f32.mrb[0].mxu0
      %v6676 = vadd.f32 0.0, %v6675
      %v6677 = vpop.f32.mrb[0].mxu0
      %6678 = vmatprep.mubr.f32.mxu0 0.0
      %6679 = vmatmul.mubr.f32.gmra.mrb[0].mxu0 %v6587
      %v6680 = vpop.f32.mrb[0].mxu0
      %v6681 = vadd.f32 0.0, %v6680
      %v6682 = vpop.f32.mrb[0].mxu0
      %6683 = vmatprep.mubr.f32.mxu0 0.0
      %6684 = vmatmul.mubr.f32.gmra.mrb[0].mxu0 %v6590
      %v6685 = vpop.f32.mrb[0].mxu0
      %v6686 = vadd.f32 0.0, %v6685
      %v6687 = vpop.f32.mrb[0].mxu0
      %6688 = vmatprep.mubr.f32.mxu0 0.0
      %6689 = vmatmul.mubr.f32.gmra.mrb[0].mxu0 %v6593
      %v6690 = vpop.f32.mrb[0].mxu0
      %v6691 = vadd.f32 0.0, %v6690
      %v6692 = vpop.f32.mrb[0].mxu0
      %6693 = vmatprep.mubr.f32.mxu0 0.0
      %6694 = vmatmul.mubr.f32.gmra.mrb[0].mxu0 %v6596
      %v6695 = vpop.f32.mrb[0].mxu0
      %v6696 = vadd.f32 0.0, %v6695
      %v6697 = vpop.f32.mrb[0].mxu0
      %6698 = vmatprep.mubr.f32.mxu0 0.0
      %6699 = vmatmul.mubr.f32.gmra.mrb[0].mxu0 %v6599
      %v6700 = vpop.f32.mrb[0].mxu0
      %v6701 = vadd.f32 0.0, %v6700
      %v6702 = vpop.f32.mrb[0].mxu0
      %6703 = vmatprep.mubr.f32.mxu0 0.0
      %6704 = vmatmul.mubr.f32.gmra.mrb[0].mxu0 %v6602
      %v6705 = vpop.f32.mrb[0].mxu0
      %v6706 = vadd.f32 0.0, %v6705
      %v6707 = vpop.f32.mrb[0].mxu0
      %6708 = vdwg.mxu0
      %6709 = vrot.lane.b32.xlu0 %v1372, 64
      %v6710 = vpop.permute.xlu0 %6709
      %6711 = vrot.lane.b32.xlu0 %v1374, 64
      %v6712 = vpop.permute.xlu0 %6711
      %6713 = vrot.lane.b32.xlu0 %v1376, 64
      %v6714 = vpop.permute.xlu0 %6713
      %6715 = vrot.lane.b32.xlu0 %v1378, 64
      %v6716 = vpop.permute.xlu0 %6715
      %6717 = vrot.lane.b32.xlu0 %v1380, 64
      %v6718 = vpop.permute.xlu0 %6717
      %6719 = vrot.lane.b32.xlu0 %v1382, 64
      %v6720 = vpop.permute.xlu0 %6719
      %6721 = vrot.lane.b32.xlu0 %v1384, 64
      %v6722 = vpop.permute.xlu0 %6721
      %6723 = vrot.lane.b32.xlu0 %v1386, 64
      %v6724 = vpop.permute.xlu0 %6723
      %v6734 = vsel %vm4076, %v5421, 0
      %v6737 = vsel %vm4076, %v5422, 0
      %v6740 = vsel %vm4076, %v5423, 0
      %v6743 = vsel %vm4076, %v5424, 0
      %v6746 = vsel %vm4076, %v5425, 0
      %v6749 = vsel %vm4076, %v5426, 0
      %v6752 = vsel %vm4076, %v5427, 0
      %v6755 = vsel %vm4076, %v5428, 0
      %6757 = vmatprep.subr.mxu0 0.0
      %6758 = vmatpush1.msra.mxu0 %v6710
      %6759 = vmatprep.subr.mxu0 0.0
      %6760 = vmatpush1.msra.mxu0 %v6712
      %6761 = vmatprep.subr.mxu0 0.0
      %6762 = vmatpush1.msra.mxu0 %v6714
      %6763 = vmatprep.subr.mxu0 0.0
      %6764 = vmatpush1.msra.mxu0 %v6716
      %6765 = vmatprep.subr.mxu0 0.0
      %6766 = vmatpush1.msra.mxu0 %v6718
      %6767 = vmatprep.subr.mxu0 0.0
      %6768 = vmatpush1.msra.mxu0 %v6720
      %6769 = vmatprep.subr.mxu0 0.0
      %6770 = vmatpush1.msra.mxu0 %v6722
      %6771 = vmatprep.subr.mxu0 0.0
      %6772 = vmatpush1.msra.mxu0 %v6724
      %6773 = vmatprep.subr.mxu0 0.0
      %6774 = vmatpush1.msra.mxu0 0.0
      %6775 = vmatprep.subr.mxu0 0.0
      %6776 = vmatpush1.msra.mxu0 0.0
      %6777 = vmatprep.subr.mxu0 0.0
      %6778 = vmatpush1.msra.mxu0 0.0
      %6779 = vmatprep.subr.mxu0 0.0
      %6780 = vmatpush1.msra.mxu0 0.0
      %6781 = vmatprep.subr.mxu0 0.0
      %6782 = vmatpush1.msra.mxu0 0.0
      %6783 = vmatprep.subr.mxu0 0.0
      %6784 = vmatpush1.msra.mxu0 0.0
      %6785 = vmatprep.subr.mxu0 0.0
      %6786 = vmatpush1.msra.mxu0 0.0
      %6787 = vmatprep.subr.mxu0 0.0
      %6788 = vmatpush1.msra.mxu0 0.0
      %6789 = vmatprep.subr.mxu0 0.0
      %6790 = vmatpush1.msra.mxu0 0.0
      %6791 = vmatprep.subr.mxu0 0.0
      %6792 = vmatpush1.msra.mxu0 0.0
      %6793 = vmatprep.subr.mxu0 0.0
      %6794 = vmatpush1.msra.mxu0 0.0
      %6795 = vmatprep.subr.mxu0 0.0
      %6796 = vmatpush1.msra.mxu0 0.0
      %6797 = vmatprep.subr.mxu0 0.0
      %6798 = vmatpush1.msra.mxu0 0.0
      %6799 = vmatprep.subr.mxu0 0.0
      %6800 = vmatpush1.msra.mxu0 0.0
      %6801 = vmatprep.subr.mxu0 0.0
      %6802 = vmatpush1.msra.mxu0 0.0
      %6803 = vmatprep.subr.mxu0 0.0
      %6804 = vmatpush1.msra.mxu0 0.0
      %6805 = vmatprep.subr.mxu0 0.0
      %6806 = vmatpush1.msra.mxu0 0.0
      %6807 = vmatprep.subr.mxu0 0.0
      %6808 = vmatpush1.msra.mxu0 0.0
      %6809 = vmatprep.subr.mxu0 0.0
      %6810 = vmatpush1.msra.mxu0 0.0
      %6811 = vmatprep.subr.mxu0 0.0
      %6812 = vmatpush1.msra.mxu0 0.0
      %6813 = vmatprep.subr.mxu0 0.0
      %6814 = vmatpush1.msra.mxu0 0.0
      %6815 = vmatprep.subr.mxu0 0.0
      %6816 = vmatpush1.msra.mxu0 0.0
      %6817 = vmatprep.subr.mxu0 0.0
      %6818 = vmatpush1.msra.mxu0 0.0
      %6819 = vmatprep.subr.mxu0 0.0
      %6820 = vmatpush1.msra.mxu0 0.0
      %6821 = vmatprep.mubr.f32.mxu0 0.0
      %6822 = vmatmul.mubr.f32.gmra.mrb[0].mxu0 %v6734
      %v6823 = vpop.f32.mrb[0].mxu0
      %v6824 = vadd.f32 0.0, %v6823
      %v6825 = vpop.f32.mrb[0].mxu0
      %6826 = vmatprep.mubr.f32.mxu0 0.0
      %6827 = vmatmul.mubr.f32.gmra.mrb[0].mxu0 %v6737
      %v6828 = vpop.f32.mrb[0].mxu0
      %v6829 = vadd.f32 0.0, %v6828
      %v6830 = vpop.f32.mrb[0].mxu0
      %6831 = vmatprep.mubr.f32.mxu0 0.0
      %6832 = vmatmul.mubr.f32.gmra.mrb[0].mxu0 %v6740
      %v6833 = vpop.f32.mrb[0].mxu0
      %v6834 = vadd.f32 0.0, %v6833
      %v6835 = vpop.f32.mrb[0].mxu0
      %6836 = vmatprep.mubr.f32.mxu0 0.0
      %6837 = vmatmul.mubr.f32.gmra.mrb[0].mxu0 %v6743
      %v6838 = vpop.f32.mrb[0].mxu0
      %v6839 = vadd.f32 0.0, %v6838
      %v6840 = vpop.f32.mrb[0].mxu0
      %6841 = vmatprep.mubr.f32.mxu0 0.0
      %6842 = vmatmul.mubr.f32.gmra.mrb[0].mxu0 %v6746
      %v6843 = vpop.f32.mrb[0].mxu0
      %v6844 = vadd.f32 0.0, %v6843
      %v6845 = vpop.f32.mrb[0].mxu0
      %6846 = vmatprep.mubr.f32.mxu0 0.0
      %6847 = vmatmul.mubr.f32.gmra.mrb[0].mxu0 %v6749
      %v6848 = vpop.f32.mrb[0].mxu0
      %v6849 = vadd.f32 0.0, %v6848
      %v6850 = vpop.f32.mrb[0].mxu0
      %6851 = vmatprep.mubr.f32.mxu0 0.0
      %6852 = vmatmul.mubr.f32.gmra.mrb[0].mxu0 %v6752
      %v6853 = vpop.f32.mrb[0].mxu0
      %v6854 = vadd.f32 0.0, %v6853
      %v6855 = vpop.f32.mrb[0].mxu0
      %6856 = vmatprep.mubr.f32.mxu0 0.0
      %6857 = vmatmul.mubr.f32.gmra.mrb[0].mxu0 %v6755
      %v6858 = vpop.f32.mrb[0].mxu0
      %v6859 = vadd.f32 0.0, %v6858
      %v6860 = vpop.f32.mrb[0].mxu0
      %6861 = vdwg.mxu0
      %6862 = vrot.lane.b32.xlu0 %v1388, 64
      %v6863 = vpop.permute.xlu0 %6862
      %6864 = vrot.lane.b32.xlu0 %v1390, 64
      %v6865 = vpop.permute.xlu0 %6864
      %6866 = vrot.lane.b32.xlu0 %v1392, 64
      %v6867 = vpop.permute.xlu0 %6866
      %6868 = vrot.lane.b32.xlu0 %v1394, 64
      %v6869 = vpop.permute.xlu0 %6868
      %6870 = vrot.lane.b32.xlu0 %v1396, 64
      %v6871 = vpop.permute.xlu0 %6870
      %6872 = vrot.lane.b32.xlu0 %v1398, 64
      %v6873 = vpop.permute.xlu0 %6872
      %6874 = vrot.lane.b32.xlu0 %v1400, 64
      %v6875 = vpop.permute.xlu0 %6874
      %6876 = vrot.lane.b32.xlu0 %v1402, 64
      %v6877 = vpop.permute.xlu0 %6876
      %v6887 = vsel %vm4076, %v5429, 0
      %v6890 = vsel %vm4076, %v5430, 0
      %v6893 = vsel %vm4076, %v5431, 0
      %v6896 = vsel %vm4076, %v5432, 0
      %v6899 = vsel %vm4076, %v5433, 0
      %v6902 = vsel %vm4076, %v5434, 0
      %v6905 = vsel %vm4076, %v5435, 0
      %v6908 = vsel %vm4076, %v5436, 0
      %6910 = vmatprep.subr.mxu0 0.0
      %6911 = vmatpush1.msra.mxu0 %v6863
      %6912 = vmatprep.subr.mxu0 0.0
      %6913 = vmatpush1.msra.mxu0 %v6865
      %6914 = vmatprep.subr.mxu0 0.0
      %6915 = vmatpush1.msra.mxu0 %v6867
      %6916 = vmatprep.subr.mxu0 0.0
      %6917 = vmatpush1.msra.mxu0 %v6869
      %6918 = vmatprep.subr.mxu0 0.0
      %6919 = vmatpush1.msra.mxu0 %v6871
      %6920 = vmatprep.subr.mxu0 0.0
      %6921 = vmatpush1.msra.mxu0 %v6873
      %6922 = vmatprep.subr.mxu0 0.0
      %6923 = vmatpush1.msra.mxu0 %v6875
      %6924 = vmatprep.subr.mxu0 0.0
      %6925 = vmatpush1.msra.mxu0 %v6877
      %6926 = vmatprep.subr.mxu0 0.0
      %6927 = vmatpush1.msra.mxu0 0.0
      %6928 = vmatprep.subr.mxu0 0.0
      %6929 = vmatpush1.msra.mxu0 0.0
      %6930 = vmatprep.subr.mxu0 0.0
      %6931 = vmatpush1.msra.mxu0 0.0
      %6932 = vmatprep.subr.mxu0 0.0
      %6933 = vmatpush1.msra.mxu0 0.0
      %6934 = vmatprep.subr.mxu0 0.0
      %6935 = vmatpush1.msra.mxu0 0.0
      %6936 = vmatprep.subr.mxu0 0.0
      %6937 = vmatpush1.msra.mxu0 0.0
      %6938 = vmatprep.subr.mxu0 0.0
      %6939 = vmatpush1.msra.mxu0 0.0
      %6940 = vmatprep.subr.mxu0 0.0
      %6941 = vmatpush1.msra.mxu0 0.0
      %6942 = vmatprep.subr.mxu0 0.0
      %6943 = vmatpush1.msra.mxu0 0.0
      %6944 = vmatprep.subr.mxu0 0.0
      %6945 = vmatpush1.msra.mxu0 0.0
      %6946 = vmatprep.subr.mxu0 0.0
      %6947 = vmatpush1.msra.mxu0 0.0
      %6948 = vmatprep.subr.mxu0 0.0
      %6949 = vmatpush1.msra.mxu0 0.0
      %6950 = vmatprep.subr.mxu0 0.0
      %6951 = vmatpush1.msra.mxu0 0.0
      %6952 = vmatprep.subr.mxu0 0.0
      %6953 = vmatpush1.msra.mxu0 0.0
      %6954 = vmatprep.subr.mxu0 0.0
      %6955 = vmatpush1.msra.mxu0 0.0
      %6956 = vmatprep.subr.mxu0 0.0
      %6957 = vmatpush1.msra.mxu0 0.0
      %6958 = vmatprep.subr.mxu0 0.0
      %6959 = vmatpush1.msra.mxu0 0.0
      %6960 = vmatprep.subr.mxu0 0.0
      %6961 = vmatpush1.msra.mxu0 0.0
      %6962 = vmatprep.subr.mxu0 0.0
      %6963 = vmatpush1.msra.mxu0 0.0
      %6964 = vmatprep.subr.mxu0 0.0
      %6965 = vmatpush1.msra.mxu0 0.0
      %6966 = vmatprep.subr.mxu0 0.0
      %6967 = vmatpush1.msra.mxu0 0.0
      %6968 = vmatprep.subr.mxu0 0.0
      %6969 = vmatpush1.msra.mxu0 0.0
      %6970 = vmatprep.subr.mxu0 0.0
      %6971 = vmatpush1.msra.mxu0 0.0
      %6972 = vmatprep.subr.mxu0 0.0
      %6973 = vmatpush1.msra.mxu0 0.0
      %6974 = vmatprep.mubr.f32.mxu0 0.0
      %6975 = vmatmul.mubr.f32.gmra.mrb[0].mxu0 %v6887
      %v6976 = vpop.f32.mrb[0].mxu0
      %v6977 = vadd.f32 0.0, %v6976
      %v6978 = vpop.f32.mrb[0].mxu0
      %6979 = vmatprep.mubr.f32.mxu0 0.0
      %6980 = vmatmul.mubr.f32.gmra.mrb[0].mxu0 %v6890
      %v6981 = vpop.f32.mrb[0].mxu0
      %v6982 = vadd.f32 0.0, %v6981
      %v6983 = vpop.f32.mrb[0].mxu0
      %6984 = vmatprep.mubr.f32.mxu0 0.0
      %6985 = vmatmul.mubr.f32.gmra.mrb[0].mxu0 %v6893
      %v6986 = vpop.f32.mrb[0].mxu0
      %v6987 = vadd.f32 0.0, %v6986
      %v6988 = vpop.f32.mrb[0].mxu0
      %6989 = vmatprep.mubr.f32.mxu0 0.0
      %6990 = vmatmul.mubr.f32.gmra.mrb[0].mxu0 %v6896
      %v6991 = vpop.f32.mrb[0].mxu0
      %v6992 = vadd.f32 0.0, %v6991
      %v6993 = vpop.f32.mrb[0].mxu0
      %6994 = vmatprep.mubr.f32.mxu0 0.0
      %6995 = vmatmul.mubr.f32.gmra.mrb[0].mxu0 %v6899
      %v6996 = vpop.f32.mrb[0].mxu0
      %v6997 = vadd.f32 0.0, %v6996
      %v6998 = vpop.f32.mrb[0].mxu0
      %6999 = vmatprep.mubr.f32.mxu0 0.0
      %7000 = vmatmul.mubr.f32.gmra.mrb[0].mxu0 %v6902
      %v7001 = vpop.f32.mrb[0].mxu0
      %v7002 = vadd.f32 0.0, %v7001
      %v7003 = vpop.f32.mrb[0].mxu0
      %7004 = vmatprep.mubr.f32.mxu0 0.0
      %7005 = vmatmul.mubr.f32.gmra.mrb[0].mxu0 %v6905
      %v7006 = vpop.f32.mrb[0].mxu0
      %v7007 = vadd.f32 0.0, %v7006
      %v7008 = vpop.f32.mrb[0].mxu0
      %7009 = vmatprep.mubr.f32.mxu0 0.0
      %7010 = vmatmul.mubr.f32.gmra.mrb[0].mxu0 %v6908
      %v7011 = vpop.f32.mrb[0].mxu0
      %v7012 = vadd.f32 0.0, %v7011
      %v7013 = vpop.f32.mrb[0].mxu0
      %7014 = vdwg.mxu0
      %7015 = vrot.lane.b32.xlu0 %v1404, 64
      %v7016 = vpop.permute.xlu0 %7015
      %7017 = vrot.lane.b32.xlu0 %v1406, 64
      %v7018 = vpop.permute.xlu0 %7017
      %7019 = vrot.lane.b32.xlu0 %v1408, 64
      %v7020 = vpop.permute.xlu0 %7019
      %7021 = vrot.lane.b32.xlu0 %v1410, 64
      %v7022 = vpop.permute.xlu0 %7021
      %7023 = vrot.lane.b32.xlu0 %v1412, 64
      %v7024 = vpop.permute.xlu0 %7023
      %7025 = vrot.lane.b32.xlu0 %v1414, 64
      %v7026 = vpop.permute.xlu0 %7025
      %7027 = vrot.lane.b32.xlu0 %v1416, 64
      %v7028 = vpop.permute.xlu0 %7027
      %7029 = vrot.lane.b32.xlu0 %v1418, 64
      %v7030 = vpop.permute.xlu0 %7029
      %v7040 = vsel %vm4076, %v5437, 0
      %v7043 = vsel %vm4076, %v5438, 0
      %v7046 = vsel %vm4076, %v5439, 0
      %v7049 = vsel %vm4076, %v5440, 0
      %v7052 = vsel %vm4076, %v5441, 0
      %v7055 = vsel %vm4076, %v5442, 0
      %v7058 = vsel %vm4076, %v5443, 0
      %v7061 = vsel %vm4076, %v5444, 0
      %7063 = vmatprep.subr.mxu0 0.0
      %7064 = vmatpush1.msra.mxu0 %v7016
      %7065 = vmatprep.subr.mxu0 0.0
      %7066 = vmatpush1.msra.mxu0 %v7018
      %7067 = vmatprep.subr.mxu0 0.0
      %7068 = vmatpush1.msra.mxu0 %v7020
      %7069 = vmatprep.subr.mxu0 0.0
      %7070 = vmatpush1.msra.mxu0 %v7022
      %7071 = vmatprep.subr.mxu0 0.0
      %7072 = vmatpush1.msra.mxu0 %v7024
      %7073 = vmatprep.subr.mxu0 0.0
      %7074 = vmatpush1.msra.mxu0 %v7026
      %7075 = vmatprep.subr.mxu0 0.0
      %7076 = vmatpush1.msra.mxu0 %v7028
      %7077 = vmatprep.subr.mxu0 0.0
      %7078 = vmatpush1.msra.mxu0 %v7030
      %7079 = vmatprep.subr.mxu0 0.0
      %7080 = vmatpush1.msra.mxu0 0.0
      %7081 = vmatprep.subr.mxu0 0.0
      %7082 = vmatpush1.msra.mxu0 0.0
      %7083 = vmatprep.subr.mxu0 0.0
      %7084 = vmatpush1.msra.mxu0 0.0
      %7085 = vmatprep.subr.mxu0 0.0
      %7086 = vmatpush1.msra.mxu0 0.0
      %7087 = vmatprep.subr.mxu0 0.0
      %7088 = vmatpush1.msra.mxu0 0.0
      %7089 = vmatprep.subr.mxu0 0.0
      %7090 = vmatpush1.msra.mxu0 0.0
      %7091 = vmatprep.subr.mxu0 0.0
      %7092 = vmatpush1.msra.mxu0 0.0
      %7093 = vmatprep.subr.mxu0 0.0
      %7094 = vmatpush1.msra.mxu0 0.0
      %7095 = vmatprep.subr.mxu0 0.0
      %7096 = vmatpush1.msra.mxu0 0.0
      %7097 = vmatprep.subr.mxu0 0.0
      %7098 = vmatpush1.msra.mxu0 0.0
      %7099 = vmatprep.subr.mxu0 0.0
      %7100 = vmatpush1.msra.mxu0 0.0
      %7101 = vmatprep.subr.mxu0 0.0
      %7102 = vmatpush1.msra.mxu0 0.0
      %7103 = vmatprep.subr.mxu0 0.0
      %7104 = vmatpush1.msra.mxu0 0.0
      %7105 = vmatprep.subr.mxu0 0.0
      %7106 = vmatpush1.msra.mxu0 0.0
      %7107 = vmatprep.subr.mxu0 0.0
      %7108 = vmatpush1.msra.mxu0 0.0
      %7109 = vmatprep.subr.mxu0 0.0
      %7110 = vmatpush1.msra.mxu0 0.0
      %7111 = vmatprep.subr.mxu0 0.0
      %7112 = vmatpush1.msra.mxu0 0.0
      %7113 = vmatprep.subr.mxu0 0.0
      %7114 = vmatpush1.msra.mxu0 0.0
      %7115 = vmatprep.subr.mxu0 0.0
      %7116 = vmatpush1.msra.mxu0 0.0
      %7117 = vmatprep.subr.mxu0 0.0
      %7118 = vmatpush1.msra.mxu0 0.0
      %7119 = vmatprep.subr.mxu0 0.0
      %7120 = vmatpush1.msra.mxu0 0.0
      %7121 = vmatprep.subr.mxu0 0.0
      %7122 = vmatpush1.msra.mxu0 0.0
      %7123 = vmatprep.subr.mxu0 0.0
      %7124 = vmatpush1.msra.mxu0 0.0
      %7125 = vmatprep.subr.mxu0 0.0
      %7126 = vmatpush1.msra.mxu0 0.0
      %7127 = vmatprep.mubr.f32.mxu0 0.0
      %7128 = vmatmul.mubr.f32.gmra.mrb[0].mxu0 %v7040
      %v7129 = vpop.f32.mrb[0].mxu0
      %v7130 = vadd.f32 0.0, %v7129
      %v7131 = vpop.f32.mrb[0].mxu0
      %7132 = vmatprep.mubr.f32.mxu0 0.0
      %7133 = vmatmul.mubr.f32.gmra.mrb[0].mxu0 %v7043
      %v7134 = vpop.f32.mrb[0].mxu0
      %v7135 = vadd.f32 0.0, %v7134
      %v7136 = vpop.f32.mrb[0].mxu0
      %7137 = vmatprep.mubr.f32.mxu0 0.0
      %7138 = vmatmul.mubr.f32.gmra.mrb[0].mxu0 %v7046
      %v7139 = vpop.f32.mrb[0].mxu0
      %v7140 = vadd.f32 0.0, %v7139
      %v7141 = vpop.f32.mrb[0].mxu0
      %7142 = vmatprep.mubr.f32.mxu0 0.0
      %7143 = vmatmul.mubr.f32.gmra.mrb[0].mxu0 %v7049
      %v7144 = vpop.f32.mrb[0].mxu0
      %v7145 = vadd.f32 0.0, %v7144
      %v7146 = vpop.f32.mrb[0].mxu0
      %7147 = vmatprep.mubr.f32.mxu0 0.0
      %7148 = vmatmul.mubr.f32.gmra.mrb[0].mxu0 %v7052
      %v7149 = vpop.f32.mrb[0].mxu0
      %v7150 = vadd.f32 0.0, %v7149
      %v7151 = vpop.f32.mrb[0].mxu0
      %7152 = vmatprep.mubr.f32.mxu0 0.0
      %7153 = vmatmul.mubr.f32.gmra.mrb[0].mxu0 %v7055
      %v7154 = vpop.f32.mrb[0].mxu0
      %v7155 = vadd.f32 0.0, %v7154
      %v7156 = vpop.f32.mrb[0].mxu0
      %7157 = vmatprep.mubr.f32.mxu0 0.0
      %7158 = vmatmul.mubr.f32.gmra.mrb[0].mxu0 %v7058
      %v7159 = vpop.f32.mrb[0].mxu0
      %v7160 = vadd.f32 0.0, %v7159
      %v7161 = vpop.f32.mrb[0].mxu0
      %7162 = vmatprep.mubr.f32.mxu0 0.0
      %7163 = vmatmul.mubr.f32.gmra.mrb[0].mxu0 %v7061
      %v7164 = vpop.f32.mrb[0].mxu0
      %v7165 = vadd.f32 0.0, %v7164
      %v7166 = vpop.f32.mrb[0].mxu0
      %7167 = vdwg.mxu0
      %7168 = vrot.lane.b32.xlu0 %v1420, 64
      %v7169 = vpop.permute.xlu0 %7168
      %7170 = vrot.lane.b32.xlu0 %v1422, 64
      %v7171 = vpop.permute.xlu0 %7170
      %7172 = vrot.lane.b32.xlu0 %v1424, 64
      %v7173 = vpop.permute.xlu0 %7172
      %7174 = vrot.lane.b32.xlu0 %v1426, 64
      %v7175 = vpop.permute.xlu0 %7174
      %7176 = vrot.lane.b32.xlu0 %v1428, 64
      %v7177 = vpop.permute.xlu0 %7176
      %7178 = vrot.lane.b32.xlu0 %v1430, 64
      %v7179 = vpop.permute.xlu0 %7178
      %7180 = vrot.lane.b32.xlu0 %v1432, 64
      %v7181 = vpop.permute.xlu0 %7180
      %7182 = vrot.lane.b32.xlu0 %v1434, 64
      %v7183 = vpop.permute.xlu0 %7182
      %v7193 = vsel %vm4076, %v5445, 0
      %v7196 = vsel %vm4076, %v5446, 0
      %v7199 = vsel %vm4076, %v5447, 0
      %v7202 = vsel %vm4076, %v5448, 0
      %v7205 = vsel %vm4076, %v5449, 0
      %v7208 = vsel %vm4076, %v5450, 0
      %v7211 = vsel %vm4076, %v5451, 0
      %v7214 = vsel %vm4076, %v5452, 0
      %7216 = vmatprep.subr.mxu0 0.0
      %7217 = vmatpush1.msra.mxu0 %v7169
      %7218 = vmatprep.subr.mxu0 0.0
      %7219 = vmatpush1.msra.mxu0 %v7171
      %7220 = vmatprep.subr.mxu0 0.0
      %7221 = vmatpush1.msra.mxu0 %v7173
      %7222 = vmatprep.subr.mxu0 0.0
      %7223 = vmatpush1.msra.mxu0 %v7175
      %7224 = vmatprep.subr.mxu0 0.0
      %7225 = vmatpush1.msra.mxu0 %v7177
      %7226 = vmatprep.subr.mxu0 0.0
      %7227 = vmatpush1.msra.mxu0 %v7179
      %7228 = vmatprep.subr.mxu0 0.0
      %7229 = vmatpush1.msra.mxu0 %v7181
      %7230 = vmatprep.subr.mxu0 0.0
      %7231 = vmatpush1.msra.mxu0 %v7183
      %7232 = vmatprep.subr.mxu0 0.0
      %7233 = vmatpush1.msra.mxu0 0.0
      %7234 = vmatprep.subr.mxu0 0.0
      %7235 = vmatpush1.msra.mxu0 0.0
      %7236 = vmatprep.subr.mxu0 0.0
      %7237 = vmatpush1.msra.mxu0 0.0
      %7238 = vmatprep.subr.mxu0 0.0
      %7239 = vmatpush1.msra.mxu0 0.0
      %7240 = vmatprep.subr.mxu0 0.0
      %7241 = vmatpush1.msra.mxu0 0.0
      %7242 = vmatprep.subr.mxu0 0.0
      %7243 = vmatpush1.msra.mxu0 0.0
      %7244 = vmatprep.subr.mxu0 0.0
      %7245 = vmatpush1.msra.mxu0 0.0
      %7246 = vmatprep.subr.mxu0 0.0
      %7247 = vmatpush1.msra.mxu0 0.0
      %7248 = vmatprep.subr.mxu0 0.0
      %7249 = vmatpush1.msra.mxu0 0.0
      %7250 = vmatprep.subr.mxu0 0.0
      %7251 = vmatpush1.msra.mxu0 0.0
      %7252 = vmatprep.subr.mxu0 0.0
      %7253 = vmatpush1.msra.mxu0 0.0
      %7254 = vmatprep.subr.mxu0 0.0
      %7255 = vmatpush1.msra.mxu0 0.0
      %7256 = vmatprep.subr.mxu0 0.0
      %7257 = vmatpush1.msra.mxu0 0.0
      %7258 = vmatprep.subr.mxu0 0.0
      %7259 = vmatpush1.msra.mxu0 0.0
      %7260 = vmatprep.subr.mxu0 0.0
      %7261 = vmatpush1.msra.mxu0 0.0
      %7262 = vmatprep.subr.mxu0 0.0
      %7263 = vmatpush1.msra.mxu0 0.0
      %7264 = vmatprep.subr.mxu0 0.0
      %7265 = vmatpush1.msra.mxu0 0.0
      %7266 = vmatprep.subr.mxu0 0.0
      %7267 = vmatpush1.msra.mxu0 0.0
      %7268 = vmatprep.subr.mxu0 0.0
      %7269 = vmatpush1.msra.mxu0 0.0
      %7270 = vmatprep.subr.mxu0 0.0
      %7271 = vmatpush1.msra.mxu0 0.0
      %7272 = vmatprep.subr.mxu0 0.0
      %7273 = vmatpush1.msra.mxu0 0.0
      %7274 = vmatprep.subr.mxu0 0.0
      %7275 = vmatpush1.msra.mxu0 0.0
      %7276 = vmatprep.subr.mxu0 0.0
      %7277 = vmatpush1.msra.mxu0 0.0
      %7278 = vmatprep.subr.mxu0 0.0
      %7279 = vmatpush1.msra.mxu0 0.0
      %7280 = vmatprep.mubr.f32.mxu0 0.0
      %7281 = vmatmul.mubr.f32.gmra.mrb[0].mxu0 %v7193
      %v7282 = vpop.f32.mrb[0].mxu0
      %v7283 = vadd.f32 0.0, %v7282
      %v7284 = vpop.f32.mrb[0].mxu0
      %7285 = vmatprep.mubr.f32.mxu0 0.0
      %7286 = vmatmul.mubr.f32.gmra.mrb[0].mxu0 %v7196
      %v7287 = vpop.f32.mrb[0].mxu0
      %v7288 = vadd.f32 0.0, %v7287
      %v7289 = vpop.f32.mrb[0].mxu0
      %7290 = vmatprep.mubr.f32.mxu0 0.0
      %7291 = vmatmul.mubr.f32.gmra.mrb[0].mxu0 %v7199
      %v7292 = vpop.f32.mrb[0].mxu0
      %v7293 = vadd.f32 0.0, %v7292
      %v7294 = vpop.f32.mrb[0].mxu0
      %7295 = vmatprep.mubr.f32.mxu0 0.0
      %7296 = vmatmul.mubr.f32.gmra.mrb[0].mxu0 %v7202
      %v7297 = vpop.f32.mrb[0].mxu0
      %v7298 = vadd.f32 0.0, %v7297
      %v7299 = vpop.f32.mrb[0].mxu0
      %7300 = vmatprep.mubr.f32.mxu0 0.0
      %7301 = vmatmul.mubr.f32.gmra.mrb[0].mxu0 %v7205
      %v7302 = vpop.f32.mrb[0].mxu0
      %v7303 = vadd.f32 0.0, %v7302
      %v7304 = vpop.f32.mrb[0].mxu0
      %7305 = vmatprep.mubr.f32.mxu0 0.0
      %7306 = vmatmul.mubr.f32.gmra.mrb[0].mxu0 %v7208
      %v7307 = vpop.f32.mrb[0].mxu0
      %v7308 = vadd.f32 0.0, %v7307
      %v7309 = vpop.f32.mrb[0].mxu0
      %7310 = vmatprep.mubr.f32.mxu0 0.0
      %7311 = vmatmul.mubr.f32.gmra.mrb[0].mxu0 %v7211
      %v7312 = vpop.f32.mrb[0].mxu0
      %v7313 = vadd.f32 0.0, %v7312
      %v7314 = vpop.f32.mrb[0].mxu0
      %7315 = vmatprep.mubr.f32.mxu0 0.0
      %7316 = vmatmul.mubr.f32.gmra.mrb[0].mxu0 %v7214
      %v7317 = vpop.f32.mrb[0].mxu0
      %v7318 = vadd.f32 0.0, %v7317
      %v7319 = vpop.f32.mrb[0].mxu0
      %7320 = vdwg.mxu0
      %7321 = vrot.lane.b32.xlu0 %v1436, 64
      %v7322 = vpop.permute.xlu0 %7321
      %7323 = vrot.lane.b32.xlu0 %v1438, 64
      %v7324 = vpop.permute.xlu0 %7323
      %7325 = vrot.lane.b32.xlu0 %v1440, 64
      %v7326 = vpop.permute.xlu0 %7325
      %7327 = vrot.lane.b32.xlu0 %v1442, 64
      %v7328 = vpop.permute.xlu0 %7327
      %7329 = vrot.lane.b32.xlu0 %v1444, 64
      %v7330 = vpop.permute.xlu0 %7329
      %7331 = vrot.lane.b32.xlu0 %v1446, 64
      %v7332 = vpop.permute.xlu0 %7331
      %7333 = vrot.lane.b32.xlu0 %v1448, 64
      %v7334 = vpop.permute.xlu0 %7333
      %7335 = vrot.lane.b32.xlu0 %v1450, 64
      %v7336 = vpop.permute.xlu0 %7335
      %v7346 = vsel %vm4076, %v5453, 0
      %v7349 = vsel %vm4076, %v5454, 0
      %v7352 = vsel %vm4076, %v5455, 0
      %v7355 = vsel %vm4076, %v5456, 0
      %v7358 = vsel %vm4076, %v5457, 0
      %v7361 = vsel %vm4076, %v5458, 0
      %v7364 = vsel %vm4076, %v5459, 0
      %v7367 = vsel %vm4076, %v5460, 0
      %7369 = vmatprep.subr.mxu0 0.0
      %7370 = vmatpush1.msra.mxu0 %v7322
      %7371 = vmatprep.subr.mxu0 0.0
      %7372 = vmatpush1.msra.mxu0 %v7324
      %7373 = vmatprep.subr.mxu0 0.0
      %7374 = vmatpush1.msra.mxu0 %v7326
      %7375 = vmatprep.subr.mxu0 0.0
      %7376 = vmatpush1.msra.mxu0 %v7328
      %7377 = vmatprep.subr.mxu0 0.0
      %7378 = vmatpush1.msra.mxu0 %v7330
      %7379 = vmatprep.subr.mxu0 0.0
      %7380 = vmatpush1.msra.mxu0 %v7332
      %7381 = vmatprep.subr.mxu0 0.0
      %7382 = vmatpush1.msra.mxu0 %v7334
      %7383 = vmatprep.subr.mxu0 0.0
      %7384 = vmatpush1.msra.mxu0 %v7336
      %7385 = vmatprep.subr.mxu0 0.0
      %7386 = vmatpush1.msra.mxu0 0.0
      %7387 = vmatprep.subr.mxu0 0.0
      %7388 = vmatpush1.msra.mxu0 0.0
      %7389 = vmatprep.subr.mxu0 0.0
      %7390 = vmatpush1.msra.mxu0 0.0
      %7391 = vmatprep.subr.mxu0 0.0
      %7392 = vmatpush1.msra.mxu0 0.0
      %7393 = vmatprep.subr.mxu0 0.0
      %7394 = vmatpush1.msra.mxu0 0.0
      %7395 = vmatprep.subr.mxu0 0.0
      %7396 = vmatpush1.msra.mxu0 0.0
      %7397 = vmatprep.subr.mxu0 0.0
      %7398 = vmatpush1.msra.mxu0 0.0
      %7399 = vmatprep.subr.mxu0 0.0
      %7400 = vmatpush1.msra.mxu0 0.0
      %7401 = vmatprep.subr.mxu0 0.0
      %7402 = vmatpush1.msra.mxu0 0.0
      %7403 = vmatprep.subr.mxu0 0.0
      %7404 = vmatpush1.msra.mxu0 0.0
      %7405 = vmatprep.subr.mxu0 0.0
      %7406 = vmatpush1.msra.mxu0 0.0
      %7407 = vmatprep.subr.mxu0 0.0
      %7408 = vmatpush1.msra.mxu0 0.0
      %7409 = vmatprep.subr.mxu0 0.0
      %7410 = vmatpush1.msra.mxu0 0.0
      %7411 = vmatprep.subr.mxu0 0.0
      %7412 = vmatpush1.msra.mxu0 0.0
      %7413 = vmatprep.subr.mxu0 0.0
      %7414 = vmatpush1.msra.mxu0 0.0
      %7415 = vmatprep.subr.mxu0 0.0
      %7416 = vmatpush1.msra.mxu0 0.0
      %7417 = vmatprep.subr.mxu0 0.0
      %7418 = vmatpush1.msra.mxu0 0.0
      %7419 = vmatprep.subr.mxu0 0.0
      %7420 = vmatpush1.msra.mxu0 0.0
      %7421 = vmatprep.subr.mxu0 0.0
      %7422 = vmatpush1.msra.mxu0 0.0
      %7423 = vmatprep.subr.mxu0 0.0
      %7424 = vmatpush1.msra.mxu0 0.0
      %7425 = vmatprep.subr.mxu0 0.0
      %7426 = vmatpush1.msra.mxu0 0.0
      %7427 = vmatprep.subr.mxu0 0.0
      %7428 = vmatpush1.msra.mxu0 0.0
      %7429 = vmatprep.subr.mxu0 0.0
      %7430 = vmatpush1.msra.mxu0 0.0
      %7431 = vmatprep.subr.mxu0 0.0
      %7432 = vmatpush1.msra.mxu0 0.0
      %7433 = vmatprep.mubr.f32.mxu0 0.0
      %7434 = vmatmul.mubr.f32.gmra.mrb[0].mxu0 %v7346
      %v7435 = vpop.f32.mrb[0].mxu0
      %v7436 = vadd.f32 0.0, %v7435
      %v7437 = vpop.f32.mrb[0].mxu0
      %7438 = vmatprep.mubr.f32.mxu0 0.0
      %7439 = vmatmul.mubr.f32.gmra.mrb[0].mxu0 %v7349
      %v7440 = vpop.f32.mrb[0].mxu0
      %v7441 = vadd.f32 0.0, %v7440
      %v7442 = vpop.f32.mrb[0].mxu0
      %7443 = vmatprep.mubr.f32.mxu0 0.0
      %7444 = vmatmul.mubr.f32.gmra.mrb[0].mxu0 %v7352
      %v7445 = vpop.f32.mrb[0].mxu0
      %v7446 = vadd.f32 0.0, %v7445
      %v7447 = vpop.f32.mrb[0].mxu0
      %7448 = vmatprep.mubr.f32.mxu0 0.0
      %7449 = vmatmul.mubr.f32.gmra.mrb[0].mxu0 %v7355
      %v7450 = vpop.f32.mrb[0].mxu0
      %v7451 = vadd.f32 0.0, %v7450
      %v7452 = vpop.f32.mrb[0].mxu0
      %7453 = vmatprep.mubr.f32.mxu0 0.0
      %7454 = vmatmul.mubr.f32.gmra.mrb[0].mxu0 %v7358
      %v7455 = vpop.f32.mrb[0].mxu0
      %v7456 = vadd.f32 0.0, %v7455
      %v7457 = vpop.f32.mrb[0].mxu0
      %7458 = vmatprep.mubr.f32.mxu0 0.0
      %7459 = vmatmul.mubr.f32.gmra.mrb[0].mxu0 %v7361
      %v7460 = vpop.f32.mrb[0].mxu0
      %v7461 = vadd.f32 0.0, %v7460
      %v7462 = vpop.f32.mrb[0].mxu0
      %7463 = vmatprep.mubr.f32.mxu0 0.0
      %7464 = vmatmul.mubr.f32.gmra.mrb[0].mxu0 %v7364
      %v7465 = vpop.f32.mrb[0].mxu0
      %v7466 = vadd.f32 0.0, %v7465
      %v7467 = vpop.f32.mrb[0].mxu0
      %7468 = vmatprep.mubr.f32.mxu0 0.0
      %7469 = vmatmul.mubr.f32.gmra.mrb[0].mxu0 %v7367
      %v7470 = vpop.f32.mrb[0].mxu0
      %v7471 = vadd.f32 0.0, %v7470
      %v7472 = vpop.f32.mrb[0].mxu0
      %7473 = vdwg.mxu0
      %7474 = vrot.lane.b32.xlu0 %v1452, 64
      %v7475 = vpop.permute.xlu0 %7474
      %7476 = vrot.lane.b32.xlu0 %v1454, 64
      %v7477 = vpop.permute.xlu0 %7476
      %7478 = vrot.lane.b32.xlu0 %v1456, 64
      %v7479 = vpop.permute.xlu0 %7478
      %7480 = vrot.lane.b32.xlu0 %v1458, 64
      %v7481 = vpop.permute.xlu0 %7480
      %7482 = vrot.lane.b32.xlu0 %v1460, 64
      %v7483 = vpop.permute.xlu0 %7482
      %7484 = vrot.lane.b32.xlu0 %v1462, 64
      %v7485 = vpop.permute.xlu0 %7484
      %7486 = vrot.lane.b32.xlu0 %v1464, 64
      %v7487 = vpop.permute.xlu0 %7486
      %7488 = vrot.lane.b32.xlu0 %v1466, 64
      %v7489 = vpop.permute.xlu0 %7488
      %v7499 = vsel %vm4076, %v5461, 0
      %v7502 = vsel %vm4076, %v5462, 0
      %v7505 = vsel %vm4076, %v5463, 0
      %v7508 = vsel %vm4076, %v5464, 0
      %v7511 = vsel %vm4076, %v5465, 0
      %v7514 = vsel %vm4076, %v5466, 0
      %v7517 = vsel %vm4076, %v5467, 0
      %v7520 = vsel %vm4076, %v5468, 0
      %7522 = vmatprep.subr.mxu0 0.0
      %7523 = vmatpush1.msra.mxu0 %v7475
      %7524 = vmatprep.subr.mxu0 0.0
      %7525 = vmatpush1.msra.mxu0 %v7477
      %7526 = vmatprep.subr.mxu0 0.0
      %7527 = vmatpush1.msra.mxu0 %v7479
      %7528 = vmatprep.subr.mxu0 0.0
      %7529 = vmatpush1.msra.mxu0 %v7481
      %7530 = vmatprep.subr.mxu0 0.0
      %7531 = vmatpush1.msra.mxu0 %v7483
      %7532 = vmatprep.subr.mxu0 0.0
      %7533 = vmatpush1.msra.mxu0 %v7485
      %7534 = vmatprep.subr.mxu0 0.0
      %7535 = vmatpush1.msra.mxu0 %v7487
      %7536 = vmatprep.subr.mxu0 0.0
      %7537 = vmatpush1.msra.mxu0 %v7489
      %7538 = vmatprep.subr.mxu0 0.0
      %7539 = vmatpush1.msra.mxu0 0.0
      %7540 = vmatprep.subr.mxu0 0.0
      %7541 = vmatpush1.msra.mxu0 0.0
      %7542 = vmatprep.subr.mxu0 0.0
      %7543 = vmatpush1.msra.mxu0 0.0
      %7544 = vmatprep.subr.mxu0 0.0
      %7545 = vmatpush1.msra.mxu0 0.0
      %7546 = vmatprep.subr.mxu0 0.0
      %7547 = vmatpush1.msra.mxu0 0.0
      %7548 = vmatprep.subr.mxu0 0.0
      %7549 = vmatpush1.msra.mxu0 0.0
      %7550 = vmatprep.subr.mxu0 0.0
      %7551 = vmatpush1.msra.mxu0 0.0
      %7552 = vmatprep.subr.mxu0 0.0
      %7553 = vmatpush1.msra.mxu0 0.0
      %7554 = vmatprep.subr.mxu0 0.0
      %7555 = vmatpush1.msra.mxu0 0.0
      %7556 = vmatprep.subr.mxu0 0.0
      %7557 = vmatpush1.msra.mxu0 0.0
      %7558 = vmatprep.subr.mxu0 0.0
      %7559 = vmatpush1.msra.mxu0 0.0
      %7560 = vmatprep.subr.mxu0 0.0
      %7561 = vmatpush1.msra.mxu0 0.0
      %7562 = vmatprep.subr.mxu0 0.0
      %7563 = vmatpush1.msra.mxu0 0.0
      %7564 = vmatprep.subr.mxu0 0.0
      %7565 = vmatpush1.msra.mxu0 0.0
      %7566 = vmatprep.subr.mxu0 0.0
      %7567 = vmatpush1.msra.mxu0 0.0
      %7568 = vmatprep.subr.mxu0 0.0
      %7569 = vmatpush1.msra.mxu0 0.0
      %7570 = vmatprep.subr.mxu0 0.0
      %7571 = vmatpush1.msra.mxu0 0.0
      %7572 = vmatprep.subr.mxu0 0.0
      %7573 = vmatpush1.msra.mxu0 0.0
      %7574 = vmatprep.subr.mxu0 0.0
      %7575 = vmatpush1.msra.mxu0 0.0
      %7576 = vmatprep.subr.mxu0 0.0
      %7577 = vmatpush1.msra.mxu0 0.0
      %7578 = vmatprep.subr.mxu0 0.0
      %7579 = vmatpush1.msra.mxu0 0.0
      %7580 = vmatprep.subr.mxu0 0.0
      %7581 = vmatpush1.msra.mxu0 0.0
      %7582 = vmatprep.subr.mxu0 0.0
      %7583 = vmatpush1.msra.mxu0 0.0
      %7584 = vmatprep.subr.mxu0 0.0
      %7585 = vmatpush1.msra.mxu0 0.0
      %7586 = vmatprep.mubr.f32.mxu0 0.0
      %7587 = vmatmul.mubr.f32.gmra.mrb[0].mxu0 %v7499
      %v7588 = vpop.f32.mrb[0].mxu0
      %v7589 = vadd.f32 0.0, %v7588
      %v7590 = vpop.f32.mrb[0].mxu0
      %7591 = vmatprep.mubr.f32.mxu0 0.0
      %7592 = vmatmul.mubr.f32.gmra.mrb[0].mxu0 %v7502
      %v7593 = vpop.f32.mrb[0].mxu0
      %v7594 = vadd.f32 0.0, %v7593
      %v7595 = vpop.f32.mrb[0].mxu0
      %7596 = vmatprep.mubr.f32.mxu0 0.0
      %7597 = vmatmul.mubr.f32.gmra.mrb[0].mxu0 %v7505
      %v7598 = vpop.f32.mrb[0].mxu0
      %v7599 = vadd.f32 0.0, %v7598
      %v7600 = vpop.f32.mrb[0].mxu0
      %7601 = vmatprep.mubr.f32.mxu0 0.0
      %7602 = vmatmul.mubr.f32.gmra.mrb[0].mxu0 %v7508
      %v7603 = vpop.f32.mrb[0].mxu0
      %v7604 = vadd.f32 0.0, %v7603
      %v7605 = vpop.f32.mrb[0].mxu0
      %7606 = vmatprep.mubr.f32.mxu0 0.0
      %7607 = vmatmul.mubr.f32.gmra.mrb[0].mxu0 %v7511
      %v7608 = vpop.f32.mrb[0].mxu0
      %v7609 = vadd.f32 0.0, %v7608
      %v7610 = vpop.f32.mrb[0].mxu0
      %7611 = vmatprep.mubr.f32.mxu0 0.0
      %7612 = vmatmul.mubr.f32.gmra.mrb[0].mxu0 %v7514
      %v7613 = vpop.f32.mrb[0].mxu0
      %v7614 = vadd.f32 0.0, %v7613
      %v7615 = vpop.f32.mrb[0].mxu0
      %7616 = vmatprep.mubr.f32.mxu0 0.0
      %7617 = vmatmul.mubr.f32.gmra.mrb[0].mxu0 %v7517
      %v7618 = vpop.f32.mrb[0].mxu0
      %v7619 = vadd.f32 0.0, %v7618
      %v7620 = vpop.f32.mrb[0].mxu0
      %7621 = vmatprep.mubr.f32.mxu0 0.0
      %7622 = vmatmul.mubr.f32.gmra.mrb[0].mxu0 %v7520
      %v7623 = vpop.f32.mrb[0].mxu0
      %v7624 = vadd.f32 0.0, %v7623
      %v7625 = vpop.f32.mrb[0].mxu0
      %7626 = vdwg.mxu0
      %7627 = vrot.lane.b32.xlu0 %v1468, 64
      %v7628 = vpop.permute.xlu0 %7627
      %7629 = vrot.lane.b32.xlu0 %v1470, 64
      %v7630 = vpop.permute.xlu0 %7629
      %7631 = vrot.lane.b32.xlu0 %v1472, 64
      %v7632 = vpop.permute.xlu0 %7631
      %7633 = vrot.lane.b32.xlu0 %v1474, 64
      %v7634 = vpop.permute.xlu0 %7633
      %7635 = vrot.lane.b32.xlu0 %v1476, 64
      %v7636 = vpop.permute.xlu0 %7635
      %7637 = vrot.lane.b32.xlu0 %v1478, 64
      %v7638 = vpop.permute.xlu0 %7637
      %7639 = vrot.lane.b32.xlu0 %v1480, 64
      %v7640 = vpop.permute.xlu0 %7639
      %7641 = vrot.lane.b32.xlu0 %v1482, 64
      %v7642 = vpop.permute.xlu0 %7641
      %v7652 = vsel %vm4076, %v5469, 0
      %v7655 = vsel %vm4076, %v5470, 0
      %v7658 = vsel %vm4076, %v5471, 0
      %v7661 = vsel %vm4076, %v5472, 0
      %v7664 = vsel %vm4076, %v5473, 0
      %v7667 = vsel %vm4076, %v5474, 0
      %v7670 = vsel %vm4076, %v5475, 0
      %v7673 = vsel %vm4076, %v5476, 0
      %7675 = vmatprep.subr.mxu0 0.0
      %7676 = vmatpush1.msra.mxu0 %v7628
      %7677 = vmatprep.subr.mxu0 0.0
      %7678 = vmatpush1.msra.mxu0 %v7630
      %7679 = vmatprep.subr.mxu0 0.0
      %7680 = vmatpush1.msra.mxu0 %v7632
      %7681 = vmatprep.subr.mxu0 0.0
      %7682 = vmatpush1.msra.mxu0 %v7634
      %7683 = vmatprep.subr.mxu0 0.0
      %7684 = vmatpush1.msra.mxu0 %v7636
      %7685 = vmatprep.subr.mxu0 0.0
      %7686 = vmatpush1.msra.mxu0 %v7638
      %7687 = vmatprep.subr.mxu0 0.0
      %7688 = vmatpush1.msra.mxu0 %v7640
      %7689 = vmatprep.subr.mxu0 0.0
      %7690 = vmatpush1.msra.mxu0 %v7642
      %7691 = vmatprep.subr.mxu0 0.0
      %7692 = vmatpush1.msra.mxu0 0.0
      %7693 = vmatprep.subr.mxu0 0.0
      %7694 = vmatpush1.msra.mxu0 0.0
      %7695 = vmatprep.subr.mxu0 0.0
      %7696 = vmatpush1.msra.mxu0 0.0
      %7697 = vmatprep.subr.mxu0 0.0
      %7698 = vmatpush1.msra.mxu0 0.0
      %7699 = vmatprep.subr.mxu0 0.0
      %7700 = vmatpush1.msra.mxu0 0.0
      %7701 = vmatprep.subr.mxu0 0.0
      %7702 = vmatpush1.msra.mxu0 0.0
      %7703 = vmatprep.subr.mxu0 0.0
      %7704 = vmatpush1.msra.mxu0 0.0
      %7705 = vmatprep.subr.mxu0 0.0
      %7706 = vmatpush1.msra.mxu0 0.0
      %7707 = vmatprep.subr.mxu0 0.0
      %7708 = vmatpush1.msra.mxu0 0.0
      %7709 = vmatprep.subr.mxu0 0.0
      %7710 = vmatpush1.msra.mxu0 0.0
      %7711 = vmatprep.subr.mxu0 0.0
      %7712 = vmatpush1.msra.mxu0 0.0
      %7713 = vmatprep.subr.mxu0 0.0
      %7714 = vmatpush1.msra.mxu0 0.0
      %7715 = vmatprep.subr.mxu0 0.0
      %7716 = vmatpush1.msra.mxu0 0.0
      %7717 = vmatprep.subr.mxu0 0.0
      %7718 = vmatpush1.msra.mxu0 0.0
      %7719 = vmatprep.subr.mxu0 0.0
      %7720 = vmatpush1.msra.mxu0 0.0
      %7721 = vmatprep.subr.mxu0 0.0
      %7722 = vmatpush1.msra.mxu0 0.0
      %7723 = vmatprep.subr.mxu0 0.0
      %7724 = vmatpush1.msra.mxu0 0.0
      %7725 = vmatprep.subr.mxu0 0.0
      %7726 = vmatpush1.msra.mxu0 0.0
      %7727 = vmatprep.subr.mxu0 0.0
      %7728 = vmatpush1.msra.mxu0 0.0
      %7729 = vmatprep.subr.mxu0 0.0
      %7730 = vmatpush1.msra.mxu0 0.0
      %7731 = vmatprep.subr.mxu0 0.0
      %7732 = vmatpush1.msra.mxu0 0.0
      %7733 = vmatprep.subr.mxu0 0.0
      %7734 = vmatpush1.msra.mxu0 0.0
      %7735 = vmatprep.subr.mxu0 0.0
      %7736 = vmatpush1.msra.mxu0 0.0
      %7737 = vmatprep.subr.mxu0 0.0
      %7738 = vmatpush1.msra.mxu0 0.0
      %7739 = vmatprep.mubr.f32.mxu0 0.0
      %7740 = vmatmul.mubr.f32.gmra.mrb[0].mxu0 %v7652
      %v7741 = vpop.f32.mrb[0].mxu0
      %v7742 = vadd.f32 0.0, %v7741
      %v7743 = vpop.f32.mrb[0].mxu0
      %7744 = vmatprep.mubr.f32.mxu0 0.0
      %7745 = vmatmul.mubr.f32.gmra.mrb[0].mxu0 %v7655
      %v7746 = vpop.f32.mrb[0].mxu0
      %v7747 = vadd.f32 0.0, %v7746
      %v7748 = vpop.f32.mrb[0].mxu0
      %7749 = vmatprep.mubr.f32.mxu0 0.0
      %7750 = vmatmul.mubr.f32.gmra.mrb[0].mxu0 %v7658
      %v7751 = vpop.f32.mrb[0].mxu0
      %v7752 = vadd.f32 0.0, %v7751
      %v7753 = vpop.f32.mrb[0].mxu0
      %7754 = vmatprep.mubr.f32.mxu0 0.0
      %7755 = vmatmul.mubr.f32.gmra.mrb[0].mxu0 %v7661
      %v7756 = vpop.f32.mrb[0].mxu0
      %v7757 = vadd.f32 0.0, %v7756
      %v7758 = vpop.f32.mrb[0].mxu0
      %7759 = vmatprep.mubr.f32.mxu0 0.0
      %7760 = vmatmul.mubr.f32.gmra.mrb[0].mxu0 %v7664
      %v7761 = vpop.f32.mrb[0].mxu0
      %v7762 = vadd.f32 0.0, %v7761
      %v7763 = vpop.f32.mrb[0].mxu0
      %7764 = vmatprep.mubr.f32.mxu0 0.0
      %7765 = vmatmul.mubr.f32.gmra.mrb[0].mxu0 %v7667
      %v7766 = vpop.f32.mrb[0].mxu0
      %v7767 = vadd.f32 0.0, %v7766
      %v7768 = vpop.f32.mrb[0].mxu0
      %7769 = vmatprep.mubr.f32.mxu0 0.0
      %7770 = vmatmul.mubr.f32.gmra.mrb[0].mxu0 %v7670
      %v7771 = vpop.f32.mrb[0].mxu0
      %v7772 = vadd.f32 0.0, %v7771
      %v7773 = vpop.f32.mrb[0].mxu0
      %7774 = vmatprep.mubr.f32.mxu0 0.0
      %7775 = vmatmul.mubr.f32.gmra.mrb[0].mxu0 %v7673
      %v7776 = vpop.f32.mrb[0].mxu0
      %v7777 = vadd.f32 0.0, %v7776
      %v7778 = vpop.f32.mrb[0].mxu0
      %7779 = vdwg.mxu0
      %7780 = vrot.lane.b32.xlu0 %v1484, 64
      %v7781 = vpop.permute.xlu0 %7780
      %7782 = vrot.lane.b32.xlu0 %v1486, 64
      %v7783 = vpop.permute.xlu0 %7782
      %7784 = vrot.lane.b32.xlu0 %v1488, 64
      %v7785 = vpop.permute.xlu0 %7784
      %7786 = vrot.lane.b32.xlu0 %v1490, 64
      %v7787 = vpop.permute.xlu0 %7786
      %7788 = vrot.lane.b32.xlu0 %v1492, 64
      %v7789 = vpop.permute.xlu0 %7788
      %7790 = vrot.lane.b32.xlu0 %v1494, 64
      %v7791 = vpop.permute.xlu0 %7790
      %7792 = vrot.lane.b32.xlu0 %v1496, 64
      %v7793 = vpop.permute.xlu0 %7792
      %7794 = vrot.lane.b32.xlu0 %v1498, 64
      %v7795 = vpop.permute.xlu0 %7794
      %v7805 = vsel %vm4076, %v5477, 0
      %v7808 = vsel %vm4076, %v5478, 0
      %v7811 = vsel %vm4076, %v5479, 0
      %v7814 = vsel %vm4076, %v5480, 0
      %v7817 = vsel %vm4076, %v5481, 0
      %v7820 = vsel %vm4076, %v5482, 0
      %v7823 = vsel %vm4076, %v5483, 0
      %v7826 = vsel %vm4076, %v5484, 0
      %7828 = vmatprep.subr.mxu0 0.0
      %7829 = vmatpush1.msra.mxu0 %v7781
      %7830 = vmatprep.subr.mxu0 0.0
      %7831 = vmatpush1.msra.mxu0 %v7783
      %7832 = vmatprep.subr.mxu0 0.0
      %7833 = vmatpush1.msra.mxu0 %v7785
      %7834 = vmatprep.subr.mxu0 0.0
      %7835 = vmatpush1.msra.mxu0 %v7787
      %7836 = vmatprep.subr.mxu0 0.0
      %7837 = vmatpush1.msra.mxu0 %v7789
      %7838 = vmatprep.subr.mxu0 0.0
      %7839 = vmatpush1.msra.mxu0 %v7791
      %7840 = vmatprep.subr.mxu0 0.0
      %7841 = vmatpush1.msra.mxu0 %v7793
      %7842 = vmatprep.subr.mxu0 0.0
      %7843 = vmatpush1.msra.mxu0 %v7795
      %7844 = vmatprep.subr.mxu0 0.0
      %7845 = vmatpush1.msra.mxu0 0.0
      %7846 = vmatprep.subr.mxu0 0.0
      %7847 = vmatpush1.msra.mxu0 0.0
      %7848 = vmatprep.subr.mxu0 0.0
      %7849 = vmatpush1.msra.mxu0 0.0
      %7850 = vmatprep.subr.mxu0 0.0
      %7851 = vmatpush1.msra.mxu0 0.0
      %7852 = vmatprep.subr.mxu0 0.0
      %7853 = vmatpush1.msra.mxu0 0.0
      %7854 = vmatprep.subr.mxu0 0.0
      %7855 = vmatpush1.msra.mxu0 0.0
      %7856 = vmatprep.subr.mxu0 0.0
      %7857 = vmatpush1.msra.mxu0 0.0
      %7858 = vmatprep.subr.mxu0 0.0
      %7859 = vmatpush1.msra.mxu0 0.0
      %7860 = vmatprep.subr.mxu0 0.0
      %7861 = vmatpush1.msra.mxu0 0.0
      %7862 = vmatprep.subr.mxu0 0.0
      %7863 = vmatpush1.msra.mxu0 0.0
      %7864 = vmatprep.subr.mxu0 0.0
      %7865 = vmatpush1.msra.mxu0 0.0
      %7866 = vmatprep.subr.mxu0 0.0
      %7867 = vmatpush1.msra.mxu0 0.0
      %7868 = vmatprep.subr.mxu0 0.0
      %7869 = vmatpush1.msra.mxu0 0.0
      %7870 = vmatprep.subr.mxu0 0.0
      %7871 = vmatpush1.msra.mxu0 0.0
      %7872 = vmatprep.subr.mxu0 0.0
      %7873 = vmatpush1.msra.mxu0 0.0
      %7874 = vmatprep.subr.mxu0 0.0
      %7875 = vmatpush1.msra.mxu0 0.0
      %7876 = vmatprep.subr.mxu0 0.0
      %7877 = vmatpush1.msra.mxu0 0.0
      %7878 = vmatprep.subr.mxu0 0.0
      %7879 = vmatpush1.msra.mxu0 0.0
      %7880 = vmatprep.subr.mxu0 0.0
      %7881 = vmatpush1.msra.mxu0 0.0
      %7882 = vmatprep.subr.mxu0 0.0
      %7883 = vmatpush1.msra.mxu0 0.0
      %7884 = vmatprep.subr.mxu0 0.0
      %7885 = vmatpush1.msra.mxu0 0.0
      %7886 = vmatprep.subr.mxu0 0.0
      %7887 = vmatpush1.msra.mxu0 0.0
      %7888 = vmatprep.subr.mxu0 0.0
      %7889 = vmatpush1.msra.mxu0 0.0
      %7890 = vmatprep.subr.mxu0 0.0
      %7891 = vmatpush1.msra.mxu0 0.0
      %7892 = vmatprep.mubr.f32.mxu0 0.0
      %7893 = vmatmul.mubr.f32.gmra.mrb[0].mxu0 %v7805
      %v7894 = vpop.f32.mrb[0].mxu0
      %v7895 = vadd.f32 0.0, %v7894
      %v7896 = vpop.f32.mrb[0].mxu0
      %7897 = vmatprep.mubr.f32.mxu0 0.0
      %7898 = vmatmul.mubr.f32.gmra.mrb[0].mxu0 %v7808
      %v7899 = vpop.f32.mrb[0].mxu0
      %v7900 = vadd.f32 0.0, %v7899
      %v7901 = vpop.f32.mrb[0].mxu0
      %7902 = vmatprep.mubr.f32.mxu0 0.0
      %7903 = vmatmul.mubr.f32.gmra.mrb[0].mxu0 %v7811
      %v7904 = vpop.f32.mrb[0].mxu0
      %v7905 = vadd.f32 0.0, %v7904
      %v7906 = vpop.f32.mrb[0].mxu0
      %7907 = vmatprep.mubr.f32.mxu0 0.0
      %7908 = vmatmul.mubr.f32.gmra.mrb[0].mxu0 %v7814
      %v7909 = vpop.f32.mrb[0].mxu0
      %v7910 = vadd.f32 0.0, %v7909
      %v7911 = vpop.f32.mrb[0].mxu0
      %7912 = vmatprep.mubr.f32.mxu0 0.0
      %7913 = vmatmul.mubr.f32.gmra.mrb[0].mxu0 %v7817
      %v7914 = vpop.f32.mrb[0].mxu0
      %v7915 = vadd.f32 0.0, %v7914
      %v7916 = vpop.f32.mrb[0].mxu0
      %7917 = vmatprep.mubr.f32.mxu0 0.0
      %7918 = vmatmul.mubr.f32.gmra.mrb[0].mxu0 %v7820
      %v7919 = vpop.f32.mrb[0].mxu0
      %v7920 = vadd.f32 0.0, %v7919
      %v7921 = vpop.f32.mrb[0].mxu0
      %7922 = vmatprep.mubr.f32.mxu0 0.0
      %7923 = vmatmul.mubr.f32.gmra.mrb[0].mxu0 %v7823
      %v7924 = vpop.f32.mrb[0].mxu0
      %v7925 = vadd.f32 0.0, %v7924
      %v7926 = vpop.f32.mrb[0].mxu0
      %7927 = vmatprep.mubr.f32.mxu0 0.0
      %7928 = vmatmul.mubr.f32.gmra.mrb[0].mxu0 %v7826
      %v7929 = vpop.f32.mrb[0].mxu0
      %v7930 = vadd.f32 0.0, %v7929
      %v7931 = vpop.f32.mrb[0].mxu0
      %7932 = vdwg.mxu0
      %7965 = vrot.lane.b32.xlu0 %v6212, 8
      %v7966 = vpop.permute.xlu0 %7965
      %7967 = vrot.lane.b32.xlu0 %v6217, 8
      %v7968 = vpop.permute.xlu0 %7967
      %7969 = vrot.lane.b32.xlu0 %v6222, 8
      %v7970 = vpop.permute.xlu0 %7969
      %7971 = vrot.lane.b32.xlu0 %v6227, 8
      %v7972 = vpop.permute.xlu0 %7971
      %7973 = vrot.lane.b32.xlu0 %v6232, 8
      %v7974 = vpop.permute.xlu0 %7973
      %7975 = vrot.lane.b32.xlu0 %v6237, 8
      %v7976 = vpop.permute.xlu0 %7975
      %7977 = vrot.lane.b32.xlu0 %v6242, 8
      %v7978 = vpop.permute.xlu0 %7977
      %7979 = vrot.lane.b32.xlu0 %v6247, 8
      %v7980 = vpop.permute.xlu0 %7979
      %7981 = vrot.lane.b32.xlu0 %v6365, 8
      %v7982 = vpop.permute.xlu0 %7981
      %7983 = vrot.lane.b32.xlu0 %v6370, 8
      %v7984 = vpop.permute.xlu0 %7983
      %7985 = vrot.lane.b32.xlu0 %v6375, 8
      %v7986 = vpop.permute.xlu0 %7985
      %7987 = vrot.lane.b32.xlu0 %v6380, 8
      %v7988 = vpop.permute.xlu0 %7987
      %7989 = vrot.lane.b32.xlu0 %v6385, 8
      %v7990 = vpop.permute.xlu0 %7989
      %7991 = vrot.lane.b32.xlu0 %v6390, 8
      %v7992 = vpop.permute.xlu0 %7991
      %7993 = vrot.lane.b32.xlu0 %v6395, 8
      %v7994 = vpop.permute.xlu0 %7993
      %7995 = vrot.lane.b32.xlu0 %v6400, 8
      %v7996 = vpop.permute.xlu0 %7995
      %7997 = vrot.lane.b32.xlu0 %v6518, 8
      %v7998 = vpop.permute.xlu0 %7997
      %7999 = vrot.lane.b32.xlu0 %v6523, 8
      %v8000 = vpop.permute.xlu0 %7999
      %8001 = vrot.lane.b32.xlu0 %v6528, 8
      %v8002 = vpop.permute.xlu0 %8001
      %8003 = vrot.lane.b32.xlu0 %v6533, 8
      %v8004 = vpop.permute.xlu0 %8003
      %8005 = vrot.lane.b32.xlu0 %v6538, 8
      %v8006 = vpop.permute.xlu0 %8005
      %8007 = vrot.lane.b32.xlu0 %v6543, 8
      %v8008 = vpop.permute.xlu0 %8007
      %8009 = vrot.lane.b32.xlu0 %v6548, 8
      %v8010 = vpop.permute.xlu0 %8009
      %8011 = vrot.lane.b32.xlu0 %v6553, 8
      %v8012 = vpop.permute.xlu0 %8011
      %8013 = vrot.lane.b32.xlu0 %v6671, 8
      %v8014 = vpop.permute.xlu0 %8013
      %8015 = vrot.lane.b32.xlu0 %v6676, 8
      %v8016 = vpop.permute.xlu0 %8015
      %8017 = vrot.lane.b32.xlu0 %v6681, 8
      %v8018 = vpop.permute.xlu0 %8017
      %8019 = vrot.lane.b32.xlu0 %v6686, 8
      %v8020 = vpop.permute.xlu0 %8019
      %8021 = vrot.lane.b32.xlu0 %v6691, 8
      %v8022 = vpop.permute.xlu0 %8021
      %8023 = vrot.lane.b32.xlu0 %v6696, 8
      %v8024 = vpop.permute.xlu0 %8023
      %8025 = vrot.lane.b32.xlu0 %v6701, 8
      %v8026 = vpop.permute.xlu0 %8025
      %8027 = vrot.lane.b32.xlu0 %v6706, 8
      %v8028 = vpop.permute.xlu0 %8027
      %8093 = vrot.lane.b32.xlu0 %v6824, 16
      %v8094 = vpop.permute.xlu0 %8093
      %8095 = vrot.lane.b32.xlu0 %v6829, 16
      %v8096 = vpop.permute.xlu0 %8095
      %8097 = vrot.lane.b32.xlu0 %v6834, 16
      %v8098 = vpop.permute.xlu0 %8097
      %8099 = vrot.lane.b32.xlu0 %v6839, 16
      %v8100 = vpop.permute.xlu0 %8099
      %8101 = vrot.lane.b32.xlu0 %v6844, 16
      %v8102 = vpop.permute.xlu0 %8101
      %8103 = vrot.lane.b32.xlu0 %v6849, 16
      %v8104 = vpop.permute.xlu0 %8103
      %8105 = vrot.lane.b32.xlu0 %v6854, 16
      %v8106 = vpop.permute.xlu0 %8105
      %8107 = vrot.lane.b32.xlu0 %v6859, 16
      %v8108 = vpop.permute.xlu0 %8107
      %8109 = vrot.lane.b32.xlu0 %v6977, 16
      %v8110 = vpop.permute.xlu0 %8109
      %8111 = vrot.lane.b32.xlu0 %v6982, 16
      %v8112 = vpop.permute.xlu0 %8111
      %8113 = vrot.lane.b32.xlu0 %v6987, 16
      %v8114 = vpop.permute.xlu0 %8113
      %8115 = vrot.lane.b32.xlu0 %v6992, 16
      %v8116 = vpop.permute.xlu0 %8115
      %8117 = vrot.lane.b32.xlu0 %v6997, 16
      %v8118 = vpop.permute.xlu0 %8117
      %8119 = vrot.lane.b32.xlu0 %v7002, 16
      %v8120 = vpop.permute.xlu0 %8119
      %8121 = vrot.lane.b32.xlu0 %v7007, 16
      %v8122 = vpop.permute.xlu0 %8121
      %8123 = vrot.lane.b32.xlu0 %v7012, 16
      %v8124 = vpop.permute.xlu0 %8123
      %8125 = vrot.lane.b32.xlu0 %v7130, 16
      %v8126 = vpop.permute.xlu0 %8125
      %8127 = vrot.lane.b32.xlu0 %v7135, 16
      %v8128 = vpop.permute.xlu0 %8127
      %8129 = vrot.lane.b32.xlu0 %v7140, 16
      %v8130 = vpop.permute.xlu0 %8129
      %8131 = vrot.lane.b32.xlu0 %v7145, 16
      %v8132 = vpop.permute.xlu0 %8131
      %8133 = vrot.lane.b32.xlu0 %v7150, 16
      %v8134 = vpop.permute.xlu0 %8133
      %8135 = vrot.lane.b32.xlu0 %v7155, 16
      %v8136 = vpop.permute.xlu0 %8135
      %8137 = vrot.lane.b32.xlu0 %v7160, 16
      %v8138 = vpop.permute.xlu0 %8137
      %8139 = vrot.lane.b32.xlu0 %v7165, 16
      %v8140 = vpop.permute.xlu0 %8139
      %8141 = vrot.lane.b32.xlu0 %v7283, 16
      %v8142 = vpop.permute.xlu0 %8141
      %8143 = vrot.lane.b32.xlu0 %v7288, 16
      %v8144 = vpop.permute.xlu0 %8143
      %8145 = vrot.lane.b32.xlu0 %v7293, 16
      %v8146 = vpop.permute.xlu0 %8145
      %8147 = vrot.lane.b32.xlu0 %v7298, 16
      %v8148 = vpop.permute.xlu0 %8147
      %8149 = vrot.lane.b32.xlu0 %v7303, 16
      %v8150 = vpop.permute.xlu0 %8149
      %8151 = vrot.lane.b32.xlu0 %v7308, 16
      %v8152 = vpop.permute.xlu0 %8151
      %8153 = vrot.lane.b32.xlu0 %v7313, 16
      %v8154 = vpop.permute.xlu0 %8153
      %8155 = vrot.lane.b32.xlu0 %v7318, 16
      %v8156 = vpop.permute.xlu0 %8155
      %8221 = vrot.lane.b32.xlu0 %v7436, 24
      %v8222 = vpop.permute.xlu0 %8221
      %8223 = vrot.lane.b32.xlu0 %v7441, 24
      %v8224 = vpop.permute.xlu0 %8223
      %8225 = vrot.lane.b32.xlu0 %v7446, 24
      %v8226 = vpop.permute.xlu0 %8225
      %8227 = vrot.lane.b32.xlu0 %v7451, 24
      %v8228 = vpop.permute.xlu0 %8227
      %8229 = vrot.lane.b32.xlu0 %v7456, 24
      %v8230 = vpop.permute.xlu0 %8229
      %8231 = vrot.lane.b32.xlu0 %v7461, 24
      %v8232 = vpop.permute.xlu0 %8231
      %8233 = vrot.lane.b32.xlu0 %v7466, 24
      %v8234 = vpop.permute.xlu0 %8233
      %8235 = vrot.lane.b32.xlu0 %v7471, 24
      %v8236 = vpop.permute.xlu0 %8235
      %8237 = vrot.lane.b32.xlu0 %v7589, 24
      %v8238 = vpop.permute.xlu0 %8237
      %8239 = vrot.lane.b32.xlu0 %v7594, 24
      %v8240 = vpop.permute.xlu0 %8239
      %8241 = vrot.lane.b32.xlu0 %v7599, 24
      %v8242 = vpop.permute.xlu0 %8241
      %8243 = vrot.lane.b32.xlu0 %v7604, 24
      %v8244 = vpop.permute.xlu0 %8243
      %8245 = vrot.lane.b32.xlu0 %v7609, 24
      %v8246 = vpop.permute.xlu0 %8245
      %8247 = vrot.lane.b32.xlu0 %v7614, 24
      %v8248 = vpop.permute.xlu0 %8247
      %8249 = vrot.lane.b32.xlu0 %v7619, 24
      %v8250 = vpop.permute.xlu0 %8249
      %8251 = vrot.lane.b32.xlu0 %v7624, 24
      %v8252 = vpop.permute.xlu0 %8251
      %8253 = vrot.lane.b32.xlu0 %v7742, 24
      %v8254 = vpop.permute.xlu0 %8253
      %8255 = vrot.lane.b32.xlu0 %v7747, 24
      %v8256 = vpop.permute.xlu0 %8255
      %8257 = vrot.lane.b32.xlu0 %v7752, 24
      %v8258 = vpop.permute.xlu0 %8257
      %8259 = vrot.lane.b32.xlu0 %v7757, 24
      %v8260 = vpop.permute.xlu0 %8259
      %8261 = vrot.lane.b32.xlu0 %v7762, 24
      %v8262 = vpop.permute.xlu0 %8261
      %8263 = vrot.lane.b32.xlu0 %v7767, 24
      %v8264 = vpop.permute.xlu0 %8263
      %8265 = vrot.lane.b32.xlu0 %v7772, 24
      %v8266 = vpop.permute.xlu0 %8265
      %8267 = vrot.lane.b32.xlu0 %v7777, 24
      %v8268 = vpop.permute.xlu0 %8267
      %8269 = vrot.lane.b32.xlu0 %v7895, 24
      %v8270 = vpop.permute.xlu0 %8269
      %8271 = vrot.lane.b32.xlu0 %v7900, 24
      %v8272 = vpop.permute.xlu0 %8271
      %8273 = vrot.lane.b32.xlu0 %v7905, 24
      %v8274 = vpop.permute.xlu0 %8273
      %8275 = vrot.lane.b32.xlu0 %v7910, 24
      %v8276 = vpop.permute.xlu0 %8275
      %8277 = vrot.lane.b32.xlu0 %v7915, 24
      %v8278 = vpop.permute.xlu0 %8277
      %8279 = vrot.lane.b32.xlu0 %v7920, 24
      %v8280 = vpop.permute.xlu0 %8279
      %8281 = vrot.lane.b32.xlu0 %v7925, 24
      %v8282 = vpop.permute.xlu0 %8281
      %8283 = vrot.lane.b32.xlu0 %v7930, 24
      %v8284 = vpop.permute.xlu0 %8283
      %v8317 = vsel %vm1515, %v5600, %v7966
      %v8318 = vsel %vm1515, %v5605, %v7968
      %v8319 = vsel %vm1515, %v5610, %v7970
      %v8320 = vsel %vm1515, %v5615, %v7972
      %v8321 = vsel %vm1515, %v5620, %v7974
      %v8322 = vsel %vm1515, %v5625, %v7976
      %v8323 = vsel %vm1515, %v5630, %v7978
      %v8324 = vsel %vm1515, %v5635, %v7980
      %v8325 = vsel %vm1515, %v5753, %v7982
      %v8326 = vsel %vm1515, %v5758, %v7984
      %v8327 = vsel %vm1515, %v5763, %v7986
      %v8328 = vsel %vm1515, %v5768, %v7988
      %v8329 = vsel %vm1515, %v5773, %v7990
      %v8330 = vsel %vm1515, %v5778, %v7992
      %v8331 = vsel %vm1515, %v5783, %v7994
      %v8332 = vsel %vm1515, %v5788, %v7996
      %v8333 = vsel %vm1515, %v5906, %v7998
      %v8334 = vsel %vm1515, %v5911, %v8000
      %v8335 = vsel %vm1515, %v5916, %v8002
      %v8336 = vsel %vm1515, %v5921, %v8004
      %v8337 = vsel %vm1515, %v5926, %v8006
      %v8338 = vsel %vm1515, %v5931, %v8008
      %v8339 = vsel %vm1515, %v5936, %v8010
      %v8340 = vsel %vm1515, %v5941, %v8012
      %v8341 = vsel %vm1515, %v6059, %v8014
      %v8342 = vsel %vm1515, %v6064, %v8016
      %v8343 = vsel %vm1515, %v6069, %v8018
      %v8344 = vsel %vm1515, %v6074, %v8020
      %v8345 = vsel %vm1515, %v6079, %v8022
      %v8346 = vsel %vm1515, %v6084, %v8024
      %v8347 = vsel %vm1515, %v6089, %v8026
      %v8348 = vsel %vm1515, %v6094, %v8028
      %vm8349 = vcmask 130048
      %v8350 = vsel %vm8349, %v8317, %v8094
      %v8351 = vsel %vm8349, %v8318, %v8096
      %v8352 = vsel %vm8349, %v8319, %v8098
      %v8353 = vsel %vm8349, %v8320, %v8100
      %v8354 = vsel %vm8349, %v8321, %v8102
      %v8355 = vsel %vm8349, %v8322, %v8104
      %v8356 = vsel %vm8349, %v8323, %v8106
      %v8357 = vsel %vm8349, %v8324, %v8108
      %v8358 = vsel %vm8349, %v8325, %v8110
      %v8359 = vsel %vm8349, %v8326, %v8112
      %v8360 = vsel %vm8349, %v8327, %v8114
      %v8361 = vsel %vm8349, %v8328, %v8116
      %v8362 = vsel %vm8349, %v8329, %v8118
      %v8363 = vsel %vm8349, %v8330, %v8120
      %v8364 = vsel %vm8349, %v8331, %v8122
      %v8365 = vsel %vm8349, %v8332, %v8124
      %v8366 = vsel %vm8349, %v8333, %v8126
      %v8367 = vsel %vm8349, %v8334, %v8128
      %v8368 = vsel %vm8349, %v8335, %v8130
      %v8369 = vsel %vm8349, %v8336, %v8132
      %v8370 = vsel %vm8349, %v8337, %v8134
      %v8371 = vsel %vm8349, %v8338, %v8136
      %v8372 = vsel %vm8349, %v8339, %v8138
      %v8373 = vsel %vm8349, %v8340, %v8140
      %v8374 = vsel %vm8349, %v8341, %v8142
      %v8375 = vsel %vm8349, %v8342, %v8144
      %v8376 = vsel %vm8349, %v8343, %v8146
      %v8377 = vsel %vm8349, %v8344, %v8148
      %v8378 = vsel %vm8349, %v8345, %v8150
      %v8379 = vsel %vm8349, %v8346, %v8152
      %v8380 = vsel %vm8349, %v8347, %v8154
      %v8381 = vsel %vm8349, %v8348, %v8156
      %vm8382 = vcmask 195584
      %v8383 = vsel %vm8382, %v8350, %v8222
      %v8384 = vsel %vm8382, %v8351, %v8224
      %v8385 = vsel %vm8382, %v8352, %v8226
      %v8386 = vsel %vm8382, %v8353, %v8228
      %v8387 = vsel %vm8382, %v8354, %v8230
      %v8388 = vsel %vm8382, %v8355, %v8232
      %v8389 = vsel %vm8382, %v8356, %v8234
      %v8390 = vsel %vm8382, %v8357, %v8236
      %v8391 = vsel %vm8382, %v8358, %v8238
      %v8392 = vsel %vm8382, %v8359, %v8240
      %v8393 = vsel %vm8382, %v8360, %v8242
      %v8394 = vsel %vm8382, %v8361, %v8244
      %v8395 = vsel %vm8382, %v8362, %v8246
      %v8396 = vsel %vm8382, %v8363, %v8248
      %v8397 = vsel %vm8382, %v8364, %v8250
      %v8398 = vsel %vm8382, %v8365, %v8252
      %v8399 = vsel %vm8382, %v8366, %v8254
      %v8400 = vsel %vm8382, %v8367, %v8256
      %v8401 = vsel %vm8382, %v8368, %v8258
      %v8402 = vsel %vm8382, %v8369, %v8260
      %v8403 = vsel %vm8382, %v8370, %v8262
      %v8404 = vsel %vm8382, %v8371, %v8264
      %v8405 = vsel %vm8382, %v8372, %v8266
      %v8406 = vsel %vm8382, %v8373, %v8268
      %v8407 = vsel %vm8382, %v8374, %v8270
      %v8408 = vsel %vm8382, %v8375, %v8272
      %v8409 = vsel %vm8382, %v8376, %v8274
      %v8410 = vsel %vm8382, %v8377, %v8276
      %v8411 = vsel %vm8382, %v8378, %v8278
      %v8412 = vsel %vm8382, %v8379, %v8280
      %v8413 = vsel %vm8382, %v8380, %v8282
      %v8414 = vsel %vm8382, %v8381, %v8284
      %v8415 = vld [vmem:[%s4] sm:$0xff]
      %v8416 = vld [vmem:[%s4 + $0x8] sm:$0xff]
      %v8417 = vld [vmem:[%s4 + $0x10] sm:$0xff]
      %v8418 = vld [vmem:[%s4 + $0x18] sm:$0xff]
      %v8419 = vld [vmem:[%s5] sm:$0x1]
      %v8421 = vlaneseq
      %v8422 = vshrl.u32 %v8421, 7
      %v8423 = vsub.s32 0, %v8422
      %v8424 = vrot.slane %v8419, %v8423
      %v8427 = vsel %vm456, %v8383, 0
      %v8430 = vsel %vm456, %v8384, 0
      %v8433 = vsel %vm456, %v8385, 0
      %v8436 = vsel %vm456, %v8386, 0
      %v8439 = vsel %vm456, %v8387, 0
      %v8442 = vsel %vm456, %v8388, 0
      %v8445 = vsel %vm456, %v8389, 0
      %v8448 = vsel %vm456, %v8390, 0
      %v8451 = vsel %vm456, %v8391, 0
      %v8454 = vsel %vm456, %v8392, 0
      %v8457 = vsel %vm456, %v8393, 0
      %v8460 = vsel %vm456, %v8394, 0
      %v8463 = vsel %vm456, %v8395, 0
      %v8466 = vsel %vm456, %v8396, 0
      %v8469 = vsel %vm456, %v8397, 0
      %v8472 = vsel %vm456, %v8398, 0
      %v8475 = vsel %vm456, %v8399, 0
      %v8478 = vsel %vm456, %v8400, 0
      %v8481 = vsel %vm456, %v8401, 0
      %v8484 = vsel %vm456, %v8402, 0
      %v8487 = vsel %vm456, %v8403, 0
      %v8490 = vsel %vm456, %v8404, 0
      %v8493 = vsel %vm456, %v8405, 0
      %v8496 = vsel %vm456, %v8406, 0
      %v8499 = vsel %vm456, %v8407, 0
      %v8502 = vsel %vm456, %v8408, 0
      %v8505 = vsel %vm456, %v8409, 0
      %v8508 = vsel %vm456, %v8410, 0
      %v8511 = vsel %vm456, %v8411, 0
      %v8514 = vsel %vm456, %v8412, 0
      %v8517 = vsel %vm456, %v8413, 0
      %v8520 = vsel %vm456, %v8414, 0
      %8522 = vmatprep.subr.mxu0 0.0
      %8523 = vmatpush1.msra.mxu0 %v8415
      %8524 = vmatprep.subr.mxu0 0.0
      %8525 = vmatpush1.msra.mxu0 %v8416
      %8526 = vmatprep.subr.mxu0 0.0
      %8527 = vmatpush1.msra.mxu0 %v8417
      %8528 = vmatprep.subr.mxu0 0.0
      %8529 = vmatpush1.msra.mxu0 %v8418
      %8530 = vmatprep.subr.mxu0 0.0
      %8531 = vmatpush1.msra.mxu0 0.0
      %8532 = vmatprep.subr.mxu0 0.0
      %8533 = vmatpush1.msra.mxu0 0.0
      %8534 = vmatprep.subr.mxu0 0.0
      %8535 = vmatpush1.msra.mxu0 0.0
      %8536 = vmatprep.subr.mxu0 0.0
      %8537 = vmatpush1.msra.mxu0 0.0
      %8538 = vmatprep.subr.mxu0 0.0
      %8539 = vmatpush1.msra.mxu0 0.0
      %8540 = vmatprep.subr.mxu0 0.0
      %8541 = vmatpush1.msra.mxu0 0.0
      %8542 = vmatprep.subr.mxu0 0.0
      %8543 = vmatpush1.msra.mxu0 0.0
      %8544 = vmatprep.subr.mxu0 0.0
      %8545 = vmatpush1.msra.mxu0 0.0
      %8546 = vmatprep.subr.mxu0 0.0
      %8547 = vmatpush1.msra.mxu0 0.0
      %8548 = vmatprep.subr.mxu0 0.0
      %8549 = vmatpush1.msra.mxu0 0.0
      %8550 = vmatprep.subr.mxu0 0.0
      %8551 = vmatpush1.msra.mxu0 0.0
      %8552 = vmatprep.subr.mxu0 0.0
      %8553 = vmatpush1.msra.mxu0 0.0
      %8554 = vmatprep.subr.mxu0 0.0
      %8555 = vmatpush1.msra.mxu0 0.0
      %8556 = vmatprep.subr.mxu0 0.0
      %8557 = vmatpush1.msra.mxu0 0.0
      %8558 = vmatprep.subr.mxu0 0.0
      %8559 = vmatpush1.msra.mxu0 0.0
      %8560 = vmatprep.subr.mxu0 0.0
      %8561 = vmatpush1.msra.mxu0 0.0
      %8562 = vmatprep.subr.mxu0 0.0
      %8563 = vmatpush1.msra.mxu0 0.0
      %8564 = vmatprep.subr.mxu0 0.0
      %8565 = vmatpush1.msra.mxu0 0.0
      %8566 = vmatprep.subr.mxu0 0.0
      %8567 = vmatpush1.msra.mxu0 0.0
      %8568 = vmatprep.subr.mxu0 0.0
      %8569 = vmatpush1.msra.mxu0 0.0
      %8570 = vmatprep.subr.mxu0 0.0
      %8571 = vmatpush1.msra.mxu0 0.0
      %8572 = vmatprep.subr.mxu0 0.0
      %8573 = vmatpush1.msra.mxu0 0.0
      %8574 = vmatprep.subr.mxu0 0.0
      %8575 = vmatpush1.msra.mxu0 0.0
      %8576 = vmatprep.subr.mxu0 0.0
      %8577 = vmatpush1.msra.mxu0 0.0
      %8578 = vmatprep.subr.mxu0 0.0
      %8579 = vmatpush1.msra.mxu0 0.0
      %8580 = vmatprep.subr.mxu0 0.0
      %8581 = vmatpush1.msra.mxu0 0.0
      %8582 = vmatprep.subr.mxu0 0.0
      %8583 = vmatpush1.msra.mxu0 0.0
      %8584 = vmatprep.subr.mxu0 0.0
      %8585 = vmatpush1.msra.mxu0 0.0
      %8586 = vmatprep.mubr.f32.mxu0 0.0
      %8587 = vmatmul.mubr.f32.gmra.mrb[0].mxu0 %v8427
      %v8588 = vpop.f32.mrb[0].mxu0
      %v8589 = vadd.f32 %v8424, %v8588
      %v8590 = vpop.f32.mrb[0].mxu0
      %8591 = vmatprep.mubr.f32.mxu0 0.0
      %8592 = vmatmul.mubr.f32.gmra.mrb[0].mxu0 %v8430
      %v8593 = vpop.f32.mrb[0].mxu0
      %v8594 = vadd.f32 %v8424, %v8593
      %v8595 = vpop.f32.mrb[0].mxu0
      %8596 = vmatprep.mubr.f32.mxu0 0.0
      %8597 = vmatmul.mubr.f32.gmra.mrb[0].mxu0 %v8433
      %v8598 = vpop.f32.mrb[0].mxu0
      %v8599 = vadd.f32 %v8424, %v8598
      %v8600 = vpop.f32.mrb[0].mxu0
      %8601 = vmatprep.mubr.f32.mxu0 0.0
      %8602 = vmatmul.mubr.f32.gmra.mrb[0].mxu0 %v8436
      %v8603 = vpop.f32.mrb[0].mxu0
      %v8604 = vadd.f32 %v8424, %v8603
      %v8605 = vpop.f32.mrb[0].mxu0
      %8606 = vmatprep.mubr.f32.mxu0 0.0
      %8607 = vmatmul.mubr.f32.gmra.mrb[0].mxu0 %v8439
      %v8608 = vpop.f32.mrb[0].mxu0
      %v8609 = vadd.f32 %v8424, %v8608
      %v8610 = vpop.f32.mrb[0].mxu0
      %8611 = vmatprep.mubr.f32.mxu0 0.0
      %8612 = vmatmul.mubr.f32.gmra.mrb[0].mxu0 %v8442
      %v8613 = vpop.f32.mrb[0].mxu0
      %v8614 = vadd.f32 %v8424, %v8613
      %v8615 = vpop.f32.mrb[0].mxu0
      %8616 = vmatprep.mubr.f32.mxu0 0.0
      %8617 = vmatmul.mubr.f32.gmra.mrb[0].mxu0 %v8445
      %v8618 = vpop.f32.mrb[0].mxu0
      %v8619 = vadd.f32 %v8424, %v8618
      %v8620 = vpop.f32.mrb[0].mxu0
      %8621 = vmatprep.mubr.f32.mxu0 0.0
      %8622 = vmatmul.mubr.f32.gmra.mrb[0].mxu0 %v8448
      %v8623 = vpop.f32.mrb[0].mxu0
      %v8624 = vadd.f32 %v8424, %v8623
      %v8625 = vpop.f32.mrb[0].mxu0
      %8626 = vmatprep.mubr.f32.mxu0 0.0
      %8627 = vmatmul.mubr.f32.gmra.mrb[0].mxu0 %v8451
      %v8628 = vpop.f32.mrb[0].mxu0
      %v8629 = vadd.f32 %v8424, %v8628
      %v8630 = vpop.f32.mrb[0].mxu0
      %8631 = vmatprep.mubr.f32.mxu0 0.0
      %8632 = vmatmul.mubr.f32.gmra.mrb[0].mxu0 %v8454
      %v8633 = vpop.f32.mrb[0].mxu0
      %v8634 = vadd.f32 %v8424, %v8633
      %v8635 = vpop.f32.mrb[0].mxu0
      %8636 = vmatprep.mubr.f32.mxu0 0.0
      %8637 = vmatmul.mubr.f32.gmra.mrb[0].mxu0 %v8457
      %v8638 = vpop.f32.mrb[0].mxu0
      %v8639 = vadd.f32 %v8424, %v8638
      %v8640 = vpop.f32.mrb[0].mxu0
      %8641 = vmatprep.mubr.f32.mxu0 0.0
      %8642 = vmatmul.mubr.f32.gmra.mrb[0].mxu0 %v8460
      %v8643 = vpop.f32.mrb[0].mxu0
      %v8644 = vadd.f32 %v8424, %v8643
      %v8645 = vpop.f32.mrb[0].mxu0
      %8646 = vmatprep.mubr.f32.mxu0 0.0
      %8647 = vmatmul.mubr.f32.gmra.mrb[0].mxu0 %v8463
      %v8648 = vpop.f32.mrb[0].mxu0
      %v8649 = vadd.f32 %v8424, %v8648
      %v8650 = vpop.f32.mrb[0].mxu0
      %8651 = vmatprep.mubr.f32.mxu0 0.0
      %8652 = vmatmul.mubr.f32.gmra.mrb[0].mxu0 %v8466
      %v8653 = vpop.f32.mrb[0].mxu0
      %v8654 = vadd.f32 %v8424, %v8653
      %v8655 = vpop.f32.mrb[0].mxu0
      %8656 = vmatprep.mubr.f32.mxu0 0.0
      %8657 = vmatmul.mubr.f32.gmra.mrb[0].mxu0 %v8469
      %v8658 = vpop.f32.mrb[0].mxu0
      %v8659 = vadd.f32 %v8424, %v8658
      %v8660 = vpop.f32.mrb[0].mxu0
      %8661 = vmatprep.mubr.f32.mxu0 0.0
      %8662 = vmatmul.mubr.f32.gmra.mrb[0].mxu0 %v8472
      %v8663 = vpop.f32.mrb[0].mxu0
      %v8664 = vadd.f32 %v8424, %v8663
      %v8665 = vpop.f32.mrb[0].mxu0
      %8666 = vmatprep.mubr.f32.mxu0 0.0
      %8667 = vmatmul.mubr.f32.gmra.mrb[0].mxu0 %v8475
      %v8668 = vpop.f32.mrb[0].mxu0
      %v8669 = vadd.f32 %v8424, %v8668
      %v8670 = vpop.f32.mrb[0].mxu0
      %8671 = vmatprep.mubr.f32.mxu0 0.0
      %8672 = vmatmul.mubr.f32.gmra.mrb[0].mxu0 %v8478
      %v8673 = vpop.f32.mrb[0].mxu0
      %v8674 = vadd.f32 %v8424, %v8673
      %v8675 = vpop.f32.mrb[0].mxu0
      %8676 = vmatprep.mubr.f32.mxu0 0.0
      %8677 = vmatmul.mubr.f32.gmra.mrb[0].mxu0 %v8481
      %v8678 = vpop.f32.mrb[0].mxu0
      %v8679 = vadd.f32 %v8424, %v8678
      %v8680 = vpop.f32.mrb[0].mxu0
      %8681 = vmatprep.mubr.f32.mxu0 0.0
      %8682 = vmatmul.mubr.f32.gmra.mrb[0].mxu0 %v8484
      %v8683 = vpop.f32.mrb[0].mxu0
      %v8684 = vadd.f32 %v8424, %v8683
      %v8685 = vpop.f32.mrb[0].mxu0
      %8686 = vmatprep.mubr.f32.mxu0 0.0
      %8687 = vmatmul.mubr.f32.gmra.mrb[0].mxu0 %v8487
      %v8688 = vpop.f32.mrb[0].mxu0
      %v8689 = vadd.f32 %v8424, %v8688
      %v8690 = vpop.f32.mrb[0].mxu0
      %8691 = vmatprep.mubr.f32.mxu0 0.0
      %8692 = vmatmul.mubr.f32.gmra.mrb[0].mxu0 %v8490
      %v8693 = vpop.f32.mrb[0].mxu0
      %v8694 = vadd.f32 %v8424, %v8693
      %v8695 = vpop.f32.mrb[0].mxu0
      %8696 = vmatprep.mubr.f32.mxu0 0.0
      %8697 = vmatmul.mubr.f32.gmra.mrb[0].mxu0 %v8493
      %v8698 = vpop.f32.mrb[0].mxu0
      %v8699 = vadd.f32 %v8424, %v8698
      %v8700 = vpop.f32.mrb[0].mxu0
      %8701 = vmatprep.mubr.f32.mxu0 0.0
      %8702 = vmatmul.mubr.f32.gmra.mrb[0].mxu0 %v8496
      %v8703 = vpop.f32.mrb[0].mxu0
      %v8704 = vadd.f32 %v8424, %v8703
      %v8705 = vpop.f32.mrb[0].mxu0
      %8706 = vmatprep.mubr.f32.mxu0 0.0
      %8707 = vmatmul.mubr.f32.gmra.mrb[0].mxu0 %v8499
      %v8708 = vpop.f32.mrb[0].mxu0
      %v8709 = vadd.f32 %v8424, %v8708
      %v8710 = vpop.f32.mrb[0].mxu0
      %8711 = vmatprep.mubr.f32.mxu0 0.0
      %8712 = vmatmul.mubr.f32.gmra.mrb[0].mxu0 %v8502
      %v8713 = vpop.f32.mrb[0].mxu0
      %v8714 = vadd.f32 %v8424, %v8713
      %v8715 = vpop.f32.mrb[0].mxu0
      %8716 = vmatprep.mubr.f32.mxu0 0.0
      %8717 = vmatmul.mubr.f32.gmra.mrb[0].mxu0 %v8505
      %v8718 = vpop.f32.mrb[0].mxu0
      %v8719 = vadd.f32 %v8424, %v8718
      %v8720 = vpop.f32.mrb[0].mxu0
      %8721 = vmatprep.mubr.f32.mxu0 0.0
      %8722 = vmatmul.mubr.f32.gmra.mrb[0].mxu0 %v8508
      %v8723 = vpop.f32.mrb[0].mxu0
      %v8724 = vadd.f32 %v8424, %v8723
      %v8725 = vpop.f32.mrb[0].mxu0
      %8726 = vmatprep.mubr.f32.mxu0 0.0
      %8727 = vmatmul.mubr.f32.gmra.mrb[0].mxu0 %v8511
      %v8728 = vpop.f32.mrb[0].mxu0
      %v8729 = vadd.f32 %v8424, %v8728
      %v8730 = vpop.f32.mrb[0].mxu0
      %8731 = vmatprep.mubr.f32.mxu0 0.0
      %8732 = vmatmul.mubr.f32.gmra.mrb[0].mxu0 %v8514
      %v8733 = vpop.f32.mrb[0].mxu0
      %v8734 = vadd.f32 %v8424, %v8733
      %v8735 = vpop.f32.mrb[0].mxu0
      %8736 = vmatprep.mubr.f32.mxu0 0.0
      %8737 = vmatmul.mubr.f32.gmra.mrb[0].mxu0 %v8517
      %v8738 = vpop.f32.mrb[0].mxu0
      %v8739 = vadd.f32 %v8424, %v8738
      %v8740 = vpop.f32.mrb[0].mxu0
      %8741 = vmatprep.mubr.f32.mxu0 0.0
      %8742 = vmatmul.mubr.f32.gmra.mrb[0].mxu0 %v8520
      %v8743 = vpop.f32.mrb[0].mxu0
      %v8744 = vadd.f32 %v8424, %v8743
      %v8745 = vpop.f32.mrb[0].mxu0
      %8746 = vdwg.mxu0
      %v8747 = vadd.f32 %v422, %v8589
      %v8748 = vadd.f32 %v424, %v8594
      %v8749 = vadd.f32 %v426, %v8599
      %v8750 = vadd.f32 %v428, %v8604
      %v8751 = vadd.f32 %v430, %v8609
      %v8752 = vadd.f32 %v432, %v8614
      %v8753 = vadd.f32 %v434, %v8619
      %v8754 = vadd.f32 %v436, %v8624
      %v8755 = vadd.f32 %v438, %v8629
      %v8756 = vadd.f32 %v440, %v8634
      %v8757 = vadd.f32 %v442, %v8639
      %v8758 = vadd.f32 %v444, %v8644
      %v8759 = vadd.f32 %v446, %v8649
      %v8760 = vadd.f32 %v448, %v8654
      %v8761 = vadd.f32 %v450, %v8659
      %v8762 = vadd.f32 %v452, %v8664
      %v8763 = vadd.f32 %v423, %v8669
      %v8764 = vadd.f32 %v425, %v8674
      %v8765 = vadd.f32 %v427, %v8679
      %v8766 = vadd.f32 %v429, %v8684
      %v8767 = vadd.f32 %v431, %v8689
      %v8768 = vadd.f32 %v433, %v8694
      %v8769 = vadd.f32 %v435, %v8699
      %v8770 = vadd.f32 %v437, %v8704
      %v8771 = vadd.f32 %v439, %v8709
      %v8772 = vadd.f32 %v441, %v8714
      %v8773 = vadd.f32 %v443, %v8719
      %v8774 = vadd.f32 %v445, %v8724
      %v8775 = vadd.f32 %v447, %v8729
      %v8776 = vadd.f32 %v449, %v8734
      %v8777 = vadd.f32 %v451, %v8739
      %v8778 = vadd.f32 %v453, %v8744
      %v8779 = vld [vmem:[%s6] sm:$0x1]
      %v8780 = vld [vmem:[%s7] sm:$0x1]
      %v8781 = vsel %vm456, %v8747, 0.0
      %8782 = vadd.xlane.f32.xlu0 %v8781
      %v8783 = vpop.xlane.xlu0 %8782
      %v8784 = vsel %vm456, %v8748, 0.0
      %8785 = vadd.xlane.f32.xlu0 %v8784
      %v8786 = vpop.xlane.xlu0 %8785
      %v8787 = vsel %vm456, %v8749, 0.0
      %8788 = vadd.xlane.f32.xlu0 %v8787
      %v8789 = vpop.xlane.xlu0 %8788
      %v8790 = vsel %vm456, %v8750, 0.0
      %8791 = vadd.xlane.f32.xlu0 %v8790
      %v8792 = vpop.xlane.xlu0 %8791
      %v8793 = vsel %vm456, %v8751, 0.0
      %8794 = vadd.xlane.f32.xlu0 %v8793
      %v8795 = vpop.xlane.xlu0 %8794
      %v8796 = vsel %vm456, %v8752, 0.0
      %8797 = vadd.xlane.f32.xlu0 %v8796
      %v8798 = vpop.xlane.xlu0 %8797
      %v8799 = vsel %vm456, %v8753, 0.0
      %8800 = vadd.xlane.f32.xlu0 %v8799
      %v8801 = vpop.xlane.xlu0 %8800
      %v8802 = vsel %vm456, %v8754, 0.0
      %8803 = vadd.xlane.f32.xlu0 %v8802
      %v8804 = vpop.xlane.xlu0 %8803
      %v8805 = vsel %vm456, %v8755, 0.0
      %8806 = vadd.xlane.f32.xlu0 %v8805
      %v8807 = vpop.xlane.xlu0 %8806
      %v8808 = vsel %vm456, %v8756, 0.0
      %8809 = vadd.xlane.f32.xlu0 %v8808
      %v8810 = vpop.xlane.xlu0 %8809
      %v8811 = vsel %vm456, %v8757, 0.0
      %8812 = vadd.xlane.f32.xlu0 %v8811
      %v8813 = vpop.xlane.xlu0 %8812
      %v8814 = vsel %vm456, %v8758, 0.0
      %8815 = vadd.xlane.f32.xlu0 %v8814
      %v8816 = vpop.xlane.xlu0 %8815
      %v8817 = vsel %vm456, %v8759, 0.0
      %8818 = vadd.xlane.f32.xlu0 %v8817
      %v8819 = vpop.xlane.xlu0 %8818
      %v8820 = vsel %vm456, %v8760, 0.0
      %8821 = vadd.xlane.f32.xlu0 %v8820
      %v8822 = vpop.xlane.xlu0 %8821
      %v8823 = vsel %vm456, %v8761, 0.0
      %8824 = vadd.xlane.f32.xlu0 %v8823
      %v8825 = vpop.xlane.xlu0 %8824
      %v8826 = vsel %vm456, %v8762, 0.0
      %8827 = vadd.xlane.f32.xlu0 %v8826
      %v8828 = vpop.xlane.xlu0 %8827
      %v8829 = vsel %vm456, %v8763, 0.0
      %8830 = vadd.xlane.f32.xlu0 %v8829
      %v8831 = vpop.xlane.xlu0 %8830
      %v8832 = vsel %vm456, %v8764, 0.0
      %8833 = vadd.xlane.f32.xlu0 %v8832
      %v8834 = vpop.xlane.xlu0 %8833
      %v8835 = vsel %vm456, %v8765, 0.0
      %8836 = vadd.xlane.f32.xlu0 %v8835
      %v8837 = vpop.xlane.xlu0 %8836
      %v8838 = vsel %vm456, %v8766, 0.0
      %8839 = vadd.xlane.f32.xlu0 %v8838
      %v8840 = vpop.xlane.xlu0 %8839
      %v8841 = vsel %vm456, %v8767, 0.0
      %8842 = vadd.xlane.f32.xlu0 %v8841
      %v8843 = vpop.xlane.xlu0 %8842
      %v8844 = vsel %vm456, %v8768, 0.0
      %8845 = vadd.xlane.f32.xlu0 %v8844
      %v8846 = vpop.xlane.xlu0 %8845
      %v8847 = vsel %vm456, %v8769, 0.0
      %8848 = vadd.xlane.f32.xlu0 %v8847
      %v8849 = vpop.xlane.xlu0 %8848
      %v8850 = vsel %vm456, %v8770, 0.0
      %8851 = vadd.xlane.f32.xlu0 %v8850
      %v8852 = vpop.xlane.xlu0 %8851
      %v8853 = vsel %vm456, %v8771, 0.0
      %8854 = vadd.xlane.f32.xlu0 %v8853
      %v8855 = vpop.xlane.xlu0 %8854
      %v8856 = vsel %vm456, %v8772, 0.0
      %8857 = vadd.xlane.f32.xlu0 %v8856
      %v8858 = vpop.xlane.xlu0 %8857
      %v8859 = vsel %vm456, %v8773, 0.0
      %8860 = vadd.xlane.f32.xlu0 %v8859
      %v8861 = vpop.xlane.xlu0 %8860
      %v8862 = vsel %vm456, %v8774, 0.0
      %8863 = vadd.xlane.f32.xlu0 %v8862
      %v8864 = vpop.xlane.xlu0 %8863
      %v8865 = vsel %vm456, %v8775, 0.0
      %8866 = vadd.xlane.f32.xlu0 %v8865
      %v8867 = vpop.xlane.xlu0 %8866
      %v8868 = vsel %vm456, %v8776, 0.0
      %8869 = vadd.xlane.f32.xlu0 %v8868
      %v8870 = vpop.xlane.xlu0 %8869
      %v8871 = vsel %vm456, %v8777, 0.0
      %8872 = vadd.xlane.f32.xlu0 %v8871
      %v8873 = vpop.xlane.xlu0 %8872
      %v8874 = vsel %vm456, %v8778, 0.0
      %8875 = vadd.xlane.f32.xlu0 %v8874
      %v8876 = vpop.xlane.xlu0 %8875
      %v8877 = vmul.f32 %v8783, %v553
      %v8878 = vmul.f32 %v8786, %v553
      %v8879 = vmul.f32 %v8789, %v553
      %v8880 = vmul.f32 %v8792, %v553
      %v8881 = vmul.f32 %v8795, %v553
      %v8882 = vmul.f32 %v8798, %v553
      %v8883 = vmul.f32 %v8801, %v553
      %v8884 = vmul.f32 %v8804, %v553
      %v8885 = vmul.f32 %v8807, %v553
      %v8886 = vmul.f32 %v8810, %v553
      %v8887 = vmul.f32 %v8813, %v553
      %v8888 = vmul.f32 %v8816, %v553
      %v8889 = vmul.f32 %v8819, %v553
      %v8890 = vmul.f32 %v8822, %v553
      %v8891 = vmul.f32 %v8825, %v553
      %v8892 = vmul.f32 %v8828, %v553
      %v8893 = vmul.f32 %v8831, %v553
      %v8894 = vmul.f32 %v8834, %v553
      %v8895 = vmul.f32 %v8837, %v553
      %v8896 = vmul.f32 %v8840, %v553
      %v8897 = vmul.f32 %v8843, %v553
      %v8898 = vmul.f32 %v8846, %v553
      %v8899 = vmul.f32 %v8849, %v553
      %v8900 = vmul.f32 %v8852, %v553
      %v8901 = vmul.f32 %v8855, %v553
      %v8902 = vmul.f32 %v8858, %v553
      %v8903 = vmul.f32 %v8861, %v553
      %v8904 = vmul.f32 %v8864, %v553
      %v8905 = vmul.f32 %v8867, %v553
      %v8906 = vmul.f32 %v8870, %v553
      %v8907 = vmul.f32 %v8873, %v553
      %v8908 = vmul.f32 %v8876, %v553
      %v8909 = vsub.f32 %v8747, %v8877
      %v8910 = vsub.f32 %v8748, %v8878
      %v8911 = vsub.f32 %v8749, %v8879
      %v8912 = vsub.f32 %v8750, %v8880
      %v8913 = vsub.f32 %v8751, %v8881
      %v8914 = vsub.f32 %v8752, %v8882
      %v8915 = vsub.f32 %v8753, %v8883
      %v8916 = vsub.f32 %v8754, %v8884
      %v8917 = vsub.f32 %v8755, %v8885
      %v8918 = vsub.f32 %v8756, %v8886
      %v8919 = vsub.f32 %v8757, %v8887
      %v8920 = vsub.f32 %v8758, %v8888
      %v8921 = vsub.f32 %v8759, %v8889
      %v8922 = vsub.f32 %v8760, %v8890
      %v8923 = vsub.f32 %v8761, %v8891
      %v8924 = vsub.f32 %v8762, %v8892
      %v8925 = vsub.f32 %v8763, %v8893
      %v8926 = vsub.f32 %v8764, %v8894
      %v8927 = vsub.f32 %v8765, %v8895
      %v8928 = vsub.f32 %v8766, %v8896
      %v8929 = vsub.f32 %v8767, %v8897
      %v8930 = vsub.f32 %v8768, %v8898
      %v8931 = vsub.f32 %v8769, %v8899
      %v8932 = vsub.f32 %v8770, %v8900
      %v8933 = vsub.f32 %v8771, %v8901
      %v8934 = vsub.f32 %v8772, %v8902
      %v8935 = vsub.f32 %v8773, %v8903
      %v8936 = vsub.f32 %v8774, %v8904
      %v8937 = vsub.f32 %v8775, %v8905
      %v8938 = vsub.f32 %v8776, %v8906
      %v8939 = vsub.f32 %v8777, %v8907
      %v8940 = vsub.f32 %v8778, %v8908
      %v8941 = vmul.f32 %v8909, %v8909
      %v8942 = vmul.f32 %v8910, %v8910
      %v8943 = vmul.f32 %v8911, %v8911
      %v8944 = vmul.f32 %v8912, %v8912
      %v8945 = vmul.f32 %v8913, %v8913
      %v8946 = vmul.f32 %v8914, %v8914
      %v8947 = vmul.f32 %v8915, %v8915
      %v8948 = vmul.f32 %v8916, %v8916
      %v8949 = vmul.f32 %v8917, %v8917
      %v8950 = vmul.f32 %v8918, %v8918
      %v8951 = vmul.f32 %v8919, %v8919
      %v8952 = vmul.f32 %v8920, %v8920
      %v8953 = vmul.f32 %v8921, %v8921
      %v8954 = vmul.f32 %v8922, %v8922
      %v8955 = vmul.f32 %v8923, %v8923
      %v8956 = vmul.f32 %v8924, %v8924
      %v8957 = vmul.f32 %v8925, %v8925
      %v8958 = vmul.f32 %v8926, %v8926
      %v8959 = vmul.f32 %v8927, %v8927
      %v8960 = vmul.f32 %v8928, %v8928
      %v8961 = vmul.f32 %v8929, %v8929
      %v8962 = vmul.f32 %v8930, %v8930
      %v8963 = vmul.f32 %v8931, %v8931
      %v8964 = vmul.f32 %v8932, %v8932
      %v8965 = vmul.f32 %v8933, %v8933
      %v8966 = vmul.f32 %v8934, %v8934
      %v8967 = vmul.f32 %v8935, %v8935
      %v8968 = vmul.f32 %v8936, %v8936
      %v8969 = vmul.f32 %v8937, %v8937
      %v8970 = vmul.f32 %v8938, %v8938
      %v8971 = vmul.f32 %v8939, %v8939
      %v8972 = vmul.f32 %v8940, %v8940
      %v8973 = vsel %vm456, %v8941, 0.0
      %8974 = vadd.xlane.f32.xlu0 %v8973
      %v8975 = vpop.xlane.xlu0 %8974
      %v8976 = vsel %vm456, %v8942, 0.0
      %8977 = vadd.xlane.f32.xlu0 %v8976
      %v8978 = vpop.xlane.xlu0 %8977
      %v8979 = vsel %vm456, %v8943, 0.0
      %8980 = vadd.xlane.f32.xlu0 %v8979
      %v8981 = vpop.xlane.xlu0 %8980
      %v8982 = vsel %vm456, %v8944, 0.0
      %8983 = vadd.xlane.f32.xlu0 %v8982
      %v8984 = vpop.xlane.xlu0 %8983
      %v8985 = vsel %vm456, %v8945, 0.0
      %8986 = vadd.xlane.f32.xlu0 %v8985
      %v8987 = vpop.xlane.xlu0 %8986
      %v8988 = vsel %vm456, %v8946, 0.0
      %8989 = vadd.xlane.f32.xlu0 %v8988
      %v8990 = vpop.xlane.xlu0 %8989
      %v8991 = vsel %vm456, %v8947, 0.0
      %8992 = vadd.xlane.f32.xlu0 %v8991
      %v8993 = vpop.xlane.xlu0 %8992
      %v8994 = vsel %vm456, %v8948, 0.0
      %8995 = vadd.xlane.f32.xlu0 %v8994
      %v8996 = vpop.xlane.xlu0 %8995
      %v8997 = vsel %vm456, %v8949, 0.0
      %8998 = vadd.xlane.f32.xlu0 %v8997
      %v8999 = vpop.xlane.xlu0 %8998
      %v9000 = vsel %vm456, %v8950, 0.0
      %9001 = vadd.xlane.f32.xlu0 %v9000
      %v9002 = vpop.xlane.xlu0 %9001
      %v9003 = vsel %vm456, %v8951, 0.0
      %9004 = vadd.xlane.f32.xlu0 %v9003
      %v9005 = vpop.xlane.xlu0 %9004
      %v9006 = vsel %vm456, %v8952, 0.0
      %9007 = vadd.xlane.f32.xlu0 %v9006
      %v9008 = vpop.xlane.xlu0 %9007
      %v9009 = vsel %vm456, %v8953, 0.0
      %9010 = vadd.xlane.f32.xlu0 %v9009
      %v9011 = vpop.xlane.xlu0 %9010
      %v9012 = vsel %vm456, %v8954, 0.0
      %9013 = vadd.xlane.f32.xlu0 %v9012
      %v9014 = vpop.xlane.xlu0 %9013
      %v9015 = vsel %vm456, %v8955, 0.0
      %9016 = vadd.xlane.f32.xlu0 %v9015
      %v9017 = vpop.xlane.xlu0 %9016
      %v9018 = vsel %vm456, %v8956, 0.0
      %9019 = vadd.xlane.f32.xlu0 %v9018
      %v9020 = vpop.xlane.xlu0 %9019
      %v9021 = vsel %vm456, %v8957, 0.0
      %9022 = vadd.xlane.f32.xlu0 %v9021
      %v9023 = vpop.xlane.xlu0 %9022
      %v9024 = vsel %vm456, %v8958, 0.0
      %9025 = vadd.xlane.f32.xlu0 %v9024
      %v9026 = vpop.xlane.xlu0 %9025
      %v9027 = vsel %vm456, %v8959, 0.0
      %9028 = vadd.xlane.f32.xlu0 %v9027
      %v9029 = vpop.xlane.xlu0 %9028
      %v9030 = vsel %vm456, %v8960, 0.0
      %9031 = vadd.xlane.f32.xlu0 %v9030
      %v9032 = vpop.xlane.xlu0 %9031
      %v9033 = vsel %vm456, %v8961, 0.0
      %9034 = vadd.xlane.f32.xlu0 %v9033
      %v9035 = vpop.xlane.xlu0 %9034
      %v9036 = vsel %vm456, %v8962, 0.0
      %9037 = vadd.xlane.f32.xlu0 %v9036
      %v9038 = vpop.xlane.xlu0 %9037
      %v9039 = vsel %vm456, %v8963, 0.0
      %9040 = vadd.xlane.f32.xlu0 %v9039
      %v9041 = vpop.xlane.xlu0 %9040
      %v9042 = vsel %vm456, %v8964, 0.0
      %9043 = vadd.xlane.f32.xlu0 %v9042
      %v9044 = vpop.xlane.xlu0 %9043
      %v9045 = vsel %vm456, %v8965, 0.0
      %9046 = vadd.xlane.f32.xlu0 %v9045
      %v9047 = vpop.xlane.xlu0 %9046
      %v9048 = vsel %vm456, %v8966, 0.0
      %9049 = vadd.xlane.f32.xlu0 %v9048
      %v9050 = vpop.xlane.xlu0 %9049
      %v9051 = vsel %vm456, %v8967, 0.0
      %9052 = vadd.xlane.f32.xlu0 %v9051
      %v9053 = vpop.xlane.xlu0 %9052
      %v9054 = vsel %vm456, %v8968, 0.0
      %9055 = vadd.xlane.f32.xlu0 %v9054
      %v9056 = vpop.xlane.xlu0 %9055
      %v9057 = vsel %vm456, %v8969, 0.0
      %9058 = vadd.xlane.f32.xlu0 %v9057
      %v9059 = vpop.xlane.xlu0 %9058
      %v9060 = vsel %vm456, %v8970, 0.0
      %9061 = vadd.xlane.f32.xlu0 %v9060
      %v9062 = vpop.xlane.xlu0 %9061
      %v9063 = vsel %vm456, %v8971, 0.0
      %9064 = vadd.xlane.f32.xlu0 %v9063
      %v9065 = vpop.xlane.xlu0 %9064
      %v9066 = vsel %vm456, %v8972, 0.0
      %9067 = vadd.xlane.f32.xlu0 %v9066
      %v9068 = vpop.xlane.xlu0 %9067
      %v9069 = vmul.f32 %v8975, %v553
      %v9070 = vmul.f32 %v8978, %v553
      %v9071 = vmul.f32 %v8981, %v553
      %v9072 = vmul.f32 %v8984, %v553
      %v9073 = vmul.f32 %v8987, %v553
      %v9074 = vmul.f32 %v8990, %v553
      %v9075 = vmul.f32 %v8993, %v553
      %v9076 = vmul.f32 %v8996, %v553
      %v9077 = vmul.f32 %v8999, %v553
      %v9078 = vmul.f32 %v9002, %v553
      %v9079 = vmul.f32 %v9005, %v553
      %v9080 = vmul.f32 %v9008, %v553
      %v9081 = vmul.f32 %v9011, %v553
      %v9082 = vmul.f32 %v9014, %v553
      %v9083 = vmul.f32 %v9017, %v553
      %v9084 = vmul.f32 %v9020, %v553
      %v9085 = vmul.f32 %v9023, %v553
      %v9086 = vmul.f32 %v9026, %v553
      %v9087 = vmul.f32 %v9029, %v553
      %v9088 = vmul.f32 %v9032, %v553
      %v9089 = vmul.f32 %v9035, %v553
      %v9090 = vmul.f32 %v9038, %v553
      %v9091 = vmul.f32 %v9041, %v553
      %v9092 = vmul.f32 %v9044, %v553
      %v9093 = vmul.f32 %v9047, %v553
      %v9094 = vmul.f32 %v9050, %v553
      %v9095 = vmul.f32 %v9053, %v553
      %v9096 = vmul.f32 %v9056, %v553
      %v9097 = vmul.f32 %v9059, %v553
      %v9098 = vmul.f32 %v9062, %v553
      %v9099 = vmul.f32 %v9065, %v553
      %v9100 = vmul.f32 %v9068, %v553
      %v9101 = vadd.f32 %v9069, 1e-05
      %v9102 = vadd.f32 %v9070, 1e-05
      %v9103 = vadd.f32 %v9071, 1e-05
      %v9104 = vadd.f32 %v9072, 1e-05
      %v9105 = vadd.f32 %v9073, 1e-05
      %v9106 = vadd.f32 %v9074, 1e-05
      %v9107 = vadd.f32 %v9075, 1e-05
      %v9108 = vadd.f32 %v9076, 1e-05
      %v9109 = vadd.f32 %v9077, 1e-05
      %v9110 = vadd.f32 %v9078, 1e-05
      %v9111 = vadd.f32 %v9079, 1e-05
      %v9112 = vadd.f32 %v9080, 1e-05
      %v9113 = vadd.f32 %v9081, 1e-05
      %v9114 = vadd.f32 %v9082, 1e-05
      %v9115 = vadd.f32 %v9083, 1e-05
      %v9116 = vadd.f32 %v9084, 1e-05
      %v9117 = vadd.f32 %v9085, 1e-05
      %v9118 = vadd.f32 %v9086, 1e-05
      %v9119 = vadd.f32 %v9087, 1e-05
      %v9120 = vadd.f32 %v9088, 1e-05
      %v9121 = vadd.f32 %v9089, 1e-05
      %v9122 = vadd.f32 %v9090, 1e-05
      %v9123 = vadd.f32 %v9091, 1e-05
      %v9124 = vadd.f32 %v9092, 1e-05
      %v9125 = vadd.f32 %v9093, 1e-05
      %v9126 = vadd.f32 %v9094, 1e-05
      %v9127 = vadd.f32 %v9095, 1e-05
      %v9128 = vadd.f32 %v9096, 1e-05
      %v9129 = vadd.f32 %v9097, 1e-05
      %v9130 = vadd.f32 %v9098, 1e-05
      %v9131 = vadd.f32 %v9099, 1e-05
      %v9132 = vadd.f32 %v9100, 1e-05
      %v9133 = vrsqrt.pop %v9101
      %v9134 = vrsqrt.pop %v9102
      %v9135 = vrsqrt.pop %v9103
      %v9136 = vrsqrt.pop %v9104
      %v9137 = vrsqrt.pop %v9105
      %v9138 = vrsqrt.pop %v9106
      %v9139 = vrsqrt.pop %v9107
      %v9140 = vrsqrt.pop %v9108
      %v9141 = vrsqrt.pop %v9109
      %v9142 = vrsqrt.pop %v9110
      %v9143 = vrsqrt.pop %v9111
      %v9144 = vrsqrt.pop %v9112
      %v9145 = vrsqrt.pop %v9113
      %v9146 = vrsqrt.pop %v9114
      %v9147 = vrsqrt.pop %v9115
      %v9148 = vrsqrt.pop %v9116
      %v9149 = vrsqrt.pop %v9117
      %v9150 = vrsqrt.pop %v9118
      %v9151 = vrsqrt.pop %v9119
      %v9152 = vrsqrt.pop %v9120
      %v9153 = vrsqrt.pop %v9121
      %v9154 = vrsqrt.pop %v9122
      %v9155 = vrsqrt.pop %v9123
      %v9156 = vrsqrt.pop %v9124
      %v9157 = vrsqrt.pop %v9125
      %v9158 = vrsqrt.pop %v9126
      %v9159 = vrsqrt.pop %v9127
      %v9160 = vrsqrt.pop %v9128
      %v9161 = vrsqrt.pop %v9129
      %v9162 = vrsqrt.pop %v9130
      %v9163 = vrsqrt.pop %v9131
      %v9164 = vrsqrt.pop %v9132
      %v9165 = vmul.f32 %v8909, %v9133
      %v9166 = vmul.f32 %v8910, %v9134
      %v9167 = vmul.f32 %v8911, %v9135
      %v9168 = vmul.f32 %v8912, %v9136
      %v9169 = vmul.f32 %v8913, %v9137
      %v9170 = vmul.f32 %v8914, %v9138
      %v9171 = vmul.f32 %v8915, %v9139
      %v9172 = vmul.f32 %v8916, %v9140
      %v9173 = vmul.f32 %v8917, %v9141
      %v9174 = vmul.f32 %v8918, %v9142
      %v9175 = vmul.f32 %v8919, %v9143
      %v9176 = vmul.f32 %v8920, %v9144
      %v9177 = vmul.f32 %v8921, %v9145
      %v9178 = vmul.f32 %v8922, %v9146
      %v9179 = vmul.f32 %v8923, %v9147
      %v9180 = vmul.f32 %v8924, %v9148
      %v9181 = vmul.f32 %v8925, %v9149
      %v9182 = vmul.f32 %v8926, %v9150
      %v9183 = vmul.f32 %v8927, %v9151
      %v9184 = vmul.f32 %v8928, %v9152
      %v9185 = vmul.f32 %v8929, %v9153
      %v9186 = vmul.f32 %v8930, %v9154
      %v9187 = vmul.f32 %v8931, %v9155
      %v9188 = vmul.f32 %v8932, %v9156
      %v9189 = vmul.f32 %v8933, %v9157
      %v9190 = vmul.f32 %v8934, %v9158
      %v9191 = vmul.f32 %v8935, %v9159
      %v9192 = vmul.f32 %v8936, %v9160
      %v9193 = vmul.f32 %v8937, %v9161
      %v9194 = vmul.f32 %v8938, %v9162
      %v9195 = vmul.f32 %v8939, %v9163
      %v9196 = vmul.f32 %v8940, %v9164
      %v9198 = vlaneseq
      %v9199 = vshrl.u32 %v9198, 7
      %v9200 = vsub.s32 0, %v9199
      %v9201 = vrot.slane %v8779, %v9200
      %v9203 = vmul.f32 %v9165, %v9201
      %v9204 = vmul.f32 %v9166, %v9201
      %v9205 = vmul.f32 %v9167, %v9201
      %v9206 = vmul.f32 %v9168, %v9201
      %v9207 = vmul.f32 %v9169, %v9201
      %v9208 = vmul.f32 %v9170, %v9201
      %v9209 = vmul.f32 %v9171, %v9201
      %v9210 = vmul.f32 %v9172, %v9201
      %v9211 = vmul.f32 %v9173, %v9201
      %v9212 = vmul.f32 %v9174, %v9201
      %v9213 = vmul.f32 %v9175, %v9201
      %v9214 = vmul.f32 %v9176, %v9201
      %v9215 = vmul.f32 %v9177, %v9201
      %v9216 = vmul.f32 %v9178, %v9201
      %v9217 = vmul.f32 %v9179, %v9201
      %v9218 = vmul.f32 %v9180, %v9201
      %v9219 = vmul.f32 %v9181, %v9201
      %v9220 = vmul.f32 %v9182, %v9201
      %v9221 = vmul.f32 %v9183, %v9201
      %v9222 = vmul.f32 %v9184, %v9201
      %v9223 = vmul.f32 %v9185, %v9201
      %v9224 = vmul.f32 %v9186, %v9201
      %v9225 = vmul.f32 %v9187, %v9201
      %v9226 = vmul.f32 %v9188, %v9201
      %v9227 = vmul.f32 %v9189, %v9201
      %v9228 = vmul.f32 %v9190, %v9201
      %v9229 = vmul.f32 %v9191, %v9201
      %v9230 = vmul.f32 %v9192, %v9201
      %v9231 = vmul.f32 %v9193, %v9201
      %v9232 = vmul.f32 %v9194, %v9201
      %v9233 = vmul.f32 %v9195, %v9201
      %v9234 = vmul.f32 %v9196, %v9201
      %v9236 = vlaneseq
      %v9237 = vshrl.u32 %v9236, 7
      %v9238 = vsub.s32 0, %v9237
      %v9239 = vrot.slane %v8780, %v9238
      %v9241 = vadd.f32 %v9203, %v9239
      %v9242 = vadd.f32 %v9204, %v9239
      %v9243 = vadd.f32 %v9205, %v9239
      %v9244 = vadd.f32 %v9206, %v9239
      %v9245 = vadd.f32 %v9207, %v9239
      %v9246 = vadd.f32 %v9208, %v9239
      %v9247 = vadd.f32 %v9209, %v9239
      %v9248 = vadd.f32 %v9210, %v9239
      %v9249 = vadd.f32 %v9211, %v9239
      %v9250 = vadd.f32 %v9212, %v9239
      %v9251 = vadd.f32 %v9213, %v9239
      %v9252 = vadd.f32 %v9214, %v9239
      %v9253 = vadd.f32 %v9215, %v9239
      %v9254 = vadd.f32 %v9216, %v9239
      %v9255 = vadd.f32 %v9217, %v9239
      %v9256 = vadd.f32 %v9218, %v9239
      %v9257 = vadd.f32 %v9219, %v9239
      %v9258 = vadd.f32 %v9220, %v9239
      %v9259 = vadd.f32 %v9221, %v9239
      %v9260 = vadd.f32 %v9222, %v9239
      %v9261 = vadd.f32 %v9223, %v9239
      %v9262 = vadd.f32 %v9224, %v9239
      %v9263 = vadd.f32 %v9225, %v9239
      %v9264 = vadd.f32 %v9226, %v9239
      %v9265 = vadd.f32 %v9227, %v9239
      %v9266 = vadd.f32 %v9228, %v9239
      %v9267 = vadd.f32 %v9229, %v9239
      %v9268 = vadd.f32 %v9230, %v9239
      %v9269 = vadd.f32 %v9231, %v9239
      %v9270 = vadd.f32 %v9232, %v9239
      %v9271 = vadd.f32 %v9233, %v9239
      %v9272 = vadd.f32 %v9234, %v9239
      %v9273 = vld [vmem:[%s8] sm:$0xff]
      %v9274 = vld [vmem:[%s8 + $0x8] sm:$0xff]
      %v9275 = vld [vmem:[%s8 + $0x10] sm:$0xff]
      %v9276 = vld [vmem:[%s8 + $0x18] sm:$0xff]
      %v9277 = vld [vmem:[%s9] sm:$0x1]
      %v9279 = vlaneseq
      %v9280 = vshrl.u32 %v9279, 7
      %v9281 = vsub.s32 0, %v9280
      %v9282 = vrot.slane %v9277, %v9281
      %v9285 = vsel %vm456, %v9241, 0
      %v9288 = vsel %vm456, %v9242, 0
      %v9291 = vsel %vm456, %v9243, 0
      %v9294 = vsel %vm456, %v9244, 0
      %v9297 = vsel %vm456, %v9245, 0
      %v9300 = vsel %vm456, %v9246, 0
      %v9303 = vsel %vm456, %v9247, 0
      %v9306 = vsel %vm456, %v9248, 0
      %v9309 = vsel %vm456, %v9249, 0
      %v9312 = vsel %vm456, %v9250, 0
      %v9315 = vsel %vm456, %v9251, 0
      %v9318 = vsel %vm456, %v9252, 0
      %v9321 = vsel %vm456, %v9253, 0
      %v9324 = vsel %vm456, %v9254, 0
      %v9327 = vsel %vm456, %v9255, 0
      %v9330 = vsel %vm456, %v9256, 0
      %v9333 = vsel %vm456, %v9257, 0
      %v9336 = vsel %vm456, %v9258, 0
      %v9339 = vsel %vm456, %v9259, 0
      %v9342 = vsel %vm456, %v9260, 0
      %v9345 = vsel %vm456, %v9261, 0
      %v9348 = vsel %vm456, %v9262, 0
      %v9351 = vsel %vm456, %v9263, 0
      %v9354 = vsel %vm456, %v9264, 0
      %v9357 = vsel %vm456, %v9265, 0
      %v9360 = vsel %vm456, %v9266, 0
      %v9363 = vsel %vm456, %v9267, 0
      %v9366 = vsel %vm456, %v9268, 0
      %v9369 = vsel %vm456, %v9269, 0
      %v9372 = vsel %vm456, %v9270, 0
      %v9375 = vsel %vm456, %v9271, 0
      %v9378 = vsel %vm456, %v9272, 0
      %9380 = vmatprep.subr.mxu0 0.0
      %9381 = vmatpush1.msra.mxu0 %v9273
      %9382 = vmatprep.subr.mxu0 0.0
      %9383 = vmatpush1.msra.mxu0 %v9274
      %9384 = vmatprep.subr.mxu0 0.0
      %9385 = vmatpush1.msra.mxu0 %v9275
      %9386 = vmatprep.subr.mxu0 0.0
      %9387 = vmatpush1.msra.mxu0 %v9276
      %9388 = vmatprep.subr.mxu0 0.0
      %9389 = vmatpush1.msra.mxu0 0.0
      %9390 = vmatprep.subr.mxu0 0.0
      %9391 = vmatpush1.msra.mxu0 0.0
      %9392 = vmatprep.subr.mxu0 0.0
      %9393 = vmatpush1.msra.mxu0 0.0
      %9394 = vmatprep.subr.mxu0 0.0
      %9395 = vmatpush1.msra.mxu0 0.0
      %9396 = vmatprep.subr.mxu0 0.0
      %9397 = vmatpush1.msra.mxu0 0.0
      %9398 = vmatprep.subr.mxu0 0.0
      %9399 = vmatpush1.msra.mxu0 0.0
      %9400 = vmatprep.subr.mxu0 0.0
      %9401 = vmatpush1.msra.mxu0 0.0
      %9402 = vmatprep.subr.mxu0 0.0
      %9403 = vmatpush1.msra.mxu0 0.0
      %9404 = vmatprep.subr.mxu0 0.0
      %9405 = vmatpush1.msra.mxu0 0.0
      %9406 = vmatprep.subr.mxu0 0.0
      %9407 = vmatpush1.msra.mxu0 0.0
      %9408 = vmatprep.subr.mxu0 0.0
      %9409 = vmatpush1.msra.mxu0 0.0
      %9410 = vmatprep.subr.mxu0 0.0
      %9411 = vmatpush1.msra.mxu0 0.0
      %9412 = vmatprep.subr.mxu0 0.0
      %9413 = vmatpush1.msra.mxu0 0.0
      %9414 = vmatprep.subr.mxu0 0.0
      %9415 = vmatpush1.msra.mxu0 0.0
      %9416 = vmatprep.subr.mxu0 0.0
      %9417 = vmatpush1.msra.mxu0 0.0
      %9418 = vmatprep.subr.mxu0 0.0
      %9419 = vmatpush1.msra.mxu0 0.0
      %9420 = vmatprep.subr.mxu0 0.0
      %9421 = vmatpush1.msra.mxu0 0.0
      %9422 = vmatprep.subr.mxu0 0.0
      %9423 = vmatpush1.msra.mxu0 0.0
      %9424 = vmatprep.subr.mxu0 0.0
      %9425 = vmatpush1.msra.mxu0 0.0
      %9426 = vmatprep.subr.mxu0 0.0
      %9427 = vmatpush1.msra.mxu0 0.0
      %9428 = vmatprep.subr.mxu0 0.0
      %9429 = vmatpush1.msra.mxu0 0.0
      %9430 = vmatprep.subr.mxu0 0.0
      %9431 = vmatpush1.msra.mxu0 0.0
      %9432 = vmatprep.subr.mxu0 0.0
      %9433 = vmatpush1.msra.mxu0 0.0
      %9434 = vmatprep.subr.mxu0 0.0
      %9435 = vmatpush1.msra.mxu0 0.0
      %9436 = vmatprep.subr.mxu0 0.0
      %9437 = vmatpush1.msra.mxu0 0.0
      %9438 = vmatprep.subr.mxu0 0.0
      %9439 = vmatpush1.msra.mxu0 0.0
      %9440 = vmatprep.subr.mxu0 0.0
      %9441 = vmatpush1.msra.mxu0 0.0
      %9442 = vmatprep.subr.mxu0 0.0
      %9443 = vmatpush1.msra.mxu0 0.0
      %9444 = vmatprep.mubr.f32.mxu0 0.0
      %9445 = vmatmul.mubr.f32.gmra.mrb[0].mxu0 %v9285
      %v9446 = vpop.f32.mrb[0].mxu0
      %v9447 = vadd.f32 %v9282, %v9446
      %v9448 = vpop.f32.mrb[0].mxu0
      %9449 = vmatprep.mubr.f32.mxu0 0.0
      %9450 = vmatmul.mubr.f32.gmra.mrb[0].mxu0 %v9288
      %v9451 = vpop.f32.mrb[0].mxu0
      %v9452 = vadd.f32 %v9282, %v9451
      %v9453 = vpop.f32.mrb[0].mxu0
      %9454 = vmatprep.mubr.f32.mxu0 0.0
      %9455 = vmatmul.mubr.f32.gmra.mrb[0].mxu0 %v9291
      %v9456 = vpop.f32.mrb[0].mxu0
      %v9457 = vadd.f32 %v9282, %v9456
      %v9458 = vpop.f32.mrb[0].mxu0
      %9459 = vmatprep.mubr.f32.mxu0 0.0
      %9460 = vmatmul.mubr.f32.gmra.mrb[0].mxu0 %v9294
      %v9461 = vpop.f32.mrb[0].mxu0
      %v9462 = vadd.f32 %v9282, %v9461
      %v9463 = vpop.f32.mrb[0].mxu0
      %9464 = vmatprep.mubr.f32.mxu0 0.0
      %9465 = vmatmul.mubr.f32.gmra.mrb[0].mxu0 %v9297
      %v9466 = vpop.f32.mrb[0].mxu0
      %v9467 = vadd.f32 %v9282, %v9466
      %v9468 = vpop.f32.mrb[0].mxu0
      %9469 = vmatprep.mubr.f32.mxu0 0.0
      %9470 = vmatmul.mubr.f32.gmra.mrb[0].mxu0 %v9300
      %v9471 = vpop.f32.mrb[0].mxu0
      %v9472 = vadd.f32 %v9282, %v9471
      %v9473 = vpop.f32.mrb[0].mxu0
      %9474 = vmatprep.mubr.f32.mxu0 0.0
      %9475 = vmatmul.mubr.f32.gmra.mrb[0].mxu0 %v9303
      %v9476 = vpop.f32.mrb[0].mxu0
      %v9477 = vadd.f32 %v9282, %v9476
      %v9478 = vpop.f32.mrb[0].mxu0
      %9479 = vmatprep.mubr.f32.mxu0 0.0
      %9480 = vmatmul.mubr.f32.gmra.mrb[0].mxu0 %v9306
      %v9481 = vpop.f32.mrb[0].mxu0
      %v9482 = vadd.f32 %v9282, %v9481
      %v9483 = vpop.f32.mrb[0].mxu0
      %9484 = vmatprep.mubr.f32.mxu0 0.0
      %9485 = vmatmul.mubr.f32.gmra.mrb[0].mxu0 %v9309
      %v9486 = vpop.f32.mrb[0].mxu0
      %v9487 = vadd.f32 %v9282, %v9486
      %v9488 = vpop.f32.mrb[0].mxu0
      %9489 = vmatprep.mubr.f32.mxu0 0.0
      %9490 = vmatmul.mubr.f32.gmra.mrb[0].mxu0 %v9312
      %v9491 = vpop.f32.mrb[0].mxu0
      %v9492 = vadd.f32 %v9282, %v9491
      %v9493 = vpop.f32.mrb[0].mxu0
      %9494 = vmatprep.mubr.f32.mxu0 0.0
      %9495 = vmatmul.mubr.f32.gmra.mrb[0].mxu0 %v9315
      %v9496 = vpop.f32.mrb[0].mxu0
      %v9497 = vadd.f32 %v9282, %v9496
      %v9498 = vpop.f32.mrb[0].mxu0
      %9499 = vmatprep.mubr.f32.mxu0 0.0
      %9500 = vmatmul.mubr.f32.gmra.mrb[0].mxu0 %v9318
      %v9501 = vpop.f32.mrb[0].mxu0
      %v9502 = vadd.f32 %v9282, %v9501
      %v9503 = vpop.f32.mrb[0].mxu0
      %9504 = vmatprep.mubr.f32.mxu0 0.0
      %9505 = vmatmul.mubr.f32.gmra.mrb[0].mxu0 %v9321
      %v9506 = vpop.f32.mrb[0].mxu0
      %v9507 = vadd.f32 %v9282, %v9506
      %v9508 = vpop.f32.mrb[0].mxu0
      %9509 = vmatprep.mubr.f32.mxu0 0.0
      %9510 = vmatmul.mubr.f32.gmra.mrb[0].mxu0 %v9324
      %v9511 = vpop.f32.mrb[0].mxu0
      %v9512 = vadd.f32 %v9282, %v9511
      %v9513 = vpop.f32.mrb[0].mxu0
      %9514 = vmatprep.mubr.f32.mxu0 0.0
      %9515 = vmatmul.mubr.f32.gmra.mrb[0].mxu0 %v9327
      %v9516 = vpop.f32.mrb[0].mxu0
      %v9517 = vadd.f32 %v9282, %v9516
      %v9518 = vpop.f32.mrb[0].mxu0
      %9519 = vmatprep.mubr.f32.mxu0 0.0
      %9520 = vmatmul.mubr.f32.gmra.mrb[0].mxu0 %v9330
      %v9521 = vpop.f32.mrb[0].mxu0
      %v9522 = vadd.f32 %v9282, %v9521
      %v9523 = vpop.f32.mrb[0].mxu0
      %9524 = vmatprep.mubr.f32.mxu0 0.0
      %9525 = vmatmul.mubr.f32.gmra.mrb[0].mxu0 %v9333
      %v9526 = vpop.f32.mrb[0].mxu0
      %v9527 = vadd.f32 %v9282, %v9526
      %v9528 = vpop.f32.mrb[0].mxu0
      %9529 = vmatprep.mubr.f32.mxu0 0.0
      %9530 = vmatmul.mubr.f32.gmra.mrb[0].mxu0 %v9336
      %v9531 = vpop.f32.mrb[0].mxu0
      %v9532 = vadd.f32 %v9282, %v9531
      %v9533 = vpop.f32.mrb[0].mxu0
      %9534 = vmatprep.mubr.f32.mxu0 0.0
      %9535 = vmatmul.mubr.f32.gmra.mrb[0].mxu0 %v9339
      %v9536 = vpop.f32.mrb[0].mxu0
      %v9537 = vadd.f32 %v9282, %v9536
      %v9538 = vpop.f32.mrb[0].mxu0
      %9539 = vmatprep.mubr.f32.mxu0 0.0
      %9540 = vmatmul.mubr.f32.gmra.mrb[0].mxu0 %v9342
      %v9541 = vpop.f32.mrb[0].mxu0
      %v9542 = vadd.f32 %v9282, %v9541
      %v9543 = vpop.f32.mrb[0].mxu0
      %9544 = vmatprep.mubr.f32.mxu0 0.0
      %9545 = vmatmul.mubr.f32.gmra.mrb[0].mxu0 %v9345
      %v9546 = vpop.f32.mrb[0].mxu0
      %v9547 = vadd.f32 %v9282, %v9546
      %v9548 = vpop.f32.mrb[0].mxu0
      %9549 = vmatprep.mubr.f32.mxu0 0.0
      %9550 = vmatmul.mubr.f32.gmra.mrb[0].mxu0 %v9348
      %v9551 = vpop.f32.mrb[0].mxu0
      %v9552 = vadd.f32 %v9282, %v9551
      %v9553 = vpop.f32.mrb[0].mxu0
      %9554 = vmatprep.mubr.f32.mxu0 0.0
      %9555 = vmatmul.mubr.f32.gmra.mrb[0].mxu0 %v9351
      %v9556 = vpop.f32.mrb[0].mxu0
      %v9557 = vadd.f32 %v9282, %v9556
      %v9558 = vpop.f32.mrb[0].mxu0
      %9559 = vmatprep.mubr.f32.mxu0 0.0
      %9560 = vmatmul.mubr.f32.gmra.mrb[0].mxu0 %v9354
      %v9561 = vpop.f32.mrb[0].mxu0
      %v9562 = vadd.f32 %v9282, %v9561
      %v9563 = vpop.f32.mrb[0].mxu0
      %9564 = vmatprep.mubr.f32.mxu0 0.0
      %9565 = vmatmul.mubr.f32.gmra.mrb[0].mxu0 %v9357
      %v9566 = vpop.f32.mrb[0].mxu0
      %v9567 = vadd.f32 %v9282, %v9566
      %v9568 = vpop.f32.mrb[0].mxu0
      %9569 = vmatprep.mubr.f32.mxu0 0.0
      %9570 = vmatmul.mubr.f32.gmra.mrb[0].mxu0 %v9360
      %v9571 = vpop.f32.mrb[0].mxu0
      %v9572 = vadd.f32 %v9282, %v9571
      %v9573 = vpop.f32.mrb[0].mxu0
      %9574 = vmatprep.mubr.f32.mxu0 0.0
      %9575 = vmatmul.mubr.f32.gmra.mrb[0].mxu0 %v9363
      %v9576 = vpop.f32.mrb[0].mxu0
      %v9577 = vadd.f32 %v9282, %v9576
      %v9578 = vpop.f32.mrb[0].mxu0
      %9579 = vmatprep.mubr.f32.mxu0 0.0
      %9580 = vmatmul.mubr.f32.gmra.mrb[0].mxu0 %v9366
      %v9581 = vpop.f32.mrb[0].mxu0
      %v9582 = vadd.f32 %v9282, %v9581
      %v9583 = vpop.f32.mrb[0].mxu0
      %9584 = vmatprep.mubr.f32.mxu0 0.0
      %9585 = vmatmul.mubr.f32.gmra.mrb[0].mxu0 %v9369
      %v9586 = vpop.f32.mrb[0].mxu0
      %v9587 = vadd.f32 %v9282, %v9586
      %v9588 = vpop.f32.mrb[0].mxu0
      %9589 = vmatprep.mubr.f32.mxu0 0.0
      %9590 = vmatmul.mubr.f32.gmra.mrb[0].mxu0 %v9372
      %v9591 = vpop.f32.mrb[0].mxu0
      %v9592 = vadd.f32 %v9282, %v9591
      %v9593 = vpop.f32.mrb[0].mxu0
      %9594 = vmatprep.mubr.f32.mxu0 0.0
      %9595 = vmatmul.mubr.f32.gmra.mrb[0].mxu0 %v9375
      %v9596 = vpop.f32.mrb[0].mxu0
      %v9597 = vadd.f32 %v9282, %v9596
      %v9598 = vpop.f32.mrb[0].mxu0
      %9599 = vmatprep.mubr.f32.mxu0 0.0
      %9600 = vmatmul.mubr.f32.gmra.mrb[0].mxu0 %v9378
      %v9601 = vpop.f32.mrb[0].mxu0
      %v9602 = vadd.f32 %v9282, %v9601
      %v9603 = vpop.f32.mrb[0].mxu0
      %9604 = vdwg.mxu0
      %v9605 = vmul.f32 %v9447, 0.5
      %v9606 = vmul.f32 %v9452, 0.5
      %v9607 = vmul.f32 %v9457, 0.5
      %v9608 = vmul.f32 %v9462, 0.5
      %v9609 = vmul.f32 %v9467, 0.5
      %v9610 = vmul.f32 %v9472, 0.5
      %v9611 = vmul.f32 %v9477, 0.5
      %v9612 = vmul.f32 %v9482, 0.5
      %v9613 = vmul.f32 %v9487, 0.5
      %v9614 = vmul.f32 %v9492, 0.5
      %v9615 = vmul.f32 %v9497, 0.5
      %v9616 = vmul.f32 %v9502, 0.5
      %v9617 = vmul.f32 %v9507, 0.5
      %v9618 = vmul.f32 %v9512, 0.5
      %v9619 = vmul.f32 %v9517, 0.5
      %v9620 = vmul.f32 %v9522, 0.5
      %v9621 = vmul.f32 %v9527, 0.5
      %v9622 = vmul.f32 %v9532, 0.5
      %v9623 = vmul.f32 %v9537, 0.5
      %v9624 = vmul.f32 %v9542, 0.5
      %v9625 = vmul.f32 %v9547, 0.5
      %v9626 = vmul.f32 %v9552, 0.5
      %v9627 = vmul.f32 %v9557, 0.5
      %v9628 = vmul.f32 %v9562, 0.5
      %v9629 = vmul.f32 %v9567, 0.5
      %v9630 = vmul.f32 %v9572, 0.5
      %v9631 = vmul.f32 %v9577, 0.5
      %v9632 = vmul.f32 %v9582, 0.5
      %v9633 = vmul.f32 %v9587, 0.5
      %v9634 = vmul.f32 %v9592, 0.5
      %v9635 = vmul.f32 %v9597, 0.5
      %v9636 = vmul.f32 %v9602, 0.5
      %v9637 = vmul.f32 %v9447, 0.70710677
      %v9638 = vmul.f32 %v9452, 0.70710677
      %v9639 = vmul.f32 %v9457, 0.70710677
      %v9640 = vmul.f32 %v9462, 0.70710677
      %v9641 = vmul.f32 %v9467, 0.70710677
      %v9642 = vmul.f32 %v9472, 0.70710677
      %v9643 = vmul.f32 %v9477, 0.70710677
      %v9644 = vmul.f32 %v9482, 0.70710677
      %v9645 = vmul.f32 %v9487, 0.70710677
      %v9646 = vmul.f32 %v9492, 0.70710677
      %v9647 = vmul.f32 %v9497, 0.70710677
      %v9648 = vmul.f32 %v9502, 0.70710677
      %v9649 = vmul.f32 %v9507, 0.70710677
      %v9650 = vmul.f32 %v9512, 0.70710677
      %v9651 = vmul.f32 %v9517, 0.70710677
      %v9652 = vmul.f32 %v9522, 0.70710677
      %v9653 = vmul.f32 %v9527, 0.70710677
      %v9654 = vmul.f32 %v9532, 0.70710677
      %v9655 = vmul.f32 %v9537, 0.70710677
      %v9656 = vmul.f32 %v9542, 0.70710677
      %v9657 = vmul.f32 %v9547, 0.70710677
      %v9658 = vmul.f32 %v9552, 0.70710677
      %v9659 = vmul.f32 %v9557, 0.70710677
      %v9660 = vmul.f32 %v9562, 0.70710677
      %v9661 = vmul.f32 %v9567, 0.70710677
      %v9662 = vmul.f32 %v9572, 0.70710677
      %v9663 = vmul.f32 %v9577, 0.70710677
      %v9664 = vmul.f32 %v9582, 0.70710677
      %v9665 = vmul.f32 %v9587, 0.70710677
      %v9666 = vmul.f32 %v9592, 0.70710677
      %v9667 = vmul.f32 %v9597, 0.70710677
      %v9668 = vmul.f32 %v9602, 0.70710677
      %v9669 = verf.f32.pop %v9637
      %v9670 = verf.f32.pop %v9638
      %v9671 = verf.f32.pop %v9639
      %v9672 = verf.f32.pop %v9640
      %v9673 = verf.f32.pop %v9641
      %v9674 = verf.f32.pop %v9642
      %v9675 = verf.f32.pop %v9643
      %v9676 = verf.f32.pop %v9644
      %v9677 = verf.f32.pop %v9645
      %v9678 = verf.f32.pop %v9646
      %v9679 = verf.f32.pop %v9647
      %v9680 = verf.f32.pop %v9648
      %v9681 = verf.f32.pop %v9649
      %v9682 = verf.f32.pop %v9650
      %v9683 = verf.f32.pop %v9651
      %v9684 = verf.f32.pop %v9652
      %v9685 = verf.f32.pop %v9653
      %v9686 = verf.f32.pop %v9654
      %v9687 = verf.f32.pop %v9655
      %v9688 = verf.f32.pop %v9656
      %v9689 = verf.f32.pop %v9657
      %v9690 = verf.f32.pop %v9658
      %v9691 = verf.f32.pop %v9659
      %v9692 = verf.f32.pop %v9660
      %v9693 = verf.f32.pop %v9661
      %v9694 = verf.f32.pop %v9662
      %v9695 = verf.f32.pop %v9663
      %v9696 = verf.f32.pop %v9664
      %v9697 = verf.f32.pop %v9665
      %v9698 = verf.f32.pop %v9666
      %v9699 = verf.f32.pop %v9667
      %v9700 = verf.f32.pop %v9668
      %v9701 = vadd.f32 %v9669, 1.0
      %v9702 = vadd.f32 %v9670, 1.0
      %v9703 = vadd.f32 %v9671, 1.0
      %v9704 = vadd.f32 %v9672, 1.0
      %v9705 = vadd.f32 %v9673, 1.0
      %v9706 = vadd.f32 %v9674, 1.0
      %v9707 = vadd.f32 %v9675, 1.0
      %v9708 = vadd.f32 %v9676, 1.0
      %v9709 = vadd.f32 %v9677, 1.0
      %v9710 = vadd.f32 %v9678, 1.0
      %v9711 = vadd.f32 %v9679, 1.0
      %v9712 = vadd.f32 %v9680, 1.0
      %v9713 = vadd.f32 %v9681, 1.0
      %v9714 = vadd.f32 %v9682, 1.0
      %v9715 = vadd.f32 %v9683, 1.0
      %v9716 = vadd.f32 %v9684, 1.0
      %v9717 = vadd.f32 %v9685, 1.0
      %v9718 = vadd.f32 %v9686, 1.0
      %v9719 = vadd.f32 %v9687, 1.0
      %v9720 = vadd.f32 %v9688, 1.0
      %v9721 = vadd.f32 %v9689, 1.0
      %v9722 = vadd.f32 %v9690, 1.0
      %v9723 = vadd.f32 %v9691, 1.0
      %v9724 = vadd.f32 %v9692, 1.0
      %v9725 = vadd.f32 %v9693, 1.0
      %v9726 = vadd.f32 %v9694, 1.0
      %v9727 = vadd.f32 %v9695, 1.0
      %v9728 = vadd.f32 %v9696, 1.0
      %v9729 = vadd.f32 %v9697, 1.0
      %v9730 = vadd.f32 %v9698, 1.0
      %v9731 = vadd.f32 %v9699, 1.0
      %v9732 = vadd.f32 %v9700, 1.0
      %v9733 = vmul.f32 %v9605, %v9701
      %v9734 = vmul.f32 %v9606, %v9702
      %v9735 = vmul.f32 %v9607, %v9703
      %v9736 = vmul.f32 %v9608, %v9704
      %v9737 = vmul.f32 %v9609, %v9705
      %v9738 = vmul.f32 %v9610, %v9706
      %v9739 = vmul.f32 %v9611, %v9707
      %v9740 = vmul.f32 %v9612, %v9708
      %v9741 = vmul.f32 %v9613, %v9709
      %v9742 = vmul.f32 %v9614, %v9710
      %v9743 = vmul.f32 %v9615, %v9711
      %v9744 = vmul.f32 %v9616, %v9712
      %v9745 = vmul.f32 %v9617, %v9713
      %v9746 = vmul.f32 %v9618, %v9714
      %v9747 = vmul.f32 %v9619, %v9715
      %v9748 = vmul.f32 %v9620, %v9716
      %v9749 = vmul.f32 %v9621, %v9717
      %v9750 = vmul.f32 %v9622, %v9718
      %v9751 = vmul.f32 %v9623, %v9719
      %v9752 = vmul.f32 %v9624, %v9720
      %v9753 = vmul.f32 %v9625, %v9721
      %v9754 = vmul.f32 %v9626, %v9722
      %v9755 = vmul.f32 %v9627, %v9723
      %v9756 = vmul.f32 %v9628, %v9724
      %v9757 = vmul.f32 %v9629, %v9725
      %v9758 = vmul.f32 %v9630, %v9726
      %v9759 = vmul.f32 %v9631, %v9727
      %v9760 = vmul.f32 %v9632, %v9728
      %v9761 = vmul.f32 %v9633, %v9729
      %v9762 = vmul.f32 %v9634, %v9730
      %v9763 = vmul.f32 %v9635, %v9731
      %v9764 = vmul.f32 %v9636, %v9732
      %v9765 = vld [vmem:[%s10] sm:$0xff]
      %v9766 = vld [vmem:[%s10 + $0x8] sm:$0xff]
      %v9767 = vld [vmem:[%s10 + $0x10] sm:$0xff]
      %v9768 = vld [vmem:[%s10 + $0x18] sm:$0xff]
      %v9769 = vld [vmem:[%s10 + $0x20] sm:$0xff]
      %v9770 = vld [vmem:[%s10 + $0x28] sm:$0xff]
      %v9771 = vld [vmem:[%s10 + $0x30] sm:$0xff]
      %v9772 = vld [vmem:[%s10 + $0x38] sm:$0xff]
      %v9773 = vld [vmem:[%s10 + $0x40] sm:$0xff]
      %v9774 = vld [vmem:[%s10 + $0x48] sm:$0xff]
      %v9775 = vld [vmem:[%s10 + $0x50] sm:$0xff]
      %v9776 = vld [vmem:[%s10 + $0x58] sm:$0xff]
      %v9777 = vld [vmem:[%s10 + $0x60] sm:$0xff]
      %v9778 = vld [vmem:[%s10 + $0x68] sm:$0xff]
      %v9779 = vld [vmem:[%s10 + $0x70] sm:$0xff]
      %v9780 = vld [vmem:[%s10 + $0x78] sm:$0xff]
      %v9781 = vld [vmem:[%s11] sm:$0x1]
      %v9783 = vlaneseq
      %v9784 = vshrl.u32 %v9783, 7
      %v9785 = vsub.s32 0, %v9784
      %v9786 = vrot.slane %v9781, %v9785
      %9788 = vmatprep.subr.mxu0 0.0
      %9789 = vmatpush1.msra.mxu0 %v9765
      %9790 = vmatprep.subr.mxu0 0.0
      %9791 = vmatpush1.msra.mxu0 %v9766
      %9792 = vmatprep.subr.mxu0 0.0
      %9793 = vmatpush1.msra.mxu0 %v9767
      %9794 = vmatprep.subr.mxu0 0.0
      %9795 = vmatpush1.msra.mxu0 %v9768
      %9796 = vmatprep.subr.mxu0 0.0
      %9797 = vmatpush1.msra.mxu0 %v9769
      %9798 = vmatprep.subr.mxu0 0.0
      %9799 = vmatpush1.msra.mxu0 %v9770
      %9800 = vmatprep.subr.mxu0 0.0
      %9801 = vmatpush1.msra.mxu0 %v9771
      %9802 = vmatprep.subr.mxu0 0.0
      %9803 = vmatpush1.msra.mxu0 %v9772
      %9804 = vmatprep.subr.mxu0 0.0
      %9805 = vmatpush1.msra.mxu0 %v9773
      %9806 = vmatprep.subr.mxu0 0.0
      %9807 = vmatpush1.msra.mxu0 %v9774
      %9808 = vmatprep.subr.mxu0 0.0
      %9809 = vmatpush1.msra.mxu0 %v9775
      %9810 = vmatprep.subr.mxu0 0.0
      %9811 = vmatpush1.msra.mxu0 %v9776
      %9812 = vmatprep.subr.mxu0 0.0
      %9813 = vmatpush1.msra.mxu0 %v9777
      %9814 = vmatprep.subr.mxu0 0.0
      %9815 = vmatpush1.msra.mxu0 %v9778
      %9816 = vmatprep.subr.mxu0 0.0
      %9817 = vmatpush1.msra.mxu0 %v9779
      %9818 = vmatprep.subr.mxu0 0.0
      %9819 = vmatpush1.msra.mxu0 %v9780
      %9820 = vmatprep.subr.mxu0 0.0
      %9821 = vmatpush1.msra.mxu0 0.0
      %9822 = vmatprep.subr.mxu0 0.0
      %9823 = vmatpush1.msra.mxu0 0.0
      %9824 = vmatprep.subr.mxu0 0.0
      %9825 = vmatpush1.msra.mxu0 0.0
      %9826 = vmatprep.subr.mxu0 0.0
      %9827 = vmatpush1.msra.mxu0 0.0
      %9828 = vmatprep.subr.mxu0 0.0
      %9829 = vmatpush1.msra.mxu0 0.0
      %9830 = vmatprep.subr.mxu0 0.0
      %9831 = vmatpush1.msra.mxu0 0.0
      %9832 = vmatprep.subr.mxu0 0.0
      %9833 = vmatpush1.msra.mxu0 0.0
      %9834 = vmatprep.subr.mxu0 0.0
      %9835 = vmatpush1.msra.mxu0 0.0
      %9836 = vmatprep.subr.mxu0 0.0
      %9837 = vmatpush1.msra.mxu0 0.0
      %9838 = vmatprep.subr.mxu0 0.0
      %9839 = vmatpush1.msra.mxu0 0.0
      %9840 = vmatprep.subr.mxu0 0.0
      %9841 = vmatpush1.msra.mxu0 0.0
      %9842 = vmatprep.subr.mxu0 0.0
      %9843 = vmatpush1.msra.mxu0 0.0
      %9844 = vmatprep.subr.mxu0 0.0
      %9845 = vmatpush1.msra.mxu0 0.0
      %9846 = vmatprep.subr.mxu0 0.0
      %9847 = vmatpush1.msra.mxu0 0.0
      %9848 = vmatprep.subr.mxu0 0.0
      %9849 = vmatpush1.msra.mxu0 0.0
      %9850 = vmatprep.subr.mxu0 0.0
      %9851 = vmatpush1.msra.mxu0 0.0
      %9852 = vmatprep.mubr.f32.mxu0 0.0
      %9853 = vmatmul.mubr.f32.gmra.mrb[0].mxu0 %v9733
      %v9854 = vpop.f32.mrb[0].mxu0
      %v9855 = vadd.f32 %v9786, %v9854
      %v9856 = vpop.f32.mrb[0].mxu0
      %9857 = vmatprep.mubr.f32.mxu0 0.0
      %9858 = vmatmul.mubr.f32.gmra.mrb[0].mxu0 %v9734
      %v9859 = vpop.f32.mrb[0].mxu0
      %v9860 = vadd.f32 %v9786, %v9859
      %v9861 = vpop.f32.mrb[0].mxu0
      %9862 = vmatprep.mubr.f32.mxu0 0.0
      %9863 = vmatmul.mubr.f32.gmra.mrb[0].mxu0 %v9735
      %v9864 = vpop.f32.mrb[0].mxu0
      %v9865 = vadd.f32 %v9786, %v9864
      %v9866 = vpop.f32.mrb[0].mxu0
      %9867 = vmatprep.mubr.f32.mxu0 0.0
      %9868 = vmatmul.mubr.f32.gmra.mrb[0].mxu0 %v9736
      %v9869 = vpop.f32.mrb[0].mxu0
      %v9870 = vadd.f32 %v9786, %v9869
      %v9871 = vpop.f32.mrb[0].mxu0
      %9872 = vmatprep.mubr.f32.mxu0 0.0
      %9873 = vmatmul.mubr.f32.gmra.mrb[0].mxu0 %v9737
      %v9874 = vpop.f32.mrb[0].mxu0
      %v9875 = vadd.f32 %v9786, %v9874
      %v9876 = vpop.f32.mrb[0].mxu0
      %9877 = vmatprep.mubr.f32.mxu0 0.0
      %9878 = vmatmul.mubr.f32.gmra.mrb[0].mxu0 %v9738
      %v9879 = vpop.f32.mrb[0].mxu0
      %v9880 = vadd.f32 %v9786, %v9879
      %v9881 = vpop.f32.mrb[0].mxu0
      %9882 = vmatprep.mubr.f32.mxu0 0.0
      %9883 = vmatmul.mubr.f32.gmra.mrb[0].mxu0 %v9739
      %v9884 = vpop.f32.mrb[0].mxu0
      %v9885 = vadd.f32 %v9786, %v9884
      %v9886 = vpop.f32.mrb[0].mxu0
      %9887 = vmatprep.mubr.f32.mxu0 0.0
      %9888 = vmatmul.mubr.f32.gmra.mrb[0].mxu0 %v9740
      %v9889 = vpop.f32.mrb[0].mxu0
      %v9890 = vadd.f32 %v9786, %v9889
      %v9891 = vpop.f32.mrb[0].mxu0
      %9892 = vmatprep.mubr.f32.mxu0 0.0
      %9893 = vmatmul.mubr.f32.gmra.mrb[0].mxu0 %v9741
      %v9894 = vpop.f32.mrb[0].mxu0
      %v9895 = vadd.f32 %v9786, %v9894
      %v9896 = vpop.f32.mrb[0].mxu0
      %9897 = vmatprep.mubr.f32.mxu0 0.0
      %9898 = vmatmul.mubr.f32.gmra.mrb[0].mxu0 %v9742
      %v9899 = vpop.f32.mrb[0].mxu0
      %v9900 = vadd.f32 %v9786, %v9899
      %v9901 = vpop.f32.mrb[0].mxu0
      %9902 = vmatprep.mubr.f32.mxu0 0.0
      %9903 = vmatmul.mubr.f32.gmra.mrb[0].mxu0 %v9743
      %v9904 = vpop.f32.mrb[0].mxu0
      %v9905 = vadd.f32 %v9786, %v9904
      %v9906 = vpop.f32.mrb[0].mxu0
      %9907 = vmatprep.mubr.f32.mxu0 0.0
      %9908 = vmatmul.mubr.f32.gmra.mrb[0].mxu0 %v9744
      %v9909 = vpop.f32.mrb[0].mxu0
      %v9910 = vadd.f32 %v9786, %v9909
      %v9911 = vpop.f32.mrb[0].mxu0
      %9912 = vmatprep.mubr.f32.mxu0 0.0
      %9913 = vmatmul.mubr.f32.gmra.mrb[0].mxu0 %v9745
      %v9914 = vpop.f32.mrb[0].mxu0
      %v9915 = vadd.f32 %v9786, %v9914
      %v9916 = vpop.f32.mrb[0].mxu0
      %9917 = vmatprep.mubr.f32.mxu0 0.0
      %9918 = vmatmul.mubr.f32.gmra.mrb[0].mxu0 %v9746
      %v9919 = vpop.f32.mrb[0].mxu0
      %v9920 = vadd.f32 %v9786, %v9919
      %v9921 = vpop.f32.mrb[0].mxu0
      %9922 = vmatprep.mubr.f32.mxu0 0.0
      %9923 = vmatmul.mubr.f32.gmra.mrb[0].mxu0 %v9747
      %v9924 = vpop.f32.mrb[0].mxu0
      %v9925 = vadd.f32 %v9786, %v9924
      %v9926 = vpop.f32.mrb[0].mxu0
      %9927 = vmatprep.mubr.f32.mxu0 0.0
      %9928 = vmatmul.mubr.f32.gmra.mrb[0].mxu0 %v9748
      %v9929 = vpop.f32.mrb[0].mxu0
      %v9930 = vadd.f32 %v9786, %v9929
      %v9931 = vpop.f32.mrb[0].mxu0
      %9932 = vmatprep.mubr.f32.mxu0 0.0
      %9933 = vmatmul.mubr.f32.gmra.mrb[0].mxu0 %v9749
      %v9934 = vpop.f32.mrb[0].mxu0
      %v9935 = vadd.f32 %v9786, %v9934
      %v9936 = vpop.f32.mrb[0].mxu0
      %9937 = vmatprep.mubr.f32.mxu0 0.0
      %9938 = vmatmul.mubr.f32.gmra.mrb[0].mxu0 %v9750
      %v9939 = vpop.f32.mrb[0].mxu0
      %v9940 = vadd.f32 %v9786, %v9939
      %v9941 = vpop.f32.mrb[0].mxu0
      %9942 = vmatprep.mubr.f32.mxu0 0.0
      %9943 = vmatmul.mubr.f32.gmra.mrb[0].mxu0 %v9751
      %v9944 = vpop.f32.mrb[0].mxu0
      %v9945 = vadd.f32 %v9786, %v9944
      %v9946 = vpop.f32.mrb[0].mxu0
      %9947 = vmatprep.mubr.f32.mxu0 0.0
      %9948 = vmatmul.mubr.f32.gmra.mrb[0].mxu0 %v9752
      %v9949 = vpop.f32.mrb[0].mxu0
      %v9950 = vadd.f32 %v9786, %v9949
      %v9951 = vpop.f32.mrb[0].mxu0
      %9952 = vmatprep.mubr.f32.mxu0 0.0
      %9953 = vmatmul.mubr.f32.gmra.mrb[0].mxu0 %v9753
      %v9954 = vpop.f32.mrb[0].mxu0
      %v9955 = vadd.f32 %v9786, %v9954
      %v9956 = vpop.f32.mrb[0].mxu0
      %9957 = vmatprep.mubr.f32.mxu0 0.0
      %9958 = vmatmul.mubr.f32.gmra.mrb[0].mxu0 %v9754
      %v9959 = vpop.f32.mrb[0].mxu0
      %v9960 = vadd.f32 %v9786, %v9959
      %v9961 = vpop.f32.mrb[0].mxu0
      %9962 = vmatprep.mubr.f32.mxu0 0.0
      %9963 = vmatmul.mubr.f32.gmra.mrb[0].mxu0 %v9755
      %v9964 = vpop.f32.mrb[0].mxu0
      %v9965 = vadd.f32 %v9786, %v9964
      %v9966 = vpop.f32.mrb[0].mxu0
      %9967 = vmatprep.mubr.f32.mxu0 0.0
      %9968 = vmatmul.mubr.f32.gmra.mrb[0].mxu0 %v9756
      %v9969 = vpop.f32.mrb[0].mxu0
      %v9970 = vadd.f32 %v9786, %v9969
      %v9971 = vpop.f32.mrb[0].mxu0
      %9972 = vmatprep.mubr.f32.mxu0 0.0
      %9973 = vmatmul.mubr.f32.gmra.mrb[0].mxu0 %v9757
      %v9974 = vpop.f32.mrb[0].mxu0
      %v9975 = vadd.f32 %v9786, %v9974
      %v9976 = vpop.f32.mrb[0].mxu0
      %9977 = vmatprep.mubr.f32.mxu0 0.0
      %9978 = vmatmul.mubr.f32.gmra.mrb[0].mxu0 %v9758
      %v9979 = vpop.f32.mrb[0].mxu0
      %v9980 = vadd.f32 %v9786, %v9979
      %v9981 = vpop.f32.mrb[0].mxu0
      %9982 = vmatprep.mubr.f32.mxu0 0.0
      %9983 = vmatmul.mubr.f32.gmra.mrb[0].mxu0 %v9759
      %v9984 = vpop.f32.mrb[0].mxu0
      %v9985 = vadd.f32 %v9786, %v9984
      %v9986 = vpop.f32.mrb[0].mxu0
      %9987 = vmatprep.mubr.f32.mxu0 0.0
      %9988 = vmatmul.mubr.f32.gmra.mrb[0].mxu0 %v9760
      %v9989 = vpop.f32.mrb[0].mxu0
      %v9990 = vadd.f32 %v9786, %v9989
      %v9991 = vpop.f32.mrb[0].mxu0
      %9992 = vmatprep.mubr.f32.mxu0 0.0
      %9993 = vmatmul.mubr.f32.gmra.mrb[0].mxu0 %v9761
      %v9994 = vpop.f32.mrb[0].mxu0
      %v9995 = vadd.f32 %v9786, %v9994
      %v9996 = vpop.f32.mrb[0].mxu0
      %9997 = vmatprep.mubr.f32.mxu0 0.0
      %9998 = vmatmul.mubr.f32.gmra.mrb[0].mxu0 %v9762
      %v9999 = vpop.f32.mrb[0].mxu0
      %v10000 = vadd.f32 %v9786, %v9999
      %v10001 = vpop.f32.mrb[0].mxu0
      %10002 = vmatprep.mubr.f32.mxu0 0.0
      %10003 = vmatmul.mubr.f32.gmra.mrb[0].mxu0 %v9763
      %v10004 = vpop.f32.mrb[0].mxu0
      %v10005 = vadd.f32 %v9786, %v10004
      %v10006 = vpop.f32.mrb[0].mxu0
      %10007 = vmatprep.mubr.f32.mxu0 0.0
      %10008 = vmatmul.mubr.f32.gmra.mrb[0].mxu0 %v9764
      %v10009 = vpop.f32.mrb[0].mxu0
      %v10010 = vadd.f32 %v9786, %v10009
      %v10011 = vpop.f32.mrb[0].mxu0
      %10012 = vdwg.mxu0
      %v10013 = vadd.f32 %v8747, %v9855
      %v10014 = vadd.f32 %v8748, %v9860
      %v10015 = vadd.f32 %v8749, %v9865
      %v10016 = vadd.f32 %v8750, %v9870
      %v10017 = vadd.f32 %v8751, %v9875
      %v10018 = vadd.f32 %v8752, %v9880
      %v10019 = vadd.f32 %v8753, %v9885
      %v10020 = vadd.f32 %v8754, %v9890
      %v10021 = vadd.f32 %v8755, %v9895
      %v10022 = vadd.f32 %v8756, %v9900
      %v10023 = vadd.f32 %v8757, %v9905
      %v10024 = vadd.f32 %v8758, %v9910
      %v10025 = vadd.f32 %v8759, %v9915
      %v10026 = vadd.f32 %v8760, %v9920
      %v10027 = vadd.f32 %v8761, %v9925
      %v10028 = vadd.f32 %v8762, %v9930
      %v10029 = vadd.f32 %v8763, %v9935
      %v10030 = vadd.f32 %v8764, %v9940
      %v10031 = vadd.f32 %v8765, %v9945
      %v10032 = vadd.f32 %v8766, %v9950
      %v10033 = vadd.f32 %v8767, %v9955
      %v10034 = vadd.f32 %v8768, %v9960
      %v10035 = vadd.f32 %v8769, %v9965
      %v10036 = vadd.f32 %v8770, %v9970
      %v10037 = vadd.f32 %v8771, %v9975
      %v10038 = vadd.f32 %v8772, %v9980
      %v10039 = vadd.f32 %v8773, %v9985
      %v10040 = vadd.f32 %v8774, %v9990
      %v10041 = vadd.f32 %v8775, %v9995
      %v10042 = vadd.f32 %v8776, %v10000
      %v10043 = vadd.f32 %v8777, %v10005
      %v10044 = vadd.f32 %v8778, %v10010
      %10045 = vst.msk [vmem:[%s420] sm:$0xff] %vm456, %v10013
      %10046 = vst.msk [vmem:[%s420 + $0x8] sm:$0xff] %vm456, %v10029
      %10047 = vst.msk [vmem:[%s420 + $0x10] sm:$0xff] %vm456, %v10014
      %10048 = vst.msk [vmem:[%s420 + $0x18] sm:$0xff] %vm456, %v10030
      %10049 = vst.msk [vmem:[%s420 + $0x20] sm:$0xff] %vm456, %v10015
      %10050 = vst.msk [vmem:[%s420 + $0x28] sm:$0xff] %vm456, %v10031
      %10051 = vst.msk [vmem:[%s420 + $0x30] sm:$0xff] %vm456, %v10016
      %10052 = vst.msk [vmem:[%s420 + $0x38] sm:$0xff] %vm456, %v10032
      %10053 = vst.msk [vmem:[%s420 + $0x40] sm:$0xff] %vm456, %v10017
      %10054 = vst.msk [vmem:[%s420 + $0x48] sm:$0xff] %vm456, %v10033
      %10055 = vst.msk [vmem:[%s420 + $0x50] sm:$0xff] %vm456, %v10018
      %10056 = vst.msk [vmem:[%s420 + $0x58] sm:$0xff] %vm456, %v10034
      %10057 = vst.msk [vmem:[%s420 + $0x60] sm:$0xff] %vm456, %v10019
      %10058 = vst.msk [vmem:[%s420 + $0x68] sm:$0xff] %vm456, %v10035
      %10059 = vst.msk [vmem:[%s420 + $0x70] sm:$0xff] %vm456, %v10020
      %10060 = vst.msk [vmem:[%s420 + $0x78] sm:$0xff] %vm456, %v10036
      %10061 = vst.msk [vmem:[%s420 + $0x80] sm:$0xff] %vm456, %v10021
      %10062 = vst.msk [vmem:[%s420 + $0x88] sm:$0xff] %vm456, %v10037
      %10063 = vst.msk [vmem:[%s420 + $0x90] sm:$0xff] %vm456, %v10022
      %10064 = vst.msk [vmem:[%s420 + $0x98] sm:$0xff] %vm456, %v10038
      %10065 = vst.msk [vmem:[%s420 + $0xa0] sm:$0xff] %vm456, %v10023
      %10066 = vst.msk [vmem:[%s420 + $0xa8] sm:$0xff] %vm456, %v10039
      %10067 = vst.msk [vmem:[%s420 + $0xb0] sm:$0xff] %vm456, %v10024
      %10068 = vst.msk [vmem:[%s420 + $0xb8] sm:$0xff] %vm456, %v10040
      %10069 = vst.msk [vmem:[%s420 + $0xc0] sm:$0xff] %vm456, %v10025
      %10070 = vst.msk [vmem:[%s420 + $0xc8] sm:$0xff] %vm456, %v10041
      %10071 = vst.msk [vmem:[%s420 + $0xd0] sm:$0xff] %vm456, %v10026
      %10072 = vst.msk [vmem:[%s420 + $0xd8] sm:$0xff] %vm456, %v10042
      %10073 = vst.msk [vmem:[%s420 + $0xe0] sm:$0xff] %vm456, %v10027
      %10074 = vst.msk [vmem:[%s420 + $0xe8] sm:$0xff] %vm456, %v10043
      %10075 = vst.msk [vmem:[%s420 + $0xf0] sm:$0xff] %vm456, %v10028
      %10076 = vst.msk [vmem:[%s420 + $0xf8] sm:$0xff] %vm456, %v10044
      %s10077 = smul.u32 2, %s23
      %p10078 = scmp.lt.s32.totalorder %s10077, 3
      %s10079 = scalar_select %p10078, %s10077, 3
      %s10080 = smul.addr %s10079, 16
      %s10081 = smul.addr %s10080, 8
      %s10082 = scalar_lea.vmem %s12, %s10081
      // Predicated region
      $region69: #{tpu_custom_call.1} parent=67 // pred_check
        %p10083 = pneg %p298
      $region70: #{tpu_custom_call.1} parent=67 // pred_check_branch
        %10085 = sbr.rel (%p10083) target = $region72
      $region71: #{tpu_custom_call.1} parent=67 // pred_region
        %s10086 = smul.u32 2, %s23
      $region72: #{tpu_custom_call.1} parent=67 // pred_fallthru
        _
    $region68: #{tpu_custom_call.1} parent=5 // pred_fallthru
      _
    %p10087 = scmp.le.s32.totalorder 2, %s18
    // Predicated region
    $region73: #{tpu_custom_call.1} parent=5 // pred_check
      %p10088 = pneg %p10087
    $region74: #{tpu_custom_call.1} parent=5 // pred_check_branch
      %10090 = sbr.rel (%p10088) target = $region76
    $region75: #{tpu_custom_call.1} parent=5 // pred_region
      %s10091 = ssub.s32 %s18, 2
      // Predicated region
      $region77: #{tpu_custom_call.1} parent=75 // pred_check
        %p10092 = pneg %p304
      $region78: #{tpu_custom_call.1} parent=75 // pred_check_branch
        %10094 = sbr.rel (%p10092) target = $region80
      $region79: #{tpu_custom_call.1} parent=75 // pred_region
        %s10095 = smul.u32 2, %s24
        %p10096 = scmp.lt.s32.totalorder %s10095, 3
        %s10097 = scalar_select %p10096, %s10095, 3
        %s10098 = smul.addr %s10097, 16
        %s10099 = smul.addr %s10098, 8
        %s10100 = scalar_lea.vmem %s12, %s10099
      $region80: #{tpu_custom_call.1} parent=75 // pred_fallthru
        _
    $region76: #{tpu_custom_call.1} parent=5 // pred_fallthru
      _
  $region6: #{tpu_custom_call.1} parent=0 // loop_footer
    %s22 = sadd.s32 1, %s18
  $region7: #{tpu_custom_call.1} parent=0 // loop_footer_branch
    %17 = sbr.rel target = $region3
  $region8: #{tpu_custom_call.1} parent=0 // loop_exit
    _

</llo_original>
